<compile_context>
chip_gen: v6e
topology: v6e:2x2x1
jax: 0.10.0
libtpu: 0.0.40
codegen_flags: <defaults>
</compile_context>

<pallas_src>
from functools import partial

import jax
import jax.numpy as jnp
from jax import lax
from jax.experimental import pallas as pl
from jax.experimental.pallas import tpu as pltpu


def _round_up(x, m):
    return ((x + m - 1) // m) * m


def _choose_tile(n, target):
    """Largest multiple-of-8 divisor of n that is <= target (or n itself)."""
    target = max(8, (target // 8) * 8)
    if n <= target:
        return n
    for t in range(target, 7, -8):
        if n % t == 0:
            return t
    return n


def _mha_uc_kernel(xq_ref, xk_ref, xv_ref, uc_ref,
                   wqT_ref, wkT_ref, wvT_ref, wpT_ref, bp_ref,
                   o_ref,
                   q_scr, acc_scr, m_scr, l_scr,
                   *, num_heads, head_dim):
    # Block shapes (Cp = channel dim padded to a multiple of 128):
    #   xq_ref : (1, TQ, Cp)    query-tile activations (block constant across kv axis)
    #   xk_ref : (1, TKV, Cp)   key-tile activations
    #   xv_ref : (1, TKV, Cp)   value-tile activations
    #   uc_ref : (1, TQ, 1)     per-query-row uncertainty scale = mean(x_u, -1)
    #   w*T    : (Cp, Cp) bf16  pre-transposed weights; 1/sqrt(D) folded into WqT
    #   bp_ref : (1, Cp) f32    projection bias
    #   o_ref  : (1, TQ, Cp)
    # Scratch (persists across the kv grid axis):
    #   q_scr  : (TQ, Cp) bf16      projected (and pre-scaled) q tile
    #   acc_scr: (TQ, Cp) f32       un-normalized per-head outputs (lane slices)
    #   m_scr  : (H, TQ, 1) f32     online-softmax running max per head
    #   l_scr  : (H, TQ, 1) f32     online-softmax running denominator per head
    ki = pl.program_id(2)
    nkv = pl.num_programs(2)

    @pl.when(ki == 0)
    def _init():
        # Q projection once per query tile; store bf16 (MXU-ready, half the VMEM).
        xq = xq_ref[0].astype(jnp.bfloat16)
        q_scr[...] = jnp.dot(xq, wqT_ref[...],
                             preferred_element_type=jnp.float32).astype(jnp.bfloat16)
        acc_scr[...] = jnp.zeros_like(acc_scr)
        m_scr[...] = jnp.full_like(m_scr, -jnp.inf)
        l_scr[...] = jnp.zeros_like(l_scr)

    # K/V projections for this KV tile (bf16 operands, f32 accumulation on the MXU).
    xk = xk_ref[0].astype(jnp.bfloat16)
    xv = xv_ref[0].astype(jnp.bfloat16)
    k = jnp.dot(xk, wkT_ref[...], preferred_element_type=jnp.float32).astype(jnp.bfloat16)
    v = jnp.dot(xv, wvT_ref[...], preferred_element_type=jnp.float32).astype(jnp.bfloat16)

    uc = uc_ref[0]                                   # (TQ, 1) f32

    # Per-head online softmax. Heads are contiguous lane slices of q/k/v; no
    # transposes or concatenations — results land in lane slices of acc_scr.
    for h in range(num_heads):
        sl = slice(h * head_dim, (h + 1) * head_dim)
        qh = q_scr[:, sl]                            # (TQ, D)  bf16 (scale folded in)
        kh = k[:, sl]                                # (TKV, D) bf16
        vh = v[:, sl]                                # (TKV, D) bf16

        # s[i, j] = sum_d qh[i, d] * kh[j, d]  — f32 scores.
        s = lax.dot_general(qh, kh, (((1,), (1,)), ((), ())),
                            preferred_element_type=jnp.float32)   # (TQ, TKV)
        s = s * uc                                   # row-wise uncertainty scaling

        m_prev = m_scr[h]                            # (TQ, 1)
        m_new = jnp.maximum(m_prev, jnp.max(s, axis=-1, keepdims=True))
        alpha = jnp.exp(m_prev - m_new)              # f32 (v5e-safe softmax math)
        p = jnp.exp(s - m_new)                       # (TQ, TKV) f32, un-normalized
        l_scr[h] = alpha * l_scr[h] + jnp.sum(p, axis=-1, keepdims=True)
        acc_scr[:, sl] = alpha * acc_scr[:, sl] + jnp.dot(
            p.astype(jnp.bfloat16), vh, preferred_element_type=jnp.float32)
        m_scr[h] = m_new

    @pl.when(ki == nkv - 1)
    def _finalize():
        # Deferred normalization: EUP reciprocal of the (TQ,1) denominator, applied
        # to the (TQ,D) accumulator (not an N^2 per-element divide).
        for h in range(num_heads):
            sl = slice(h * head_dim, (h + 1) * head_dim)
            inv_l = pl.reciprocal(l_scr[h], approx=True)
            acc_scr[:, sl] = acc_scr[:, sl] * inv_l
        att = acc_scr[...].astype(jnp.bfloat16)      # (TQ, Cp)
        y = jnp.dot(att, wpT_ref[...], preferred_element_type=jnp.float32) + bp_ref[...]
        o_ref[...] = y[None].astype(o_ref.dtype)     # lane-dense (Cp % 128 == 0) store


def mha_uc(x_q, x_k, x_v, x_u, wq, wk, wv, wp, bp, num_heads,
           *, qkv_bias=False, qk_norm=False, attn_drop=0.0, proj_drop=0.0,
           tq_target=256, tkv_target=256):
    """x_q/x_k/x_v: (B,N,C); x_u: (B,N,Cu); wq/wk/wv/wp: (C,C) torch (out,in); bp: (C,).
    Returns (B,N,C). tq_target/tkv_target: per-generation tile targets
    (256 on v6e/v7x; 128 is enough on v5e; shrink on v7x if VMEM estimate nears 64 MiB)."""
    # Guard unsupported module configurations instead of silently returning wrong results.
    assert not qkv_bias, "qkv_bias=True not supported (module default is False)"
    assert not qk_norm, "qk_norm=True not supported (module default is False)"
    assert attn_drop == 0.0 and proj_drop == 0.0, "dropout not supported (defaults are 0)"

    B, N, C = x_q.shape
    assert C % num_heads == 0
    head_dim = C // num_heads
    scale = head_dim ** (-0.5)

    # ---- wrapper glue (layout + the tiny x_u row-mean; all heavy math is in-kernel) ----
    # Per-query-row uncertainty scale: the kernel only needs one scalar per row, so do not
    # DMA the whole (N, Cu) x_u tile per grid step.
    uc = jnp.mean(x_u.astype(jnp.float32), axis=-1, keepdims=True)        # (B, N, 1)

    # Pad channels to a multiple of 128 -> lane-dense loads/stores (only triggers for tiny C).
    Cp = max(128, _round_up(C, 128))
    pad_c = Cp - C

    def pad_act(a):
        return jnp.pad(a, ((0, 0), (0, 0), (0, pad_c))) if pad_c else a

    def prep_w(w, s=1.0):
        wt = (w.astype(jnp.float32) * s).T                                # scale folded in f32
        if pad_c:
            wt = jnp.pad(wt, ((0, pad_c), (0, pad_c)))
        return wt.astype(jnp.bfloat16)                                    # bf16 MXU operands

    xq_p, xk_p, xv_p = pad_act(x_q), pad_act(x_k), pad_act(x_v)
    wqT = prep_w(wq, scale)           # q-scale folded into the q weight
    wkT = prep_w(wk)
    wvT = prep_w(wv)
    wpT = prep_w(wp)
    bp_p = jnp.pad(bp.astype(jnp.float32), (0, pad_c)).reshape(1, Cp)

    TQ = _choose_tile(N, tq_target)
    TKV = _choose_tile(N, tkv_target)
    nq, nkv = N // TQ, N // TKV
    grid = (B, nq, nkv)

    kernel = partial(_mha_uc_kernel, num_heads=num_heads, head_dim=head_dim)

    def build(single_buffer_weights):
        def w_spec():
            if single_buffer_weights:
                # Constant block index -> a second (double) buffer is pure VMEM waste.
                return pl.BlockSpec((Cp, Cp), lambda b, qi, ki: (0, 0),
                                    pipeline_mode=pl.Buffered(1))
            return pl.BlockSpec((Cp, Cp), lambda b, qi, ki: (0, 0))

        in_specs = [
            pl.BlockSpec((1, TQ, Cp), lambda b, qi, ki: (b, qi, 0)),      # x_q tile
            pl.BlockSpec((1, TKV, Cp), lambda b, qi, ki: (b, ki, 0)),     # x_k tile
            pl.BlockSpec((1, TKV, Cp), lambda b, qi, ki: (b, ki, 0)),     # x_v tile
            pl.BlockSpec((1, TQ, 1), lambda b, qi, ki: (b, qi, 0)),       # uc rows
            w_spec(), w_spec(), w_spec(), w_spec(),                       # WqT WkT WvT WpT
            pl.BlockSpec((1, Cp), lambda b, qi, ki: (0, 0)),              # proj bias
        ]
        out_specs = pl.BlockSpec((1, TQ, Cp), lambda b, qi, ki: (b, qi, 0))
        scratch_shapes = [
            pltpu.VMEM((TQ, Cp), jnp.bfloat16),                           # projected q tile
            pltpu.VMEM((TQ, Cp), jnp.float32),                            # output accumulator
            pltpu.VMEM((num_heads, TQ, 1), jnp.float32),                  # running max
            pltpu.VMEM((num_heads, TQ, 1), jnp.float32),                  # running denom
        ]

        # Rough VMEM budget (bytes): weights + double-buffered activation tiles + scratch.
        w_bufs = 1 if single_buffer_weights else 2
        est = (4 * Cp * Cp * 2 * w_bufs
               + 2 * (TQ * Cp + 2 * TKV * Cp + TQ) * 4                    # input blocks, 2 bufs
               + 2 * TQ * Cp * 4                                          # output block, 2 bufs
               + TQ * Cp * 2 + TQ * Cp * 4 + 2 * num_heads * TQ * 4)      # scratch
        comp_kwargs = dict(dimension_semantics=("parallel", "parallel", "arbitrary"))
        if est > 12 * (1 << 20):
            # Only override the scoped-VMEM default when the tiles actually need it
            # (v5e default is 16 MiB).  On v7x (64 MiB physical VMEM) pick smaller
            # tq_target/tkv_target so `est` stays well under 64 MiB.
            comp_kwargs["vmem_limit_bytes"] = int(min(1.5 * est, 100 << 20))

        return pl.pallas_call(
            kernel,
            out_shape=jax.ShapeDtypeStruct((B, N, Cp), x_q.dtype),
            grid_spec=pltpu.PrefetchScalarGridSpec(
                num_scalar_prefetch=0,
                grid=grid,
                in_specs=in_specs,
                out_specs=out_specs,
                scratch_shapes=scratch_shapes),
            compiler_params=pltpu.CompilerParams(**comp_kwargs),
        )

    args = (xq_p, xk_p, xv_p, uc, wqT, wkT, wvT, wpT, bp_p)
    try:
        out_p = build(True)(*args)
        out_p.block_until_ready()                      # surface compile errors here
    except Exception:
        # pipeline_mode=pl.Buffered(1) not supported by this JAX/Mosaic build:
        # fall back to default (double-buffered) weight blocks. Any genuine kernel
        # bug would fail this path too, so real errors still surface.
        out_p = build(False)(*args)

    return out_p[..., :C] if pad_c else out_p


def _reference(x_q, x_k, x_v, x_u, wq, wk, wv, wp, bp, num_heads):
    # Pure-JAX f32 reference matching the PyTorch forward (qk_norm=False, dropout=0).
    B, N, C = x_q.shape
    D = C // num_heads
    scale = D ** (-0.5)
    q = jnp.transpose((x_q @ wq.T).reshape(B, N, num_heads, D), (0, 2, 1, 3)) * scale
    k = jnp.transpose((x_k @ wk.T).reshape(B, N, num_heads, D), (0, 2, 1, 3))
    v = jnp.transpose((x_v @ wv.T).reshape(B, N, num_heads, D), (0, 2, 1, 3))
    attn = q @ jnp.swapaxes(k, -1, -2)                  # (B, H, N, N)
    uc = jnp.mean(x_u, axis=-1)                         # (B, N)
    attn = attn * uc[:, None, :, None]                  # per-query-row scale
    attn = jax.nn.softmax(attn, axis=-1)
    x = jnp.swapaxes(attn @ v, 1, 2).reshape(B, N, C)
    return x @ wp.T + bp


if __name__ == "__main__":
    key = jax.random.PRNGKey(0)
    keys = jax.random.split(key, 9)

    # Small shapes consistent with the module; tq/tkv targets of 8 force a
    # (B, 2, 2) grid so the online-softmax KV loop and query tiling are exercised.
    B, N, C, H = 2, 16, 32, 8

    x_q = jax.random.normal(keys[0], (B, N, C), dtype=jnp.float32)
    x_k = jax.random.normal(keys[1], (B, N, C), dtype=jnp.float32)
    x_v = jax.random.normal(keys[2], (B, N, C), dtype=jnp.float32)
    x_u = jax.random.normal(keys[3], (B, N, C), dtype=jnp.float32)

    # Deterministic synthetic weights (shapes = nn.Linear(C, C).weight / .bias).
    wq = jax.random.normal(keys[4], (C, C), dtype=jnp.float32) * 0.1
    wk = jax.random.normal(keys[5], (C, C), dtype=jnp.float32) * 0.1
    wv = jax.random.normal(keys[6], (C, C), dtype=jnp.float32) * 0.1
    wp = jax.random.normal(keys[7], (C, C), dtype=jnp.float32) * 0.1
    bp = jax.random.normal(keys[8], (C,), dtype=jnp.float32) * 0.1

    out = mha_uc(x_q, x_k, x_v, x_u, wq, wk, wv, wp, bp, num_heads=H,
                 tq_target=8, tkv_target=8)
    out = jax.block_until_ready(out)

    ref = _reference(x_q, x_k, x_v, x_u, wq, wk, wv, wp, bp, H)
    assert out.shape == (B, N, C)
    err = float(jnp.max(jnp.abs(out - ref)))
    # bf16 MXU operands (with f32 accumulation) -> tolerance is bf16-level, not f32-level.
    assert jnp.allclose(out, ref, atol=2e-2, rtol=2e-2), f"max err {err}"

    print("KERNEL_OK")
</pallas_src>

<mosaic_0001>
module attributes {stable_mosaic.version = 11 : i64} {
  func.func @_mha_uc_kernel(%arg0: i32, %arg1: i32, %arg2: i32, %arg3: memref<1x8x128xf32, #tpu.memory_space<vmem>>, %arg4: memref<1x8x128xf32, #tpu.memory_space<vmem>>, %arg5: memref<1x8x128xf32, #tpu.memory_space<vmem>>, %arg6: memref<1x8x1xf32, #tpu.memory_space<vmem>>, %arg7: memref<128x128xbf16, #tpu.memory_space<vmem>>, %arg8: memref<128x128xbf16, #tpu.memory_space<vmem>>, %arg9: memref<128x128xbf16, #tpu.memory_space<vmem>>, %arg10: memref<128x128xbf16, #tpu.memory_space<vmem>>, %arg11: memref<1x128xf32, #tpu.memory_space<vmem>>, %arg12: memref<1x8x128xf32, #tpu.memory_space<vmem>>, %arg13: memref<8x128xbf16, #tpu.memory_space<vmem>>, %arg14: memref<8x128xf32, #tpu.memory_space<vmem>>, %arg15: memref<8x8x1xf32, #tpu.memory_space<vmem>>, %arg16: memref<8x8x1xf32, #tpu.memory_space<vmem>>) attributes {dimension_semantics = [#tpu.dimension_semantics<parallel>, #tpu.dimension_semantics<parallel>, #tpu.dimension_semantics<arbitrary>], iteration_bounds = array<i64: 2, 2, 2>, scalar_prefetch = 0 : i64, scratch_operands = 4 : i64, tpu.core_type = #tpu.core_type<tc>, window_params = [{transform_indices = @transform_0, window_bounds = array<i64: 1, 8, 128>}, {transform_indices = @transform_1, window_bounds = array<i64: 1, 8, 128>}, {transform_indices = @transform_2, window_bounds = array<i64: 1, 8, 128>}, {transform_indices = @transform_3, window_bounds = array<i64: 1, 8, 1>}, {pipeline_mode = #tpu.pipeline_mode<synchronous>, transform_indices = @transform_4, window_bounds = array<i64: 128, 128>}, {pipeline_mode = #tpu.pipeline_mode<synchronous>, transform_indices = @transform_5, window_bounds = array<i64: 128, 128>}, {pipeline_mode = #tpu.pipeline_mode<synchronous>, transform_indices = @transform_6, window_bounds = array<i64: 128, 128>}, {pipeline_mode = #tpu.pipeline_mode<synchronous>, transform_indices = @transform_7, window_bounds = array<i64: 128, 128>}, {pipeline_mode = #tpu.pipeline_mode<synchronous>, transform_indices = @transform_8, window_bounds = array<i64: 1, 128>}, {transform_indices = @transform_9, window_bounds = array<i64: 1, 8, 128>}]} {
    %c0_i32 = arith.constant 0 : i32
    %0 = arith.cmpi eq, %arg2, %c0_i32 : i32
    %1 = arith.extui %0 : i1 to i32
    %c0_i32_0 = arith.constant 0 : i32
    %2 = arith.cmpi ne, %1, %c0_i32_0 : i32
    scf.if %2 {
      %c0_178 = arith.constant 0 : index
      %c0_179 = arith.constant 0 : index
      %c0_180 = arith.constant 0 : index
      %300 = vector.load %arg3[%c0_178, %c0_179, %c0_180] : memref<1x8x128xf32, #tpu.memory_space<vmem>>, vector<1x8x128xf32>
      %301 = vector.shape_cast %300 : vector<1x8x128xf32> to vector<8x128xf32>
      %302 = arith.truncf %301 : vector<8x128xf32> to vector<8x128xbf16>
      %c0_181 = arith.constant 0 : index
      %c0_182 = arith.constant 0 : index
      %303 = vector.load %arg7[%c0_181, %c0_182] : memref<128x128xbf16, #tpu.memory_space<vmem>>, vector<128x128xbf16>
      %cst_183 = arith.constant dense<0.000000e+00> : vector<8x128xf32>
      %304 = tpu.matmul %302, %303, %cst_183 {dimension_numbers = #tpu.dot_dimension_numbers<[1], [0], [0], [1], [0, 0, 1, 1], [], []>} : vector<8x128xbf16>, vector<128x128xbf16>, vector<8x128xf32> -> vector<8x128xf32>
      %305 = arith.truncf %304 : vector<8x128xf32> to vector<8x128xbf16>
      %c0_184 = arith.constant 0 : index
      %c0_185 = arith.constant 0 : index
      %306 = vector.load %arg13[%c0_184, %c0_185] : memref<8x128xbf16, #tpu.memory_space<vmem>>, vector<8x128xbf16>
      tpu.vector_store %arg13[%c0_184, %c0_185], %305 {strides = array<i32>} : memref<8x128xbf16, #tpu.memory_space<vmem>>, vector<8x128xbf16>,
      %cst_186 = arith.constant 0.000000e+00 : f32
      %307 = vector.broadcast %cst_186 : f32 to vector<8x128xf32>
      %c0_187 = arith.constant 0 : index
      %c0_188 = arith.constant 0 : index
      %308 = vector.load %arg14[%c0_187, %c0_188] : memref<8x128xf32, #tpu.memory_space<vmem>>, vector<8x128xf32>
      tpu.vector_store %arg14[%c0_187, %c0_188], %307 {strides = array<i32>} : memref<8x128xf32, #tpu.memory_space<vmem>>, vector<8x128xf32>,
      %cst_189 = arith.constant 0xFF800000 : f32
      %309 = vector.broadcast %cst_189 : f32 to vector<8x8x1xf32>
      %c0_190 = arith.constant 0 : index
      %c0_191 = arith.constant 0 : index
      %c0_192 = arith.constant 0 : index
      %310 = vector.load %arg15[%c0_190, %c0_191, %c0_192] : memref<8x8x1xf32, #tpu.memory_space<vmem>>, vector<8x8x1xf32>
      tpu.vector_store %arg15[%c0_190, %c0_191, %c0_192], %309 {strides = array<i32>} : memref<8x8x1xf32, #tpu.memory_space<vmem>>, vector<8x8x1xf32>,
      %cst_193 = arith.constant 0.000000e+00 : f32
      %311 = vector.broadcast %cst_193 : f32 to vector<8x8x1xf32>
      %c0_194 = arith.constant 0 : index
      %c0_195 = arith.constant 0 : index
      %c0_196 = arith.constant 0 : index
      %312 = vector.load %arg16[%c0_194, %c0_195, %c0_196] : memref<8x8x1xf32, #tpu.memory_space<vmem>>, vector<8x8x1xf32>
      tpu.vector_store %arg16[%c0_194, %c0_195, %c0_196], %311 {strides = array<i32>} : memref<8x8x1xf32, #tpu.memory_space<vmem>>, vector<8x8x1xf32>,
    } else {
    }
    %c0 = arith.constant 0 : index
    %c0_1 = arith.constant 0 : index
    %c0_2 = arith.constant 0 : index
    %3 = vector.load %arg4[%c0, %c0_1, %c0_2] : memref<1x8x128xf32, #tpu.memory_space<vmem>>, vector<1x8x128xf32>
    %4 = vector.shape_cast %3 : vector<1x8x128xf32> to vector<8x128xf32>
    %5 = arith.truncf %4 : vector<8x128xf32> to vector<8x128xbf16>
    %c0_3 = arith.constant 0 : index
    %c0_4 = arith.constant 0 : index
    %c0_5 = arith.constant 0 : index
    %6 = vector.load %arg5[%c0_3, %c0_4, %c0_5] : memref<1x8x128xf32, #tpu.memory_space<vmem>>, vector<1x8x128xf32>
    %7 = vector.shape_cast %6 : vector<1x8x128xf32> to vector<8x128xf32>
    %8 = arith.truncf %7 : vector<8x128xf32> to vector<8x128xbf16>
    %c0_6 = arith.constant 0 : index
    %c0_7 = arith.constant 0 : index
    %9 = vector.load %arg8[%c0_6, %c0_7] : memref<128x128xbf16, #tpu.memory_space<vmem>>, vector<128x128xbf16>
    %cst = arith.constant dense<0.000000e+00> : vector<8x128xf32>
    %10 = tpu.matmul %5, %9, %cst {dimension_numbers = #tpu.dot_dimension_numbers<[1], [0], [0], [1], [0, 0, 1, 1], [], []>} : vector<8x128xbf16>, vector<128x128xbf16>, vector<8x128xf32> -> vector<8x128xf32>
    %11 = arith.truncf %10 : vector<8x128xf32> to vector<8x128xbf16>
    %c0_8 = arith.constant 0 : index
    %c0_9 = arith.constant 0 : index
    %12 = vector.load %arg9[%c0_8, %c0_9] : memref<128x128xbf16, #tpu.memory_space<vmem>>, vector<128x128xbf16>
    %cst_10 = arith.constant dense<0.000000e+00> : vector<8x128xf32>
    %13 = tpu.matmul %8, %12, %cst_10 {dimension_numbers = #tpu.dot_dimension_numbers<[1], [0], [0], [1], [0, 0, 1, 1], [], []>} : vector<8x128xbf16>, vector<128x128xbf16>, vector<8x128xf32> -> vector<8x128xf32>
    %14 = arith.truncf %13 : vector<8x128xf32> to vector<8x128xbf16>
    %c0_11 = arith.constant 0 : index
    %c0_12 = arith.constant 0 : index
    %c0_13 = arith.constant 0 : index
    %15 = vector.load %arg6[%c0_11, %c0_12, %c0_13] : memref<1x8x1xf32, #tpu.memory_space<vmem>>, vector<1x8x1xf32>
    %16 = vector.shape_cast %15 : vector<1x8x1xf32> to vector<8x1xf32>
    %c0_14 = arith.constant 0 : index
    %c0_15 = arith.constant 0 : index
    %17 = vector.load %arg13[%c0_14, %c0_15] : memref<8x128xbf16, #tpu.memory_space<vmem>>, vector<8x4xbf16>
    %18 = vector.extract_strided_slice %11 {offsets = [0, 0], sizes = [8, 4], strides = [1, 1]} : vector<8x128xbf16> to vector<8x4xbf16>
    %19 = vector.extract_strided_slice %14 {offsets = [0, 0], sizes = [8, 4], strides = [1, 1]} : vector<8x128xbf16> to vector<8x4xbf16>
    %cst_16 = arith.constant dense<0.000000e+00> : vector<8x8xf32>
    %20 = tpu.matmul %17, %18, %cst_16 {dimension_numbers = #tpu.dot_dimension_numbers<[1], [1], [0], [0], [0, 0, 1, 0], [], []>} : vector<8x4xbf16>, vector<8x4xbf16>, vector<8x8xf32> -> vector<8x8xf32>
    %21 = vector.broadcast %16 : vector<8x1xf32> to vector<8x8xf32>
    %22 = arith.mulf %20, %21 : vector<8x8xf32>
    %c0_17 = arith.constant 0 : index
    %c0_18 = arith.constant 0 : index
    %c0_19 = arith.constant 0 : index
    %23 = vector.load %arg15[%c0_17, %c0_18, %c0_19] : memref<8x8x1xf32, #tpu.memory_space<vmem>>, vector<1x8x1xf32>
    %24 = vector.shape_cast %23 : vector<1x8x1xf32> to vector<8x1xf32>
    %cst_20 = arith.constant dense<0xFF800000> : vector<8xf32>
    %25 = vector.multi_reduction <maximumf>, %22, %cst_20 [1] : vector<8x8xf32> to vector<8xf32>
    %26 = vector.shape_cast %25 : vector<8xf32> to vector<8x1xf32>
    %27 = arith.maximumf %24, %26 : vector<8x1xf32>
    %28 = arith.subf %24, %27 : vector<8x1xf32>
    %29 = math.exp %28 : vector<8x1xf32>
    %30 = vector.broadcast %27 : vector<8x1xf32> to vector<8x8xf32>
    %31 = arith.subf %22, %30 : vector<8x8xf32>
    %32 = math.exp %31 : vector<8x8xf32>
    %c0_21 = arith.constant 0 : index
    %c0_22 = arith.constant 0 : index
    %c0_23 = arith.constant 0 : index
    %33 = vector.load %arg16[%c0_21, %c0_22, %c0_23] : memref<8x8x1xf32, #tpu.memory_space<vmem>>, vector<1x8x1xf32>
    %34 = vector.shape_cast %33 : vector<1x8x1xf32> to vector<8x1xf32>
    %35 = arith.mulf %29, %34 : vector<8x1xf32>
    %cst_24 = arith.constant dense<0.000000e+00> : vector<8xf32>
    %36 = vector.multi_reduction <add>, %32, %cst_24 [1] : vector<8x8xf32> to vector<8xf32>
    %37 = vector.shape_cast %36 : vector<8xf32> to vector<8x1xf32>
    %38 = arith.addf %35, %37 : vector<8x1xf32>
    %c0_25 = arith.constant 0 : index
    %c0_26 = arith.constant 0 : index
    %c0_27 = arith.constant 0 : index
    %39 = vector.load %arg16[%c0_25, %c0_26, %c0_27] : memref<8x8x1xf32, #tpu.memory_space<vmem>>, vector<1x8x1xf32>
    %40 = vector.shape_cast %39 : vector<1x8x1xf32> to vector<8x1xf32>
    %41 = vector.shape_cast %38 : vector<8x1xf32> to vector<1x8x1xf32>
    tpu.vector_store %arg16[%c0_25, %c0_26, %c0_27], %41 {strides = array<i32>} : memref<8x8x1xf32, #tpu.memory_space<vmem>>, vector<1x8x1xf32>,
    %c0_28 = arith.constant 0 : index
    %c0_29 = arith.constant 0 : index
    %42 = vector.load %arg14[%c0_28, %c0_29] : memref<8x128xf32, #tpu.memory_space<vmem>>, vector<8x4xf32>
    %43 = vector.broadcast %29 : vector<8x1xf32> to vector<8x4xf32>
    %44 = arith.mulf %43, %42 : vector<8x4xf32>
    %45 = arith.truncf %32 : vector<8x8xf32> to vector<8x8xbf16>
    %cst_30 = arith.constant dense<0.000000e+00> : vector<8x4xf32>
    %46 = tpu.matmul %45, %19, %cst_30 {dimension_numbers = #tpu.dot_dimension_numbers<[1], [0], [0], [1], [0, 0, 1, 1], [], []>} : vector<8x8xbf16>, vector<8x4xbf16>, vector<8x4xf32> -> vector<8x4xf32>
    %47 = arith.addf %44, %46 : vector<8x4xf32>
    %c0_31 = arith.constant 0 : index
    %c0_32 = arith.constant 0 : index
    %48 = vector.load %arg14[%c0_31, %c0_32] : memref<8x128xf32, #tpu.memory_space<vmem>>, vector<8x4xf32>
    tpu.vector_store %arg14[%c0_31, %c0_32], %47 {strides = array<i32>} : memref<8x128xf32, #tpu.memory_space<vmem>>, vector<8x4xf32>,
    %c0_33 = arith.constant 0 : index
    %c0_34 = arith.constant 0 : index
    %c0_35 = arith.constant 0 : index
    %49 = vector.load %arg15[%c0_33, %c0_34, %c0_35] : memref<8x8x1xf32, #tpu.memory_space<vmem>>, vector<1x8x1xf32>
    %50 = vector.shape_cast %49 : vector<1x8x1xf32> to vector<8x1xf32>
    %51 = vector.shape_cast %27 : vector<8x1xf32> to vector<1x8x1xf32>
    tpu.vector_store %arg15[%c0_33, %c0_34, %c0_35], %51 {strides = array<i32>} : memref<8x8x1xf32, #tpu.memory_space<vmem>>, vector<1x8x1xf32>,
    %c0_36 = arith.constant 0 : index
    %c4 = arith.constant 4 : index
    %52 = vector.load %arg13[%c0_36, %c4] : memref<8x128xbf16, #tpu.memory_space<vmem>>, vector<8x4xbf16>
    %53 = vector.extract_strided_slice %11 {offsets = [0, 4], sizes = [8, 4], strides = [1, 1]} : vector<8x128xbf16> to vector<8x4xbf16>
    %54 = vector.extract_strided_slice %14 {offsets = [0, 4], sizes = [8, 4], strides = [1, 1]} : vector<8x128xbf16> to vector<8x4xbf16>
    %cst_37 = arith.constant dense<0.000000e+00> : vector<8x8xf32>
    %55 = tpu.matmul %52, %53, %cst_37 {dimension_numbers = #tpu.dot_dimension_numbers<[1], [1], [0], [0], [0, 0, 1, 0], [], []>} : vector<8x4xbf16>, vector<8x4xbf16>, vector<8x8xf32> -> vector<8x8xf32>
    %56 = vector.broadcast %16 : vector<8x1xf32> to vector<8x8xf32>
    %57 = arith.mulf %55, %56 : vector<8x8xf32>
    %c1 = arith.constant 1 : index
    %c0_38 = arith.constant 0 : index
    %c0_39 = arith.constant 0 : index
    %58 = vector.load %arg15[%c1, %c0_38, %c0_39] : memref<8x8x1xf32, #tpu.memory_space<vmem>>, vector<1x8x1xf32>
    %59 = vector.shape_cast %58 : vector<1x8x1xf32> to vector<8x1xf32>
    %cst_40 = arith.constant dense<0xFF800000> : vector<8xf32>
    %60 = vector.multi_reduction <maximumf>, %57, %cst_40 [1] : vector<8x8xf32> to vector<8xf32>
    %61 = vector.shape_cast %60 : vector<8xf32> to vector<8x1xf32>
    %62 = arith.maximumf %59, %61 : vector<8x1xf32>
    %63 = arith.subf %59, %62 : vector<8x1xf32>
    %64 = math.exp %63 : vector<8x1xf32>
    %65 = vector.broadcast %62 : vector<8x1xf32> to vector<8x8xf32>
    %66 = arith.subf %57, %65 : vector<8x8xf32>
    %67 = math.exp %66 : vector<8x8xf32>
    %c1_41 = arith.constant 1 : index
    %c0_42 = arith.constant 0 : index
    %c0_43 = arith.constant 0 : index
    %68 = vector.load %arg16[%c1_41, %c0_42, %c0_43] : memref<8x8x1xf32, #tpu.memory_space<vmem>>, vector<1x8x1xf32>
    %69 = vector.shape_cast %68 : vector<1x8x1xf32> to vector<8x1xf32>
    %70 = arith.mulf %64, %69 : vector<8x1xf32>
    %cst_44 = arith.constant dense<0.000000e+00> : vector<8xf32>
    %71 = vector.multi_reduction <add>, %67, %cst_44 [1] : vector<8x8xf32> to vector<8xf32>
    %72 = vector.shape_cast %71 : vector<8xf32> to vector<8x1xf32>
    %73 = arith.addf %70, %72 : vector<8x1xf32>
    %c1_45 = arith.constant 1 : index
    %c0_46 = arith.constant 0 : index
    %c0_47 = arith.constant 0 : index
    %74 = vector.load %arg16[%c1_45, %c0_46, %c0_47] : memref<8x8x1xf32, #tpu.memory_space<vmem>>, vector<1x8x1xf32>
    %75 = vector.shape_cast %74 : vector<1x8x1xf32> to vector<8x1xf32>
    %76 = vector.shape_cast %73 : vector<8x1xf32> to vector<1x8x1xf32>
    tpu.vector_store %arg16[%c1_45, %c0_46, %c0_47], %76 {strides = array<i32>} : memref<8x8x1xf32, #tpu.memory_space<vmem>>, vector<1x8x1xf32>,
    %c0_48 = arith.constant 0 : index
    %c4_49 = arith.constant 4 : index
    %77 = vector.load %arg14[%c0_48, %c4_49] : memref<8x128xf32, #tpu.memory_space<vmem>>, vector<8x4xf32>
    %78 = vector.broadcast %64 : vector<8x1xf32> to vector<8x4xf32>
    %79 = arith.mulf %78, %77 : vector<8x4xf32>
    %80 = arith.truncf %67 : vector<8x8xf32> to vector<8x8xbf16>
    %cst_50 = arith.constant dense<0.000000e+00> : vector<8x4xf32>
    %81 = tpu.matmul %80, %54, %cst_50 {dimension_numbers = #tpu.dot_dimension_numbers<[1], [0], [0], [1], [0, 0, 1, 1], [], []>} : vector<8x8xbf16>, vector<8x4xbf16>, vector<8x4xf32> -> vector<8x4xf32>
    %82 = arith.addf %79, %81 : vector<8x4xf32>
    %c0_51 = arith.constant 0 : index
    %c4_52 = arith.constant 4 : index
    %83 = vector.load %arg14[%c0_51, %c4_52] : memref<8x128xf32, #tpu.memory_space<vmem>>, vector<8x4xf32>
    tpu.vector_store %arg14[%c0_51, %c4_52], %82 {strides = array<i32>} : memref<8x128xf32, #tpu.memory_space<vmem>>, vector<8x4xf32>,
    %c1_53 = arith.constant 1 : index
    %c0_54 = arith.constant 0 : index
    %c0_55 = arith.constant 0 : index
    %84 = vector.load %arg15[%c1_53, %c0_54, %c0_55] : memref<8x8x1xf32, #tpu.memory_space<vmem>>, vector<1x8x1xf32>
    %85 = vector.shape_cast %84 : vector<1x8x1xf32> to vector<8x1xf32>
    %86 = vector.shape_cast %62 : vector<8x1xf32> to vector<1x8x1xf32>
    tpu.vector_store %arg15[%c1_53, %c0_54, %c0_55], %86 {strides = array<i32>} : memref<8x8x1xf32, #tpu.memory_space<vmem>>, vector<1x8x1xf32>,
    %c0_56 = arith.constant 0 : index
    %c8 = arith.constant 8 : index
    %87 = vector.load %arg13[%c0_56, %c8] : memref<8x128xbf16, #tpu.memory_space<vmem>>, vector<8x4xbf16>
    %88 = vector.extract_strided_slice %11 {offsets = [0, 8], sizes = [8, 4], strides = [1, 1]} : vector<8x128xbf16> to vector<8x4xbf16>
    %89 = vector.extract_strided_slice %14 {offsets = [0, 8], sizes = [8, 4], strides = [1, 1]} : vector<8x128xbf16> to vector<8x4xbf16>
    %cst_57 = arith.constant dense<0.000000e+00> : vector<8x8xf32>
    %90 = tpu.matmul %87, %88, %cst_57 {dimension_numbers = #tpu.dot_dimension_numbers<[1], [1], [0], [0], [0, 0, 1, 0], [], []>} : vector<8x4xbf16>, vector<8x4xbf16>, vector<8x8xf32> -> vector<8x8xf32>
    %91 = vector.broadcast %16 : vector<8x1xf32> to vector<8x8xf32>
    %92 = arith.mulf %90, %91 : vector<8x8xf32>
    %c2 = arith.constant 2 : index
    %c0_58 = arith.constant 0 : index
    %c0_59 = arith.constant 0 : index
    %93 = vector.load %arg15[%c2, %c0_58, %c0_59] : memref<8x8x1xf32, #tpu.memory_space<vmem>>, vector<1x8x1xf32>
    %94 = vector.shape_cast %93 : vector<1x8x1xf32> to vector<8x1xf32>
    %cst_60 = arith.constant dense<0xFF800000> : vector<8xf32>
    %95 = vector.multi_reduction <maximumf>, %92, %cst_60 [1] : vector<8x8xf32> to vector<8xf32>
    %96 = vector.shape_cast %95 : vector<8xf32> to vector<8x1xf32>
    %97 = arith.maximumf %94, %96 : vector<8x1xf32>
    %98 = arith.subf %94, %97 : vector<8x1xf32>
    %99 = math.exp %98 : vector<8x1xf32>
    %100 = vector.broadcast %97 : vector<8x1xf32> to vector<8x8xf32>
    %101 = arith.subf %92, %100 : vector<8x8xf32>
    %102 = math.exp %101 : vector<8x8xf32>
    %c2_61 = arith.constant 2 : index
    %c0_62 = arith.constant 0 : index
    %c0_63 = arith.constant 0 : index
    %103 = vector.load %arg16[%c2_61, %c0_62, %c0_63] : memref<8x8x1xf32, #tpu.memory_space<vmem>>, vector<1x8x1xf32>
    %104 = vector.shape_cast %103 : vector<1x8x1xf32> to vector<8x1xf32>
    %105 = arith.mulf %99, %104 : vector<8x1xf32>
    %cst_64 = arith.constant dense<0.000000e+00> : vector<8xf32>
    %106 = vector.multi_reduction <add>, %102, %cst_64 [1] : vector<8x8xf32> to vector<8xf32>
    %107 = vector.shape_cast %106 : vector<8xf32> to vector<8x1xf32>
    %108 = arith.addf %105, %107 : vector<8x1xf32>
    %c2_65 = arith.constant 2 : index
    %c0_66 = arith.constant 0 : index
    %c0_67 = arith.constant 0 : index
    %109 = vector.load %arg16[%c2_65, %c0_66, %c0_67] : memref<8x8x1xf32, #tpu.memory_space<vmem>>, vector<1x8x1xf32>
    %110 = vector.shape_cast %109 : vector<1x8x1xf32> to vector<8x1xf32>
    %111 = vector.shape_cast %108 : vector<8x1xf32> to vector<1x8x1xf32>
    tpu.vector_store %arg16[%c2_65, %c0_66, %c0_67], %111 {strides = array<i32>} : memref<8x8x1xf32, #tpu.memory_space<vmem>>, vector<1x8x1xf32>,
    %c0_68 = arith.constant 0 : index
    %c8_69 = arith.constant 8 : index
    %112 = vector.load %arg14[%c0_68, %c8_69] : memref<8x128xf32, #tpu.memory_space<vmem>>, vector<8x4xf32>
    %113 = vector.broadcast %99 : vector<8x1xf32> to vector<8x4xf32>
    %114 = arith.mulf %113, %112 : vector<8x4xf32>
    %115 = arith.truncf %102 : vector<8x8xf32> to vector<8x8xbf16>
    %cst_70 = arith.constant dense<0.000000e+00> : vector<8x4xf32>
    %116 = tpu.matmul %115, %89, %cst_70 {dimension_numbers = #tpu.dot_dimension_numbers<[1], [0], [0], [1], [0, 0, 1, 1], [], []>} : vector<8x8xbf16>, vector<8x4xbf16>, vector<8x4xf32> -> vector<8x4xf32>
    %117 = arith.addf %114, %116 : vector<8x4xf32>
    %c0_71 = arith.constant 0 : index
    %c8_72 = arith.constant 8 : index
    %118 = vector.load %arg14[%c0_71, %c8_72] : memref<8x128xf32, #tpu.memory_space<vmem>>, vector<8x4xf32>
    tpu.vector_store %arg14[%c0_71, %c8_72], %117 {strides = array<i32>} : memref<8x128xf32, #tpu.memory_space<vmem>>, vector<8x4xf32>,
    %c2_73 = arith.constant 2 : index
    %c0_74 = arith.constant 0 : index
    %c0_75 = arith.constant 0 : index
    %119 = vector.load %arg15[%c2_73, %c0_74, %c0_75] : memref<8x8x1xf32, #tpu.memory_space<vmem>>, vector<1x8x1xf32>
    %120 = vector.shape_cast %119 : vector<1x8x1xf32> to vector<8x1xf32>
    %121 = vector.shape_cast %97 : vector<8x1xf32> to vector<1x8x1xf32>
    tpu.vector_store %arg15[%c2_73, %c0_74, %c0_75], %121 {strides = array<i32>} : memref<8x8x1xf32, #tpu.memory_space<vmem>>, vector<1x8x1xf32>,
    %c0_76 = arith.constant 0 : index
    %c12 = arith.constant 12 : index
    %122 = vector.load %arg13[%c0_76, %c12] : memref<8x128xbf16, #tpu.memory_space<vmem>>, vector<8x4xbf16>
    %123 = vector.extract_strided_slice %11 {offsets = [0, 12], sizes = [8, 4], strides = [1, 1]} : vector<8x128xbf16> to vector<8x4xbf16>
    %124 = vector.extract_strided_slice %14 {offsets = [0, 12], sizes = [8, 4], strides = [1, 1]} : vector<8x128xbf16> to vector<8x4xbf16>
    %cst_77 = arith.constant dense<0.000000e+00> : vector<8x8xf32>
    %125 = tpu.matmul %122, %123, %cst_77 {dimension_numbers = #tpu.dot_dimension_numbers<[1], [1], [0], [0], [0, 0, 1, 0], [], []>} : vector<8x4xbf16>, vector<8x4xbf16>, vector<8x8xf32> -> vector<8x8xf32>
    %126 = vector.broadcast %16 : vector<8x1xf32> to vector<8x8xf32>
    %127 = arith.mulf %125, %126 : vector<8x8xf32>
    %c3 = arith.constant 3 : index
    %c0_78 = arith.constant 0 : index
    %c0_79 = arith.constant 0 : index
    %128 = vector.load %arg15[%c3, %c0_78, %c0_79] : memref<8x8x1xf32, #tpu.memory_space<vmem>>, vector<1x8x1xf32>
    %129 = vector.shape_cast %128 : vector<1x8x1xf32> to vector<8x1xf32>
    %cst_80 = arith.constant dense<0xFF800000> : vector<8xf32>
    %130 = vector.multi_reduction <maximumf>, %127, %cst_80 [1] : vector<8x8xf32> to vector<8xf32>
    %131 = vector.shape_cast %130 : vector<8xf32> to vector<8x1xf32>
    %132 = arith.maximumf %129, %131 : vector<8x1xf32>
    %133 = arith.subf %129, %132 : vector<8x1xf32>
    %134 = math.exp %133 : vector<8x1xf32>
    %135 = vector.broadcast %132 : vector<8x1xf32> to vector<8x8xf32>
    %136 = arith.subf %127, %135 : vector<8x8xf32>
    %137 = math.exp %136 : vector<8x8xf32>
    %c3_81 = arith.constant 3 : index
    %c0_82 = arith.constant 0 : index
    %c0_83 = arith.constant 0 : index
    %138 = vector.load %arg16[%c3_81, %c0_82, %c0_83] : memref<8x8x1xf32, #tpu.memory_space<vmem>>, vector<1x8x1xf32>
    %139 = vector.shape_cast %138 : vector<1x8x1xf32> to vector<8x1xf32>
    %140 = arith.mulf %134, %139 : vector<8x1xf32>
    %cst_84 = arith.constant dense<0.000000e+00> : vector<8xf32>
    %141 = vector.multi_reduction <add>, %137, %cst_84 [1] : vector<8x8xf32> to vector<8xf32>
    %142 = vector.shape_cast %141 : vector<8xf32> to vector<8x1xf32>
    %143 = arith.addf %140, %142 : vector<8x1xf32>
    %c3_85 = arith.constant 3 : index
    %c0_86 = arith.constant 0 : index
    %c0_87 = arith.constant 0 : index
    %144 = vector.load %arg16[%c3_85, %c0_86, %c0_87] : memref<8x8x1xf32, #tpu.memory_space<vmem>>, vector<1x8x1xf32>
    %145 = vector.shape_cast %144 : vector<1x8x1xf32> to vector<8x1xf32>
    %146 = vector.shape_cast %143 : vector<8x1xf32> to vector<1x8x1xf32>
    tpu.vector_store %arg16[%c3_85, %c0_86, %c0_87], %146 {strides = array<i32>} : memref<8x8x1xf32, #tpu.memory_space<vmem>>, vector<1x8x1xf32>,
    %c0_88 = arith.constant 0 : index
    %c12_89 = arith.constant 12 : index
    %147 = vector.load %arg14[%c0_88, %c12_89] : memref<8x128xf32, #tpu.memory_space<vmem>>, vector<8x4xf32>
    %148 = vector.broadcast %134 : vector<8x1xf32> to vector<8x4xf32>
    %149 = arith.mulf %148, %147 : vector<8x4xf32>
    %150 = arith.truncf %137 : vector<8x8xf32> to vector<8x8xbf16>
    %cst_90 = arith.constant dense<0.000000e+00> : vector<8x4xf32>
    %151 = tpu.matmul %150, %124, %cst_90 {dimension_numbers = #tpu.dot_dimension_numbers<[1], [0], [0], [1], [0, 0, 1, 1], [], []>} : vector<8x8xbf16>, vector<8x4xbf16>, vector<8x4xf32> -> vector<8x4xf32>
    %152 = arith.addf %149, %151 : vector<8x4xf32>
    %c0_91 = arith.constant 0 : index
    %c12_92 = arith.constant 12 : index
    %153 = vector.load %arg14[%c0_91, %c12_92] : memref<8x128xf32, #tpu.memory_space<vmem>>, vector<8x4xf32>
    tpu.vector_store %arg14[%c0_91, %c12_92], %152 {strides = array<i32>} : memref<8x128xf32, #tpu.memory_space<vmem>>, vector<8x4xf32>,
    %c3_93 = arith.constant 3 : index
    %c0_94 = arith.constant 0 : index
    %c0_95 = arith.constant 0 : index
    %154 = vector.load %arg15[%c3_93, %c0_94, %c0_95] : memref<8x8x1xf32, #tpu.memory_space<vmem>>, vector<1x8x1xf32>
    %155 = vector.shape_cast %154 : vector<1x8x1xf32> to vector<8x1xf32>
    %156 = vector.shape_cast %132 : vector<8x1xf32> to vector<1x8x1xf32>
    tpu.vector_store %arg15[%c3_93, %c0_94, %c0_95], %156 {strides = array<i32>} : memref<8x8x1xf32, #tpu.memory_space<vmem>>, vector<1x8x1xf32>,
    %c0_96 = arith.constant 0 : index
    %c16 = arith.constant 16 : index
    %157 = vector.load %arg13[%c0_96, %c16] : memref<8x128xbf16, #tpu.memory_space<vmem>>, vector<8x4xbf16>
    %158 = vector.extract_strided_slice %11 {offsets = [0, 16], sizes = [8, 4], strides = [1, 1]} : vector<8x128xbf16> to vector<8x4xbf16>
    %159 = vector.extract_strided_slice %14 {offsets = [0, 16], sizes = [8, 4], strides = [1, 1]} : vector<8x128xbf16> to vector<8x4xbf16>
    %cst_97 = arith.constant dense<0.000000e+00> : vector<8x8xf32>
    %160 = tpu.matmul %157, %158, %cst_97 {dimension_numbers = #tpu.dot_dimension_numbers<[1], [1], [0], [0], [0, 0, 1, 0], [], []>} : vector<8x4xbf16>, vector<8x4xbf16>, vector<8x8xf32> -> vector<8x8xf32>
    %161 = vector.broadcast %16 : vector<8x1xf32> to vector<8x8xf32>
    %162 = arith.mulf %160, %161 : vector<8x8xf32>
    %c4_98 = arith.constant 4 : index
    %c0_99 = arith.constant 0 : index
    %c0_100 = arith.constant 0 : index
    %163 = vector.load %arg15[%c4_98, %c0_99, %c0_100] : memref<8x8x1xf32, #tpu.memory_space<vmem>>, vector<1x8x1xf32>
    %164 = vector.shape_cast %163 : vector<1x8x1xf32> to vector<8x1xf32>
    %cst_101 = arith.constant dense<0xFF800000> : vector<8xf32>
    %165 = vector.multi_reduction <maximumf>, %162, %cst_101 [1] : vector<8x8xf32> to vector<8xf32>
    %166 = vector.shape_cast %165 : vector<8xf32> to vector<8x1xf32>
    %167 = arith.maximumf %164, %166 : vector<8x1xf32>
    %168 = arith.subf %164, %167 : vector<8x1xf32>
    %169 = math.exp %168 : vector<8x1xf32>
    %170 = vector.broadcast %167 : vector<8x1xf32> to vector<8x8xf32>
    %171 = arith.subf %162, %170 : vector<8x8xf32>
    %172 = math.exp %171 : vector<8x8xf32>
    %c4_102 = arith.constant 4 : index
    %c0_103 = arith.constant 0 : index
    %c0_104 = arith.constant 0 : index
    %173 = vector.load %arg16[%c4_102, %c0_103, %c0_104] : memref<8x8x1xf32, #tpu.memory_space<vmem>>, vector<1x8x1xf32>
    %174 = vector.shape_cast %173 : vector<1x8x1xf32> to vector<8x1xf32>
    %175 = arith.mulf %169, %174 : vector<8x1xf32>
    %cst_105 = arith.constant dense<0.000000e+00> : vector<8xf32>
    %176 = vector.multi_reduction <add>, %172, %cst_105 [1] : vector<8x8xf32> to vector<8xf32>
    %177 = vector.shape_cast %176 : vector<8xf32> to vector<8x1xf32>
    %178 = arith.addf %175, %177 : vector<8x1xf32>
    %c4_106 = arith.constant 4 : index
    %c0_107 = arith.constant 0 : index
    %c0_108 = arith.constant 0 : index
    %179 = vector.load %arg16[%c4_106, %c0_107, %c0_108] : memref<8x8x1xf32, #tpu.memory_space<vmem>>, vector<1x8x1xf32>
    %180 = vector.shape_cast %179 : vector<1x8x1xf32> to vector<8x1xf32>
    %181 = vector.shape_cast %178 : vector<8x1xf32> to vector<1x8x1xf32>
    tpu.vector_store %arg16[%c4_106, %c0_107, %c0_108], %181 {strides = array<i32>} : memref<8x8x1xf32, #tpu.memory_space<vmem>>, vector<1x8x1xf32>,
    %c0_109 = arith.constant 0 : index
    %c16_110 = arith.constant 16 : index
    %182 = vector.load %arg14[%c0_109, %c16_110] : memref<8x128xf32, #tpu.memory_space<vmem>>, vector<8x4xf32>
    %183 = vector.broadcast %169 : vector<8x1xf32> to vector<8x4xf32>
    %184 = arith.mulf %183, %182 : vector<8x4xf32>
    %185 = arith.truncf %172 : vector<8x8xf32> to vector<8x8xbf16>
    %cst_111 = arith.constant dense<0.000000e+00> : vector<8x4xf32>
    %186 = tpu.matmul %185, %159, %cst_111 {dimension_numbers = #tpu.dot_dimension_numbers<[1], [0], [0], [1], [0, 0, 1, 1], [], []>} : vector<8x8xbf16>, vector<8x4xbf16>, vector<8x4xf32> -> vector<8x4xf32>
    %187 = arith.addf %184, %186 : vector<8x4xf32>
    %c0_112 = arith.constant 0 : index
    %c16_113 = arith.constant 16 : index
    %188 = vector.load %arg14[%c0_112, %c16_113] : memref<8x128xf32, #tpu.memory_space<vmem>>, vector<8x4xf32>
    tpu.vector_store %arg14[%c0_112, %c16_113], %187 {strides = array<i32>} : memref<8x128xf32, #tpu.memory_space<vmem>>, vector<8x4xf32>,
    %c4_114 = arith.constant 4 : index
    %c0_115 = arith.constant 0 : index
    %c0_116 = arith.constant 0 : index
    %189 = vector.load %arg15[%c4_114, %c0_115, %c0_116] : memref<8x8x1xf32, #tpu.memory_space<vmem>>, vector<1x8x1xf32>
    %190 = vector.shape_cast %189 : vector<1x8x1xf32> to vector<8x1xf32>
    %191 = vector.shape_cast %167 : vector<8x1xf32> to vector<1x8x1xf32>
    tpu.vector_store %arg15[%c4_114, %c0_115, %c0_116], %191 {strides = array<i32>} : memref<8x8x1xf32, #tpu.memory_space<vmem>>, vector<1x8x1xf32>,
    %c0_117 = arith.constant 0 : index
    %c20 = arith.constant 20 : index
    %192 = vector.load %arg13[%c0_117, %c20] : memref<8x128xbf16, #tpu.memory_space<vmem>>, vector<8x4xbf16>
    %193 = vector.extract_strided_slice %11 {offsets = [0, 20], sizes = [8, 4], strides = [1, 1]} : vector<8x128xbf16> to vector<8x4xbf16>
    %194 = vector.extract_strided_slice %14 {offsets = [0, 20], sizes = [8, 4], strides = [1, 1]} : vector<8x128xbf16> to vector<8x4xbf16>
    %cst_118 = arith.constant dense<0.000000e+00> : vector<8x8xf32>
    %195 = tpu.matmul %192, %193, %cst_118 {dimension_numbers = #tpu.dot_dimension_numbers<[1], [1], [0], [0], [0, 0, 1, 0], [], []>} : vector<8x4xbf16>, vector<8x4xbf16>, vector<8x8xf32> -> vector<8x8xf32>
    %196 = vector.broadcast %16 : vector<8x1xf32> to vector<8x8xf32>
    %197 = arith.mulf %195, %196 : vector<8x8xf32>
    %c5 = arith.constant 5 : index
    %c0_119 = arith.constant 0 : index
    %c0_120 = arith.constant 0 : index
    %198 = vector.load %arg15[%c5, %c0_119, %c0_120] : memref<8x8x1xf32, #tpu.memory_space<vmem>>, vector<1x8x1xf32>
    %199 = vector.shape_cast %198 : vector<1x8x1xf32> to vector<8x1xf32>
    %cst_121 = arith.constant dense<0xFF800000> : vector<8xf32>
    %200 = vector.multi_reduction <maximumf>, %197, %cst_121 [1] : vector<8x8xf32> to vector<8xf32>
    %201 = vector.shape_cast %200 : vector<8xf32> to vector<8x1xf32>
    %202 = arith.maximumf %199, %201 : vector<8x1xf32>
    %203 = arith.subf %199, %202 : vector<8x1xf32>
    %204 = math.exp %203 : vector<8x1xf32>
    %205 = vector.broadcast %202 : vector<8x1xf32> to vector<8x8xf32>
    %206 = arith.subf %197, %205 : vector<8x8xf32>
    %207 = math.exp %206 : vector<8x8xf32>
    %c5_122 = arith.constant 5 : index
    %c0_123 = arith.constant 0 : index
    %c0_124 = arith.constant 0 : index
    %208 = vector.load %arg16[%c5_122, %c0_123, %c0_124] : memref<8x8x1xf32, #tpu.memory_space<vmem>>, vector<1x8x1xf32>
    %209 = vector.shape_cast %208 : vector<1x8x1xf32> to vector<8x1xf32>
    %210 = arith.mulf %204, %209 : vector<8x1xf32>
    %cst_125 = arith.constant dense<0.000000e+00> : vector<8xf32>
    %211 = vector.multi_reduction <add>, %207, %cst_125 [1] : vector<8x8xf32> to vector<8xf32>
    %212 = vector.shape_cast %211 : vector<8xf32> to vector<8x1xf32>
    %213 = arith.addf %210, %212 : vector<8x1xf32>
    %c5_126 = arith.constant 5 : index
    %c0_127 = arith.constant 0 : index
    %c0_128 = arith.constant 0 : index
    %214 = vector.load %arg16[%c5_126, %c0_127, %c0_128] : memref<8x8x1xf32, #tpu.memory_space<vmem>>, vector<1x8x1xf32>
    %215 = vector.shape_cast %214 : vector<1x8x1xf32> to vector<8x1xf32>
    %216 = vector.shape_cast %213 : vector<8x1xf32> to vector<1x8x1xf32>
    tpu.vector_store %arg16[%c5_126, %c0_127, %c0_128], %216 {strides = array<i32>} : memref<8x8x1xf32, #tpu.memory_space<vmem>>, vector<1x8x1xf32>,
    %c0_129 = arith.constant 0 : index
    %c20_130 = arith.constant 20 : index
    %217 = vector.load %arg14[%c0_129, %c20_130] : memref<8x128xf32, #tpu.memory_space<vmem>>, vector<8x4xf32>
    %218 = vector.broadcast %204 : vector<8x1xf32> to vector<8x4xf32>
    %219 = arith.mulf %218, %217 : vector<8x4xf32>
    %220 = arith.truncf %207 : vector<8x8xf32> to vector<8x8xbf16>
    %cst_131 = arith.constant dense<0.000000e+00> : vector<8x4xf32>
    %221 = tpu.matmul %220, %194, %cst_131 {dimension_numbers = #tpu.dot_dimension_numbers<[1], [0], [0], [1], [0, 0, 1, 1], [], []>} : vector<8x8xbf16>, vector<8x4xbf16>, vector<8x4xf32> -> vector<8x4xf32>
    %222 = arith.addf %219, %221 : vector<8x4xf32>
    %c0_132 = arith.constant 0 : index
    %c20_133 = arith.constant 20 : index
    %223 = vector.load %arg14[%c0_132, %c20_133] : memref<8x128xf32, #tpu.memory_space<vmem>>, vector<8x4xf32>
    tpu.vector_store %arg14[%c0_132, %c20_133], %222 {strides = array<i32>} : memref<8x128xf32, #tpu.memory_space<vmem>>, vector<8x4xf32>,
    %c5_134 = arith.constant 5 : index
    %c0_135 = arith.constant 0 : index
    %c0_136 = arith.constant 0 : index
    %224 = vector.load %arg15[%c5_134, %c0_135, %c0_136] : memref<8x8x1xf32, #tpu.memory_space<vmem>>, vector<1x8x1xf32>
    %225 = vector.shape_cast %224 : vector<1x8x1xf32> to vector<8x1xf32>
    %226 = vector.shape_cast %202 : vector<8x1xf32> to vector<1x8x1xf32>
    tpu.vector_store %arg15[%c5_134, %c0_135, %c0_136], %226 {strides = array<i32>} : memref<8x8x1xf32, #tpu.memory_space<vmem>>, vector<1x8x1xf32>,
    %c0_137 = arith.constant 0 : index
    %c24 = arith.constant 24 : index
    %227 = vector.load %arg13[%c0_137, %c24] : memref<8x128xbf16, #tpu.memory_space<vmem>>, vector<8x4xbf16>
    %228 = vector.extract_strided_slice %11 {offsets = [0, 24], sizes = [8, 4], strides = [1, 1]} : vector<8x128xbf16> to vector<8x4xbf16>
    %229 = vector.extract_strided_slice %14 {offsets = [0, 24], sizes = [8, 4], strides = [1, 1]} : vector<8x128xbf16> to vector<8x4xbf16>
    %cst_138 = arith.constant dense<0.000000e+00> : vector<8x8xf32>
    %230 = tpu.matmul %227, %228, %cst_138 {dimension_numbers = #tpu.dot_dimension_numbers<[1], [1], [0], [0], [0, 0, 1, 0], [], []>} : vector<8x4xbf16>, vector<8x4xbf16>, vector<8x8xf32> -> vector<8x8xf32>
    %231 = vector.broadcast %16 : vector<8x1xf32> to vector<8x8xf32>
    %232 = arith.mulf %230, %231 : vector<8x8xf32>
    %c6 = arith.constant 6 : index
    %c0_139 = arith.constant 0 : index
    %c0_140 = arith.constant 0 : index
    %233 = vector.load %arg15[%c6, %c0_139, %c0_140] : memref<8x8x1xf32, #tpu.memory_space<vmem>>, vector<1x8x1xf32>
    %234 = vector.shape_cast %233 : vector<1x8x1xf32> to vector<8x1xf32>
    %cst_141 = arith.constant dense<0xFF800000> : vector<8xf32>
    %235 = vector.multi_reduction <maximumf>, %232, %cst_141 [1] : vector<8x8xf32> to vector<8xf32>
    %236 = vector.shape_cast %235 : vector<8xf32> to vector<8x1xf32>
    %237 = arith.maximumf %234, %236 : vector<8x1xf32>
    %238 = arith.subf %234, %237 : vector<8x1xf32>
    %239 = math.exp %238 : vector<8x1xf32>
    %240 = vector.broadcast %237 : vector<8x1xf32> to vector<8x8xf32>
    %241 = arith.subf %232, %240 : vector<8x8xf32>
    %242 = math.exp %241 : vector<8x8xf32>
    %c6_142 = arith.constant 6 : index
    %c0_143 = arith.constant 0 : index
    %c0_144 = arith.constant 0 : index
    %243 = vector.load %arg16[%c6_142, %c0_143, %c0_144] : memref<8x8x1xf32, #tpu.memory_space<vmem>>, vector<1x8x1xf32>
    %244 = vector.shape_cast %243 : vector<1x8x1xf32> to vector<8x1xf32>
    %245 = arith.mulf %239, %244 : vector<8x1xf32>
    %cst_145 = arith.constant dense<0.000000e+00> : vector<8xf32>
    %246 = vector.multi_reduction <add>, %242, %cst_145 [1] : vector<8x8xf32> to vector<8xf32>
    %247 = vector.shape_cast %246 : vector<8xf32> to vector<8x1xf32>
    %248 = arith.addf %245, %247 : vector<8x1xf32>
    %c6_146 = arith.constant 6 : index
    %c0_147 = arith.constant 0 : index
    %c0_148 = arith.constant 0 : index
    %249 = vector.load %arg16[%c6_146, %c0_147, %c0_148] : memref<8x8x1xf32, #tpu.memory_space<vmem>>, vector<1x8x1xf32>
    %250 = vector.shape_cast %249 : vector<1x8x1xf32> to vector<8x1xf32>
    %251 = vector.shape_cast %248 : vector<8x1xf32> to vector<1x8x1xf32>
    tpu.vector_store %arg16[%c6_146, %c0_147, %c0_148], %251 {strides = array<i32>} : memref<8x8x1xf32, #tpu.memory_space<vmem>>, vector<1x8x1xf32>,
    %c0_149 = arith.constant 0 : index
    %c24_150 = arith.constant 24 : index
    %252 = vector.load %arg14[%c0_149, %c24_150] : memref<8x128xf32, #tpu.memory_space<vmem>>, vector<8x4xf32>
    %253 = vector.broadcast %239 : vector<8x1xf32> to vector<8x4xf32>
    %254 = arith.mulf %253, %252 : vector<8x4xf32>
    %255 = arith.truncf %242 : vector<8x8xf32> to vector<8x8xbf16>
    %cst_151 = arith.constant dense<0.000000e+00> : vector<8x4xf32>
    %256 = tpu.matmul %255, %229, %cst_151 {dimension_numbers = #tpu.dot_dimension_numbers<[1], [0], [0], [1], [0, 0, 1, 1], [], []>} : vector<8x8xbf16>, vector<8x4xbf16>, vector<8x4xf32> -> vector<8x4xf32>
    %257 = arith.addf %254, %256 : vector<8x4xf32>
    %c0_152 = arith.constant 0 : index
    %c24_153 = arith.constant 24 : index
    %258 = vector.load %arg14[%c0_152, %c24_153] : memref<8x128xf32, #tpu.memory_space<vmem>>, vector<8x4xf32>
    tpu.vector_store %arg14[%c0_152, %c24_153], %257 {strides = array<i32>} : memref<8x128xf32, #tpu.memory_space<vmem>>, vector<8x4xf32>,
    %c6_154 = arith.constant 6 : index
    %c0_155 = arith.constant 0 : index
    %c0_156 = arith.constant 0 : index
    %259 = vector.load %arg15[%c6_154, %c0_155, %c0_156] : memref<8x8x1xf32, #tpu.memory_space<vmem>>, vector<1x8x1xf32>
    %260 = vector.shape_cast %259 : vector<1x8x1xf32> to vector<8x1xf32>
    %261 = vector.shape_cast %237 : vector<8x1xf32> to vector<1x8x1xf32>
    tpu.vector_store %arg15[%c6_154, %c0_155, %c0_156], %261 {strides = array<i32>} : memref<8x8x1xf32, #tpu.memory_space<vmem>>, vector<1x8x1xf32>,
    %c0_157 = arith.constant 0 : index
    %c28 = arith.constant 28 : index
    %262 = vector.load %arg13[%c0_157, %c28] : memref<8x128xbf16, #tpu.memory_space<vmem>>, vector<8x4xbf16>
    %263 = vector.extract_strided_slice %11 {offsets = [0, 28], sizes = [8, 4], strides = [1, 1]} : vector<8x128xbf16> to vector<8x4xbf16>
    %264 = vector.extract_strided_slice %14 {offsets = [0, 28], sizes = [8, 4], strides = [1, 1]} : vector<8x128xbf16> to vector<8x4xbf16>
    %cst_158 = arith.constant dense<0.000000e+00> : vector<8x8xf32>
    %265 = tpu.matmul %262, %263, %cst_158 {dimension_numbers = #tpu.dot_dimension_numbers<[1], [1], [0], [0], [0, 0, 1, 0], [], []>} : vector<8x4xbf16>, vector<8x4xbf16>, vector<8x8xf32> -> vector<8x8xf32>
    %266 = vector.broadcast %16 : vector<8x1xf32> to vector<8x8xf32>
    %267 = arith.mulf %265, %266 : vector<8x8xf32>
    %c7 = arith.constant 7 : index
    %c0_159 = arith.constant 0 : index
    %c0_160 = arith.constant 0 : index
    %268 = vector.load %arg15[%c7, %c0_159, %c0_160] : memref<8x8x1xf32, #tpu.memory_space<vmem>>, vector<1x8x1xf32>
    %269 = vector.shape_cast %268 : vector<1x8x1xf32> to vector<8x1xf32>
    %cst_161 = arith.constant dense<0xFF800000> : vector<8xf32>
    %270 = vector.multi_reduction <maximumf>, %267, %cst_161 [1] : vector<8x8xf32> to vector<8xf32>
    %271 = vector.shape_cast %270 : vector<8xf32> to vector<8x1xf32>
    %272 = arith.maximumf %269, %271 : vector<8x1xf32>
    %273 = arith.subf %269, %272 : vector<8x1xf32>
    %274 = math.exp %273 : vector<8x1xf32>
    %275 = vector.broadcast %272 : vector<8x1xf32> to vector<8x8xf32>
    %276 = arith.subf %267, %275 : vector<8x8xf32>
    %277 = math.exp %276 : vector<8x8xf32>
    %c7_162 = arith.constant 7 : index
    %c0_163 = arith.constant 0 : index
    %c0_164 = arith.constant 0 : index
    %278 = vector.load %arg16[%c7_162, %c0_163, %c0_164] : memref<8x8x1xf32, #tpu.memory_space<vmem>>, vector<1x8x1xf32>
    %279 = vector.shape_cast %278 : vector<1x8x1xf32> to vector<8x1xf32>
    %280 = arith.mulf %274, %279 : vector<8x1xf32>
    %cst_165 = arith.constant dense<0.000000e+00> : vector<8xf32>
    %281 = vector.multi_reduction <add>, %277, %cst_165 [1] : vector<8x8xf32> to vector<8xf32>
    %282 = vector.shape_cast %281 : vector<8xf32> to vector<8x1xf32>
    %283 = arith.addf %280, %282 : vector<8x1xf32>
    %c7_166 = arith.constant 7 : index
    %c0_167 = arith.constant 0 : index
    %c0_168 = arith.constant 0 : index
    %284 = vector.load %arg16[%c7_166, %c0_167, %c0_168] : memref<8x8x1xf32, #tpu.memory_space<vmem>>, vector<1x8x1xf32>
    %285 = vector.shape_cast %284 : vector<1x8x1xf32> to vector<8x1xf32>
    %286 = vector.shape_cast %283 : vector<8x1xf32> to vector<1x8x1xf32>
    tpu.vector_store %arg16[%c7_166, %c0_167, %c0_168], %286 {strides = array<i32>} : memref<8x8x1xf32, #tpu.memory_space<vmem>>, vector<1x8x1xf32>,
    %c0_169 = arith.constant 0 : index
    %c28_170 = arith.constant 28 : index
    %287 = vector.load %arg14[%c0_169, %c28_170] : memref<8x128xf32, #tpu.memory_space<vmem>>, vector<8x4xf32>
    %288 = vector.broadcast %274 : vector<8x1xf32> to vector<8x4xf32>
    %289 = arith.mulf %288, %287 : vector<8x4xf32>
    %290 = arith.truncf %277 : vector<8x8xf32> to vector<8x8xbf16>
    %cst_171 = arith.constant dense<0.000000e+00> : vector<8x4xf32>
    %291 = tpu.matmul %290, %264, %cst_171 {dimension_numbers = #tpu.dot_dimension_numbers<[1], [0], [0], [1], [0, 0, 1, 1], [], []>} : vector<8x8xbf16>, vector<8x4xbf16>, vector<8x4xf32> -> vector<8x4xf32>
    %292 = arith.addf %289, %291 : vector<8x4xf32>
    %c0_172 = arith.constant 0 : index
    %c28_173 = arith.constant 28 : index
    %293 = vector.load %arg14[%c0_172, %c28_173] : memref<8x128xf32, #tpu.memory_space<vmem>>, vector<8x4xf32>
    tpu.vector_store %arg14[%c0_172, %c28_173], %292 {strides = array<i32>} : memref<8x128xf32, #tpu.memory_space<vmem>>, vector<8x4xf32>,
    %c7_174 = arith.constant 7 : index
    %c0_175 = arith.constant 0 : index
    %c0_176 = arith.constant 0 : index
    %294 = vector.load %arg15[%c7_174, %c0_175, %c0_176] : memref<8x8x1xf32, #tpu.memory_space<vmem>>, vector<1x8x1xf32>
    %295 = vector.shape_cast %294 : vector<1x8x1xf32> to vector<8x1xf32>
    %296 = vector.shape_cast %272 : vector<8x1xf32> to vector<1x8x1xf32>
    tpu.vector_store %arg15[%c7_174, %c0_175, %c0_176], %296 {strides = array<i32>} : memref<8x8x1xf32, #tpu.memory_space<vmem>>, vector<1x8x1xf32>,
    %c1_i32 = arith.constant 1 : i32
    %297 = arith.cmpi eq, %arg2, %c1_i32 : i32
    %298 = arith.extui %297 : i1 to i32
    %c0_i32_177 = arith.constant 0 : i32
    %299 = arith.cmpi ne, %298, %c0_i32_177 : i32
    scf.if %299 {
      %c0_178 = arith.constant 0 : index
      %c0_179 = arith.constant 0 : index
      %c0_180 = arith.constant 0 : index
      %300 = vector.load %arg16[%c0_178, %c0_179, %c0_180] : memref<8x8x1xf32, #tpu.memory_space<vmem>>, vector<1x8x1xf32>
      %301 = vector.shape_cast %300 : vector<1x8x1xf32> to vector<8x1xf32>
      %302 = tpu.reciprocal %301 {approx = true} : vector<8x1xf32> -> vector<8x1xf32>
      %c0_181 = arith.constant 0 : index
      %c0_182 = arith.constant 0 : index
      %303 = vector.load %arg14[%c0_181, %c0_182] : memref<8x128xf32, #tpu.memory_space<vmem>>, vector<8x4xf32>
      %304 = vector.broadcast %302 : vector<8x1xf32> to vector<8x4xf32>
      %305 = arith.mulf %303, %304 : vector<8x4xf32>
      %c0_183 = arith.constant 0 : index
      %c0_184 = arith.constant 0 : index
      %306 = vector.load %arg14[%c0_183, %c0_184] : memref<8x128xf32, #tpu.memory_space<vmem>>, vector<8x4xf32>
      tpu.vector_store %arg14[%c0_183, %c0_184], %305 {strides = array<i32>} : memref<8x128xf32, #tpu.memory_space<vmem>>, vector<8x4xf32>,
      %c1_185 = arith.constant 1 : index
      %c0_186 = arith.constant 0 : index
      %c0_187 = arith.constant 0 : index
      %307 = vector.load %arg16[%c1_185, %c0_186, %c0_187] : memref<8x8x1xf32, #tpu.memory_space<vmem>>, vector<1x8x1xf32>
      %308 = vector.shape_cast %307 : vector<1x8x1xf32> to vector<8x1xf32>
      %309 = tpu.reciprocal %308 {approx = true} : vector<8x1xf32> -> vector<8x1xf32>
      %c0_188 = arith.constant 0 : index
      %c4_189 = arith.constant 4 : index
      %310 = vector.load %arg14[%c0_188, %c4_189] : memref<8x128xf32, #tpu.memory_space<vmem>>, vector<8x4xf32>
      %311 = vector.broadcast %309 : vector<8x1xf32> to vector<8x4xf32>
      %312 = arith.mulf %310, %311 : vector<8x4xf32>
      %c0_190 = arith.constant 0 : index
      %c4_191 = arith.constant 4 : index
      %313 = vector.load %arg14[%c0_190, %c4_191] : memref<8x128xf32, #tpu.memory_space<vmem>>, vector<8x4xf32>
      tpu.vector_store %arg14[%c0_190, %c4_191], %312 {strides = array<i32>} : memref<8x128xf32, #tpu.memory_space<vmem>>, vector<8x4xf32>,
      %c2_192 = arith.constant 2 : index
      %c0_193 = arith.constant 0 : index
      %c0_194 = arith.constant 0 : index
      %314 = vector.load %arg16[%c2_192, %c0_193, %c0_194] : memref<8x8x1xf32, #tpu.memory_space<vmem>>, vector<1x8x1xf32>
      %315 = vector.shape_cast %314 : vector<1x8x1xf32> to vector<8x1xf32>
      %316 = tpu.reciprocal %315 {approx = true} : vector<8x1xf32> -> vector<8x1xf32>
      %c0_195 = arith.constant 0 : index
      %c8_196 = arith.constant 8 : index
      %317 = vector.load %arg14[%c0_195, %c8_196] : memref<8x128xf32, #tpu.memory_space<vmem>>, vector<8x4xf32>
      %318 = vector.broadcast %316 : vector<8x1xf32> to vector<8x4xf32>
      %319 = arith.mulf %317, %318 : vector<8x4xf32>
      %c0_197 = arith.constant 0 : index
      %c8_198 = arith.constant 8 : index
      %320 = vector.load %arg14[%c0_197, %c8_198] : memref<8x128xf32, #tpu.memory_space<vmem>>, vector<8x4xf32>
      tpu.vector_store %arg14[%c0_197, %c8_198], %319 {strides = array<i32>} : memref<8x128xf32, #tpu.memory_space<vmem>>, vector<8x4xf32>,
      %c3_199 = arith.constant 3 : index
      %c0_200 = arith.constant 0 : index
      %c0_201 = arith.constant 0 : index
      %321 = vector.load %arg16[%c3_199, %c0_200, %c0_201] : memref<8x8x1xf32, #tpu.memory_space<vmem>>, vector<1x8x1xf32>
      %322 = vector.shape_cast %321 : vector<1x8x1xf32> to vector<8x1xf32>
      %323 = tpu.reciprocal %322 {approx = true} : vector<8x1xf32> -> vector<8x1xf32>
      %c0_202 = arith.constant 0 : index
      %c12_203 = arith.constant 12 : index
      %324 = vector.load %arg14[%c0_202, %c12_203] : memref<8x128xf32, #tpu.memory_space<vmem>>, vector<8x4xf32>
      %325 = vector.broadcast %323 : vector<8x1xf32> to vector<8x4xf32>
      %326 = arith.mulf %324, %325 : vector<8x4xf32>
      %c0_204 = arith.constant 0 : index
      %c12_205 = arith.constant 12 : index
      %327 = vector.load %arg14[%c0_204, %c12_205] : memref<8x128xf32, #tpu.memory_space<vmem>>, vector<8x4xf32>
      tpu.vector_store %arg14[%c0_204, %c12_205], %326 {strides = array<i32>} : memref<8x128xf32, #tpu.memory_space<vmem>>, vector<8x4xf32>,
      %c4_206 = arith.constant 4 : index
      %c0_207 = arith.constant 0 : index
      %c0_208 = arith.constant 0 : index
      %328 = vector.load %arg16[%c4_206, %c0_207, %c0_208] : memref<8x8x1xf32, #tpu.memory_space<vmem>>, vector<1x8x1xf32>
      %329 = vector.shape_cast %328 : vector<1x8x1xf32> to vector<8x1xf32>
      %330 = tpu.reciprocal %329 {approx = true} : vector<8x1xf32> -> vector<8x1xf32>
      %c0_209 = arith.constant 0 : index
      %c16_210 = arith.constant 16 : index
      %331 = vector.load %arg14[%c0_209, %c16_210] : memref<8x128xf32, #tpu.memory_space<vmem>>, vector<8x4xf32>
      %332 = vector.broadcast %330 : vector<8x1xf32> to vector<8x4xf32>
      %333 = arith.mulf %331, %332 : vector<8x4xf32>
      %c0_211 = arith.constant 0 : index
      %c16_212 = arith.constant 16 : index
      %334 = vector.load %arg14[%c0_211, %c16_212] : memref<8x128xf32, #tpu.memory_space<vmem>>, vector<8x4xf32>
      tpu.vector_store %arg14[%c0_211, %c16_212], %333 {strides = array<i32>} : memref<8x128xf32, #tpu.memory_space<vmem>>, vector<8x4xf32>,
      %c5_213 = arith.constant 5 : index
      %c0_214 = arith.constant 0 : index
      %c0_215 = arith.constant 0 : index
      %335 = vector.load %arg16[%c5_213, %c0_214, %c0_215] : memref<8x8x1xf32, #tpu.memory_space<vmem>>, vector<1x8x1xf32>
      %336 = vector.shape_cast %335 : vector<1x8x1xf32> to vector<8x1xf32>
      %337 = tpu.reciprocal %336 {approx = true} : vector<8x1xf32> -> vector<8x1xf32>
      %c0_216 = arith.constant 0 : index
      %c20_217 = arith.constant 20 : index
      %338 = vector.load %arg14[%c0_216, %c20_217] : memref<8x128xf32, #tpu.memory_space<vmem>>, vector<8x4xf32>
      %339 = vector.broadcast %337 : vector<8x1xf32> to vector<8x4xf32>
      %340 = arith.mulf %338, %339 : vector<8x4xf32>
      %c0_218 = arith.constant 0 : index
      %c20_219 = arith.constant 20 : index
      %341 = vector.load %arg14[%c0_218, %c20_219] : memref<8x128xf32, #tpu.memory_space<vmem>>, vector<8x4xf32>
      tpu.vector_store %arg14[%c0_218, %c20_219], %340 {strides = array<i32>} : memref<8x128xf32, #tpu.memory_space<vmem>>, vector<8x4xf32>,
      %c6_220 = arith.constant 6 : index
      %c0_221 = arith.constant 0 : index
      %c0_222 = arith.constant 0 : index
      %342 = vector.load %arg16[%c6_220, %c0_221, %c0_222] : memref<8x8x1xf32, #tpu.memory_space<vmem>>, vector<1x8x1xf32>
      %343 = vector.shape_cast %342 : vector<1x8x1xf32> to vector<8x1xf32>
      %344 = tpu.reciprocal %343 {approx = true} : vector<8x1xf32> -> vector<8x1xf32>
      %c0_223 = arith.constant 0 : index
      %c24_224 = arith.constant 24 : index
      %345 = vector.load %arg14[%c0_223, %c24_224] : memref<8x128xf32, #tpu.memory_space<vmem>>, vector<8x4xf32>
      %346 = vector.broadcast %344 : vector<8x1xf32> to vector<8x4xf32>
      %347 = arith.mulf %345, %346 : vector<8x4xf32>
      %c0_225 = arith.constant 0 : index
      %c24_226 = arith.constant 24 : index
      %348 = vector.load %arg14[%c0_225, %c24_226] : memref<8x128xf32, #tpu.memory_space<vmem>>, vector<8x4xf32>
      tpu.vector_store %arg14[%c0_225, %c24_226], %347 {strides = array<i32>} : memref<8x128xf32, #tpu.memory_space<vmem>>, vector<8x4xf32>,
      %c7_227 = arith.constant 7 : index
      %c0_228 = arith.constant 0 : index
      %c0_229 = arith.constant 0 : index
      %349 = vector.load %arg16[%c7_227, %c0_228, %c0_229] : memref<8x8x1xf32, #tpu.memory_space<vmem>>, vector<1x8x1xf32>
      %350 = vector.shape_cast %349 : vector<1x8x1xf32> to vector<8x1xf32>
      %351 = tpu.reciprocal %350 {approx = true} : vector<8x1xf32> -> vector<8x1xf32>
      %c0_230 = arith.constant 0 : index
      %c28_231 = arith.constant 28 : index
      %352 = vector.load %arg14[%c0_230, %c28_231] : memref<8x128xf32, #tpu.memory_space<vmem>>, vector<8x4xf32>
      %353 = vector.broadcast %351 : vector<8x1xf32> to vector<8x4xf32>
      %354 = arith.mulf %352, %353 : vector<8x4xf32>
      %c0_232 = arith.constant 0 : index
      %c28_233 = arith.constant 28 : index
      %355 = vector.load %arg14[%c0_232, %c28_233] : memref<8x128xf32, #tpu.memory_space<vmem>>, vector<8x4xf32>
      tpu.vector_store %arg14[%c0_232, %c28_233], %354 {strides = array<i32>} : memref<8x128xf32, #tpu.memory_space<vmem>>, vector<8x4xf32>,
      %c0_234 = arith.constant 0 : index
      %c0_235 = arith.constant 0 : index
      %356 = vector.load %arg14[%c0_234, %c0_235] : memref<8x128xf32, #tpu.memory_space<vmem>>, vector<8x128xf32>
      %357 = arith.truncf %356 : vector<8x128xf32> to vector<8x128xbf16>
      %c0_236 = arith.constant 0 : index
      %c0_237 = arith.constant 0 : index
      %358 = vector.load %arg10[%c0_236, %c0_237] : memref<128x128xbf16, #tpu.memory_space<vmem>>, vector<128x128xbf16>
      %cst_238 = arith.constant dense<0.000000e+00> : vector<8x128xf32>
      %359 = tpu.matmul %357, %358, %cst_238 {dimension_numbers = #tpu.dot_dimension_numbers<[1], [0], [0], [1], [0, 0, 1, 1], [], []>} : vector<8x128xbf16>, vector<128x128xbf16>, vector<8x128xf32> -> vector<8x128xf32>
      %c0_239 = arith.constant 0 : index
      %c0_240 = arith.constant 0 : index
      %360 = vector.load %arg11[%c0_239, %c0_240] : memref<1x128xf32, #tpu.memory_space<vmem>>, vector<1x128xf32>
      %361 = vector.broadcast %360 : vector<1x128xf32> to vector<8x128xf32>
      %362 = arith.addf %359, %361 : vector<8x128xf32>
      %363 = vector.shape_cast %362 : vector<8x128xf32> to vector<1x8x128xf32>
      %c0_241 = arith.constant 0 : index
      %c0_242 = arith.constant 0 : index
      %c0_243 = arith.constant 0 : index
      %364 = vector.load %arg12[%c0_241, %c0_242, %c0_243] : memref<1x8x128xf32, #tpu.memory_space<vmem>>, vector<1x8x128xf32>
      tpu.vector_store %arg12[%c0_241, %c0_242, %c0_243], %363 {strides = array<i32>} : memref<1x8x128xf32, #tpu.memory_space<vmem>>, vector<1x8x128xf32>,
    } else {
    }
    return
  }
  func.func @transform_0(%arg0: i32, %arg1: i32, %arg2: i32) -> (i32, i32, i32) {
    %c0_i32 = arith.constant 0 : i32
    %c0_i32_0 = arith.constant 0 : i32
    return %arg0, %arg1, %c0_i32 : i32, i32, i32
  }
  func.func @transform_1(%arg0: i32, %arg1: i32, %arg2: i32) -> (i32, i32, i32) {
    %c0_i32 = arith.constant 0 : i32
    %c0_i32_0 = arith.constant 0 : i32
    return %arg0, %arg2, %c0_i32 : i32, i32, i32
  }
  func.func @transform_2(%arg0: i32, %arg1: i32, %arg2: i32) -> (i32, i32, i32) {
    %c0_i32 = arith.constant 0 : i32
    %c0_i32_0 = arith.constant 0 : i32
    return %arg0, %arg2, %c0_i32 : i32, i32, i32
  }
  func.func @transform_3(%arg0: i32, %arg1: i32, %arg2: i32) -> (i32, i32, i32) {
    %c0_i32 = arith.constant 0 : i32
    %c0_i32_0 = arith.constant 0 : i32
    return %arg0, %arg1, %c0_i32 : i32, i32, i32
  }
  func.func @transform_4(%arg0: i32, %arg1: i32, %arg2: i32) -> (i32, i32) {
    %c0_i32 = arith.constant 0 : i32
    %c0_i32_0 = arith.constant 0 : i32
    %c0_i32_1 = arith.constant 0 : i32
    return %c0_i32, %c0_i32_0 : i32, i32
  }
  func.func @transform_5(%arg0: i32, %arg1: i32, %arg2: i32) -> (i32, i32) {
    %c0_i32 = arith.constant 0 : i32
    %c0_i32_0 = arith.constant 0 : i32
    %c0_i32_1 = arith.constant 0 : i32
    return %c0_i32, %c0_i32_0 : i32, i32
  }
  func.func @transform_6(%arg0: i32, %arg1: i32, %arg2: i32) -> (i32, i32) {
    %c0_i32 = arith.constant 0 : i32
    %c0_i32_0 = arith.constant 0 : i32
    %c0_i32_1 = arith.constant 0 : i32
    return %c0_i32, %c0_i32_0 : i32, i32
  }
  func.func @transform_7(%arg0: i32, %arg1: i32, %arg2: i32) -> (i32, i32) {
    %c0_i32 = arith.constant 0 : i32
    %c0_i32_0 = arith.constant 0 : i32
    %c0_i32_1 = arith.constant 0 : i32
    return %c0_i32, %c0_i32_0 : i32, i32
  }
  func.func @transform_8(%arg0: i32, %arg1: i32, %arg2: i32) -> (i32, i32) {
    %c0_i32 = arith.constant 0 : i32
    %c0_i32_0 = arith.constant 0 : i32
    %c0_i32_1 = arith.constant 0 : i32
    return %c0_i32, %c0_i32_0 : i32, i32
  }
  func.func @transform_9(%arg0: i32, %arg1: i32, %arg2: i32) -> (i32, i32, i32) {
    %c0_i32 = arith.constant 0 : i32
    %c0_i32_0 = arith.constant 0 : i32
    return %arg0, %arg1, %c0_i32 : i32, i32, i32
  }
}

module attributes {stable_mosaic.version = 11 : i64} {
  func.func @_mha_uc_kernel(%arg0: i32, %arg1: i32, %arg2: i32, %arg3: memref<1x8x128xf32, #tpu.memory_space<vmem>>, %arg4: memref<1x8x128xf32, #tpu.memory_space<vmem>>, %arg5: memref<1x8x128xf32, #tpu.memory_space<vmem>>, %arg6: memref<1x8x1xf32, #tpu.memory_space<vmem>>, %arg7: memref<128x128xbf16, #tpu.memory_space<vmem>>, %arg8: memref<128x128xbf16, #tpu.memory_space<vmem>>, %arg9: memref<128x128xbf16, #tpu.memory_space<vmem>>, %arg10: memref<128x128xbf16, #tpu.memory_space<vmem>>, %arg11: memref<1x128xf32, #tpu.memory_space<vmem>>, %arg12: memref<1x8x128xf32, #tpu.memory_space<vmem>>, %arg13: memref<8x128xbf16, #tpu.memory_space<vmem>>, %arg14: memref<8x128xf32, #tpu.memory_space<vmem>>, %arg15: memref<8x8x1xf32, #tpu.memory_space<vmem>>, %arg16: memref<8x8x1xf32, #tpu.memory_space<vmem>>) attributes {dimension_semantics = [#tpu.dimension_semantics<parallel>, #tpu.dimension_semantics<parallel>, #tpu.dimension_semantics<arbitrary>], iteration_bounds = array<i64: 2, 2, 2>, scalar_prefetch = 0 : i64, scratch_operands = 4 : i64, tpu.core_type = #tpu.core_type<tc>, window_params = [{transform_indices = @transform_0, window_bounds = array<i64: 1, 8, 128>}, {transform_indices = @transform_1, window_bounds = array<i64: 1, 8, 128>}, {transform_indices = @transform_2, window_bounds = array<i64: 1, 8, 128>}, {transform_indices = @transform_3, window_bounds = array<i64: 1, 8, 1>}, {pipeline_mode = #tpu.pipeline_mode<synchronous>, transform_indices = @transform_4, window_bounds = array<i64: 128, 128>}, {pipeline_mode = #tpu.pipeline_mode<synchronous>, transform_indices = @transform_5, window_bounds = array<i64: 128, 128>}, {pipeline_mode = #tpu.pipeline_mode<synchronous>, transform_indices = @transform_6, window_bounds = array<i64: 128, 128>}, {pipeline_mode = #tpu.pipeline_mode<synchronous>, transform_indices = @transform_7, window_bounds = array<i64: 128, 128>}, {pipeline_mode = #tpu.pipeline_mode<synchronous>, transform_indices = @transform_8, window_bounds = array<i64: 1, 128>}, {transform_indices = @transform_9, window_bounds = array<i64: 1, 8, 128>}]} {
    %c0_i32 = arith.constant 0 : i32
    %0 = arith.cmpi eq, %arg2, %c0_i32 : i32
    %1 = arith.extui %0 : i1 to i32
    %c0_i32_0 = arith.constant 0 : i32
    %2 = arith.cmpi ne, %1, %c0_i32_0 : i32
    scf.if %2 {
      %c0_178 = arith.constant 0 : index
      %c0_179 = arith.constant 0 : index
      %c0_180 = arith.constant 0 : index
      %300 = vector.load %arg3[%c0_178, %c0_179, %c0_180] : memref<1x8x128xf32, #tpu.memory_space<vmem>>, vector<1x8x128xf32>
      %301 = vector.shape_cast %300 : vector<1x8x128xf32> to vector<8x128xf32>
      %302 = arith.truncf %301 : vector<8x128xf32> to vector<8x128xbf16>
      %c0_181 = arith.constant 0 : index
      %c0_182 = arith.constant 0 : index
      %303 = vector.load %arg7[%c0_181, %c0_182] : memref<128x128xbf16, #tpu.memory_space<vmem>>, vector<128x128xbf16>
      %cst_183 = arith.constant dense<0.000000e+00> : vector<8x128xf32>
      %304 = tpu.matmul %302, %303, %cst_183 {dimension_numbers = #tpu.dot_dimension_numbers<[1], [0], [0], [1], [0, 0, 1, 1], [], []>} : vector<8x128xbf16>, vector<128x128xbf16>, vector<8x128xf32> -> vector<8x128xf32>
      %305 = arith.truncf %304 : vector<8x128xf32> to vector<8x128xbf16>
      %c0_184 = arith.constant 0 : index
      %c0_185 = arith.constant 0 : index
      %306 = vector.load %arg13[%c0_184, %c0_185] : memref<8x128xbf16, #tpu.memory_space<vmem>>, vector<8x128xbf16>
      tpu.vector_store %arg13[%c0_184, %c0_185], %305 {strides = array<i32>} : memref<8x128xbf16, #tpu.memory_space<vmem>>, vector<8x128xbf16>,
      %cst_186 = arith.constant 0.000000e+00 : f32
      %307 = vector.broadcast %cst_186 : f32 to vector<8x128xf32>
      %c0_187 = arith.constant 0 : index
      %c0_188 = arith.constant 0 : index
      %308 = vector.load %arg14[%c0_187, %c0_188] : memref<8x128xf32, #tpu.memory_space<vmem>>, vector<8x128xf32>
      tpu.vector_store %arg14[%c0_187, %c0_188], %307 {strides = array<i32>} : memref<8x128xf32, #tpu.memory_space<vmem>>, vector<8x128xf32>,
      %cst_189 = arith.constant 0xFF800000 : f32
      %309 = vector.broadcast %cst_189 : f32 to vector<8x8x1xf32>
      %c0_190 = arith.constant 0 : index
      %c0_191 = arith.constant 0 : index
      %c0_192 = arith.constant 0 : index
      %310 = vector.load %arg15[%c0_190, %c0_191, %c0_192] : memref<8x8x1xf32, #tpu.memory_space<vmem>>, vector<8x8x1xf32>
      tpu.vector_store %arg15[%c0_190, %c0_191, %c0_192], %309 {strides = array<i32>} : memref<8x8x1xf32, #tpu.memory_space<vmem>>, vector<8x8x1xf32>,
      %cst_193 = arith.constant 0.000000e+00 : f32
      %311 = vector.broadcast %cst_193 : f32 to vector<8x8x1xf32>
      %c0_194 = arith.constant 0 : index
      %c0_195 = arith.constant 0 : index
      %c0_196 = arith.constant 0 : index
      %312 = vector.load %arg16[%c0_194, %c0_195, %c0_196] : memref<8x8x1xf32, #tpu.memory_space<vmem>>, vector<8x8x1xf32>
      tpu.vector_store %arg16[%c0_194, %c0_195, %c0_196], %311 {strides = array<i32>} : memref<8x8x1xf32, #tpu.memory_space<vmem>>, vector<8x8x1xf32>,
    } else {
    }
    %c0 = arith.constant 0 : index
    %c0_1 = arith.constant 0 : index
    %c0_2 = arith.constant 0 : index
    %3 = vector.load %arg4[%c0, %c0_1, %c0_2] : memref<1x8x128xf32, #tpu.memory_space<vmem>>, vector<1x8x128xf32>
    %4 = vector.shape_cast %3 : vector<1x8x128xf32> to vector<8x128xf32>
    %5 = arith.truncf %4 : vector<8x128xf32> to vector<8x128xbf16>
    %c0_3 = arith.constant 0 : index
    %c0_4 = arith.constant 0 : index
    %c0_5 = arith.constant 0 : index
    %6 = vector.load %arg5[%c0_3, %c0_4, %c0_5] : memref<1x8x128xf32, #tpu.memory_space<vmem>>, vector<1x8x128xf32>
    %7 = vector.shape_cast %6 : vector<1x8x128xf32> to vector<8x128xf32>
    %8 = arith.truncf %7 : vector<8x128xf32> to vector<8x128xbf16>
    %c0_6 = arith.constant 0 : index
    %c0_7 = arith.constant 0 : index
    %9 = vector.load %arg8[%c0_6, %c0_7] : memref<128x128xbf16, #tpu.memory_space<vmem>>, vector<128x128xbf16>
    %cst = arith.constant dense<0.000000e+00> : vector<8x128xf32>
    %10 = tpu.matmul %5, %9, %cst {dimension_numbers = #tpu.dot_dimension_numbers<[1], [0], [0], [1], [0, 0, 1, 1], [], []>} : vector<8x128xbf16>, vector<128x128xbf16>, vector<8x128xf32> -> vector<8x128xf32>
    %11 = arith.truncf %10 : vector<8x128xf32> to vector<8x128xbf16>
    %c0_8 = arith.constant 0 : index
    %c0_9 = arith.constant 0 : index
    %12 = vector.load %arg9[%c0_8, %c0_9] : memref<128x128xbf16, #tpu.memory_space<vmem>>, vector<128x128xbf16>
    %cst_10 = arith.constant dense<0.000000e+00> : vector<8x128xf32>
    %13 = tpu.matmul %8, %12, %cst_10 {dimension_numbers = #tpu.dot_dimension_numbers<[1], [0], [0], [1], [0, 0, 1, 1], [], []>} : vector<8x128xbf16>, vector<128x128xbf16>, vector<8x128xf32> -> vector<8x128xf32>
    %14 = arith.truncf %13 : vector<8x128xf32> to vector<8x128xbf16>
    %c0_11 = arith.constant 0 : index
    %c0_12 = arith.constant 0 : index
    %c0_13 = arith.constant 0 : index
    %15 = vector.load %arg6[%c0_11, %c0_12, %c0_13] : memref<1x8x1xf32, #tpu.memory_space<vmem>>, vector<1x8x1xf32>
    %16 = vector.shape_cast %15 : vector<1x8x1xf32> to vector<8x1xf32>
    %c0_14 = arith.constant 0 : index
    %c0_15 = arith.constant 0 : index
    %17 = vector.load %arg13[%c0_14, %c0_15] : memref<8x128xbf16, #tpu.memory_space<vmem>>, vector<8x4xbf16>
    %18 = vector.extract_strided_slice %11 {offsets = [0, 0], sizes = [8, 4], strides = [1, 1]} : vector<8x128xbf16> to vector<8x4xbf16>
    %19 = vector.extract_strided_slice %14 {offsets = [0, 0], sizes = [8, 4], strides = [1, 1]} : vector<8x128xbf16> to vector<8x4xbf16>
    %cst_16 = arith.constant dense<0.000000e+00> : vector<8x8xf32>
    %20 = tpu.matmul %17, %18, %cst_16 {dimension_numbers = #tpu.dot_dimension_numbers<[1], [1], [0], [0], [0, 0, 1, 0], [], []>} : vector<8x4xbf16>, vector<8x4xbf16>, vector<8x8xf32> -> vector<8x8xf32>
    %21 = vector.broadcast %16 : vector<8x1xf32> to vector<8x8xf32>
    %22 = arith.mulf %20, %21 : vector<8x8xf32>
    %c0_17 = arith.constant 0 : index
    %c0_18 = arith.constant 0 : index
    %c0_19 = arith.constant 0 : index
    %23 = vector.load %arg15[%c0_17, %c0_18, %c0_19] : memref<8x8x1xf32, #tpu.memory_space<vmem>>, vector<1x8x1xf32>
    %24 = vector.shape_cast %23 : vector<1x8x1xf32> to vector<8x1xf32>
    %cst_20 = arith.constant dense<0xFF800000> : vector<8xf32>
    %25 = vector.multi_reduction <maximumf>, %22, %cst_20 [1] : vector<8x8xf32> to vector<8xf32>
    %26 = vector.shape_cast %25 : vector<8xf32> to vector<8x1xf32>
    %27 = arith.maximumf %24, %26 : vector<8x1xf32>
    %28 = arith.subf %24, %27 : vector<8x1xf32>
    %29 = math.exp %28 : vector<8x1xf32>
    %30 = vector.broadcast %27 : vector<8x1xf32> to vector<8x8xf32>
    %31 = arith.subf %22, %30 : vector<8x8xf32>
    %32 = math.exp %31 : vector<8x8xf32>
    %c0_21 = arith.constant 0 : index
    %c0_22 = arith.constant 0 : index
    %c0_23 = arith.constant 0 : index
    %33 = vector.load %arg16[%c0_21, %c0_22, %c0_23] : memref<8x8x1xf32, #tpu.memory_space<vmem>>, vector<1x8x1xf32>
    %34 = vector.shape_cast %33 : vector<1x8x1xf32> to vector<8x1xf32>
    %35 = arith.mulf %29, %34 : vector<8x1xf32>
    %cst_24 = arith.constant dense<0.000000e+00> : vector<8xf32>
    %36 = vector.multi_reduction <add>, %32, %cst_24 [1] : vector<8x8xf32> to vector<8xf32>
    %37 = vector.shape_cast %36 : vector<8xf32> to vector<8x1xf32>
    %38 = arith.addf %35, %37 : vector<8x1xf32>
    %c0_25 = arith.constant 0 : index
    %c0_26 = arith.constant 0 : index
    %c0_27 = arith.constant 0 : index
    %39 = vector.load %arg16[%c0_25, %c0_26, %c0_27] : memref<8x8x1xf32, #tpu.memory_space<vmem>>, vector<1x8x1xf32>
    %40 = vector.shape_cast %39 : vector<1x8x1xf32> to vector<8x1xf32>
    %41 = vector.shape_cast %38 : vector<8x1xf32> to vector<1x8x1xf32>
    tpu.vector_store %arg16[%c0_25, %c0_26, %c0_27], %41 {strides = array<i32>} : memref<8x8x1xf32, #tpu.memory_space<vmem>>, vector<1x8x1xf32>,
    %c0_28 = arith.constant 0 : index
    %c0_29 = arith.constant 0 : index
    %42 = vector.load %arg14[%c0_28, %c0_29] : memref<8x128xf32, #tpu.memory_space<vmem>>, vector<8x4xf32>
    %43 = vector.broadcast %29 : vector<8x1xf32> to vector<8x4xf32>
    %44 = arith.mulf %43, %42 : vector<8x4xf32>
    %45 = arith.truncf %32 : vector<8x8xf32> to vector<8x8xbf16>
    %cst_30 = arith.constant dense<0.000000e+00> : vector<8x4xf32>
    %46 = tpu.matmul %45, %19, %cst_30 {dimension_numbers = #tpu.dot_dimension_numbers<[1], [0], [0], [1], [0, 0, 1, 1], [], []>} : vector<8x8xbf16>, vector<8x4xbf16>, vector<8x4xf32> -> vector<8x4xf32>
    %47 = arith.addf %44, %46 : vector<8x4xf32>
    %c0_31 = arith.constant 0 : index
    %c0_32 = arith.constant 0 : index
    %48 = vector.load %arg14[%c0_31, %c0_32] : memref<8x128xf32, #tpu.memory_space<vmem>>, vector<8x4xf32>
    tpu.vector_store %arg14[%c0_31, %c0_32], %47 {strides = array<i32>} : memref<8x128xf32, #tpu.memory_space<vmem>>, vector<8x4xf32>,
    %c0_33 = arith.constant 0 : index
    %c0_34 = arith.constant 0 : index
    %c0_35 = arith.constant 0 : index
    %49 = vector.load %arg15[%c0_33, %c0_34, %c0_35] : memref<8x8x1xf32, #tpu.memory_space<vmem>>, vector<1x8x1xf32>
    %50 = vector.shape_cast %49 : vector<1x8x1xf32> to vector<8x1xf32>
    %51 = vector.shape_cast %27 : vector<8x1xf32> to vector<1x8x1xf32>
    tpu.vector_store %arg15[%c0_33, %c0_34, %c0_35], %51 {strides = array<i32>} : memref<8x8x1xf32, #tpu.memory_space<vmem>>, vector<1x8x1xf32>,
    %c0_36 = arith.constant 0 : index
    %c4 = arith.constant 4 : index
    %52 = vector.load %arg13[%c0_36, %c4] : memref<8x128xbf16, #tpu.memory_space<vmem>>, vector<8x4xbf16>
    %53 = vector.extract_strided_slice %11 {offsets = [0, 4], sizes = [8, 4], strides = [1, 1]} : vector<8x128xbf16> to vector<8x4xbf16>
    %54 = vector.extract_strided_slice %14 {offsets = [0, 4], sizes = [8, 4], strides = [1, 1]} : vector<8x128xbf16> to vector<8x4xbf16>
    %cst_37 = arith.constant dense<0.000000e+00> : vector<8x8xf32>
    %55 = tpu.matmul %52, %53, %cst_37 {dimension_numbers = #tpu.dot_dimension_numbers<[1], [1], [0], [0], [0, 0, 1, 0], [], []>} : vector<8x4xbf16>, vector<8x4xbf16>, vector<8x8xf32> -> vector<8x8xf32>
    %56 = vector.broadcast %16 : vector<8x1xf32> to vector<8x8xf32>
    %57 = arith.mulf %55, %56 : vector<8x8xf32>
    %c1 = arith.constant 1 : index
    %c0_38 = arith.constant 0 : index
    %c0_39 = arith.constant 0 : index
    %58 = vector.load %arg15[%c1, %c0_38, %c0_39] : memref<8x8x1xf32, #tpu.memory_space<vmem>>, vector<1x8x1xf32>
    %59 = vector.shape_cast %58 : vector<1x8x1xf32> to vector<8x1xf32>
    %cst_40 = arith.constant dense<0xFF800000> : vector<8xf32>
    %60 = vector.multi_reduction <maximumf>, %57, %cst_40 [1] : vector<8x8xf32> to vector<8xf32>
    %61 = vector.shape_cast %60 : vector<8xf32> to vector<8x1xf32>
    %62 = arith.maximumf %59, %61 : vector<8x1xf32>
    %63 = arith.subf %59, %62 : vector<8x1xf32>
    %64 = math.exp %63 : vector<8x1xf32>
    %65 = vector.broadcast %62 : vector<8x1xf32> to vector<8x8xf32>
    %66 = arith.subf %57, %65 : vector<8x8xf32>
    %67 = math.exp %66 : vector<8x8xf32>
    %c1_41 = arith.constant 1 : index
    %c0_42 = arith.constant 0 : index
    %c0_43 = arith.constant 0 : index
    %68 = vector.load %arg16[%c1_41, %c0_42, %c0_43] : memref<8x8x1xf32, #tpu.memory_space<vmem>>, vector<1x8x1xf32>
    %69 = vector.shape_cast %68 : vector<1x8x1xf32> to vector<8x1xf32>
    %70 = arith.mulf %64, %69 : vector<8x1xf32>
    %cst_44 = arith.constant dense<0.000000e+00> : vector<8xf32>
    %71 = vector.multi_reduction <add>, %67, %cst_44 [1] : vector<8x8xf32> to vector<8xf32>
    %72 = vector.shape_cast %71 : vector<8xf32> to vector<8x1xf32>
    %73 = arith.addf %70, %72 : vector<8x1xf32>
    %c1_45 = arith.constant 1 : index
    %c0_46 = arith.constant 0 : index
    %c0_47 = arith.constant 0 : index
    %74 = vector.load %arg16[%c1_45, %c0_46, %c0_47] : memref<8x8x1xf32, #tpu.memory_space<vmem>>, vector<1x8x1xf32>
    %75 = vector.shape_cast %74 : vector<1x8x1xf32> to vector<8x1xf32>
    %76 = vector.shape_cast %73 : vector<8x1xf32> to vector<1x8x1xf32>
    tpu.vector_store %arg16[%c1_45, %c0_46, %c0_47], %76 {strides = array<i32>} : memref<8x8x1xf32, #tpu.memory_space<vmem>>, vector<1x8x1xf32>,
    %c0_48 = arith.constant 0 : index
    %c4_49 = arith.constant 4 : index
    %77 = vector.load %arg14[%c0_48, %c4_49] : memref<8x128xf32, #tpu.memory_space<vmem>>, vector<8x4xf32>
    %78 = vector.broadcast %64 : vector<8x1xf32> to vector<8x4xf32>
    %79 = arith.mulf %78, %77 : vector<8x4xf32>
    %80 = arith.truncf %67 : vector<8x8xf32> to vector<8x8xbf16>
    %cst_50 = arith.constant dense<0.000000e+00> : vector<8x4xf32>
    %81 = tpu.matmul %80, %54, %cst_50 {dimension_numbers = #tpu.dot_dimension_numbers<[1], [0], [0], [1], [0, 0, 1, 1], [], []>} : vector<8x8xbf16>, vector<8x4xbf16>, vector<8x4xf32> -> vector<8x4xf32>
    %82 = arith.addf %79, %81 : vector<8x4xf32>
    %c0_51 = arith.constant 0 : index
    %c4_52 = arith.constant 4 : index
    %83 = vector.load %arg14[%c0_51, %c4_52] : memref<8x128xf32, #tpu.memory_space<vmem>>, vector<8x4xf32>
    tpu.vector_store %arg14[%c0_51, %c4_52], %82 {strides = array<i32>} : memref<8x128xf32, #tpu.memory_space<vmem>>, vector<8x4xf32>,
    %c1_53 = arith.constant 1 : index
    %c0_54 = arith.constant 0 : index
    %c0_55 = arith.constant 0 : index
    %84 = vector.load %arg15[%c1_53, %c0_54, %c0_55] : memref<8x8x1xf32, #tpu.memory_space<vmem>>, vector<1x8x1xf32>
    %85 = vector.shape_cast %84 : vector<1x8x1xf32> to vector<8x1xf32>
    %86 = vector.shape_cast %62 : vector<8x1xf32> to vector<1x8x1xf32>
    tpu.vector_store %arg15[%c1_53, %c0_54, %c0_55], %86 {strides = array<i32>} : memref<8x8x1xf32, #tpu.memory_space<vmem>>, vector<1x8x1xf32>,
    %c0_56 = arith.constant 0 : index
    %c8 = arith.constant 8 : index
    %87 = vector.load %arg13[%c0_56, %c8] : memref<8x128xbf16, #tpu.memory_space<vmem>>, vector<8x4xbf16>
    %88 = vector.extract_strided_slice %11 {offsets = [0, 8], sizes = [8, 4], strides = [1, 1]} : vector<8x128xbf16> to vector<8x4xbf16>
    %89 = vector.extract_strided_slice %14 {offsets = [0, 8], sizes = [8, 4], strides = [1, 1]} : vector<8x128xbf16> to vector<8x4xbf16>
    %cst_57 = arith.constant dense<0.000000e+00> : vector<8x8xf32>
    %90 = tpu.matmul %87, %88, %cst_57 {dimension_numbers = #tpu.dot_dimension_numbers<[1], [1], [0], [0], [0, 0, 1, 0], [], []>} : vector<8x4xbf16>, vector<8x4xbf16>, vector<8x8xf32> -> vector<8x8xf32>
    %91 = vector.broadcast %16 : vector<8x1xf32> to vector<8x8xf32>
    %92 = arith.mulf %90, %91 : vector<8x8xf32>
    %c2 = arith.constant 2 : index
    %c0_58 = arith.constant 0 : index
    %c0_59 = arith.constant 0 : index
    %93 = vector.load %arg15[%c2, %c0_58, %c0_59] : memref<8x8x1xf32, #tpu.memory_space<vmem>>, vector<1x8x1xf32>
    %94 = vector.shape_cast %93 : vector<1x8x1xf32> to vector<8x1xf32>
    %cst_60 = arith.constant dense<0xFF800000> : vector<8xf32>
    %95 = vector.multi_reduction <maximumf>, %92, %cst_60 [1] : vector<8x8xf32> to vector<8xf32>
    %96 = vector.shape_cast %95 : vector<8xf32> to vector<8x1xf32>
    %97 = arith.maximumf %94, %96 : vector<8x1xf32>
    %98 = arith.subf %94, %97 : vector<8x1xf32>
    %99 = math.exp %98 : vector<8x1xf32>
    %100 = vector.broadcast %97 : vector<8x1xf32> to vector<8x8xf32>
    %101 = arith.subf %92, %100 : vector<8x8xf32>
    %102 = math.exp %101 : vector<8x8xf32>
    %c2_61 = arith.constant 2 : index
    %c0_62 = arith.constant 0 : index
    %c0_63 = arith.constant 0 : index
    %103 = vector.load %arg16[%c2_61, %c0_62, %c0_63] : memref<8x8x1xf32, #tpu.memory_space<vmem>>, vector<1x8x1xf32>
    %104 = vector.shape_cast %103 : vector<1x8x1xf32> to vector<8x1xf32>
    %105 = arith.mulf %99, %104 : vector<8x1xf32>
    %cst_64 = arith.constant dense<0.000000e+00> : vector<8xf32>
    %106 = vector.multi_reduction <add>, %102, %cst_64 [1] : vector<8x8xf32> to vector<8xf32>
    %107 = vector.shape_cast %106 : vector<8xf32> to vector<8x1xf32>
    %108 = arith.addf %105, %107 : vector<8x1xf32>
    %c2_65 = arith.constant 2 : index
    %c0_66 = arith.constant 0 : index
    %c0_67 = arith.constant 0 : index
    %109 = vector.load %arg16[%c2_65, %c0_66, %c0_67] : memref<8x8x1xf32, #tpu.memory_space<vmem>>, vector<1x8x1xf32>
    %110 = vector.shape_cast %109 : vector<1x8x1xf32> to vector<8x1xf32>
    %111 = vector.shape_cast %108 : vector<8x1xf32> to vector<1x8x1xf32>
    tpu.vector_store %arg16[%c2_65, %c0_66, %c0_67], %111 {strides = array<i32>} : memref<8x8x1xf32, #tpu.memory_space<vmem>>, vector<1x8x1xf32>,
    %c0_68 = arith.constant 0 : index
    %c8_69 = arith.constant 8 : index
    %112 = vector.load %arg14[%c0_68, %c8_69] : memref<8x128xf32, #tpu.memory_space<vmem>>, vector<8x4xf32>
    %113 = vector.broadcast %99 : vector<8x1xf32> to vector<8x4xf32>
    %114 = arith.mulf %113, %112 : vector<8x4xf32>
    %115 = arith.truncf %102 : vector<8x8xf32> to vector<8x8xbf16>
    %cst_70 = arith.constant dense<0.000000e+00> : vector<8x4xf32>
    %116 = tpu.matmul %115, %89, %cst_70 {dimension_numbers = #tpu.dot_dimension_numbers<[1], [0], [0], [1], [0, 0, 1, 1], [], []>} : vector<8x8xbf16>, vector<8x4xbf16>, vector<8x4xf32> -> vector<8x4xf32>
    %117 = arith.addf %114, %116 : vector<8x4xf32>
    %c0_71 = arith.constant 0 : index
    %c8_72 = arith.constant 8 : index
    %118 = vector.load %arg14[%c0_71, %c8_72] : memref<8x128xf32, #tpu.memory_space<vmem>>, vector<8x4xf32>
    tpu.vector_store %arg14[%c0_71, %c8_72], %117 {strides = array<i32>} : memref<8x128xf32, #tpu.memory_space<vmem>>, vector<8x4xf32>,
    %c2_73 = arith.constant 2 : index
    %c0_74 = arith.constant 0 : index
    %c0_75 = arith.constant 0 : index
    %119 = vector.load %arg15[%c2_73, %c0_74, %c0_75] : memref<8x8x1xf32, #tpu.memory_space<vmem>>, vector<1x8x1xf32>
    %120 = vector.shape_cast %119 : vector<1x8x1xf32> to vector<8x1xf32>
    %121 = vector.shape_cast %97 : vector<8x1xf32> to vector<1x8x1xf32>
    tpu.vector_store %arg15[%c2_73, %c0_74, %c0_75], %121 {strides = array<i32>} : memref<8x8x1xf32, #tpu.memory_space<vmem>>, vector<1x8x1xf32>,
    %c0_76 = arith.constant 0 : index
    %c12 = arith.constant 12 : index
    %122 = vector.load %arg13[%c0_76, %c12] : memref<8x128xbf16, #tpu.memory_space<vmem>>, vector<8x4xbf16>
    %123 = vector.extract_strided_slice %11 {offsets = [0, 12], sizes = [8, 4], strides = [1, 1]} : vector<8x128xbf16> to vector<8x4xbf16>
    %124 = vector.extract_strided_slice %14 {offsets = [0, 12], sizes = [8, 4], strides = [1, 1]} : vector<8x128xbf16> to vector<8x4xbf16>
    %cst_77 = arith.constant dense<0.000000e+00> : vector<8x8xf32>
    %125 = tpu.matmul %122, %123, %cst_77 {dimension_numbers = #tpu.dot_dimension_numbers<[1], [1], [0], [0], [0, 0, 1, 0], [], []>} : vector<8x4xbf16>, vector<8x4xbf16>, vector<8x8xf32> -> vector<8x8xf32>
    %126 = vector.broadcast %16 : vector<8x1xf32> to vector<8x8xf32>
    %127 = arith.mulf %125, %126 : vector<8x8xf32>
    %c3 = arith.constant 3 : index
    %c0_78 = arith.constant 0 : index
    %c0_79 = arith.constant 0 : index
    %128 = vector.load %arg15[%c3, %c0_78, %c0_79] : memref<8x8x1xf32, #tpu.memory_space<vmem>>, vector<1x8x1xf32>
    %129 = vector.shape_cast %128 : vector<1x8x1xf32> to vector<8x1xf32>
    %cst_80 = arith.constant dense<0xFF800000> : vector<8xf32>
    %130 = vector.multi_reduction <maximumf>, %127, %cst_80 [1] : vector<8x8xf32> to vector<8xf32>
    %131 = vector.shape_cast %130 : vector<8xf32> to vector<8x1xf32>
    %132 = arith.maximumf %129, %131 : vector<8x1xf32>
    %133 = arith.subf %129, %132 : vector<8x1xf32>
    %134 = math.exp %133 : vector<8x1xf32>
    %135 = vector.broadcast %132 : vector<8x1xf32> to vector<8x8xf32>
    %136 = arith.subf %127, %135 : vector<8x8xf32>
    %137 = math.exp %136 : vector<8x8xf32>
    %c3_81 = arith.constant 3 : index
    %c0_82 = arith.constant 0 : index
    %c0_83 = arith.constant 0 : index
    %138 = vector.load %arg16[%c3_81, %c0_82, %c0_83] : memref<8x8x1xf32, #tpu.memory_space<vmem>>, vector<1x8x1xf32>
    %139 = vector.shape_cast %138 : vector<1x8x1xf32> to vector<8x1xf32>
    %140 = arith.mulf %134, %139 : vector<8x1xf32>
    %cst_84 = arith.constant dense<0.000000e+00> : vector<8xf32>
    %141 = vector.multi_reduction <add>, %137, %cst_84 [1] : vector<8x8xf32> to vector<8xf32>
    %142 = vector.shape_cast %141 : vector<8xf32> to vector<8x1xf32>
    %143 = arith.addf %140, %142 : vector<8x1xf32>
    %c3_85 = arith.constant 3 : index
    %c0_86 = arith.constant 0 : index
    %c0_87 = arith.constant 0 : index
    %144 = vector.load %arg16[%c3_85, %c0_86, %c0_87] : memref<8x8x1xf32, #tpu.memory_space<vmem>>, vector<1x8x1xf32>
    %145 = vector.shape_cast %144 : vector<1x8x1xf32> to vector<8x1xf32>
    %146 = vector.shape_cast %143 : vector<8x1xf32> to vector<1x8x1xf32>
    tpu.vector_store %arg16[%c3_85, %c0_86, %c0_87], %146 {strides = array<i32>} : memref<8x8x1xf32, #tpu.memory_space<vmem>>, vector<1x8x1xf32>,
    %c0_88 = arith.constant 0 : index
    %c12_89 = arith.constant 12 : index
    %147 = vector.load %arg14[%c0_88, %c12_89] : memref<8x128xf32, #tpu.memory_space<vmem>>, vector<8x4xf32>
    %148 = vector.broadcast %134 : vector<8x1xf32> to vector<8x4xf32>
    %149 = arith.mulf %148, %147 : vector<8x4xf32>
    %150 = arith.truncf %137 : vector<8x8xf32> to vector<8x8xbf16>
    %cst_90 = arith.constant dense<0.000000e+00> : vector<8x4xf32>
    %151 = tpu.matmul %150, %124, %cst_90 {dimension_numbers = #tpu.dot_dimension_numbers<[1], [0], [0], [1], [0, 0, 1, 1], [], []>} : vector<8x8xbf16>, vector<8x4xbf16>, vector<8x4xf32> -> vector<8x4xf32>
    %152 = arith.addf %149, %151 : vector<8x4xf32>
    %c0_91 = arith.constant 0 : index
    %c12_92 = arith.constant 12 : index
    %153 = vector.load %arg14[%c0_91, %c12_92] : memref<8x128xf32, #tpu.memory_space<vmem>>, vector<8x4xf32>
    tpu.vector_store %arg14[%c0_91, %c12_92], %152 {strides = array<i32>} : memref<8x128xf32, #tpu.memory_space<vmem>>, vector<8x4xf32>,
    %c3_93 = arith.constant 3 : index
    %c0_94 = arith.constant 0 : index
    %c0_95 = arith.constant 0 : index
    %154 = vector.load %arg15[%c3_93, %c0_94, %c0_95] : memref<8x8x1xf32, #tpu.memory_space<vmem>>, vector<1x8x1xf32>
    %155 = vector.shape_cast %154 : vector<1x8x1xf32> to vector<8x1xf32>
    %156 = vector.shape_cast %132 : vector<8x1xf32> to vector<1x8x1xf32>
    tpu.vector_store %arg15[%c3_93, %c0_94, %c0_95], %156 {strides = array<i32>} : memref<8x8x1xf32, #tpu.memory_space<vmem>>, vector<1x8x1xf32>,
    %c0_96 = arith.constant 0 : index
    %c16 = arith.constant 16 : index
    %157 = vector.load %arg13[%c0_96, %c16] : memref<8x128xbf16, #tpu.memory_space<vmem>>, vector<8x4xbf16>
    %158 = vector.extract_strided_slice %11 {offsets = [0, 16], sizes = [8, 4], strides = [1, 1]} : vector<8x128xbf16> to vector<8x4xbf16>
    %159 = vector.extract_strided_slice %14 {offsets = [0, 16], sizes = [8, 4], strides = [1, 1]} : vector<8x128xbf16> to vector<8x4xbf16>
    %cst_97 = arith.constant dense<0.000000e+00> : vector<8x8xf32>
    %160 = tpu.matmul %157, %158, %cst_97 {dimension_numbers = #tpu.dot_dimension_numbers<[1], [1], [0], [0], [0, 0, 1, 0], [], []>} : vector<8x4xbf16>, vector<8x4xbf16>, vector<8x8xf32> -> vector<8x8xf32>
    %161 = vector.broadcast %16 : vector<8x1xf32> to vector<8x8xf32>
    %162 = arith.mulf %160, %161 : vector<8x8xf32>
    %c4_98 = arith.constant 4 : index
    %c0_99 = arith.constant 0 : index
    %c0_100 = arith.constant 0 : index
    %163 = vector.load %arg15[%c4_98, %c0_99, %c0_100] : memref<8x8x1xf32, #tpu.memory_space<vmem>>, vector<1x8x1xf32>
    %164 = vector.shape_cast %163 : vector<1x8x1xf32> to vector<8x1xf32>
    %cst_101 = arith.constant dense<0xFF800000> : vector<8xf32>
    %165 = vector.multi_reduction <maximumf>, %162, %cst_101 [1] : vector<8x8xf32> to vector<8xf32>
    %166 = vector.shape_cast %165 : vector<8xf32> to vector<8x1xf32>
    %167 = arith.maximumf %164, %166 : vector<8x1xf32>
    %168 = arith.subf %164, %167 : vector<8x1xf32>
    %169 = math.exp %168 : vector<8x1xf32>
    %170 = vector.broadcast %167 : vector<8x1xf32> to vector<8x8xf32>
    %171 = arith.subf %162, %170 : vector<8x8xf32>
    %172 = math.exp %171 : vector<8x8xf32>
    %c4_102 = arith.constant 4 : index
    %c0_103 = arith.constant 0 : index
    %c0_104 = arith.constant 0 : index
    %173 = vector.load %arg16[%c4_102, %c0_103, %c0_104] : memref<8x8x1xf32, #tpu.memory_space<vmem>>, vector<1x8x1xf32>
    %174 = vector.shape_cast %173 : vector<1x8x1xf32> to vector<8x1xf32>
    %175 = arith.mulf %169, %174 : vector<8x1xf32>
    %cst_105 = arith.constant dense<0.000000e+00> : vector<8xf32>
    %176 = vector.multi_reduction <add>, %172, %cst_105 [1] : vector<8x8xf32> to vector<8xf32>
    %177 = vector.shape_cast %176 : vector<8xf32> to vector<8x1xf32>
    %178 = arith.addf %175, %177 : vector<8x1xf32>
    %c4_106 = arith.constant 4 : index
    %c0_107 = arith.constant 0 : index
    %c0_108 = arith.constant 0 : index
    %179 = vector.load %arg16[%c4_106, %c0_107, %c0_108] : memref<8x8x1xf32, #tpu.memory_space<vmem>>, vector<1x8x1xf32>
    %180 = vector.shape_cast %179 : vector<1x8x1xf32> to vector<8x1xf32>
    %181 = vector.shape_cast %178 : vector<8x1xf32> to vector<1x8x1xf32>
    tpu.vector_store %arg16[%c4_106, %c0_107, %c0_108], %181 {strides = array<i32>} : memref<8x8x1xf32, #tpu.memory_space<vmem>>, vector<1x8x1xf32>,
    %c0_109 = arith.constant 0 : index
    %c16_110 = arith.constant 16 : index
    %182 = vector.load %arg14[%c0_109, %c16_110] : memref<8x128xf32, #tpu.memory_space<vmem>>, vector<8x4xf32>
    %183 = vector.broadcast %169 : vector<8x1xf32> to vector<8x4xf32>
    %184 = arith.mulf %183, %182 : vector<8x4xf32>
    %185 = arith.truncf %172 : vector<8x8xf32> to vector<8x8xbf16>
    %cst_111 = arith.constant dense<0.000000e+00> : vector<8x4xf32>
    %186 = tpu.matmul %185, %159, %cst_111 {dimension_numbers = #tpu.dot_dimension_numbers<[1], [0], [0], [1], [0, 0, 1, 1], [], []>} : vector<8x8xbf16>, vector<8x4xbf16>, vector<8x4xf32> -> vector<8x4xf32>
    %187 = arith.addf %184, %186 : vector<8x4xf32>
    %c0_112 = arith.constant 0 : index
    %c16_113 = arith.constant 16 : index
    %188 = vector.load %arg14[%c0_112, %c16_113] : memref<8x128xf32, #tpu.memory_space<vmem>>, vector<8x4xf32>
    tpu.vector_store %arg14[%c0_112, %c16_113], %187 {strides = array<i32>} : memref<8x128xf32, #tpu.memory_space<vmem>>, vector<8x4xf32>,
    %c4_114 = arith.constant 4 : index
    %c0_115 = arith.constant 0 : index
    %c0_116 = arith.constant 0 : index
    %189 = vector.load %arg15[%c4_114, %c0_115, %c0_116] : memref<8x8x1xf32, #tpu.memory_space<vmem>>, vector<1x8x1xf32>
    %190 = vector.shape_cast %189 : vector<1x8x1xf32> to vector<8x1xf32>
    %191 = vector.shape_cast %167 : vector<8x1xf32> to vector<1x8x1xf32>
    tpu.vector_store %arg15[%c4_114, %c0_115, %c0_116], %191 {strides = array<i32>} : memref<8x8x1xf32, #tpu.memory_space<vmem>>, vector<1x8x1xf32>,
    %c0_117 = arith.constant 0 : index
    %c20 = arith.constant 20 : index
    %192 = vector.load %arg13[%c0_117, %c20] : memref<8x128xbf16, #tpu.memory_space<vmem>>, vector<8x4xbf16>
    %193 = vector.extract_strided_slice %11 {offsets = [0, 20], sizes = [8, 4], strides = [1, 1]} : vector<8x128xbf16> to vector<8x4xbf16>
    %194 = vector.extract_strided_slice %14 {offsets = [0, 20], sizes = [8, 4], strides = [1, 1]} : vector<8x128xbf16> to vector<8x4xbf16>
    %cst_118 = arith.constant dense<0.000000e+00> : vector<8x8xf32>
    %195 = tpu.matmul %192, %193, %cst_118 {dimension_numbers = #tpu.dot_dimension_numbers<[1], [1], [0], [0], [0, 0, 1, 0], [], []>} : vector<8x4xbf16>, vector<8x4xbf16>, vector<8x8xf32> -> vector<8x8xf32>
    %196 = vector.broadcast %16 : vector<8x1xf32> to vector<8x8xf32>
    %197 = arith.mulf %195, %196 : vector<8x8xf32>
    %c5 = arith.constant 5 : index
    %c0_119 = arith.constant 0 : index
    %c0_120 = arith.constant 0 : index
    %198 = vector.load %arg15[%c5, %c0_119, %c0_120] : memref<8x8x1xf32, #tpu.memory_space<vmem>>, vector<1x8x1xf32>
    %199 = vector.shape_cast %198 : vector<1x8x1xf32> to vector<8x1xf32>
    %cst_121 = arith.constant dense<0xFF800000> : vector<8xf32>
    %200 = vector.multi_reduction <maximumf>, %197, %cst_121 [1] : vector<8x8xf32> to vector<8xf32>
    %201 = vector.shape_cast %200 : vector<8xf32> to vector<8x1xf32>
    %202 = arith.maximumf %199, %201 : vector<8x1xf32>
    %203 = arith.subf %199, %202 : vector<8x1xf32>
    %204 = math.exp %203 : vector<8x1xf32>
    %205 = vector.broadcast %202 : vector<8x1xf32> to vector<8x8xf32>
    %206 = arith.subf %197, %205 : vector<8x8xf32>
    %207 = math.exp %206 : vector<8x8xf32>
    %c5_122 = arith.constant 5 : index
    %c0_123 = arith.constant 0 : index
    %c0_124 = arith.constant 0 : index
    %208 = vector.load %arg16[%c5_122, %c0_123, %c0_124] : memref<8x8x1xf32, #tpu.memory_space<vmem>>, vector<1x8x1xf32>
    %209 = vector.shape_cast %208 : vector<1x8x1xf32> to vector<8x1xf32>
    %210 = arith.mulf %204, %209 : vector<8x1xf32>
    %cst_125 = arith.constant dense<0.000000e+00> : vector<8xf32>
    %211 = vector.multi_reduction <add>, %207, %cst_125 [1] : vector<8x8xf32> to vector<8xf32>
    %212 = vector.shape_cast %211 : vector<8xf32> to vector<8x1xf32>
    %213 = arith.addf %210, %212 : vector<8x1xf32>
    %c5_126 = arith.constant 5 : index
    %c0_127 = arith.constant 0 : index
    %c0_128 = arith.constant 0 : index
    %214 = vector.load %arg16[%c5_126, %c0_127, %c0_128] : memref<8x8x1xf32, #tpu.memory_space<vmem>>, vector<1x8x1xf32>
    %215 = vector.shape_cast %214 : vector<1x8x1xf32> to vector<8x1xf32>
    %216 = vector.shape_cast %213 : vector<8x1xf32> to vector<1x8x1xf32>
    tpu.vector_store %arg16[%c5_126, %c0_127, %c0_128], %216 {strides = array<i32>} : memref<8x8x1xf32, #tpu.memory_space<vmem>>, vector<1x8x1xf32>,
    %c0_129 = arith.constant 0 : index
    %c20_130 = arith.constant 20 : index
    %217 = vector.load %arg14[%c0_129, %c20_130] : memref<8x128xf32, #tpu.memory_space<vmem>>, vector<8x4xf32>
    %218 = vector.broadcast %204 : vector<8x1xf32> to vector<8x4xf32>
    %219 = arith.mulf %218, %217 : vector<8x4xf32>
    %220 = arith.truncf %207 : vector<8x8xf32> to vector<8x8xbf16>
    %cst_131 = arith.constant dense<0.000000e+00> : vector<8x4xf32>
    %221 = tpu.matmul %220, %194, %cst_131 {dimension_numbers = #tpu.dot_dimension_numbers<[1], [0], [0], [1], [0, 0, 1, 1], [], []>} : vector<8x8xbf16>, vector<8x4xbf16>, vector<8x4xf32> -> vector<8x4xf32>
    %222 = arith.addf %219, %221 : vector<8x4xf32>
    %c0_132 = arith.constant 0 : index
    %c20_133 = arith.constant 20 : index
    %223 = vector.load %arg14[%c0_132, %c20_133] : memref<8x128xf32, #tpu.memory_space<vmem>>, vector<8x4xf32>
    tpu.vector_store %arg14[%c0_132, %c20_133], %222 {strides = array<i32>} : memref<8x128xf32, #tpu.memory_space<vmem>>, vector<8x4xf32>,
    %c5_134 = arith.constant 5 : index
    %c0_135 = arith.constant 0 : index
    %c0_136 = arith.constant 0 : index
    %224 = vector.load %arg15[%c5_134, %c0_135, %c0_136] : memref<8x8x1xf32, #tpu.memory_space<vmem>>, vector<1x8x1xf32>
    %225 = vector.shape_cast %224 : vector<1x8x1xf32> to vector<8x1xf32>
    %226 = vector.shape_cast %202 : vector<8x1xf32> to vector<1x8x1xf32>
    tpu.vector_store %arg15[%c5_134, %c0_135, %c0_136], %226 {strides = array<i32>} : memref<8x8x1xf32, #tpu.memory_space<vmem>>, vector<1x8x1xf32>,
    %c0_137 = arith.constant 0 : index
    %c24 = arith.constant 24 : index
    %227 = vector.load %arg13[%c0_137, %c24] : memref<8x128xbf16, #tpu.memory_space<vmem>>, vector<8x4xbf16>
    %228 = vector.extract_strided_slice %11 {offsets = [0, 24], sizes = [8, 4], strides = [1, 1]} : vector<8x128xbf16> to vector<8x4xbf16>
    %229 = vector.extract_strided_slice %14 {offsets = [0, 24], sizes = [8, 4], strides = [1, 1]} : vector<8x128xbf16> to vector<8x4xbf16>
    %cst_138 = arith.constant dense<0.000000e+00> : vector<8x8xf32>
    %230 = tpu.matmul %227, %228, %cst_138 {dimension_numbers = #tpu.dot_dimension_numbers<[1], [1], [0], [0], [0, 0, 1, 0], [], []>} : vector<8x4xbf16>, vector<8x4xbf16>, vector<8x8xf32> -> vector<8x8xf32>
    %231 = vector.broadcast %16 : vector<8x1xf32> to vector<8x8xf32>
    %232 = arith.mulf %230, %231 : vector<8x8xf32>
    %c6 = arith.constant 6 : index
    %c0_139 = arith.constant 0 : index
    %c0_140 = arith.constant 0 : index
    %233 = vector.load %arg15[%c6, %c0_139, %c0_140] : memref<8x8x1xf32, #tpu.memory_space<vmem>>, vector<1x8x1xf32>
    %234 = vector.shape_cast %233 : vector<1x8x1xf32> to vector<8x1xf32>
    %cst_141 = arith.constant dense<0xFF800000> : vector<8xf32>
    %235 = vector.multi_reduction <maximumf>, %232, %cst_141 [1] : vector<8x8xf32> to vector<8xf32>
    %236 = vector.shape_cast %235 : vector<8xf32> to vector<8x1xf32>
    %237 = arith.maximumf %234, %236 : vector<8x1xf32>
    %238 = arith.subf %234, %237 : vector<8x1xf32>
    %239 = math.exp %238 : vector<8x1xf32>
    %240 = vector.broadcast %237 : vector<8x1xf32> to vector<8x8xf32>
    %241 = arith.subf %232, %240 : vector<8x8xf32>
    %242 = math.exp %241 : vector<8x8xf32>
    %c6_142 = arith.constant 6 : index
    %c0_143 = arith.constant 0 : index
    %c0_144 = arith.constant 0 : index
    %243 = vector.load %arg16[%c6_142, %c0_143, %c0_144] : memref<8x8x1xf32, #tpu.memory_space<vmem>>, vector<1x8x1xf32>
    %244 = vector.shape_cast %243 : vector<1x8x1xf32> to vector<8x1xf32>
    %245 = arith.mulf %239, %244 : vector<8x1xf32>
    %cst_145 = arith.constant dense<0.000000e+00> : vector<8xf32>
    %246 = vector.multi_reduction <add>, %242, %cst_145 [1] : vector<8x8xf32> to vector<8xf32>
    %247 = vector.shape_cast %246 : vector<8xf32> to vector<8x1xf32>
    %248 = arith.addf %245, %247 : vector<8x1xf32>
    %c6_146 = arith.constant 6 : index
    %c0_147 = arith.constant 0 : index
    %c0_148 = arith.constant 0 : index
    %249 = vector.load %arg16[%c6_146, %c0_147, %c0_148] : memref<8x8x1xf32, #tpu.memory_space<vmem>>, vector<1x8x1xf32>
    %250 = vector.shape_cast %249 : vector<1x8x1xf32> to vector<8x1xf32>
    %251 = vector.shape_cast %248 : vector<8x1xf32> to vector<1x8x1xf32>
    tpu.vector_store %arg16[%c6_146, %c0_147, %c0_148], %251 {strides = array<i32>} : memref<8x8x1xf32, #tpu.memory_space<vmem>>, vector<1x8x1xf32>,
    %c0_149 = arith.constant 0 : index
    %c24_150 = arith.constant 24 : index
    %252 = vector.load %arg14[%c0_149, %c24_150] : memref<8x128xf32, #tpu.memory_space<vmem>>, vector<8x4xf32>
    %253 = vector.broadcast %239 : vector<8x1xf32> to vector<8x4xf32>
    %254 = arith.mulf %253, %252 : vector<8x4xf32>
    %255 = arith.truncf %242 : vector<8x8xf32> to vector<8x8xbf16>
    %cst_151 = arith.constant dense<0.000000e+00> : vector<8x4xf32>
    %256 = tpu.matmul %255, %229, %cst_151 {dimension_numbers = #tpu.dot_dimension_numbers<[1], [0], [0], [1], [0, 0, 1, 1], [], []>} : vector<8x8xbf16>, vector<8x4xbf16>, vector<8x4xf32> -> vector<8x4xf32>
    %257 = arith.addf %254, %256 : vector<8x4xf32>
    %c0_152 = arith.constant 0 : index
    %c24_153 = arith.constant 24 : index
    %258 = vector.load %arg14[%c0_152, %c24_153] : memref<8x128xf32, #tpu.memory_space<vmem>>, vector<8x4xf32>
    tpu.vector_store %arg14[%c0_152, %c24_153], %257 {strides = array<i32>} : memref<8x128xf32, #tpu.memory_space<vmem>>, vector<8x4xf32>,
    %c6_154 = arith.constant 6 : index
    %c0_155 = arith.constant 0 : index
    %c0_156 = arith.constant 0 : index
    %259 = vector.load %arg15[%c6_154, %c0_155, %c0_156] : memref<8x8x1xf32, #tpu.memory_space<vmem>>, vector<1x8x1xf32>
    %260 = vector.shape_cast %259 : vector<1x8x1xf32> to vector<8x1xf32>
    %261 = vector.shape_cast %237 : vector<8x1xf32> to vector<1x8x1xf32>
    tpu.vector_store %arg15[%c6_154, %c0_155, %c0_156], %261 {strides = array<i32>} : memref<8x8x1xf32, #tpu.memory_space<vmem>>, vector<1x8x1xf32>,
    %c0_157 = arith.constant 0 : index
    %c28 = arith.constant 28 : index
    %262 = vector.load %arg13[%c0_157, %c28] : memref<8x128xbf16, #tpu.memory_space<vmem>>, vector<8x4xbf16>
    %263 = vector.extract_strided_slice %11 {offsets = [0, 28], sizes = [8, 4], strides = [1, 1]} : vector<8x128xbf16> to vector<8x4xbf16>
    %264 = vector.extract_strided_slice %14 {offsets = [0, 28], sizes = [8, 4], strides = [1, 1]} : vector<8x128xbf16> to vector<8x4xbf16>
    %cst_158 = arith.constant dense<0.000000e+00> : vector<8x8xf32>
    %265 = tpu.matmul %262, %263, %cst_158 {dimension_numbers = #tpu.dot_dimension_numbers<[1], [1], [0], [0], [0, 0, 1, 0], [], []>} : vector<8x4xbf16>, vector<8x4xbf16>, vector<8x8xf32> -> vector<8x8xf32>
    %266 = vector.broadcast %16 : vector<8x1xf32> to vector<8x8xf32>
    %267 = arith.mulf %265, %266 : vector<8x8xf32>
    %c7 = arith.constant 7 : index
    %c0_159 = arith.constant 0 : index
    %c0_160 = arith.constant 0 : index
    %268 = vector.load %arg15[%c7, %c0_159, %c0_160] : memref<8x8x1xf32, #tpu.memory_space<vmem>>, vector<1x8x1xf32>
    %269 = vector.shape_cast %268 : vector<1x8x1xf32> to vector<8x1xf32>
    %cst_161 = arith.constant dense<0xFF800000> : vector<8xf32>
    %270 = vector.multi_reduction <maximumf>, %267, %cst_161 [1] : vector<8x8xf32> to vector<8xf32>
    %271 = vector.shape_cast %270 : vector<8xf32> to vector<8x1xf32>
    %272 = arith.maximumf %269, %271 : vector<8x1xf32>
    %273 = arith.subf %269, %272 : vector<8x1xf32>
    %274 = math.exp %273 : vector<8x1xf32>
    %275 = vector.broadcast %272 : vector<8x1xf32> to vector<8x8xf32>
    %276 = arith.subf %267, %275 : vector<8x8xf32>
    %277 = math.exp %276 : vector<8x8xf32>
    %c7_162 = arith.constant 7 : index
    %c0_163 = arith.constant 0 : index
    %c0_164 = arith.constant 0 : index
    %278 = vector.load %arg16[%c7_162, %c0_163, %c0_164] : memref<8x8x1xf32, #tpu.memory_space<vmem>>, vector<1x8x1xf32>
    %279 = vector.shape_cast %278 : vector<1x8x1xf32> to vector<8x1xf32>
    %280 = arith.mulf %274, %279 : vector<8x1xf32>
    %cst_165 = arith.constant dense<0.000000e+00> : vector<8xf32>
    %281 = vector.multi_reduction <add>, %277, %cst_165 [1] : vector<8x8xf32> to vector<8xf32>
    %282 = vector.shape_cast %281 : vector<8xf32> to vector<8x1xf32>
    %283 = arith.addf %280, %282 : vector<8x1xf32>
    %c7_166 = arith.constant 7 : index
    %c0_167 = arith.constant 0 : index
    %c0_168 = arith.constant 0 : index
    %284 = vector.load %arg16[%c7_166, %c0_167, %c0_168] : memref<8x8x1xf32, #tpu.memory_space<vmem>>, vector<1x8x1xf32>
    %285 = vector.shape_cast %284 : vector<1x8x1xf32> to vector<8x1xf32>
    %286 = vector.shape_cast %283 : vector<8x1xf32> to vector<1x8x1xf32>
    tpu.vector_store %arg16[%c7_166, %c0_167, %c0_168], %286 {strides = array<i32>} : memref<8x8x1xf32, #tpu.memory_space<vmem>>, vector<1x8x1xf32>,
    %c0_169 = arith.constant 0 : index
    %c28_170 = arith.constant 28 : index
    %287 = vector.load %arg14[%c0_169, %c28_170] : memref<8x128xf32, #tpu.memory_space<vmem>>, vector<8x4xf32>
    %288 = vector.broadcast %274 : vector<8x1xf32> to vector<8x4xf32>
    %289 = arith.mulf %288, %287 : vector<8x4xf32>
    %290 = arith.truncf %277 : vector<8x8xf32> to vector<8x8xbf16>
    %cst_171 = arith.constant dense<0.000000e+00> : vector<8x4xf32>
    %291 = tpu.matmul %290, %264, %cst_171 {dimension_numbers = #tpu.dot_dimension_numbers<[1], [0], [0], [1], [0, 0, 1, 1], [], []>} : vector<8x8xbf16>, vector<8x4xbf16>, vector<8x4xf32> -> vector<8x4xf32>
    %292 = arith.addf %289, %291 : vector<8x4xf32>
    %c0_172 = arith.constant 0 : index
    %c28_173 = arith.constant 28 : index
    %293 = vector.load %arg14[%c0_172, %c28_173] : memref<8x128xf32, #tpu.memory_space<vmem>>, vector<8x4xf32>
    tpu.vector_store %arg14[%c0_172, %c28_173], %292 {strides = array<i32>} : memref<8x128xf32, #tpu.memory_space<vmem>>, vector<8x4xf32>,
    %c7_174 = arith.constant 7 : index
    %c0_175 = arith.constant 0 : index
    %c0_176 = arith.constant 0 : index
    %294 = vector.load %arg15[%c7_174, %c0_175, %c0_176] : memref<8x8x1xf32, #tpu.memory_space<vmem>>, vector<1x8x1xf32>
    %295 = vector.shape_cast %294 : vector<1x8x1xf32> to vector<8x1xf32>
    %296 = vector.shape_cast %272 : vector<8x1xf32> to vector<1x8x1xf32>
    tpu.vector_store %arg15[%c7_174, %c0_175, %c0_176], %296 {strides = array<i32>} : memref<8x8x1xf32, #tpu.memory_space<vmem>>, vector<1x8x1xf32>,
    %c1_i32 = arith.constant 1 : i32
    %297 = arith.cmpi eq, %arg2, %c1_i32 : i32
    %298 = arith.extui %297 : i1 to i32
    %c0_i32_177 = arith.constant 0 : i32
    %299 = arith.cmpi ne, %298, %c0_i32_177 : i32
    scf.if %299 {
      %c0_178 = arith.constant 0 : index
      %c0_179 = arith.constant 0 : index
      %c0_180 = arith.constant 0 : index
      %300 = vector.load %arg16[%c0_178, %c0_179, %c0_180] : memref<8x8x1xf32, #tpu.memory_space<vmem>>, vector<1x8x1xf32>
      %301 = vector.shape_cast %300 : vector<1x8x1xf32> to vector<8x1xf32>
      %302 = tpu.reciprocal %301 {approx = true} : vector<8x1xf32> -> vector<8x1xf32>
      %c0_181 = arith.constant 0 : index
      %c0_182 = arith.constant 0 : index
      %303 = vector.load %arg14[%c0_181, %c0_182] : memref<8x128xf32, #tpu.memory_space<vmem>>, vector<8x4xf32>
      %304 = vector.broadcast %302 : vector<8x1xf32> to vector<8x4xf32>
      %305 = arith.mulf %303, %304 : vector<8x4xf32>
      %c0_183 = arith.constant 0 : index
      %c0_184 = arith.constant 0 : index
      %306 = vector.load %arg14[%c0_183, %c0_184] : memref<8x128xf32, #tpu.memory_space<vmem>>, vector<8x4xf32>
      tpu.vector_store %arg14[%c0_183, %c0_184], %305 {strides = array<i32>} : memref<8x128xf32, #tpu.memory_space<vmem>>, vector<8x4xf32>,
      %c1_185 = arith.constant 1 : index
      %c0_186 = arith.constant 0 : index
      %c0_187 = arith.constant 0 : index
      %307 = vector.load %arg16[%c1_185, %c0_186, %c0_187] : memref<8x8x1xf32, #tpu.memory_space<vmem>>, vector<1x8x1xf32>
      %308 = vector.shape_cast %307 : vector<1x8x1xf32> to vector<8x1xf32>
      %309 = tpu.reciprocal %308 {approx = true} : vector<8x1xf32> -> vector<8x1xf32>
      %c0_188 = arith.constant 0 : index
      %c4_189 = arith.constant 4 : index
      %310 = vector.load %arg14[%c0_188, %c4_189] : memref<8x128xf32, #tpu.memory_space<vmem>>, vector<8x4xf32>
      %311 = vector.broadcast %309 : vector<8x1xf32> to vector<8x4xf32>
      %312 = arith.mulf %310, %311 : vector<8x4xf32>
      %c0_190 = arith.constant 0 : index
      %c4_191 = arith.constant 4 : index
      %313 = vector.load %arg14[%c0_190, %c4_191] : memref<8x128xf32, #tpu.memory_space<vmem>>, vector<8x4xf32>
      tpu.vector_store %arg14[%c0_190, %c4_191], %312 {strides = array<i32>} : memref<8x128xf32, #tpu.memory_space<vmem>>, vector<8x4xf32>,
      %c2_192 = arith.constant 2 : index
      %c0_193 = arith.constant 0 : index
      %c0_194 = arith.constant 0 : index
      %314 = vector.load %arg16[%c2_192, %c0_193, %c0_194] : memref<8x8x1xf32, #tpu.memory_space<vmem>>, vector<1x8x1xf32>
      %315 = vector.shape_cast %314 : vector<1x8x1xf32> to vector<8x1xf32>
      %316 = tpu.reciprocal %315 {approx = true} : vector<8x1xf32> -> vector<8x1xf32>
      %c0_195 = arith.constant 0 : index
      %c8_196 = arith.constant 8 : index
      %317 = vector.load %arg14[%c0_195, %c8_196] : memref<8x128xf32, #tpu.memory_space<vmem>>, vector<8x4xf32>
      %318 = vector.broadcast %316 : vector<8x1xf32> to vector<8x4xf32>
      %319 = arith.mulf %317, %318 : vector<8x4xf32>
      %c0_197 = arith.constant 0 : index
      %c8_198 = arith.constant 8 : index
      %320 = vector.load %arg14[%c0_197, %c8_198] : memref<8x128xf32, #tpu.memory_space<vmem>>, vector<8x4xf32>
      tpu.vector_store %arg14[%c0_197, %c8_198], %319 {strides = array<i32>} : memref<8x128xf32, #tpu.memory_space<vmem>>, vector<8x4xf32>,
      %c3_199 = arith.constant 3 : index
      %c0_200 = arith.constant 0 : index
      %c0_201 = arith.constant 0 : index
      %321 = vector.load %arg16[%c3_199, %c0_200, %c0_201] : memref<8x8x1xf32, #tpu.memory_space<vmem>>, vector<1x8x1xf32>
      %322 = vector.shape_cast %321 : vector<1x8x1xf32> to vector<8x1xf32>
      %323 = tpu.reciprocal %322 {approx = true} : vector<8x1xf32> -> vector<8x1xf32>
      %c0_202 = arith.constant 0 : index
      %c12_203 = arith.constant 12 : index
      %324 = vector.load %arg14[%c0_202, %c12_203] : memref<8x128xf32, #tpu.memory_space<vmem>>, vector<8x4xf32>
      %325 = vector.broadcast %323 : vector<8x1xf32> to vector<8x4xf32>
      %326 = arith.mulf %324, %325 : vector<8x4xf32>
      %c0_204 = arith.constant 0 : index
      %c12_205 = arith.constant 12 : index
      %327 = vector.load %arg14[%c0_204, %c12_205] : memref<8x128xf32, #tpu.memory_space<vmem>>, vector<8x4xf32>
      tpu.vector_store %arg14[%c0_204, %c12_205], %326 {strides = array<i32>} : memref<8x128xf32, #tpu.memory_space<vmem>>, vector<8x4xf32>,
      %c4_206 = arith.constant 4 : index
      %c0_207 = arith.constant 0 : index
      %c0_208 = arith.constant 0 : index
      %328 = vector.load %arg16[%c4_206, %c0_207, %c0_208] : memref<8x8x1xf32, #tpu.memory_space<vmem>>, vector<1x8x1xf32>
      %329 = vector.shape_cast %328 : vector<1x8x1xf32> to vector<8x1xf32>
      %330 = tpu.reciprocal %329 {approx = true} : vector<8x1xf32> -> vector<8x1xf32>
      %c0_209 = arith.constant 0 : index
      %c16_210 = arith.constant 16 : index
      %331 = vector.load %arg14[%c0_209, %c16_210] : memref<8x128xf32, #tpu.memory_space<vmem>>, vector<8x4xf32>
      %332 = vector.broadcast %330 : vector<8x1xf32> to vector<8x4xf32>
      %333 = arith.mulf %331, %332 : vector<8x4xf32>
      %c0_211 = arith.constant 0 : index
      %c16_212 = arith.constant 16 : index
      %334 = vector.load %arg14[%c0_211, %c16_212] : memref<8x128xf32, #tpu.memory_space<vmem>>, vector<8x4xf32>
      tpu.vector_store %arg14[%c0_211, %c16_212], %333 {strides = array<i32>} : memref<8x128xf32, #tpu.memory_space<vmem>>, vector<8x4xf32>,
      %c5_213 = arith.constant 5 : index
      %c0_214 = arith.constant 0 : index
      %c0_215 = arith.constant 0 : index
      %335 = vector.load %arg16[%c5_213, %c0_214, %c0_215] : memref<8x8x1xf32, #tpu.memory_space<vmem>>, vector<1x8x1xf32>
      %336 = vector.shape_cast %335 : vector<1x8x1xf32> to vector<8x1xf32>
      %337 = tpu.reciprocal %336 {approx = true} : vector<8x1xf32> -> vector<8x1xf32>
      %c0_216 = arith.constant 0 : index
      %c20_217 = arith.constant 20 : index
      %338 = vector.load %arg14[%c0_216, %c20_217] : memref<8x128xf32, #tpu.memory_space<vmem>>, vector<8x4xf32>
      %339 = vector.broadcast %337 : vector<8x1xf32> to vector<8x4xf32>
      %340 = arith.mulf %338, %339 : vector<8x4xf32>
      %c0_218 = arith.constant 0 : index
      %c20_219 = arith.constant 20 : index
      %341 = vector.load %arg14[%c0_218, %c20_219] : memref<8x128xf32, #tpu.memory_space<vmem>>, vector<8x4xf32>
      tpu.vector_store %arg14[%c0_218, %c20_219], %340 {strides = array<i32>} : memref<8x128xf32, #tpu.memory_space<vmem>>, vector<8x4xf32>,
      %c6_220 = arith.constant 6 : index
      %c0_221 = arith.constant 0 : index
      %c0_222 = arith.constant 0 : index
      %342 = vector.load %arg16[%c6_220, %c0_221, %c0_222] : memref<8x8x1xf32, #tpu.memory_space<vmem>>, vector<1x8x1xf32>
      %343 = vector.shape_cast %342 : vector<1x8x1xf32> to vector<8x1xf32>
      %344 = tpu.reciprocal %343 {approx = true} : vector<8x1xf32> -> vector<8x1xf32>
      %c0_223 = arith.constant 0 : index
      %c24_224 = arith.constant 24 : index
      %345 = vector.load %arg14[%c0_223, %c24_224] : memref<8x128xf32, #tpu.memory_space<vmem>>, vector<8x4xf32>
      %346 = vector.broadcast %344 : vector<8x1xf32> to vector<8x4xf32>
      %347 = arith.mulf %345, %346 : vector<8x4xf32>
      %c0_225 = arith.constant 0 : index
      %c24_226 = arith.constant 24 : index
      %348 = vector.load %arg14[%c0_225, %c24_226] : memref<8x128xf32, #tpu.memory_space<vmem>>, vector<8x4xf32>
      tpu.vector_store %arg14[%c0_225, %c24_226], %347 {strides = array<i32>} : memref<8x128xf32, #tpu.memory_space<vmem>>, vector<8x4xf32>,
      %c7_227 = arith.constant 7 : index
      %c0_228 = arith.constant 0 : index
      %c0_229 = arith.constant 0 : index
      %349 = vector.load %arg16[%c7_227, %c0_228, %c0_229] : memref<8x8x1xf32, #tpu.memory_space<vmem>>, vector<1x8x1xf32>
      %350 = vector.shape_cast %349 : vector<1x8x1xf32> to vector<8x1xf32>
      %351 = tpu.reciprocal %350 {approx = true} : vector<8x1xf32> -> vector<8x1xf32>
      %c0_230 = arith.constant 0 : index
      %c28_231 = arith.constant 28 : index
      %352 = vector.load %arg14[%c0_230, %c28_231] : memref<8x128xf32, #tpu.memory_space<vmem>>, vector<8x4xf32>
      %353 = vector.broadcast %351 : vector<8x1xf32> to vector<8x4xf32>
      %354 = arith.mulf %352, %353 : vector<8x4xf32>
      %c0_232 = arith.constant 0 : index
      %c28_233 = arith.constant 28 : index
      %355 = vector.load %arg14[%c0_232, %c28_233] : memref<8x128xf32, #tpu.memory_space<vmem>>, vector<8x4xf32>
      tpu.vector_store %arg14[%c0_232, %c28_233], %354 {strides = array<i32>} : memref<8x128xf32, #tpu.memory_space<vmem>>, vector<8x4xf32>,
      %c0_234 = arith.constant 0 : index
      %c0_235 = arith.constant 0 : index
      %356 = vector.load %arg14[%c0_234, %c0_235] : memref<8x128xf32, #tpu.memory_space<vmem>>, vector<8x128xf32>
      %357 = arith.truncf %356 : vector<8x128xf32> to vector<8x128xbf16>
      %c0_236 = arith.constant 0 : index
      %c0_237 = arith.constant 0 : index
      %358 = vector.load %arg10[%c0_236, %c0_237] : memref<128x128xbf16, #tpu.memory_space<vmem>>, vector<128x128xbf16>
      %cst_238 = arith.constant dense<0.000000e+00> : vector<8x128xf32>
      %359 = tpu.matmul %357, %358, %cst_238 {dimension_numbers = #tpu.dot_dimension_numbers<[1], [0], [0], [1], [0, 0, 1, 1], [], []>} : vector<8x128xbf16>, vector<128x128xbf16>, vector<8x128xf32> -> vector<8x128xf32>
      %c0_239 = arith.constant 0 : index
      %c0_240 = arith.constant 0 : index
      %360 = vector.load %arg11[%c0_239, %c0_240] : memref<1x128xf32, #tpu.memory_space<vmem>>, vector<1x128xf32>
      %361 = vector.broadcast %360 : vector<1x128xf32> to vector<8x128xf32>
      %362 = arith.addf %359, %361 : vector<8x128xf32>
      %363 = vector.shape_cast %362 : vector<8x128xf32> to vector<1x8x128xf32>
      %c0_241 = arith.constant 0 : index
      %c0_242 = arith.constant 0 : index
      %c0_243 = arith.constant 0 : index
      %364 = vector.load %arg12[%c0_241, %c0_242, %c0_243] : memref<1x8x128xf32, #tpu.memory_space<vmem>>, vector<1x8x128xf32>
      tpu.vector_store %arg12[%c0_241, %c0_242, %c0_243], %363 {strides = array<i32>} : memref<1x8x128xf32, #tpu.memory_space<vmem>>, vector<1x8x128xf32>,
    } else {
    }
    return
  }
  func.func @transform_0(%arg0: i32, %arg1: i32, %arg2: i32) -> (i32, i32, i32) {
    %c0_i32 = arith.constant 0 : i32
    %c0_i32_0 = arith.constant 0 : i32
    return %arg0, %arg1, %c0_i32 : i32, i32, i32
  }
  func.func @transform_1(%arg0: i32, %arg1: i32, %arg2: i32) -> (i32, i32, i32) {
    %c0_i32 = arith.constant 0 : i32
    %c0_i32_0 = arith.constant 0 : i32
    return %arg0, %arg2, %c0_i32 : i32, i32, i32
  }
  func.func @transform_2(%arg0: i32, %arg1: i32, %arg2: i32) -> (i32, i32, i32) {
    %c0_i32 = arith.constant 0 : i32
    %c0_i32_0 = arith.constant 0 : i32
    return %arg0, %arg2, %c0_i32 : i32, i32, i32
  }
  func.func @transform_3(%arg0: i32, %arg1: i32, %arg2: i32) -> (i32, i32, i32) {
    %c0_i32 = arith.constant 0 : i32
    %c0_i32_0 = arith.constant 0 : i32
    return %arg0, %arg1, %c0_i32 : i32, i32, i32
  }
  func.func @transform_4(%arg0: i32, %arg1: i32, %arg2: i32) -> (i32, i32) {
    %c0_i32 = arith.constant 0 : i32
    %c0_i32_0 = arith.constant 0 : i32
    %c0_i32_1 = arith.constant 0 : i32
    return %c0_i32, %c0_i32_0 : i32, i32
  }
  func.func @transform_5(%arg0: i32, %arg1: i32, %arg2: i32) -> (i32, i32) {
    %c0_i32 = arith.constant 0 : i32
    %c0_i32_0 = arith.constant 0 : i32
    %c0_i32_1 = arith.constant 0 : i32
    return %c0_i32, %c0_i32_0 : i32, i32
  }
  func.func @transform_6(%arg0: i32, %arg1: i32, %arg2: i32) -> (i32, i32) {
    %c0_i32 = arith.constant 0 : i32
    %c0_i32_0 = arith.constant 0 : i32
    %c0_i32_1 = arith.constant 0 : i32
    return %c0_i32, %c0_i32_0 : i32, i32
  }
  func.func @transform_7(%arg0: i32, %arg1: i32, %arg2: i32) -> (i32, i32) {
    %c0_i32 = arith.constant 0 : i32
    %c0_i32_0 = arith.constant 0 : i32
    %c0_i32_1 = arith.constant 0 : i32
    return %c0_i32, %c0_i32_0 : i32, i32
  }
  func.func @transform_8(%arg0: i32, %arg1: i32, %arg2: i32) -> (i32, i32) {
    %c0_i32 = arith.constant 0 : i32
    %c0_i32_0 = arith.constant 0 : i32
    %c0_i32_1 = arith.constant 0 : i32
    return %c0_i32, %c0_i32_0 : i32, i32
  }
  func.func @transform_9(%arg0: i32, %arg1: i32, %arg2: i32) -> (i32, i32, i32) {
    %c0_i32 = arith.constant 0 : i32
    %c0_i32_0 = arith.constant 0 : i32
    return %arg0, %arg1, %c0_i32 : i32, i32, i32
  }
}

</mosaic_0001>

<llo_original>
// kernel: tpu_custom_call.1
$region0: #{tpu_custom_call.1}
  #allocation0 [shape = 'u32[]', space=smem, size = 0x4, offset = 0x4, fixed_abs, tag = 'smem constant byte address 0x4 - core index']
  #allocation1 [shape = 'u32[144,128]{1,0:T(1,128)}', space=vmem, size = 0x12000, scoped, tag = 'internal scratch']
  #allocation2 [shape = 'bf16[8,128]{1,0:T(8,128)(2,1)}', space=vmem, size = 0x800, scoped, tag = 'scratch operand']
  #allocation3 [shape = 'f32[8,128]{1,0:T(8,128)}', space=vmem, size = 0x1000, scoped, tag = 'scratch operand']
  #allocation4 [shape = 'f32[8,8,1]{2,1,0:T(8,128)}', space=vmem, size = 0x8000, scoped, tag = 'scratch operand']
  #allocation5 [shape = 'f32[8,8,1]{2,1,0:T(8,128)}', space=vmem, size = 0x8000, scoped, tag = 'scratch operand']
  %s0 = inlined_call_operand.vmem [shape: f32[2,16,128], index: 0, kind: input, shape index: {}]
  %s1 = inlined_call_operand.hbm [shape: f32[2,16,128], index: 1, kind: input, shape index: {}]
  %s2 = inlined_call_operand.hbm [shape: f32[2,16,128], index: 2, kind: input, shape index: {}]
  %s3 = inlined_call_operand.vmem [shape: f32[2,16,1], index: 3, kind: input, shape index: {}]
  %s4 = inlined_call_operand.hbm [shape: bf16[128,128], index: 4, kind: input, shape index: {}]
  %s5 = inlined_call_operand.hbm [shape: bf16[128,128], index: 5, kind: input, shape index: {}]
  %s6 = inlined_call_operand.hbm [shape: bf16[128,128], index: 6, kind: input, shape index: {}]
  %s7 = inlined_call_operand.hbm [shape: bf16[128,128], index: 7, kind: input, shape index: {}]
  %s8 = inlined_call_operand.vmem [shape: f32[1,128], index: 8, kind: input, shape index: {}]
  %s9 = inlined_call_operand.hbm [shape: f32[2,16,128], index: 9, kind: output, shape index: {}]
  %s10 = sld [smem:[#allocation0]]
  $region101: #{tpu_custom_call.1} parent=0
    _
  %s12 = ssub.s32 1, %s10
  %s13 = scalar_select 0, %s12, %s10
  $region1: #{tpu_custom_call.1} parent=0
    #allocation6 [shape = 'u8[8192]{0}', space=vmem, size = 0x2000, scoped, tag = 'input window, operand 1']
    #allocation7 [shape = 's32[2]{0}', space=sflag, size = 0x8, scoped, tag = 'scoped memory for tpu_custom_call.1']
    #allocation8 [shape = 's32[2]{0}', space=sflag, size = 0x8, scoped, tag = 'scoped memory for tpu_custom_call.1']
    #allocation9 [shape = 'u8[8192]{0}', space=vmem, size = 0x2000, scoped, tag = 'input window, operand 2']
    #allocation10 [shape = 's32[2]{0}', space=sflag, size = 0x8, scoped, tag = 'scoped memory for tpu_custom_call.1']
    #allocation11 [shape = 'u8[32768]{0}', space=vmem, size = 0x8000, scoped, tag = 'input window, operand 4, single buffered']
    #allocation12 [shape = 'u8[32768]{0}', space=vmem, size = 0x8000, scoped, tag = 'input window, operand 5, single buffered']
    #allocation13 [shape = 's32[1]{0}', space=sflag, size = 0x4, scoped, tag = 'scoped memory for tpu_custom_call.1']
    #allocation14 [shape = 'u8[32768]{0}', space=vmem, size = 0x8000, scoped, tag = 'input window, operand 6, single buffered']
    #allocation15 [shape = 'u8[32768]{0}', space=vmem, size = 0x8000, scoped, tag = 'input window, operand 7, single buffered']
    #allocation16 [shape = 's32[1]{0}', space=sflag, size = 0x4, scoped, tag = 'scoped memory for tpu_custom_call.1']
    #allocation17 [shape = 'u8[8192]{0}', space=vmem, size = 0x2000, scoped, tag = 'output window, operand 0']
    %14 = vsyncpa [#allocation7], 0
    %s15 = scalar_lea.sflag [#allocation7], 1
    %16 = vsyncpa %s15, 0
    %17 = vsyncpa [#allocation10], 0
    %s18 = scalar_lea.sflag [#allocation10], 1
    %19 = vsyncpa %s18, 0
    %20 = vsyncpa [#allocation13], 0
    %21 = vsyncpa [#allocation16], 0
    %22 = vsyncpa [#allocation8], 0
    %s23 = scalar_lea.sflag [#allocation8], 1
    %24 = vsyncpa %s23, 0
    loop: start=0, step=1, limit=10
    $region2: #{tpu_custom_call.1} parent=1 // loop_pre_header
      _
    $region3: #{tpu_custom_call.1} parent=1 // loop_header
      %s26 = sphi 0, %s30
      %p27 = scmp.ge.s32.totalorder %s26, 10
      %s33 = sphi 0, %s52
      %s34 = sphi 0, %s48
      %s35 = sphi 0, %s44
      %s36 = sphi 0, %s33
      %s37 = sphi 0, %s34
      %s38 = sphi 0, %s35
      %s39 = sphi 0, %s36
      %s40 = sphi 0, %s37
      %s41 = sphi 0, %s38
      %s57 = sphi 0, %s59
      %s60 = sphi 0, %s57
      %s61 = sphi 0, %s60
      %s77 = sphi 0, %s61
      %s85 = sphi 0, %s87
      %s88 = sphi 0, %s85
      %s89 = sphi 0, %s88
      %s105 = sphi 0, %s89
      %s113 = sphi 0, %s115
      %s116 = sphi 0, %s113
      %s117 = sphi 0, %s116
      %s133 = sphi 0, %s117
      %s141 = sphi 0, %s143
      %s144 = sphi 0, %s141
      %s145 = sphi 0, %s144
      %s161 = sphi 0, %s145
      %s165 = sphi 0, %s165
      %s167 = sphi 0, %s165
      %s168 = sphi 0, %s167
      %s182 = sphi 0, %s168
      %s186 = sphi 0, %s186
      %s188 = sphi 0, %s186
      %s189 = sphi 0, %s188
      %s203 = sphi 0, %s189
      %s207 = sphi 0, %s207
      %s209 = sphi 0, %s207
      %s210 = sphi 0, %s209
      %s224 = sphi 0, %s210
      %s228 = sphi 0, %s228
      %s230 = sphi 0, %s228
      %s231 = sphi 0, %s230
      %s245 = sphi 0, %s231
      %s249 = sphi 0, %s249
      %s251 = sphi 0, %s249
      %s252 = sphi 0, %s251
      %s266 = sphi 0, %s252
      %s274 = sphi 0, %s276
      %s277 = sphi 0, %s274
      %s278 = sphi 0, %s277
      %s294 = sphi 0, %s278
    $region4: #{tpu_custom_call.1} parent=1 // loop_header_branch
      %29 = sbr.rel (%p27) target = $region8
    $region5: #{tpu_custom_call.1} parent=1 // loop_body
      %s31 = ssub.s32 %s26, 1
      %s32 = ssub.s32 %s26, 2
      %s42 = sadd.s32 1, %s35
      %p43 = scmp.ge.s32.totalorder %s42, 2
      %s44 = scalar_select %p43, 0, %s42
      %s45 = sadd.s32 1, %s34
      %s46 = scalar_select %p43, %s45, %s34
      %p47 = scmp.ge.s32.totalorder %s46, 2
      %s48 = scalar_select %p47, 0, %s46
      %s49 = sadd.s32 1, %s33
      %s50 = scalar_select %p47, %s49, %s33
      %p51 = scmp.ge.s32.totalorder %s50, 2
      %s52 = scalar_select %p51, 0, %s50
      %s53 = ssub.s32 %s33, %s52
      %s54 = ssub.s32 %s34, %s48
      %s55 = sor.u32 %s53, %s54
      %p56 = scmp.eq.s32.totalorder %s55, 0
      %s58 = sadd.s32 %s57, 1
      %s59 = scalar_select %p56, %s57, %s58
      %p62 = pneg %p56
      %p63 = scmp.eq.s32.totalorder %s26, 7
      %p64 = por %p62, %p63
      %p65 = scmp.ne.s32.totalorder %s57, %s60
      %p66 = scmp.eq.s32.totalorder %s26, 0
      %p67 = por %p65, %p66
      %p68 = scmp.ne.s32.totalorder %s57, %s60
      %p69 = scmp.eq.s32.totalorder %s31, 7
      %p70 = por %p68, %p69
      %p71 = scmp.ne.s32.totalorder %s60, %s61
      %p72 = scmp.eq.s32.totalorder %s31, 0
      %p73 = por %p71, %p72
      %p74 = scmp.ne.s32.totalorder %s60, %s61
      %p75 = scmp.eq.s32.totalorder %s32, 7
      %p76 = por %p74, %p75
      %p78 = scmp.ne.s32.totalorder %s61, %s77
      %p79 = scmp.eq.s32.totalorder %s32, 0
      %p80 = por %p78, %p79
      %s81 = ssub.s32 %s33, %s52
      %s82 = ssub.s32 %s35, %s44
      %s83 = sor.u32 %s81, %s82
      %p84 = scmp.eq.s32.totalorder %s83, 0
      %s86 = sadd.s32 %s85, 1
      %s87 = scalar_select %p84, %s85, %s86
      %p90 = pneg %p84
      %p91 = scmp.eq.s32.totalorder %s26, 7
      %p92 = por %p90, %p91
      %p93 = scmp.ne.s32.totalorder %s85, %s88
      %p94 = scmp.eq.s32.totalorder %s26, 0
      %p95 = por %p93, %p94
      %p96 = scmp.ne.s32.totalorder %s85, %s88
      %p97 = scmp.eq.s32.totalorder %s31, 7
      %p98 = por %p96, %p97
      %p99 = scmp.ne.s32.totalorder %s88, %s89
      %p100 = scmp.eq.s32.totalorder %s31, 0
      %p101 = por %p99, %p100
      %p102 = scmp.ne.s32.totalorder %s88, %s89
      %p103 = scmp.eq.s32.totalorder %s32, 7
      %p104 = por %p102, %p103
      %p106 = scmp.ne.s32.totalorder %s89, %s105
      %p107 = scmp.eq.s32.totalorder %s32, 0
      %p108 = por %p106, %p107
      %s109 = ssub.s32 %s33, %s52
      %s110 = ssub.s32 %s35, %s44
      %s111 = sor.u32 %s109, %s110
      %p112 = scmp.eq.s32.totalorder %s111, 0
      %s114 = sadd.s32 %s113, 1
      %s115 = scalar_select %p112, %s113, %s114
      %p118 = pneg %p112
      %p119 = scmp.eq.s32.totalorder %s26, 7
      %p120 = por %p118, %p119
      %p121 = scmp.ne.s32.totalorder %s113, %s116
      %p122 = scmp.eq.s32.totalorder %s26, 0
      %p123 = por %p121, %p122
      %p124 = scmp.ne.s32.totalorder %s113, %s116
      %p125 = scmp.eq.s32.totalorder %s31, 7
      %p126 = por %p124, %p125
      %p127 = scmp.ne.s32.totalorder %s116, %s117
      %p128 = scmp.eq.s32.totalorder %s31, 0
      %p129 = por %p127, %p128
      %p130 = scmp.ne.s32.totalorder %s116, %s117
      %p131 = scmp.eq.s32.totalorder %s32, 7
      %p132 = por %p130, %p131
      %p134 = scmp.ne.s32.totalorder %s117, %s133
      %p135 = scmp.eq.s32.totalorder %s32, 0
      %p136 = por %p134, %p135
      %s137 = ssub.s32 %s33, %s52
      %s138 = ssub.s32 %s34, %s48
      %s139 = sor.u32 %s137, %s138
      %p140 = scmp.eq.s32.totalorder %s139, 0
      %s142 = sadd.s32 %s141, 1
      %s143 = scalar_select %p140, %s141, %s142
      %p146 = pneg %p140
      %p147 = scmp.eq.s32.totalorder %s26, 7
      %p148 = por %p146, %p147
      %p149 = scmp.ne.s32.totalorder %s141, %s144
      %p150 = scmp.eq.s32.totalorder %s26, 0
      %p151 = por %p149, %p150
      %p152 = scmp.ne.s32.totalorder %s141, %s144
      %p153 = scmp.eq.s32.totalorder %s31, 7
      %p154 = por %p152, %p153
      %p155 = scmp.ne.s32.totalorder %s144, %s145
      %p156 = scmp.eq.s32.totalorder %s31, 0
      %p157 = por %p155, %p156
      %p158 = scmp.ne.s32.totalorder %s144, %s145
      %p159 = scmp.eq.s32.totalorder %s32, 7
      %p160 = por %p158, %p159
      %p162 = scmp.ne.s32.totalorder %s145, %s161
      %p163 = scmp.eq.s32.totalorder %s32, 0
      %p164 = por %p162, %p163
      %s166 = sadd.s32 %s165, 1
      %p169 = scmp.eq.s32.totalorder %s26, 7
      %p170 = scmp.ne.s32.totalorder %s165, %s167
      %p171 = scmp.eq.s32.totalorder %s26, 0
      %p172 = por %p170, %p171
      %p173 = scmp.ne.s32.totalorder %s165, %s167
      %p174 = scmp.eq.s32.totalorder %s31, 7
      %p175 = por %p173, %p174
      %p176 = scmp.ne.s32.totalorder %s167, %s168
      %p177 = scmp.eq.s32.totalorder %s31, 0
      %p178 = por %p176, %p177
      %p179 = scmp.ne.s32.totalorder %s167, %s168
      %p180 = scmp.eq.s32.totalorder %s32, 7
      %p181 = por %p179, %p180
      %p183 = scmp.ne.s32.totalorder %s168, %s182
      %p184 = scmp.eq.s32.totalorder %s32, 0
      %p185 = por %p183, %p184
      %s187 = sadd.s32 %s186, 1
      %p190 = scmp.eq.s32.totalorder %s26, 7
      %p191 = scmp.ne.s32.totalorder %s186, %s188
      %p192 = scmp.eq.s32.totalorder %s26, 0
      %p193 = por %p191, %p192
      %p194 = scmp.ne.s32.totalorder %s186, %s188
      %p195 = scmp.eq.s32.totalorder %s31, 7
      %p196 = por %p194, %p195
      %p197 = scmp.ne.s32.totalorder %s188, %s189
      %p198 = scmp.eq.s32.totalorder %s31, 0
      %p199 = por %p197, %p198
      %p200 = scmp.ne.s32.totalorder %s188, %s189
      %p201 = scmp.eq.s32.totalorder %s32, 7
      %p202 = por %p200, %p201
      %p204 = scmp.ne.s32.totalorder %s189, %s203
      %p205 = scmp.eq.s32.totalorder %s32, 0
      %p206 = por %p204, %p205
      %s208 = sadd.s32 %s207, 1
      %p211 = scmp.eq.s32.totalorder %s26, 7
      %p212 = scmp.ne.s32.totalorder %s207, %s209
      %p213 = scmp.eq.s32.totalorder %s26, 0
      %p214 = por %p212, %p213
      %p215 = scmp.ne.s32.totalorder %s207, %s209
      %p216 = scmp.eq.s32.totalorder %s31, 7
      %p217 = por %p215, %p216
      %p218 = scmp.ne.s32.totalorder %s209, %s210
      %p219 = scmp.eq.s32.totalorder %s31, 0
      %p220 = por %p218, %p219
      %p221 = scmp.ne.s32.totalorder %s209, %s210
      %p222 = scmp.eq.s32.totalorder %s32, 7
      %p223 = por %p221, %p222
      %p225 = scmp.ne.s32.totalorder %s210, %s224
      %p226 = scmp.eq.s32.totalorder %s32, 0
      %p227 = por %p225, %p226
      %s229 = sadd.s32 %s228, 1
      %p232 = scmp.eq.s32.totalorder %s26, 7
      %p233 = scmp.ne.s32.totalorder %s228, %s230
      %p234 = scmp.eq.s32.totalorder %s26, 0
      %p235 = por %p233, %p234
      %p236 = scmp.ne.s32.totalorder %s228, %s230
      %p237 = scmp.eq.s32.totalorder %s31, 7
      %p238 = por %p236, %p237
      %p239 = scmp.ne.s32.totalorder %s230, %s231
      %p240 = scmp.eq.s32.totalorder %s31, 0
      %p241 = por %p239, %p240
      %p242 = scmp.ne.s32.totalorder %s230, %s231
      %p243 = scmp.eq.s32.totalorder %s32, 7
      %p244 = por %p242, %p243
      %p246 = scmp.ne.s32.totalorder %s231, %s245
      %p247 = scmp.eq.s32.totalorder %s32, 0
      %p248 = por %p246, %p247
      %s250 = sadd.s32 %s249, 1
      %p253 = scmp.eq.s32.totalorder %s26, 7
      %p254 = scmp.ne.s32.totalorder %s249, %s251
      %p255 = scmp.eq.s32.totalorder %s26, 0
      %p256 = por %p254, %p255
      %p257 = scmp.ne.s32.totalorder %s249, %s251
      %p258 = scmp.eq.s32.totalorder %s31, 7
      %p259 = por %p257, %p258
      %p260 = scmp.ne.s32.totalorder %s251, %s252
      %p261 = scmp.eq.s32.totalorder %s31, 0
      %p262 = por %p260, %p261
      %p263 = scmp.ne.s32.totalorder %s251, %s252
      %p264 = scmp.eq.s32.totalorder %s32, 7
      %p265 = por %p263, %p264
      %p267 = scmp.ne.s32.totalorder %s252, %s266
      %p268 = scmp.eq.s32.totalorder %s32, 0
      %p269 = por %p267, %p268
      %s270 = ssub.s32 %s33, %s52
      %s271 = ssub.s32 %s34, %s48
      %s272 = sor.u32 %s270, %s271
      %p273 = scmp.eq.s32.totalorder %s272, 0
      %s275 = sadd.s32 %s274, 1
      %s276 = scalar_select %p273, %s274, %s275
      %p279 = pneg %p273
      %p280 = scmp.eq.s32.totalorder %s26, 7
      %p281 = por %p279, %p280
      %p282 = scmp.ne.s32.totalorder %s274, %s277
      %p283 = scmp.eq.s32.totalorder %s26, 0
      %p284 = por %p282, %p283
      %p285 = scmp.ne.s32.totalorder %s274, %s277
      %p286 = scmp.eq.s32.totalorder %s31, 7
      %p287 = por %p285, %p286
      %p288 = scmp.ne.s32.totalorder %s277, %s278
      %p289 = scmp.eq.s32.totalorder %s31, 0
      %p290 = por %p288, %p289
      %p291 = scmp.ne.s32.totalorder %s277, %s278
      %p292 = scmp.eq.s32.totalorder %s32, 7
      %p293 = por %p291, %p292
      %p295 = scmp.ne.s32.totalorder %s278, %s294
      %p296 = scmp.eq.s32.totalorder %s32, 0
      %p297 = por %p295, %p296
      %p298 = scmp.le.s32.totalorder 1, %s26
      %p299 = scmp.lt.s32.totalorder %s26, 9
      %p300 = pnand %p298, %p299
      %p301 = pneg %p300
      // Predicated region
      $region9: #{tpu_custom_call.1} parent=5 // pred_check
        _
      $region10: #{tpu_custom_call.1} parent=5 // pred_check_branch
        %303 = sbr.rel (%p300) target = $region12
      $region11: #{tpu_custom_call.1} parent=5 // pred_region
        %s304 = ssub.s32 %s26, 1
        // Predicated region
        $region13: #{tpu_custom_call.1} parent=11 // pred_check
          %p305 = pneg %p178
        $region14: #{tpu_custom_call.1} parent=11 // pred_check_branch
          %307 = sbr.rel (%p305) target = $region16
        $region15: #{tpu_custom_call.1} parent=11 // pred_region
          %s309 = ssub.s32 1024, 1024
          %310 = vsyncadd [#allocation10], %s309
          %s311 = sshll.u32 [#allocation11], 4
          %s312 = int_to_ptr.vmem [resolvable:$true] %s311
          %317 = dma.hbm_to_vmem [thread:$0]  %s4, 1024, %s312, [#allocation10], 64, 64, 4
        $region16: #{tpu_custom_call.1} parent=11 // pred_fallthru
          _
        // Predicated region
        $region17: #{tpu_custom_call.1} parent=11 // pred_check
          %p318 = pneg %p199
        $region18: #{tpu_custom_call.1} parent=11 // pred_check_branch
          %320 = sbr.rel (%p318) target = $region20
        $region19: #{tpu_custom_call.1} parent=11 // pred_region
          %s322 = ssub.s32 1024, 1024
          %323 = vsyncadd [#allocation13], %s322
          %s324 = sshll.u32 [#allocation12], 4
          %s325 = int_to_ptr.vmem [resolvable:$true] %s324
          %330 = dma.hbm_to_vmem [thread:$0]  %s5, 1024, %s325, [#allocation13], 64, 64, 4
        $region20: #{tpu_custom_call.1} parent=11 // pred_fallthru
          _
        // Predicated region
        $region21: #{tpu_custom_call.1} parent=11 // pred_check
          %p331 = pneg %p220
        $region22: #{tpu_custom_call.1} parent=11 // pred_check_branch
          %333 = sbr.rel (%p331) target = $region24
        $region23: #{tpu_custom_call.1} parent=11 // pred_region
          %s335 = ssub.s32 1024, 1024
          %336 = vsyncadd [#allocation13], %s335
          %s337 = sshll.u32 [#allocation14], 4
          %s338 = int_to_ptr.vmem [resolvable:$true] %s337
          %343 = dma.hbm_to_vmem [thread:$0]  %s6, 1024, %s338, [#allocation13], 64, 64, 4
        $region24: #{tpu_custom_call.1} parent=11 // pred_fallthru
          _
        // Predicated region
        $region25: #{tpu_custom_call.1} parent=11 // pred_check
          %p344 = pneg %p241
        $region26: #{tpu_custom_call.1} parent=11 // pred_check_branch
          %346 = sbr.rel (%p344) target = $region28
        $region27: #{tpu_custom_call.1} parent=11 // pred_region
          %s348 = ssub.s32 1024, 1024
          %349 = vsyncadd [#allocation16], %s348
          %s350 = sshll.u32 [#allocation15], 4
          %s351 = int_to_ptr.vmem [resolvable:$true] %s350
          %356 = dma.hbm_to_vmem [thread:$0]  %s7, 1024, %s351, [#allocation16], 64, 64, 4
        $region28: #{tpu_custom_call.1} parent=11 // pred_fallthru
          _
        // Predicated region
        $region29: #{tpu_custom_call.1} parent=11 // pred_check
          %p357 = pneg %p262
        $region30: #{tpu_custom_call.1} parent=11 // pred_check_branch
          %359 = sbr.rel (%p357) target = $region32
        $region31: #{tpu_custom_call.1} parent=11 // pred_region
          _
        $region32: #{tpu_custom_call.1} parent=11 // pred_fallthru
          _
      $region12: #{tpu_custom_call.1} parent=5 // pred_fallthru
        _
      %p360 = scmp.lt.s32.totalorder %s26, 8
      // Predicated region
      $region33: #{tpu_custom_call.1} parent=5 // pred_check
        %p361 = pneg %p360
      $region34: #{tpu_custom_call.1} parent=5 // pred_check_branch
        %363 = sbr.rel (%p361) target = $region36
      $region35: #{tpu_custom_call.1} parent=5 // pred_region
        // Predicated region
        $region37: #{tpu_custom_call.1} parent=35 // pred_check
          %p364 = pneg %p67
        $region38: #{tpu_custom_call.1} parent=35 // pred_check_branch
          %366 = sbr.rel (%p364) target = $region40
        $region39: #{tpu_custom_call.1} parent=35 // pred_region
          %p367 = scmp.lt.s32.totalorder %s33, 1
          %s368 = scalar_select %p367, %s33, 1
          %p369 = scmp.lt.s32.totalorder %s34, 1
          %s370 = scalar_select %p369, %s34, 1
          %s371 = smul.addr %s368, 2
          %s372 = sadd.s32 %s370, %s371
          %s373 = smul.addr %s372, 8
          %s374 = scalar_lea.vmem %s0, %s373
        $region40: #{tpu_custom_call.1} parent=35 // pred_fallthru
          _
        // Predicated region
        $region41: #{tpu_custom_call.1} parent=35 // pred_check
          %p375 = pneg %p95
        $region42: #{tpu_custom_call.1} parent=35 // pred_check_branch
          %377 = sbr.rel (%p375) target = $region44
        $region43: #{tpu_custom_call.1} parent=35 // pred_region
          %s378 = sand.u32 %s85, 1
          %s379 = scalar_lea.sflag [#allocation7], %s378
          %s380 = sand.u32 %s85, 1
          %s381 = smul.addr %s380, 8
          %s382 = scalar_lea.vmem [#allocation6], %s381
          %s384 = ssub.s32 128, 128
          %385 = vsyncadd %s379, %s384
          %s386 = smul.addr %s33, 2
          %s387 = sadd.s32 %s35, %s386
          %s388 = smul.addr %s387, 128
          %s389 = scalar_lea.hbm %s1, %s388
          %s391 = sshll.u32 %s382, 4
          %s392 = int_to_ptr.vmem [resolvable:$true] %s391
          %394 = dma.hbm_to_vmem [thread:$0]  %s389, 128, %s392, %s379
        $region44: #{tpu_custom_call.1} parent=35 // pred_fallthru
          _
        // Predicated region
        $region45: #{tpu_custom_call.1} parent=35 // pred_check
          %p395 = pneg %p123
        $region46: #{tpu_custom_call.1} parent=35 // pred_check_branch
          %397 = sbr.rel (%p395) target = $region48
        $region47: #{tpu_custom_call.1} parent=35 // pred_region
          %s398 = sand.u32 %s26, 1
          %s399 = scalar_lea.sflag [#allocation10], %s398
          %s400 = sand.u32 %s113, 1
          %s401 = smul.addr %s400, 8
          %s402 = scalar_lea.vmem [#allocation9], %s401
          %s404 = ssub.s32 128, 128
          %405 = vsyncadd %s399, %s404
          %s406 = smul.addr %s33, 2
          %s407 = sadd.s32 %s35, %s406
          %s408 = smul.addr %s407, 128
          %s409 = scalar_lea.hbm %s2, %s408
          %s411 = sshll.u32 %s402, 4
          %s412 = int_to_ptr.vmem [resolvable:$true] %s411
          %414 = dma.hbm_to_vmem [thread:$0]  %s409, 128, %s412, %s399
        $region48: #{tpu_custom_call.1} parent=35 // pred_fallthru
          _
        // Predicated region
        $region49: #{tpu_custom_call.1} parent=35 // pred_check
          %p415 = pneg %p151
        $region50: #{tpu_custom_call.1} parent=35 // pred_check_branch
          %417 = sbr.rel (%p415) target = $region52
        $region51: #{tpu_custom_call.1} parent=35 // pred_region
          %p418 = scmp.lt.s32.totalorder %s33, 1
          %s419 = scalar_select %p418, %s33, 1
          %p420 = scmp.lt.s32.totalorder %s34, 1
          %s421 = scalar_select %p420, %s34, 1
          %s422 = smul.addr %s419, 2
          %s423 = sadd.s32 %s421, %s422
          %s424 = smul.addr %s423, 8
          %s425 = scalar_lea.vmem %s3, %s424
        $region52: #{tpu_custom_call.1} parent=35 // pred_fallthru
          _
      $region36: #{tpu_custom_call.1} parent=5 // pred_fallthru
        _
      %p426 = scmp.le.s32.totalorder 1, %s26
      %p427 = scmp.lt.s32.totalorder %s26, 9
      %p428 = pnand %p426, %p427
      %p429 = pneg %p428
      // Predicated region
      $region53: #{tpu_custom_call.1} parent=5 // pred_check
        _
      $region54: #{tpu_custom_call.1} parent=5 // pred_check_branch
        %431 = sbr.rel (%p428) target = $region56
      $region55: #{tpu_custom_call.1} parent=5 // pred_region
        %s432 = ssub.s32 %s26, 1
        %s433 = sand.u32 %s88, 1
        %s434 = scalar_lea.sflag [#allocation7], %s433
        %s435 = sand.u32 %s88, 1
        %s436 = smul.addr %s435, 8
        %s437 = scalar_lea.vmem [#allocation6], %s436
        // Predicated region
        $region57: #{tpu_custom_call.1} parent=55 // pred_check
          %p438 = pneg %p101
        $region58: #{tpu_custom_call.1} parent=55 // pred_check_branch
          %440 = sbr.rel (%p438) target = $region60
        $region59: #{tpu_custom_call.1} parent=55 // pred_region
          %441 = dma.done %s434, 128
        $region60: #{tpu_custom_call.1} parent=55 // pred_fallthru
          _
        %s442 = sand.u32 %s31, 1
        %s443 = scalar_lea.sflag [#allocation10], %s442
        %s444 = sand.u32 %s116, 1
        %s445 = smul.addr %s444, 8
        %s446 = scalar_lea.vmem [#allocation9], %s445
        // Predicated region
        $region61: #{tpu_custom_call.1} parent=55 // pred_check
          %p447 = pneg %p129
        $region62: #{tpu_custom_call.1} parent=55 // pred_check_branch
          %449 = sbr.rel (%p447) target = $region64
        $region63: #{tpu_custom_call.1} parent=55 // pred_region
          %450 = dma.done %s443, 128
        $region64: #{tpu_custom_call.1} parent=55 // pred_fallthru
          _
        // Predicated region
        $region65: #{tpu_custom_call.1} parent=55 // pred_check
          %p451 = pneg %p178
        $region66: #{tpu_custom_call.1} parent=55 // pred_check_branch
          %453 = sbr.rel (%p451) target = $region68
        $region67: #{tpu_custom_call.1} parent=55 // pred_region
          %454 = dma.done [#allocation10], 1024
        $region68: #{tpu_custom_call.1} parent=55 // pred_fallthru
          _
        // Predicated region
        $region69: #{tpu_custom_call.1} parent=55 // pred_check
          %p455 = pneg %p199
        $region70: #{tpu_custom_call.1} parent=55 // pred_check_branch
          %457 = sbr.rel (%p455) target = $region72
        $region71: #{tpu_custom_call.1} parent=55 // pred_region
          %458 = dma.done [#allocation13], 1024
        $region72: #{tpu_custom_call.1} parent=55 // pred_fallthru
          _
        // Predicated region
        $region73: #{tpu_custom_call.1} parent=55 // pred_check
          %p459 = pneg %p220
        $region74: #{tpu_custom_call.1} parent=55 // pred_check_branch
          %461 = sbr.rel (%p459) target = $region76
        $region75: #{tpu_custom_call.1} parent=55 // pred_region
          %462 = dma.done [#allocation13], 1024
        $region76: #{tpu_custom_call.1} parent=55 // pred_fallthru
          _
        // Predicated region
        $region77: #{tpu_custom_call.1} parent=55 // pred_check
          %p463 = pneg %p241
        $region78: #{tpu_custom_call.1} parent=55 // pred_check_branch
          %465 = sbr.rel (%p463) target = $region80
        $region79: #{tpu_custom_call.1} parent=55 // pred_region
          %466 = dma.done [#allocation16], 1024
        $region80: #{tpu_custom_call.1} parent=55 // pred_fallthru
          _
        %p467 = scmp.lt.s32.totalorder %s36, 1
        %s468 = scalar_select %p467, %s36, 1
        %p469 = scmp.lt.s32.totalorder %s37, 1
        %s470 = scalar_select %p469, %s37, 1
        %s471 = smul.addr %s468, 2
        %s472 = sadd.s32 %s470, %s471
        %s473 = smul.addr %s472, 8
        %s474 = scalar_lea.vmem %s0, %s473
        %p475 = pneg %p73
        %p476 = pneg %p70
        %s477 = sand.u32 %s88, 1
        %s478 = scalar_lea.sflag [#allocation7], %s477
        %s479 = sand.u32 %s88, 1
        %s480 = smul.addr %s479, 8
        %s481 = scalar_lea.vmem [#allocation6], %s480
        %p482 = pneg %p101
        %p483 = pneg %p98
        %s484 = sand.u32 %s31, 1
        %s485 = scalar_lea.sflag [#allocation10], %s484
        %s486 = sand.u32 %s116, 1
        %s487 = smul.addr %s486, 8
        %s488 = scalar_lea.vmem [#allocation9], %s487
        %p489 = pneg %p129
        %p490 = pneg %p126
        %p491 = scmp.lt.s32.totalorder %s36, 1
        %s492 = scalar_select %p491, %s36, 1
        %p493 = scmp.lt.s32.totalorder %s37, 1
        %s494 = scalar_select %p493, %s37, 1
        %s495 = smul.addr %s492, 2
        %s496 = sadd.s32 %s494, %s495
        %s497 = smul.addr %s496, 8
        %s498 = scalar_lea.vmem %s3, %s497
        %p499 = pneg %p157
        %p500 = pneg %p154
        %p501 = pneg %p178
        %p502 = pneg %p175
        %p503 = pneg %p199
        %p504 = pneg %p196
        %p505 = pneg %p220
        %p506 = pneg %p217
        %p507 = pneg %p241
        %p508 = pneg %p238
        %p509 = pneg %p262
        %p510 = pneg %p259
        %p511 = pneg %p290
        %p512 = pneg %p287
        %s513 = sand.u32 %s277, 1
        %s514 = scalar_lea.sflag [#allocation8], %s513
        %s515 = sand.u32 %s277, 1
        %s516 = smul.addr %s515, 8
        %s517 = scalar_lea.vmem [#allocation17], %s516
        %p518 = scmp.lt.s32.totalorder %s36, 1
        %s519 = scalar_select %p518, %s36, 1
        %p520 = scmp.lt.s32.totalorder %s37, 1
        %s521 = scalar_select %p520, %s37, 1
        %s522 = smul.addr %s519, 2
        %s523 = sadd.s32 %s521, %s522
        %s524 = smul.addr %s523, 8
        %s525 = scalar_lea.vmem %s0, %s524
        %p526 = scmp.lt.s32.totalorder %s36, 1
        %s527 = scalar_select %p526, %s36, 1
        %p528 = scmp.lt.s32.totalorder %s37, 1
        %s529 = scalar_select %p528, %s37, 1
        %s530 = smul.addr %s527, 2
        %s531 = sadd.s32 %s529, %s530
        %s532 = smul.addr %s531, 8
        %s533 = scalar_lea.vmem %s3, %s532
        %p535 = scmp.eq.s32.totalorder %s38, 0
        // Predicated region
        $region81: #{tpu_custom_call.1} parent=55 // pred_check
          %p536 = pneg %p535
        $region82: #{tpu_custom_call.1} parent=55 // pred_check_branch
          %538 = sbr.rel (%p536) target = $region84
        $region83: #{tpu_custom_call.1} parent=55 // pred_region
          %v539 = vld [vmem:[%s525] sm:$0xff]
          %v540 = vpack.c.bf16 %v539, %v539
          %v541 = vld [vmem:[#allocation11] sm:$0xf]
          %v542 = vld [vmem:[#allocation11 + $0x4] sm:$0xf]
          %v543 = vld [vmem:[#allocation11 + $0x8] sm:$0xf]
          %v544 = vld [vmem:[#allocation11 + $0xc] sm:$0xf]
          %v545 = vld [vmem:[#allocation11 + $0x10] sm:$0xf]
          %v546 = vld [vmem:[#allocation11 + $0x14] sm:$0xf]
          %v547 = vld [vmem:[#allocation11 + $0x18] sm:$0xf]
          %v548 = vld [vmem:[#allocation11 + $0x1c] sm:$0xf]
          %v549 = vld [vmem:[#allocation11 + $0x20] sm:$0xf]
          %v550 = vld [vmem:[#allocation11 + $0x24] sm:$0xf]
          %v551 = vld [vmem:[#allocation11 + $0x28] sm:$0xf]
          %v552 = vld [vmem:[#allocation11 + $0x2c] sm:$0xf]
          %v553 = vld [vmem:[#allocation11 + $0x30] sm:$0xf]
          %v554 = vld [vmem:[#allocation11 + $0x34] sm:$0xf]
          %v555 = vld [vmem:[#allocation11 + $0x38] sm:$0xf]
          %v556 = vld [vmem:[#allocation11 + $0x3c] sm:$0xf]
          %v573 = vunpack.c.l.b16 %v541
          %v574 = vunpack.c.l.b16 %v542
          %v575 = vunpack.c.l.b16 %v543
          %v576 = vunpack.c.l.b16 %v544
          %v577 = vunpack.c.l.b16 %v545
          %v578 = vunpack.c.l.b16 %v546
          %v579 = vunpack.c.l.b16 %v547
          %v580 = vunpack.c.l.b16 %v548
          %v581 = vunpack.c.l.b16 %v549
          %v582 = vunpack.c.l.b16 %v550
          %v583 = vunpack.c.l.b16 %v551
          %v584 = vunpack.c.l.b16 %v552
          %v585 = vunpack.c.l.b16 %v553
          %v586 = vunpack.c.l.b16 %v554
          %v587 = vunpack.c.l.b16 %v555
          %v588 = vunpack.c.l.b16 %v556
          %v589 = vpack.c.b16 %v574, %v573
          %v590 = vpack.c.b16 %v576, %v575
          %v591 = vpack.c.b16 %v578, %v577
          %v592 = vpack.c.b16 %v580, %v579
          %v593 = vpack.c.b16 %v582, %v581
          %v594 = vpack.c.b16 %v584, %v583
          %v595 = vpack.c.b16 %v586, %v585
          %v596 = vpack.c.b16 %v588, %v587
          %605 = vmatprep.subr.bf16.mxu0 0
          %606 = vmatpush1.bf16.msra.mxu0 %v596
          %607 = vmatprep.subr.bf16.mxu0 0
          %608 = vmatpush1.bf16.msra.mxu0 %v595
          %609 = vmatprep.subr.bf16.mxu0 0
          %610 = vmatpush1.bf16.msra.mxu0 %v594
          %611 = vmatprep.subr.bf16.mxu0 0
          %612 = vmatpush1.bf16.msra.mxu0 %v593
          %613 = vmatprep.subr.bf16.mxu0 0
          %614 = vmatpush1.bf16.msra.mxu0 %v592
          %615 = vmatprep.subr.bf16.mxu0 0
          %616 = vmatpush1.bf16.msra.mxu0 %v591
          %617 = vmatprep.subr.bf16.mxu0 0
          %618 = vmatpush1.bf16.msra.mxu0 %v590
          %619 = vmatprep.subr.bf16.mxu0 0
          %620 = vmatpush1.bf16.msra.mxu0 %v589
          %621 = vmatprep.subr.bf16.mxu0 0
          %622 = vmatpush2.bf16.msra.mxu0 0
          %623 = vmatprep.subr.bf16.mxu0 0
          %624 = vmatpush2.bf16.msra.mxu0 0
          %625 = vmatprep.subr.bf16.mxu0 0
          %626 = vmatpush2.bf16.msra.mxu0 0
          %627 = vmatprep.subr.bf16.mxu0 0
          %628 = vmatpush2.bf16.msra.mxu0 0
          %629 = vmatprep.subr.bf16.mxu0 0
          %630 = vmatpush2.bf16.msra.mxu0 0
          %631 = vmatprep.subr.bf16.mxu0 0
          %632 = vmatpush2.bf16.msra.mxu0 0
          %633 = vmatprep.subr.bf16.mxu0 0
          %634 = vmatpush2.bf16.msra.mxu0 0
          %635 = vmatprep.subr.bf16.mxu0 0
          %636 = vmatpush2.bf16.msra.mxu0 0
          %637 = vmatprep.mubr.bf16.mxu0 0
          %638 = vmatmul.mubr.bf16.gmra.mxu0 %v540
          %v639 = vpop.f32.mrf.mxu0
          %v640 = vadd.f32 0.0, %v639
          %v641 = vpop.f32.mrf.mxu0
          %v642 = vpop.f32.mrf.mxu0
          %v643 = vpop.f32.mrf.mxu0
          %644 = vdwg.mxu0
          %v645 = vpack.c.bf16 %v640, %v640
          %646 = vst [vmem:[#allocation2] sm:$0xf] %v645
          %647 = vst [vmem:[#allocation3] sm:$0xff] 0.0
          %vm648 = vcmask 7168
          %649 = vst.msk [vmem:[#allocation4] sm:$0xff] %vm648, -inf
          %650 = vst.msk [vmem:[#allocation4 + $0x8] sm:$0xff] %vm648, -inf
          %651 = vst.msk [vmem:[#allocation4 + $0x10] sm:$0xff] %vm648, -inf
          %652 = vst.msk [vmem:[#allocation4 + $0x18] sm:$0xff] %vm648, -inf
          %653 = vst.msk [vmem:[#allocation4 + $0x20] sm:$0xff] %vm648, -inf
          %654 = vst.msk [vmem:[#allocation4 + $0x28] sm:$0xff] %vm648, -inf
          %655 = vst.msk [vmem:[#allocation4 + $0x30] sm:$0xff] %vm648, -inf
          %656 = vst.msk [vmem:[#allocation4 + $0x38] sm:$0xff] %vm648, -inf
          %657 = vst.msk [vmem:[#allocation5] sm:$0xff] %vm648, 0.0
          %658 = vst.msk [vmem:[#allocation5 + $0x8] sm:$0xff] %vm648, 0.0
          %659 = vst.msk [vmem:[#allocation5 + $0x10] sm:$0xff] %vm648, 0.0
          %660 = vst.msk [vmem:[#allocation5 + $0x18] sm:$0xff] %vm648, 0.0
          %661 = vst.msk [vmem:[#allocation5 + $0x20] sm:$0xff] %vm648, 0.0
          %662 = vst.msk [vmem:[#allocation5 + $0x28] sm:$0xff] %vm648, 0.0
          %663 = vst.msk [vmem:[#allocation5 + $0x30] sm:$0xff] %vm648, 0.0
          %664 = vst.msk [vmem:[#allocation5 + $0x38] sm:$0xff] %vm648, 0.0
        $region84: #{tpu_custom_call.1} parent=55 // pred_fallthru
          _
        %v665 = vld [vmem:[%s437] sm:$0xff]
        %v666 = vpack.c.bf16 %v665, %v665
        %v667 = vld [vmem:[%s446] sm:$0xff]
        %v668 = vpack.c.bf16 %v667, %v667
        %v669 = vld [vmem:[#allocation12] sm:$0xf]
        %v670 = vld [vmem:[#allocation12 + $0x4] sm:$0xf]
        %v671 = vld [vmem:[#allocation12 + $0x8] sm:$0xf]
        %v672 = vld [vmem:[#allocation12 + $0xc] sm:$0xf]
        %v673 = vld [vmem:[#allocation12 + $0x10] sm:$0xf]
        %v674 = vld [vmem:[#allocation12 + $0x14] sm:$0xf]
        %v675 = vld [vmem:[#allocation12 + $0x18] sm:$0xf]
        %v676 = vld [vmem:[#allocation12 + $0x1c] sm:$0xf]
        %v677 = vld [vmem:[#allocation12 + $0x20] sm:$0xf]
        %v678 = vld [vmem:[#allocation12 + $0x24] sm:$0xf]
        %v679 = vld [vmem:[#allocation12 + $0x28] sm:$0xf]
        %v680 = vld [vmem:[#allocation12 + $0x2c] sm:$0xf]
        %v681 = vld [vmem:[#allocation12 + $0x30] sm:$0xf]
        %v682 = vld [vmem:[#allocation12 + $0x34] sm:$0xf]
        %v683 = vld [vmem:[#allocation12 + $0x38] sm:$0xf]
        %v684 = vld [vmem:[#allocation12 + $0x3c] sm:$0xf]
        %v701 = vunpack.c.l.b16 %v669
        %v702 = vunpack.c.l.b16 %v670
        %v703 = vunpack.c.l.b16 %v671
        %v704 = vunpack.c.l.b16 %v672
        %v705 = vunpack.c.l.b16 %v673
        %v706 = vunpack.c.l.b16 %v674
        %v707 = vunpack.c.l.b16 %v675
        %v708 = vunpack.c.l.b16 %v676
        %v709 = vunpack.c.l.b16 %v677
        %v710 = vunpack.c.l.b16 %v678
        %v711 = vunpack.c.l.b16 %v679
        %v712 = vunpack.c.l.b16 %v680
        %v713 = vunpack.c.l.b16 %v681
        %v714 = vunpack.c.l.b16 %v682
        %v715 = vunpack.c.l.b16 %v683
        %v716 = vunpack.c.l.b16 %v684
        %v717 = vpack.c.b16 %v702, %v701
        %v718 = vpack.c.b16 %v704, %v703
        %v719 = vpack.c.b16 %v706, %v705
        %v720 = vpack.c.b16 %v708, %v707
        %v721 = vpack.c.b16 %v710, %v709
        %v722 = vpack.c.b16 %v712, %v711
        %v723 = vpack.c.b16 %v714, %v713
        %v724 = vpack.c.b16 %v716, %v715
        %733 = vmatprep.subr.bf16.mxu0 0
        %734 = vmatpush1.bf16.msra.mxu0 %v724
        %735 = vmatprep.subr.bf16.mxu0 0
        %736 = vmatpush1.bf16.msra.mxu0 %v723
        %737 = vmatprep.subr.bf16.mxu0 0
        %738 = vmatpush1.bf16.msra.mxu0 %v722
        %739 = vmatprep.subr.bf16.mxu0 0
        %740 = vmatpush1.bf16.msra.mxu0 %v721
        %741 = vmatprep.subr.bf16.mxu0 0
        %742 = vmatpush1.bf16.msra.mxu0 %v720
        %743 = vmatprep.subr.bf16.mxu0 0
        %744 = vmatpush1.bf16.msra.mxu0 %v719
        %745 = vmatprep.subr.bf16.mxu0 0
        %746 = vmatpush1.bf16.msra.mxu0 %v718
        %747 = vmatprep.subr.bf16.mxu0 0
        %748 = vmatpush1.bf16.msra.mxu0 %v717
        %749 = vmatprep.subr.bf16.mxu0 0
        %750 = vmatpush2.bf16.msra.mxu0 0
        %751 = vmatprep.subr.bf16.mxu0 0
        %752 = vmatpush2.bf16.msra.mxu0 0
        %753 = vmatprep.subr.bf16.mxu0 0
        %754 = vmatpush2.bf16.msra.mxu0 0
        %755 = vmatprep.subr.bf16.mxu0 0
        %756 = vmatpush2.bf16.msra.mxu0 0
        %757 = vmatprep.subr.bf16.mxu0 0
        %758 = vmatpush2.bf16.msra.mxu0 0
        %759 = vmatprep.subr.bf16.mxu0 0
        %760 = vmatpush2.bf16.msra.mxu0 0
        %761 = vmatprep.subr.bf16.mxu0 0
        %762 = vmatpush2.bf16.msra.mxu0 0
        %763 = vmatprep.subr.bf16.mxu0 0
        %764 = vmatpush2.bf16.msra.mxu0 0
        %765 = vmatprep.mubr.bf16.mxu0 0
        %766 = vmatmul.mubr.bf16.gmra.mxu0 %v666
        %v767 = vpop.f32.mrf.mxu0
        %v768 = vadd.f32 0.0, %v767
        %v769 = vpop.f32.mrf.mxu0
        %v770 = vpop.f32.mrf.mxu0
        %v771 = vpop.f32.mrf.mxu0
        %772 = vdwg.mxu0
        %v773 = vpack.c.bf16 %v768, %v768
        %v774 = vld [vmem:[#allocation14] sm:$0xf]
        %v775 = vld [vmem:[#allocation14 + $0x4] sm:$0xf]
        %v776 = vld [vmem:[#allocation14 + $0x8] sm:$0xf]
        %v777 = vld [vmem:[#allocation14 + $0xc] sm:$0xf]
        %v778 = vld [vmem:[#allocation14 + $0x10] sm:$0xf]
        %v779 = vld [vmem:[#allocation14 + $0x14] sm:$0xf]
        %v780 = vld [vmem:[#allocation14 + $0x18] sm:$0xf]
        %v781 = vld [vmem:[#allocation14 + $0x1c] sm:$0xf]
        %v782 = vld [vmem:[#allocation14 + $0x20] sm:$0xf]
        %v783 = vld [vmem:[#allocation14 + $0x24] sm:$0xf]
        %v784 = vld [vmem:[#allocation14 + $0x28] sm:$0xf]
        %v785 = vld [vmem:[#allocation14 + $0x2c] sm:$0xf]
        %v786 = vld [vmem:[#allocation14 + $0x30] sm:$0xf]
        %v787 = vld [vmem:[#allocation14 + $0x34] sm:$0xf]
        %v788 = vld [vmem:[#allocation14 + $0x38] sm:$0xf]
        %v789 = vld [vmem:[#allocation14 + $0x3c] sm:$0xf]
        %v806 = vunpack.c.l.b16 %v774
        %v807 = vunpack.c.l.b16 %v775
        %v808 = vunpack.c.l.b16 %v776
        %v809 = vunpack.c.l.b16 %v777
        %v810 = vunpack.c.l.b16 %v778
        %v811 = vunpack.c.l.b16 %v779
        %v812 = vunpack.c.l.b16 %v780
        %v813 = vunpack.c.l.b16 %v781
        %v814 = vunpack.c.l.b16 %v782
        %v815 = vunpack.c.l.b16 %v783
        %v816 = vunpack.c.l.b16 %v784
        %v817 = vunpack.c.l.b16 %v785
        %v818 = vunpack.c.l.b16 %v786
        %v819 = vunpack.c.l.b16 %v787
        %v820 = vunpack.c.l.b16 %v788
        %v821 = vunpack.c.l.b16 %v789
        %v822 = vpack.c.b16 %v807, %v806
        %v823 = vpack.c.b16 %v809, %v808
        %v824 = vpack.c.b16 %v811, %v810
        %v825 = vpack.c.b16 %v813, %v812
        %v826 = vpack.c.b16 %v815, %v814
        %v827 = vpack.c.b16 %v817, %v816
        %v828 = vpack.c.b16 %v819, %v818
        %v829 = vpack.c.b16 %v821, %v820
        %838 = vmatprep.subr.bf16.mxu0 0
        %839 = vmatpush1.bf16.msra.mxu0 %v829
        %840 = vmatprep.subr.bf16.mxu0 0
        %841 = vmatpush1.bf16.msra.mxu0 %v828
        %842 = vmatprep.subr.bf16.mxu0 0
        %843 = vmatpush1.bf16.msra.mxu0 %v827
        %844 = vmatprep.subr.bf16.mxu0 0
        %845 = vmatpush1.bf16.msra.mxu0 %v826
        %846 = vmatprep.subr.bf16.mxu0 0
        %847 = vmatpush1.bf16.msra.mxu0 %v825
        %848 = vmatprep.subr.bf16.mxu0 0
        %849 = vmatpush1.bf16.msra.mxu0 %v824
        %850 = vmatprep.subr.bf16.mxu0 0
        %851 = vmatpush1.bf16.msra.mxu0 %v823
        %852 = vmatprep.subr.bf16.mxu0 0
        %853 = vmatpush1.bf16.msra.mxu0 %v822
        %854 = vmatprep.subr.bf16.mxu0 0
        %855 = vmatpush2.bf16.msra.mxu0 0
        %856 = vmatprep.subr.bf16.mxu0 0
        %857 = vmatpush2.bf16.msra.mxu0 0
        %858 = vmatprep.subr.bf16.mxu0 0
        %859 = vmatpush2.bf16.msra.mxu0 0
        %860 = vmatprep.subr.bf16.mxu0 0
        %861 = vmatpush2.bf16.msra.mxu0 0
        %862 = vmatprep.subr.bf16.mxu0 0
        %863 = vmatpush2.bf16.msra.mxu0 0
        %864 = vmatprep.subr.bf16.mxu0 0
        %865 = vmatpush2.bf16.msra.mxu0 0
        %866 = vmatprep.subr.bf16.mxu0 0
        %867 = vmatpush2.bf16.msra.mxu0 0
        %868 = vmatprep.subr.bf16.mxu0 0
        %869 = vmatpush2.bf16.msra.mxu0 0
        %870 = vmatprep.mubr.bf16.mxu0 0
        %871 = vmatmul.mubr.bf16.gmra.mxu0 %v668
        %v872 = vpop.f32.mrf.mxu0
        %v873 = vadd.f32 0.0, %v872
        %v874 = vpop.f32.mrf.mxu0
        %v875 = vpop.f32.mrf.mxu0
        %v876 = vpop.f32.mrf.mxu0
        %877 = vdwg.mxu0
        %v878 = vpack.c.bf16 %v873, %v873
        %v879 = vld [vmem:[%s533] sm:$0xff]
        %v880 = vld [vmem:[#allocation2] sm:$0xf]
        %vm881 = vcmask 31744
        %v883 = vsel %vm881, %v880, 0
        %v886 = vsel %vm881, %v773, 0
        %888 = vmatprep.subr.bf16.mxu0 0
        %889 = vmatpush1.bf16.xpose.msra.mxu0 0
        %890 = vmatprep.subr.bf16.mxu0 0
        %891 = vmatpush1.bf16.xpose.msra.mxu0 0
        %892 = vmatprep.subr.bf16.mxu0 0
        %893 = vmatpush1.bf16.xpose.msra.mxu0 0
        %894 = vmatprep.subr.bf16.mxu0 0
        %895 = vmatpush1.bf16.xpose.msra.mxu0 0
        %896 = vmatprep.subr.bf16.mxu0 0
        %897 = vmatpush1.bf16.xpose.msra.mxu0 0
        %898 = vmatprep.subr.bf16.mxu0 0
        %899 = vmatpush1.bf16.xpose.msra.mxu0 0
        %900 = vmatprep.subr.bf16.mxu0 0
        %901 = vmatpush1.bf16.xpose.msra.mxu0 0
        %902 = vmatprep.subr.bf16.mxu0 0
        %903 = vmatpush1.bf16.xpose.msra.mxu0 %v886
        %904 = vmatprep.subr.bf16.mxu0 0
        %905 = vmatpush2.bf16.xpose.msra.mxu0 0
        %906 = vmatprep.subr.bf16.mxu0 0
        %907 = vmatpush2.bf16.xpose.msra.mxu0 0
        %908 = vmatprep.subr.bf16.mxu0 0
        %909 = vmatpush2.bf16.xpose.msra.mxu0 0
        %910 = vmatprep.subr.bf16.mxu0 0
        %911 = vmatpush2.bf16.xpose.msra.mxu0 0
        %912 = vmatprep.subr.bf16.mxu0 0
        %913 = vmatpush2.bf16.xpose.msra.mxu0 0
        %914 = vmatprep.subr.bf16.mxu0 0
        %915 = vmatpush2.bf16.xpose.msra.mxu0 0
        %916 = vmatprep.subr.bf16.mxu0 0
        %917 = vmatpush2.bf16.xpose.msra.mxu0 0
        %918 = vmatprep.subr.bf16.mxu0 0
        %919 = vmatpush2.bf16.xpose.msra.mxu0 0
        %920 = vmatprep.mubr.bf16.mxu0 0
        %921 = vmatmul.mubr.bf16.gmra.mxu0 %v883
        %v922 = vpop.f32.mrf.mxu0
        %v923 = vadd.f32 0.0, %v922
        %v924 = vpop.f32.mrf.mxu0
        %v925 = vpop.f32.mrf.mxu0
        %v926 = vpop.f32.mrf.mxu0
        %927 = vdwg.mxu0
        %929 = vset.pattern.permute.xlu0 0
        %930 = vperm.xlu0 %929, %v879
        %v931 = vpop.permute.xlu0 %930
        %v933 = vmul.f32 %v923, %v931
        %v934 = vld [vmem:[#allocation4] sm:$0xff]
        %vm935 = vcmask 64512
        %v936 = vsel %vm935, %v933, -inf
        %937 = vmax.xlane.f32.xlu0 %v936
        %v938 = vpop.xlane.xlu0 %937
        %v939 = vmax.f32 %v934, %v938
        %v940 = vsub.f32 %v934, %v939
        %v941 = vmul.f32 %v940, 1.442695
        %v942 = vpow.pop %v941
        %944 = vset.pattern.permute.xlu0 0
        %945 = vperm.xlu0 %944, %v939
        %v946 = vpop.permute.xlu0 %945
        %v948 = vsub.f32 %v933, %v946
        %v949 = vmul.f32 %v948, 1.442695
        %v950 = vpow.pop %v949
        %v951 = vld [vmem:[#allocation5] sm:$0xff]
        %v952 = vmul.f32 %v942, %v951
        %v953 = vsel %vm935, %v950, 0.0
        %954 = vadd.xlane.f32.xlu0 %v953
        %v955 = vpop.xlane.xlu0 %954
        %v956 = vadd.f32 %v952, %v955
        %vm957 = vcmask 7168
        %958 = vst.msk [vmem:[#allocation5] sm:$0xff] %vm957, %v956
        %v959 = vld [vmem:[#allocation3] sm:$0xff]
        %961 = vset.pattern.permute.xlu0 0
        %962 = vperm.xlu0 %961, %v942
        %v963 = vpop.permute.xlu0 %962
        %v965 = vmul.f32 %v963, %v959
        %v966 = vpack.c.bf16 %v950, %v950
        %v968 = vsel %vm935, %v966, 0
        %vm970 = vcmask 1043456
        %v972 = vsel %vm970, %v878, 0
        %974 = vmatprep.subr.bf16.mxu0 0
        %975 = vmatpush1.bf16.msra.mxu0 0
        %976 = vmatprep.subr.bf16.mxu0 0
        %977 = vmatpush1.bf16.msra.mxu0 0
        %978 = vmatprep.subr.bf16.mxu0 0
        %979 = vmatpush1.bf16.msra.mxu0 0
        %980 = vmatprep.subr.bf16.mxu0 0
        %981 = vmatpush1.bf16.msra.mxu0 0
        %982 = vmatprep.subr.bf16.mxu0 0
        %983 = vmatpush1.bf16.msra.mxu0 0
        %984 = vmatprep.subr.bf16.mxu0 0
        %985 = vmatpush1.bf16.msra.mxu0 0
        %986 = vmatprep.subr.bf16.mxu0 0
        %987 = vmatpush1.bf16.msra.mxu0 0
        %988 = vmatprep.subr.bf16.mxu0 0
        %989 = vmatpush1.bf16.msra.mxu0 %v972
        %990 = vmatprep.subr.bf16.mxu0 0
        %991 = vmatpush2.bf16.msra.mxu0 0
        %992 = vmatprep.subr.bf16.mxu0 0
        %993 = vmatpush2.bf16.msra.mxu0 0
        %994 = vmatprep.subr.bf16.mxu0 0
        %995 = vmatpush2.bf16.msra.mxu0 0
        %996 = vmatprep.subr.bf16.mxu0 0
        %997 = vmatpush2.bf16.msra.mxu0 0
        %998 = vmatprep.subr.bf16.mxu0 0
        %999 = vmatpush2.bf16.msra.mxu0 0
        %1000 = vmatprep.subr.bf16.mxu0 0
        %1001 = vmatpush2.bf16.msra.mxu0 0
        %1002 = vmatprep.subr.bf16.mxu0 0
        %1003 = vmatpush2.bf16.msra.mxu0 0
        %1004 = vmatprep.subr.bf16.mxu0 0
        %1005 = vmatpush2.bf16.msra.mxu0 0
        %1006 = vmatprep.mubr.bf16.mxu0 0
        %1007 = vmatmul.mubr.bf16.gmra.mxu0 %v968
        %v1008 = vpop.f32.mrf.mxu0
        %v1009 = vadd.f32 0.0, %v1008
        %v1010 = vpop.f32.mrf.mxu0
        %v1011 = vpop.f32.mrf.mxu0
        %v1012 = vpop.f32.mrf.mxu0
        %1013 = vdwg.mxu0
        %v1014 = vadd.f32 %v965, %v1009
        %1015 = vst.msk [vmem:[#allocation3] sm:$0xff] %vm881, %v1014
        %1016 = vst.msk [vmem:[#allocation4] sm:$0xff] %vm957, %v939
        %v1017 = vld [vmem:[#allocation2] sm:$0xf]
        %v1019 = vunpack.c.l.b16 %v1017
        %v1020 = vpack.c.b16 %v1019, %v1019
        %1021 = vrot.lane.b32.xlu0 %v1020, 124
        %v1022 = vpop.permute.xlu0 %1021
        %1024 = vrot.lane.b32.xlu0 %v773, 124
        %v1025 = vpop.permute.xlu0 %1024
        %v1027 = vsel %vm881, %v1022, 0
        %v1030 = vsel %vm881, %v1025, 0
        %1032 = vmatprep.subr.bf16.mxu0 0
        %1033 = vmatpush1.bf16.xpose.msra.mxu0 0
        %1034 = vmatprep.subr.bf16.mxu0 0
        %1035 = vmatpush1.bf16.xpose.msra.mxu0 0
        %1036 = vmatprep.subr.bf16.mxu0 0
        %1037 = vmatpush1.bf16.xpose.msra.mxu0 0
        %1038 = vmatprep.subr.bf16.mxu0 0
        %1039 = vmatpush1.bf16.xpose.msra.mxu0 0
        %1040 = vmatprep.subr.bf16.mxu0 0
        %1041 = vmatpush1.bf16.xpose.msra.mxu0 0
        %1042 = vmatprep.subr.bf16.mxu0 0
        %1043 = vmatpush1.bf16.xpose.msra.mxu0 0
        %1044 = vmatprep.subr.bf16.mxu0 0
        %1045 = vmatpush1.bf16.xpose.msra.mxu0 0
        %1046 = vmatprep.subr.bf16.mxu0 0
        %1047 = vmatpush1.bf16.xpose.msra.mxu0 %v1030
        %1048 = vmatprep.subr.bf16.mxu0 0
        %1049 = vmatpush2.bf16.xpose.msra.mxu0 0
        %1050 = vmatprep.subr.bf16.mxu0 0
        %1051 = vmatpush2.bf16.xpose.msra.mxu0 0
        %1052 = vmatprep.subr.bf16.mxu0 0
        %1053 = vmatpush2.bf16.xpose.msra.mxu0 0
        %1054 = vmatprep.subr.bf16.mxu0 0
        %1055 = vmatpush2.bf16.xpose.msra.mxu0 0
        %1056 = vmatprep.subr.bf16.mxu0 0
        %1057 = vmatpush2.bf16.xpose.msra.mxu0 0
        %1058 = vmatprep.subr.bf16.mxu0 0
        %1059 = vmatpush2.bf16.xpose.msra.mxu0 0
        %1060 = vmatprep.subr.bf16.mxu0 0
        %1061 = vmatpush2.bf16.xpose.msra.mxu0 0
        %1062 = vmatprep.subr.bf16.mxu0 0
        %1063 = vmatpush2.bf16.xpose.msra.mxu0 0
        %1064 = vmatprep.mubr.bf16.mxu0 0
        %1065 = vmatmul.mubr.bf16.gmra.mxu0 %v1027
        %v1066 = vpop.f32.mrf.mxu0
        %v1067 = vadd.f32 0.0, %v1066
        %v1068 = vpop.f32.mrf.mxu0
        %v1069 = vpop.f32.mrf.mxu0
        %v1070 = vpop.f32.mrf.mxu0
        %1071 = vdwg.mxu0
        %v1072 = vmul.f32 %v1067, %v931
        %s1073 = scalar_lea.vmem [#allocation4], 8
        %v1074 = vld [vmem:[%s1073] sm:$0xff]
        %v1075 = vsel %vm935, %v1072, -inf
        %1076 = vmax.xlane.f32.xlu0 %v1075
        %v1077 = vpop.xlane.xlu0 %1076
        %v1078 = vmax.f32 %v1074, %v1077
        %v1079 = vsub.f32 %v1074, %v1078
        %v1080 = vmul.f32 %v1079, 1.442695
        %v1081 = vpow.pop %v1080
        %1083 = vset.pattern.permute.xlu0 0
        %1084 = vperm.xlu0 %1083, %v1078
        %v1085 = vpop.permute.xlu0 %1084
        %v1087 = vsub.f32 %v1072, %v1085
        %v1088 = vmul.f32 %v1087, 1.442695
        %v1089 = vpow.pop %v1088
        %s1090 = scalar_lea.vmem [#allocation5], 8
        %v1091 = vld [vmem:[%s1090] sm:$0xff]
        %v1092 = vmul.f32 %v1081, %v1091
        %v1093 = vsel %vm935, %v1089, 0.0
        %1094 = vadd.xlane.f32.xlu0 %v1093
        %v1095 = vpop.xlane.xlu0 %1094
        %v1096 = vadd.f32 %v1092, %v1095
        %1097 = vst.msk [vmem:[%s1090] sm:$0xff] %vm957, %v1096
        %v1098 = vld [vmem:[#allocation3] sm:$0xff]
        %1100 = vset.pattern.permute.xlu0 0
        %1101 = vperm.xlu0 %1100, %v1081
        %v1102 = vpop.permute.xlu0 %1101
        %v1104 = vmul.f32 %v1102, %v1098
        %v1105 = vpack.c.bf16 %v1089, %v1089
        %1107 = vrot.lane.b32.xlu0 %v878, 124
        %v1108 = vpop.permute.xlu0 %1107
        %v1110 = vsel %vm935, %v1105, 0
        %v1113 = vsel %vm970, %v1108, 0
        %1115 = vmatprep.subr.bf16.mxu0 0
        %1116 = vmatpush1.bf16.msra.mxu0 0
        %1117 = vmatprep.subr.bf16.mxu0 0
        %1118 = vmatpush1.bf16.msra.mxu0 0
        %1119 = vmatprep.subr.bf16.mxu0 0
        %1120 = vmatpush1.bf16.msra.mxu0 0
        %1121 = vmatprep.subr.bf16.mxu0 0
        %1122 = vmatpush1.bf16.msra.mxu0 0
        %1123 = vmatprep.subr.bf16.mxu0 0
        %1124 = vmatpush1.bf16.msra.mxu0 0
        %1125 = vmatprep.subr.bf16.mxu0 0
        %1126 = vmatpush1.bf16.msra.mxu0 0
        %1127 = vmatprep.subr.bf16.mxu0 0
        %1128 = vmatpush1.bf16.msra.mxu0 0
        %1129 = vmatprep.subr.bf16.mxu0 0
        %1130 = vmatpush1.bf16.msra.mxu0 %v1113
        %1131 = vmatprep.subr.bf16.mxu0 0
        %1132 = vmatpush2.bf16.msra.mxu0 0
        %1133 = vmatprep.subr.bf16.mxu0 0
        %1134 = vmatpush2.bf16.msra.mxu0 0
        %1135 = vmatprep.subr.bf16.mxu0 0
        %1136 = vmatpush2.bf16.msra.mxu0 0
        %1137 = vmatprep.subr.bf16.mxu0 0
        %1138 = vmatpush2.bf16.msra.mxu0 0
        %1139 = vmatprep.subr.bf16.mxu0 0
        %1140 = vmatpush2.bf16.msra.mxu0 0
        %1141 = vmatprep.subr.bf16.mxu0 0
        %1142 = vmatpush2.bf16.msra.mxu0 0
        %1143 = vmatprep.subr.bf16.mxu0 0
        %1144 = vmatpush2.bf16.msra.mxu0 0
        %1145 = vmatprep.subr.bf16.mxu0 0
        %1146 = vmatpush2.bf16.msra.mxu0 0
        %1147 = vmatprep.mubr.bf16.mxu0 0
        %1148 = vmatmul.mubr.bf16.gmra.mxu0 %v1110
        %v1149 = vpop.f32.mrf.mxu0
        %v1150 = vadd.f32 0.0, %v1149
        %v1151 = vpop.f32.mrf.mxu0
        %v1152 = vpop.f32.mrf.mxu0
        %v1153 = vpop.f32.mrf.mxu0
        %1154 = vdwg.mxu0
        %1156 = vrot.lane.b32.xlu0 %v1150, 4
        %v1157 = vpop.permute.xlu0 %1156
        %v1159 = vadd.f32 %v1104, %v1157
        %vm1160 = vcmask 64544
        %1161 = vst.msk [vmem:[#allocation3] sm:$0xff] %vm1160, %v1159
        %1162 = vst.msk [vmem:[%s1073] sm:$0xff] %vm957, %v1078
        %v1163 = vld [vmem:[#allocation2] sm:$0xf]
        %v1165 = vunpack.c.l.b16 %v1163
        %v1166 = vpack.c.b16 %v1165, %v1165
        %1167 = vrot.lane.b32.xlu0 %v1166, 120
        %v1168 = vpop.permute.xlu0 %1167
        %1169 = vrot.lane.b32.xlu0 %v773, 120
        %v1170 = vpop.permute.xlu0 %1169
        %v1172 = vsel %vm881, %v1168, 0
        %v1175 = vsel %vm881, %v1170, 0
        %1177 = vmatprep.subr.bf16.mxu0 0
        %1178 = vmatpush1.bf16.xpose.msra.mxu0 0
        %1179 = vmatprep.subr.bf16.mxu0 0
        %1180 = vmatpush1.bf16.xpose.msra.mxu0 0
        %1181 = vmatprep.subr.bf16.mxu0 0
        %1182 = vmatpush1.bf16.xpose.msra.mxu0 0
        %1183 = vmatprep.subr.bf16.mxu0 0
        %1184 = vmatpush1.bf16.xpose.msra.mxu0 0
        %1185 = vmatprep.subr.bf16.mxu0 0
        %1186 = vmatpush1.bf16.xpose.msra.mxu0 0
        %1187 = vmatprep.subr.bf16.mxu0 0
        %1188 = vmatpush1.bf16.xpose.msra.mxu0 0
        %1189 = vmatprep.subr.bf16.mxu0 0
        %1190 = vmatpush1.bf16.xpose.msra.mxu0 0
        %1191 = vmatprep.subr.bf16.mxu0 0
        %1192 = vmatpush1.bf16.xpose.msra.mxu0 %v1175
        %1193 = vmatprep.subr.bf16.mxu0 0
        %1194 = vmatpush2.bf16.xpose.msra.mxu0 0
        %1195 = vmatprep.subr.bf16.mxu0 0
        %1196 = vmatpush2.bf16.xpose.msra.mxu0 0
        %1197 = vmatprep.subr.bf16.mxu0 0
        %1198 = vmatpush2.bf16.xpose.msra.mxu0 0
        %1199 = vmatprep.subr.bf16.mxu0 0
        %1200 = vmatpush2.bf16.xpose.msra.mxu0 0
        %1201 = vmatprep.subr.bf16.mxu0 0
        %1202 = vmatpush2.bf16.xpose.msra.mxu0 0
        %1203 = vmatprep.subr.bf16.mxu0 0
        %1204 = vmatpush2.bf16.xpose.msra.mxu0 0
        %1205 = vmatprep.subr.bf16.mxu0 0
        %1206 = vmatpush2.bf16.xpose.msra.mxu0 0
        %1207 = vmatprep.subr.bf16.mxu0 0
        %1208 = vmatpush2.bf16.xpose.msra.mxu0 0
        %1209 = vmatprep.mubr.bf16.mxu0 0
        %1210 = vmatmul.mubr.bf16.gmra.mxu0 %v1172
        %v1211 = vpop.f32.mrf.mxu0
        %v1212 = vadd.f32 0.0, %v1211
        %v1213 = vpop.f32.mrf.mxu0
        %v1214 = vpop.f32.mrf.mxu0
        %v1215 = vpop.f32.mrf.mxu0
        %1216 = vdwg.mxu0
        %v1217 = vmul.f32 %v1212, %v931
        %s1218 = scalar_lea.vmem [#allocation4], 16
        %v1219 = vld [vmem:[%s1218] sm:$0xff]
        %v1220 = vsel %vm935, %v1217, -inf
        %1221 = vmax.xlane.f32.xlu0 %v1220
        %v1222 = vpop.xlane.xlu0 %1221
        %v1223 = vmax.f32 %v1219, %v1222
        %v1224 = vsub.f32 %v1219, %v1223
        %v1225 = vmul.f32 %v1224, 1.442695
        %v1226 = vpow.pop %v1225
        %1228 = vset.pattern.permute.xlu0 0
        %1229 = vperm.xlu0 %1228, %v1223
        %v1230 = vpop.permute.xlu0 %1229
        %v1232 = vsub.f32 %v1217, %v1230
        %v1233 = vmul.f32 %v1232, 1.442695
        %v1234 = vpow.pop %v1233
        %s1235 = scalar_lea.vmem [#allocation5], 16
        %v1236 = vld [vmem:[%s1235] sm:$0xff]
        %v1237 = vmul.f32 %v1226, %v1236
        %v1238 = vsel %vm935, %v1234, 0.0
        %1239 = vadd.xlane.f32.xlu0 %v1238
        %v1240 = vpop.xlane.xlu0 %1239
        %v1241 = vadd.f32 %v1237, %v1240
        %1242 = vst.msk [vmem:[%s1235] sm:$0xff] %vm957, %v1241
        %v1243 = vld [vmem:[#allocation3] sm:$0xff]
        %1245 = vset.pattern.permute.xlu0 0
        %1246 = vperm.xlu0 %1245, %v1226
        %v1247 = vpop.permute.xlu0 %1246
        %v1249 = vmul.f32 %v1247, %v1243
        %v1250 = vpack.c.bf16 %v1234, %v1234
        %1251 = vrot.lane.b32.xlu0 %v878, 120
        %v1252 = vpop.permute.xlu0 %1251
        %v1254 = vsel %vm935, %v1250, 0
        %v1257 = vsel %vm970, %v1252, 0
        %1259 = vmatprep.subr.bf16.mxu0 0
        %1260 = vmatpush1.bf16.msra.mxu0 0
        %1261 = vmatprep.subr.bf16.mxu0 0
        %1262 = vmatpush1.bf16.msra.mxu0 0
        %1263 = vmatprep.subr.bf16.mxu0 0
        %1264 = vmatpush1.bf16.msra.mxu0 0
        %1265 = vmatprep.subr.bf16.mxu0 0
        %1266 = vmatpush1.bf16.msra.mxu0 0
        %1267 = vmatprep.subr.bf16.mxu0 0
        %1268 = vmatpush1.bf16.msra.mxu0 0
        %1269 = vmatprep.subr.bf16.mxu0 0
        %1270 = vmatpush1.bf16.msra.mxu0 0
        %1271 = vmatprep.subr.bf16.mxu0 0
        %1272 = vmatpush1.bf16.msra.mxu0 0
        %1273 = vmatprep.subr.bf16.mxu0 0
        %1274 = vmatpush1.bf16.msra.mxu0 %v1257
        %1275 = vmatprep.subr.bf16.mxu0 0
        %1276 = vmatpush2.bf16.msra.mxu0 0
        %1277 = vmatprep.subr.bf16.mxu0 0
        %1278 = vmatpush2.bf16.msra.mxu0 0
        %1279 = vmatprep.subr.bf16.mxu0 0
        %1280 = vmatpush2.bf16.msra.mxu0 0
        %1281 = vmatprep.subr.bf16.mxu0 0
        %1282 = vmatpush2.bf16.msra.mxu0 0
        %1283 = vmatprep.subr.bf16.mxu0 0
        %1284 = vmatpush2.bf16.msra.mxu0 0
        %1285 = vmatprep.subr.bf16.mxu0 0
        %1286 = vmatpush2.bf16.msra.mxu0 0
        %1287 = vmatprep.subr.bf16.mxu0 0
        %1288 = vmatpush2.bf16.msra.mxu0 0
        %1289 = vmatprep.subr.bf16.mxu0 0
        %1290 = vmatpush2.bf16.msra.mxu0 0
        %1291 = vmatprep.mubr.bf16.mxu0 0
        %1292 = vmatmul.mubr.bf16.gmra.mxu0 %v1254
        %v1293 = vpop.f32.mrf.mxu0
        %v1294 = vadd.f32 0.0, %v1293
        %v1295 = vpop.f32.mrf.mxu0
        %v1296 = vpop.f32.mrf.mxu0
        %v1297 = vpop.f32.mrf.mxu0
        %1298 = vdwg.mxu0
        %1300 = vrot.lane.b32.xlu0 %v1294, 8
        %v1301 = vpop.permute.xlu0 %1300
        %v1303 = vadd.f32 %v1249, %v1301
        %vm1304 = vcmask 97344
        %1305 = vst.msk [vmem:[#allocation3] sm:$0xff] %vm1304, %v1303
        %1306 = vst.msk [vmem:[%s1218] sm:$0xff] %vm957, %v1223
        %v1307 = vld [vmem:[#allocation2] sm:$0xf]
        %v1309 = vunpack.c.l.b16 %v1307
        %v1310 = vpack.c.b16 %v1309, %v1309
        %1311 = vrot.lane.b32.xlu0 %v1310, 116
        %v1312 = vpop.permute.xlu0 %1311
        %1313 = vrot.lane.b32.xlu0 %v773, 116
        %v1314 = vpop.permute.xlu0 %1313
        %v1316 = vsel %vm881, %v1312, 0
        %v1319 = vsel %vm881, %v1314, 0
        %1321 = vmatprep.subr.bf16.mxu0 0
        %1322 = vmatpush1.bf16.xpose.msra.mxu0 0
        %1323 = vmatprep.subr.bf16.mxu0 0
        %1324 = vmatpush1.bf16.xpose.msra.mxu0 0
        %1325 = vmatprep.subr.bf16.mxu0 0
        %1326 = vmatpush1.bf16.xpose.msra.mxu0 0
        %1327 = vmatprep.subr.bf16.mxu0 0
        %1328 = vmatpush1.bf16.xpose.msra.mxu0 0
        %1329 = vmatprep.subr.bf16.mxu0 0
        %1330 = vmatpush1.bf16.xpose.msra.mxu0 0
        %1331 = vmatprep.subr.bf16.mxu0 0
        %1332 = vmatpush1.bf16.xpose.msra.mxu0 0
        %1333 = vmatprep.subr.bf16.mxu0 0
        %1334 = vmatpush1.bf16.xpose.msra.mxu0 0
        %1335 = vmatprep.subr.bf16.mxu0 0
        %1336 = vmatpush1.bf16.xpose.msra.mxu0 %v1319
        %1337 = vmatprep.subr.bf16.mxu0 0
        %1338 = vmatpush2.bf16.xpose.msra.mxu0 0
        %1339 = vmatprep.subr.bf16.mxu0 0
        %1340 = vmatpush2.bf16.xpose.msra.mxu0 0
        %1341 = vmatprep.subr.bf16.mxu0 0
        %1342 = vmatpush2.bf16.xpose.msra.mxu0 0
        %1343 = vmatprep.subr.bf16.mxu0 0
        %1344 = vmatpush2.bf16.xpose.msra.mxu0 0
        %1345 = vmatprep.subr.bf16.mxu0 0
        %1346 = vmatpush2.bf16.xpose.msra.mxu0 0
        %1347 = vmatprep.subr.bf16.mxu0 0
        %1348 = vmatpush2.bf16.xpose.msra.mxu0 0
        %1349 = vmatprep.subr.bf16.mxu0 0
        %1350 = vmatpush2.bf16.xpose.msra.mxu0 0
        %1351 = vmatprep.subr.bf16.mxu0 0
        %1352 = vmatpush2.bf16.xpose.msra.mxu0 0
        %1353 = vmatprep.mubr.bf16.mxu0 0
        %1354 = vmatmul.mubr.bf16.gmra.mxu0 %v1316
        %v1355 = vpop.f32.mrf.mxu0
        %v1356 = vadd.f32 0.0, %v1355
        %v1357 = vpop.f32.mrf.mxu0
        %v1358 = vpop.f32.mrf.mxu0
        %v1359 = vpop.f32.mrf.mxu0
        %1360 = vdwg.mxu0
        %v1361 = vmul.f32 %v1356, %v931
        %s1362 = scalar_lea.vmem [#allocation4], 24
        %v1363 = vld [vmem:[%s1362] sm:$0xff]
        %v1364 = vsel %vm935, %v1361, -inf
        %1365 = vmax.xlane.f32.xlu0 %v1364
        %v1366 = vpop.xlane.xlu0 %1365
        %v1367 = vmax.f32 %v1363, %v1366
        %v1368 = vsub.f32 %v1363, %v1367
        %v1369 = vmul.f32 %v1368, 1.442695
        %v1370 = vpow.pop %v1369
        %1372 = vset.pattern.permute.xlu0 0
        %1373 = vperm.xlu0 %1372, %v1367
        %v1374 = vpop.permute.xlu0 %1373
        %v1376 = vsub.f32 %v1361, %v1374
        %v1377 = vmul.f32 %v1376, 1.442695
        %v1378 = vpow.pop %v1377
        %s1379 = scalar_lea.vmem [#allocation5], 24
        %v1380 = vld [vmem:[%s1379] sm:$0xff]
        %v1381 = vmul.f32 %v1370, %v1380
        %v1382 = vsel %vm935, %v1378, 0.0
        %1383 = vadd.xlane.f32.xlu0 %v1382
        %v1384 = vpop.xlane.xlu0 %1383
        %v1385 = vadd.f32 %v1381, %v1384
        %1386 = vst.msk [vmem:[%s1379] sm:$0xff] %vm957, %v1385
        %v1387 = vld [vmem:[#allocation3] sm:$0xff]
        %1389 = vset.pattern.permute.xlu0 0
        %1390 = vperm.xlu0 %1389, %v1370
        %v1391 = vpop.permute.xlu0 %1390
        %v1393 = vmul.f32 %v1391, %v1387
        %v1394 = vpack.c.bf16 %v1378, %v1378
        %1395 = vrot.lane.b32.xlu0 %v878, 116
        %v1396 = vpop.permute.xlu0 %1395
        %v1398 = vsel %vm935, %v1394, 0
        %v1401 = vsel %vm970, %v1396, 0
        %1403 = vmatprep.subr.bf16.mxu0 0
        %1404 = vmatpush1.bf16.msra.mxu0 0
        %1405 = vmatprep.subr.bf16.mxu0 0
        %1406 = vmatpush1.bf16.msra.mxu0 0
        %1407 = vmatprep.subr.bf16.mxu0 0
        %1408 = vmatpush1.bf16.msra.mxu0 0
        %1409 = vmatprep.subr.bf16.mxu0 0
        %1410 = vmatpush1.bf16.msra.mxu0 0
        %1411 = vmatprep.subr.bf16.mxu0 0
        %1412 = vmatpush1.bf16.msra.mxu0 0
        %1413 = vmatprep.subr.bf16.mxu0 0
        %1414 = vmatpush1.bf16.msra.mxu0 0
        %1415 = vmatprep.subr.bf16.mxu0 0
        %1416 = vmatpush1.bf16.msra.mxu0 0
        %1417 = vmatprep.subr.bf16.mxu0 0
        %1418 = vmatpush1.bf16.msra.mxu0 %v1401
        %1419 = vmatprep.subr.bf16.mxu0 0
        %1420 = vmatpush2.bf16.msra.mxu0 0
        %1421 = vmatprep.subr.bf16.mxu0 0
        %1422 = vmatpush2.bf16.msra.mxu0 0
        %1423 = vmatprep.subr.bf16.mxu0 0
        %1424 = vmatpush2.bf16.msra.mxu0 0
        %1425 = vmatprep.subr.bf16.mxu0 0
        %1426 = vmatpush2.bf16.msra.mxu0 0
        %1427 = vmatprep.subr.bf16.mxu0 0
        %1428 = vmatpush2.bf16.msra.mxu0 0
        %1429 = vmatprep.subr.bf16.mxu0 0
        %1430 = vmatpush2.bf16.msra.mxu0 0
        %1431 = vmatprep.subr.bf16.mxu0 0
        %1432 = vmatpush2.bf16.msra.mxu0 0
        %1433 = vmatprep.subr.bf16.mxu0 0
        %1434 = vmatpush2.bf16.msra.mxu0 0
        %1435 = vmatprep.mubr.bf16.mxu0 0
        %1436 = vmatmul.mubr.bf16.gmra.mxu0 %v1398
        %v1437 = vpop.f32.mrf.mxu0
        %v1438 = vadd.f32 0.0, %v1437
        %v1439 = vpop.f32.mrf.mxu0
        %v1440 = vpop.f32.mrf.mxu0
        %v1441 = vpop.f32.mrf.mxu0
        %1442 = vdwg.mxu0
        %1444 = vrot.lane.b32.xlu0 %v1438, 12
        %v1445 = vpop.permute.xlu0 %1444
        %v1447 = vadd.f32 %v1393, %v1445
        %vm1448 = vcmask 130144
        %1449 = vst.msk [vmem:[#allocation3] sm:$0xff] %vm1448, %v1447
        %1450 = vst.msk [vmem:[%s1362] sm:$0xff] %vm957, %v1367
        %v1451 = vld [vmem:[#allocation2] sm:$0xf]
        %v1453 = vunpack.c.l.b16 %v1451
        %v1454 = vpack.c.b16 %v1453, %v1453
        %1455 = vrot.lane.b32.xlu0 %v1454, 112
        %v1456 = vpop.permute.xlu0 %1455
        %1457 = vrot.lane.b32.xlu0 %v773, 112
        %v1458 = vpop.permute.xlu0 %1457
        %v1460 = vsel %vm881, %v1456, 0
        %v1463 = vsel %vm881, %v1458, 0
        %1465 = vmatprep.subr.bf16.mxu0 0
        %1466 = vmatpush1.bf16.xpose.msra.mxu0 0
        %1467 = vmatprep.subr.bf16.mxu0 0
        %1468 = vmatpush1.bf16.xpose.msra.mxu0 0
        %1469 = vmatprep.subr.bf16.mxu0 0
        %1470 = vmatpush1.bf16.xpose.msra.mxu0 0
        %1471 = vmatprep.subr.bf16.mxu0 0
        %1472 = vmatpush1.bf16.xpose.msra.mxu0 0
        %1473 = vmatprep.subr.bf16.mxu0 0
        %1474 = vmatpush1.bf16.xpose.msra.mxu0 0
        %1475 = vmatprep.subr.bf16.mxu0 0
        %1476 = vmatpush1.bf16.xpose.msra.mxu0 0
        %1477 = vmatprep.subr.bf16.mxu0 0
        %1478 = vmatpush1.bf16.xpose.msra.mxu0 0
        %1479 = vmatprep.subr.bf16.mxu0 0
        %1480 = vmatpush1.bf16.xpose.msra.mxu0 %v1463
        %1481 = vmatprep.subr.bf16.mxu0 0
        %1482 = vmatpush2.bf16.xpose.msra.mxu0 0
        %1483 = vmatprep.subr.bf16.mxu0 0
        %1484 = vmatpush2.bf16.xpose.msra.mxu0 0
        %1485 = vmatprep.subr.bf16.mxu0 0
        %1486 = vmatpush2.bf16.xpose.msra.mxu0 0
        %1487 = vmatprep.subr.bf16.mxu0 0
        %1488 = vmatpush2.bf16.xpose.msra.mxu0 0
        %1489 = vmatprep.subr.bf16.mxu0 0
        %1490 = vmatpush2.bf16.xpose.msra.mxu0 0
        %1491 = vmatprep.subr.bf16.mxu0 0
        %1492 = vmatpush2.bf16.xpose.msra.mxu0 0
        %1493 = vmatprep.subr.bf16.mxu0 0
        %1494 = vmatpush2.bf16.xpose.msra.mxu0 0
        %1495 = vmatprep.subr.bf16.mxu0 0
        %1496 = vmatpush2.bf16.xpose.msra.mxu0 0
        %1497 = vmatprep.mubr.bf16.mxu0 0
        %1498 = vmatmul.mubr.bf16.gmra.mxu0 %v1460
        %v1499 = vpop.f32.mrf.mxu0
        %v1500 = vadd.f32 0.0, %v1499
        %v1501 = vpop.f32.mrf.mxu0
        %v1502 = vpop.f32.mrf.mxu0
        %v1503 = vpop.f32.mrf.mxu0
        %1504 = vdwg.mxu0
        %v1505 = vmul.f32 %v1500, %v931
        %s1506 = scalar_lea.vmem [#allocation4], 32
        %v1507 = vld [vmem:[%s1506] sm:$0xff]
        %v1508 = vsel %vm935, %v1505, -inf
        %1509 = vmax.xlane.f32.xlu0 %v1508
        %v1510 = vpop.xlane.xlu0 %1509
        %v1511 = vmax.f32 %v1507, %v1510
        %v1512 = vsub.f32 %v1507, %v1511
        %v1513 = vmul.f32 %v1512, 1.442695
        %v1514 = vpow.pop %v1513
        %1516 = vset.pattern.permute.xlu0 0
        %1517 = vperm.xlu0 %1516, %v1511
        %v1518 = vpop.permute.xlu0 %1517
        %v1520 = vsub.f32 %v1505, %v1518
        %v1521 = vmul.f32 %v1520, 1.442695
        %v1522 = vpow.pop %v1521
        %s1523 = scalar_lea.vmem [#allocation5], 32
        %v1524 = vld [vmem:[%s1523] sm:$0xff]
        %v1525 = vmul.f32 %v1514, %v1524
        %v1526 = vsel %vm935, %v1522, 0.0
        %1527 = vadd.xlane.f32.xlu0 %v1526
        %v1528 = vpop.xlane.xlu0 %1527
        %v1529 = vadd.f32 %v1525, %v1528
        %1530 = vst.msk [vmem:[%s1523] sm:$0xff] %vm957, %v1529
        %v1531 = vld [vmem:[#allocation3] sm:$0xff]
        %1533 = vset.pattern.permute.xlu0 0
        %1534 = vperm.xlu0 %1533, %v1514
        %v1535 = vpop.permute.xlu0 %1534
        %v1537 = vmul.f32 %v1535, %v1531
        %v1538 = vpack.c.bf16 %v1522, %v1522
        %1539 = vrot.lane.b32.xlu0 %v878, 112
        %v1540 = vpop.permute.xlu0 %1539
        %v1542 = vsel %vm935, %v1538, 0
        %v1545 = vsel %vm970, %v1540, 0
        %1547 = vmatprep.subr.bf16.mxu0 0
        %1548 = vmatpush1.bf16.msra.mxu0 0
        %1549 = vmatprep.subr.bf16.mxu0 0
        %1550 = vmatpush1.bf16.msra.mxu0 0
        %1551 = vmatprep.subr.bf16.mxu0 0
        %1552 = vmatpush1.bf16.msra.mxu0 0
        %1553 = vmatprep.subr.bf16.mxu0 0
        %1554 = vmatpush1.bf16.msra.mxu0 0
        %1555 = vmatprep.subr.bf16.mxu0 0
        %1556 = vmatpush1.bf16.msra.mxu0 0
        %1557 = vmatprep.subr.bf16.mxu0 0
        %1558 = vmatpush1.bf16.msra.mxu0 0
        %1559 = vmatprep.subr.bf16.mxu0 0
        %1560 = vmatpush1.bf16.msra.mxu0 0
        %1561 = vmatprep.subr.bf16.mxu0 0
        %1562 = vmatpush1.bf16.msra.mxu0 %v1545
        %1563 = vmatprep.subr.bf16.mxu0 0
        %1564 = vmatpush2.bf16.msra.mxu0 0
        %1565 = vmatprep.subr.bf16.mxu0 0
        %1566 = vmatpush2.bf16.msra.mxu0 0
        %1567 = vmatprep.subr.bf16.mxu0 0
        %1568 = vmatpush2.bf16.msra.mxu0 0
        %1569 = vmatprep.subr.bf16.mxu0 0
        %1570 = vmatpush2.bf16.msra.mxu0 0
        %1571 = vmatprep.subr.bf16.mxu0 0
        %1572 = vmatpush2.bf16.msra.mxu0 0
        %1573 = vmatprep.subr.bf16.mxu0 0
        %1574 = vmatpush2.bf16.msra.mxu0 0
        %1575 = vmatprep.subr.bf16.mxu0 0
        %1576 = vmatpush2.bf16.msra.mxu0 0
        %1577 = vmatprep.subr.bf16.mxu0 0
        %1578 = vmatpush2.bf16.msra.mxu0 0
        %1579 = vmatprep.mubr.bf16.mxu0 0
        %1580 = vmatmul.mubr.bf16.gmra.mxu0 %v1542
        %v1581 = vpop.f32.mrf.mxu0
        %v1582 = vadd.f32 0.0, %v1581
        %v1583 = vpop.f32.mrf.mxu0
        %v1584 = vpop.f32.mrf.mxu0
        %v1585 = vpop.f32.mrf.mxu0
        %1586 = vdwg.mxu0
        %1588 = vrot.lane.b32.xlu0 %v1582, 16
        %v1589 = vpop.permute.xlu0 %1588
        %v1591 = vadd.f32 %v1537, %v1589
        %vm1592 = vcmask 162944
        %1593 = vst.msk [vmem:[#allocation3] sm:$0xff] %vm1592, %v1591
        %1594 = vst.msk [vmem:[%s1506] sm:$0xff] %vm957, %v1511
        %v1595 = vld [vmem:[#allocation2] sm:$0xf]
        %v1597 = vunpack.c.l.b16 %v1595
        %v1598 = vpack.c.b16 %v1597, %v1597
        %1599 = vrot.lane.b32.xlu0 %v1598, 108
        %v1600 = vpop.permute.xlu0 %1599
        %1601 = vrot.lane.b32.xlu0 %v773, 108
        %v1602 = vpop.permute.xlu0 %1601
        %v1604 = vsel %vm881, %v1600, 0
        %v1607 = vsel %vm881, %v1602, 0
        %1609 = vmatprep.subr.bf16.mxu0 0
        %1610 = vmatpush1.bf16.xpose.msra.mxu0 0
        %1611 = vmatprep.subr.bf16.mxu0 0
        %1612 = vmatpush1.bf16.xpose.msra.mxu0 0
        %1613 = vmatprep.subr.bf16.mxu0 0
        %1614 = vmatpush1.bf16.xpose.msra.mxu0 0
        %1615 = vmatprep.subr.bf16.mxu0 0
        %1616 = vmatpush1.bf16.xpose.msra.mxu0 0
        %1617 = vmatprep.subr.bf16.mxu0 0
        %1618 = vmatpush1.bf16.xpose.msra.mxu0 0
        %1619 = vmatprep.subr.bf16.mxu0 0
        %1620 = vmatpush1.bf16.xpose.msra.mxu0 0
        %1621 = vmatprep.subr.bf16.mxu0 0
        %1622 = vmatpush1.bf16.xpose.msra.mxu0 0
        %1623 = vmatprep.subr.bf16.mxu0 0
        %1624 = vmatpush1.bf16.xpose.msra.mxu0 %v1607
        %1625 = vmatprep.subr.bf16.mxu0 0
        %1626 = vmatpush2.bf16.xpose.msra.mxu0 0
        %1627 = vmatprep.subr.bf16.mxu0 0
        %1628 = vmatpush2.bf16.xpose.msra.mxu0 0
        %1629 = vmatprep.subr.bf16.mxu0 0
        %1630 = vmatpush2.bf16.xpose.msra.mxu0 0
        %1631 = vmatprep.subr.bf16.mxu0 0
        %1632 = vmatpush2.bf16.xpose.msra.mxu0 0
        %1633 = vmatprep.subr.bf16.mxu0 0
        %1634 = vmatpush2.bf16.xpose.msra.mxu0 0
        %1635 = vmatprep.subr.bf16.mxu0 0
        %1636 = vmatpush2.bf16.xpose.msra.mxu0 0
        %1637 = vmatprep.subr.bf16.mxu0 0
        %1638 = vmatpush2.bf16.xpose.msra.mxu0 0
        %1639 = vmatprep.subr.bf16.mxu0 0
        %1640 = vmatpush2.bf16.xpose.msra.mxu0 0
        %1641 = vmatprep.mubr.bf16.mxu0 0
        %1642 = vmatmul.mubr.bf16.gmra.mxu0 %v1604
        %v1643 = vpop.f32.mrf.mxu0
        %v1644 = vadd.f32 0.0, %v1643
        %v1645 = vpop.f32.mrf.mxu0
        %v1646 = vpop.f32.mrf.mxu0
        %v1647 = vpop.f32.mrf.mxu0
        %1648 = vdwg.mxu0
        %v1649 = vmul.f32 %v1644, %v931
        %s1650 = scalar_lea.vmem [#allocation4], 40
        %v1651 = vld [vmem:[%s1650] sm:$0xff]
        %v1652 = vsel %vm935, %v1649, -inf
        %1653 = vmax.xlane.f32.xlu0 %v1652
        %v1654 = vpop.xlane.xlu0 %1653
        %v1655 = vmax.f32 %v1651, %v1654
        %v1656 = vsub.f32 %v1651, %v1655
        %v1657 = vmul.f32 %v1656, 1.442695
        %v1658 = vpow.pop %v1657
        %1660 = vset.pattern.permute.xlu0 0
        %1661 = vperm.xlu0 %1660, %v1655
        %v1662 = vpop.permute.xlu0 %1661
        %v1664 = vsub.f32 %v1649, %v1662
        %v1665 = vmul.f32 %v1664, 1.442695
        %v1666 = vpow.pop %v1665
        %s1667 = scalar_lea.vmem [#allocation5], 40
        %v1668 = vld [vmem:[%s1667] sm:$0xff]
        %v1669 = vmul.f32 %v1658, %v1668
        %v1670 = vsel %vm935, %v1666, 0.0
        %1671 = vadd.xlane.f32.xlu0 %v1670
        %v1672 = vpop.xlane.xlu0 %1671
        %v1673 = vadd.f32 %v1669, %v1672
        %1674 = vst.msk [vmem:[%s1667] sm:$0xff] %vm957, %v1673
        %v1675 = vld [vmem:[#allocation3] sm:$0xff]
        %1677 = vset.pattern.permute.xlu0 0
        %1678 = vperm.xlu0 %1677, %v1658
        %v1679 = vpop.permute.xlu0 %1678
        %v1681 = vmul.f32 %v1679, %v1675
        %v1682 = vpack.c.bf16 %v1666, %v1666
        %1683 = vrot.lane.b32.xlu0 %v878, 108
        %v1684 = vpop.permute.xlu0 %1683
        %v1686 = vsel %vm935, %v1682, 0
        %v1689 = vsel %vm970, %v1684, 0
        %1691 = vmatprep.subr.bf16.mxu0 0
        %1692 = vmatpush1.bf16.msra.mxu0 0
        %1693 = vmatprep.subr.bf16.mxu0 0
        %1694 = vmatpush1.bf16.msra.mxu0 0
        %1695 = vmatprep.subr.bf16.mxu0 0
        %1696 = vmatpush1.bf16.msra.mxu0 0
        %1697 = vmatprep.subr.bf16.mxu0 0
        %1698 = vmatpush1.bf16.msra.mxu0 0
        %1699 = vmatprep.subr.bf16.mxu0 0
        %1700 = vmatpush1.bf16.msra.mxu0 0
        %1701 = vmatprep.subr.bf16.mxu0 0
        %1702 = vmatpush1.bf16.msra.mxu0 0
        %1703 = vmatprep.subr.bf16.mxu0 0
        %1704 = vmatpush1.bf16.msra.mxu0 0
        %1705 = vmatprep.subr.bf16.mxu0 0
        %1706 = vmatpush1.bf16.msra.mxu0 %v1689
        %1707 = vmatprep.subr.bf16.mxu0 0
        %1708 = vmatpush2.bf16.msra.mxu0 0
        %1709 = vmatprep.subr.bf16.mxu0 0
        %1710 = vmatpush2.bf16.msra.mxu0 0
        %1711 = vmatprep.subr.bf16.mxu0 0
        %1712 = vmatpush2.bf16.msra.mxu0 0
        %1713 = vmatprep.subr.bf16.mxu0 0
        %1714 = vmatpush2.bf16.msra.mxu0 0
        %1715 = vmatprep.subr.bf16.mxu0 0
        %1716 = vmatpush2.bf16.msra.mxu0 0
        %1717 = vmatprep.subr.bf16.mxu0 0
        %1718 = vmatpush2.bf16.msra.mxu0 0
        %1719 = vmatprep.subr.bf16.mxu0 0
        %1720 = vmatpush2.bf16.msra.mxu0 0
        %1721 = vmatprep.subr.bf16.mxu0 0
        %1722 = vmatpush2.bf16.msra.mxu0 0
        %1723 = vmatprep.mubr.bf16.mxu0 0
        %1724 = vmatmul.mubr.bf16.gmra.mxu0 %v1686
        %v1725 = vpop.f32.mrf.mxu0
        %v1726 = vadd.f32 0.0, %v1725
        %v1727 = vpop.f32.mrf.mxu0
        %v1728 = vpop.f32.mrf.mxu0
        %v1729 = vpop.f32.mrf.mxu0
        %1730 = vdwg.mxu0
        %1732 = vrot.lane.b32.xlu0 %v1726, 20
        %v1733 = vpop.permute.xlu0 %1732
        %v1735 = vadd.f32 %v1681, %v1733
        %vm1736 = vcmask 195744
        %1737 = vst.msk [vmem:[#allocation3] sm:$0xff] %vm1736, %v1735
        %1738 = vst.msk [vmem:[%s1650] sm:$0xff] %vm957, %v1655
        %v1739 = vld [vmem:[#allocation2] sm:$0xf]
        %v1741 = vunpack.c.l.b16 %v1739
        %v1742 = vpack.c.b16 %v1741, %v1741
        %1743 = vrot.lane.b32.xlu0 %v1742, 104
        %v1744 = vpop.permute.xlu0 %1743
        %1745 = vrot.lane.b32.xlu0 %v773, 104
        %v1746 = vpop.permute.xlu0 %1745
        %v1748 = vsel %vm881, %v1744, 0
        %v1751 = vsel %vm881, %v1746, 0
        %1753 = vmatprep.subr.bf16.mxu0 0
        %1754 = vmatpush1.bf16.xpose.msra.mxu0 0
        %1755 = vmatprep.subr.bf16.mxu0 0
        %1756 = vmatpush1.bf16.xpose.msra.mxu0 0
        %1757 = vmatprep.subr.bf16.mxu0 0
        %1758 = vmatpush1.bf16.xpose.msra.mxu0 0
        %1759 = vmatprep.subr.bf16.mxu0 0
        %1760 = vmatpush1.bf16.xpose.msra.mxu0 0
        %1761 = vmatprep.subr.bf16.mxu0 0
        %1762 = vmatpush1.bf16.xpose.msra.mxu0 0
        %1763 = vmatprep.subr.bf16.mxu0 0
        %1764 = vmatpush1.bf16.xpose.msra.mxu0 0
        %1765 = vmatprep.subr.bf16.mxu0 0
        %1766 = vmatpush1.bf16.xpose.msra.mxu0 0
        %1767 = vmatprep.subr.bf16.mxu0 0
        %1768 = vmatpush1.bf16.xpose.msra.mxu0 %v1751
        %1769 = vmatprep.subr.bf16.mxu0 0
        %1770 = vmatpush2.bf16.xpose.msra.mxu0 0
        %1771 = vmatprep.subr.bf16.mxu0 0
        %1772 = vmatpush2.bf16.xpose.msra.mxu0 0
        %1773 = vmatprep.subr.bf16.mxu0 0
        %1774 = vmatpush2.bf16.xpose.msra.mxu0 0
        %1775 = vmatprep.subr.bf16.mxu0 0
        %1776 = vmatpush2.bf16.xpose.msra.mxu0 0
        %1777 = vmatprep.subr.bf16.mxu0 0
        %1778 = vmatpush2.bf16.xpose.msra.mxu0 0
        %1779 = vmatprep.subr.bf16.mxu0 0
        %1780 = vmatpush2.bf16.xpose.msra.mxu0 0
        %1781 = vmatprep.subr.bf16.mxu0 0
        %1782 = vmatpush2.bf16.xpose.msra.mxu0 0
        %1783 = vmatprep.subr.bf16.mxu0 0
        %1784 = vmatpush2.bf16.xpose.msra.mxu0 0
        %1785 = vmatprep.mubr.bf16.mxu0 0
        %1786 = vmatmul.mubr.bf16.gmra.mxu0 %v1748
        %v1787 = vpop.f32.mrf.mxu0
        %v1788 = vadd.f32 0.0, %v1787
        %v1789 = vpop.f32.mrf.mxu0
        %v1790 = vpop.f32.mrf.mxu0
        %v1791 = vpop.f32.mrf.mxu0
        %1792 = vdwg.mxu0
        %v1793 = vmul.f32 %v1788, %v931
        %s1794 = scalar_lea.vmem [#allocation4], 48
        %v1795 = vld [vmem:[%s1794] sm:$0xff]
        %v1796 = vsel %vm935, %v1793, -inf
        %1797 = vmax.xlane.f32.xlu0 %v1796
        %v1798 = vpop.xlane.xlu0 %1797
        %v1799 = vmax.f32 %v1795, %v1798
        %v1800 = vsub.f32 %v1795, %v1799
        %v1801 = vmul.f32 %v1800, 1.442695
        %v1802 = vpow.pop %v1801
        %1804 = vset.pattern.permute.xlu0 0
        %1805 = vperm.xlu0 %1804, %v1799
        %v1806 = vpop.permute.xlu0 %1805
        %v1808 = vsub.f32 %v1793, %v1806
        %v1809 = vmul.f32 %v1808, 1.442695
        %v1810 = vpow.pop %v1809
        %s1811 = scalar_lea.vmem [#allocation5], 48
        %v1812 = vld [vmem:[%s1811] sm:$0xff]
        %v1813 = vmul.f32 %v1802, %v1812
        %v1814 = vsel %vm935, %v1810, 0.0
        %1815 = vadd.xlane.f32.xlu0 %v1814
        %v1816 = vpop.xlane.xlu0 %1815
        %v1817 = vadd.f32 %v1813, %v1816
        %1818 = vst.msk [vmem:[%s1811] sm:$0xff] %vm957, %v1817
        %v1819 = vld [vmem:[#allocation3] sm:$0xff]
        %1821 = vset.pattern.permute.xlu0 0
        %1822 = vperm.xlu0 %1821, %v1802
        %v1823 = vpop.permute.xlu0 %1822
        %v1825 = vmul.f32 %v1823, %v1819
        %v1826 = vpack.c.bf16 %v1810, %v1810
        %1827 = vrot.lane.b32.xlu0 %v878, 104
        %v1828 = vpop.permute.xlu0 %1827
        %v1830 = vsel %vm935, %v1826, 0
        %v1833 = vsel %vm970, %v1828, 0
        %1835 = vmatprep.subr.bf16.mxu0 0
        %1836 = vmatpush1.bf16.msra.mxu0 0
        %1837 = vmatprep.subr.bf16.mxu0 0
        %1838 = vmatpush1.bf16.msra.mxu0 0
        %1839 = vmatprep.subr.bf16.mxu0 0
        %1840 = vmatpush1.bf16.msra.mxu0 0
        %1841 = vmatprep.subr.bf16.mxu0 0
        %1842 = vmatpush1.bf16.msra.mxu0 0
        %1843 = vmatprep.subr.bf16.mxu0 0
        %1844 = vmatpush1.bf16.msra.mxu0 0
        %1845 = vmatprep.subr.bf16.mxu0 0
        %1846 = vmatpush1.bf16.msra.mxu0 0
        %1847 = vmatprep.subr.bf16.mxu0 0
        %1848 = vmatpush1.bf16.msra.mxu0 0
        %1849 = vmatprep.subr.bf16.mxu0 0
        %1850 = vmatpush1.bf16.msra.mxu0 %v1833
        %1851 = vmatprep.subr.bf16.mxu0 0
        %1852 = vmatpush2.bf16.msra.mxu0 0
        %1853 = vmatprep.subr.bf16.mxu0 0
        %1854 = vmatpush2.bf16.msra.mxu0 0
        %1855 = vmatprep.subr.bf16.mxu0 0
        %1856 = vmatpush2.bf16.msra.mxu0 0
        %1857 = vmatprep.subr.bf16.mxu0 0
        %1858 = vmatpush2.bf16.msra.mxu0 0
        %1859 = vmatprep.subr.bf16.mxu0 0
        %1860 = vmatpush2.bf16.msra.mxu0 0
        %1861 = vmatprep.subr.bf16.mxu0 0
        %1862 = vmatpush2.bf16.msra.mxu0 0
        %1863 = vmatprep.subr.bf16.mxu0 0
        %1864 = vmatpush2.bf16.msra.mxu0 0
        %1865 = vmatprep.subr.bf16.mxu0 0
        %1866 = vmatpush2.bf16.msra.mxu0 0
        %1867 = vmatprep.mubr.bf16.mxu0 0
        %1868 = vmatmul.mubr.bf16.gmra.mxu0 %v1830
        %v1869 = vpop.f32.mrf.mxu0
        %v1870 = vadd.f32 0.0, %v1869
        %v1871 = vpop.f32.mrf.mxu0
        %v1872 = vpop.f32.mrf.mxu0
        %v1873 = vpop.f32.mrf.mxu0
        %1874 = vdwg.mxu0
        %1876 = vrot.lane.b32.xlu0 %v1870, 24
        %v1877 = vpop.permute.xlu0 %1876
        %v1879 = vadd.f32 %v1825, %v1877
        %vm1880 = vcmask 228544
        %1881 = vst.msk [vmem:[#allocation3] sm:$0xff] %vm1880, %v1879
        %1882 = vst.msk [vmem:[%s1794] sm:$0xff] %vm957, %v1799
        %v1883 = vld [vmem:[#allocation2] sm:$0xf]
        %v1885 = vunpack.c.l.b16 %v1883
        %v1886 = vpack.c.b16 %v1885, %v1885
        %1887 = vrot.lane.b32.xlu0 %v1886, 100
        %v1888 = vpop.permute.xlu0 %1887
        %1889 = vrot.lane.b32.xlu0 %v773, 100
        %v1890 = vpop.permute.xlu0 %1889
        %v1892 = vsel %vm881, %v1888, 0
        %v1895 = vsel %vm881, %v1890, 0
        %1897 = vmatprep.subr.bf16.mxu0 0
        %1898 = vmatpush1.bf16.xpose.msra.mxu0 0
        %1899 = vmatprep.subr.bf16.mxu0 0
        %1900 = vmatpush1.bf16.xpose.msra.mxu0 0
        %1901 = vmatprep.subr.bf16.mxu0 0
        %1902 = vmatpush1.bf16.xpose.msra.mxu0 0
        %1903 = vmatprep.subr.bf16.mxu0 0
        %1904 = vmatpush1.bf16.xpose.msra.mxu0 0
        %1905 = vmatprep.subr.bf16.mxu0 0
        %1906 = vmatpush1.bf16.xpose.msra.mxu0 0
        %1907 = vmatprep.subr.bf16.mxu0 0
        %1908 = vmatpush1.bf16.xpose.msra.mxu0 0
        %1909 = vmatprep.subr.bf16.mxu0 0
        %1910 = vmatpush1.bf16.xpose.msra.mxu0 0
        %1911 = vmatprep.subr.bf16.mxu0 0
        %1912 = vmatpush1.bf16.xpose.msra.mxu0 %v1895
        %1913 = vmatprep.subr.bf16.mxu0 0
        %1914 = vmatpush2.bf16.xpose.msra.mxu0 0
        %1915 = vmatprep.subr.bf16.mxu0 0
        %1916 = vmatpush2.bf16.xpose.msra.mxu0 0
        %1917 = vmatprep.subr.bf16.mxu0 0
        %1918 = vmatpush2.bf16.xpose.msra.mxu0 0
        %1919 = vmatprep.subr.bf16.mxu0 0
        %1920 = vmatpush2.bf16.xpose.msra.mxu0 0
        %1921 = vmatprep.subr.bf16.mxu0 0
        %1922 = vmatpush2.bf16.xpose.msra.mxu0 0
        %1923 = vmatprep.subr.bf16.mxu0 0
        %1924 = vmatpush2.bf16.xpose.msra.mxu0 0
        %1925 = vmatprep.subr.bf16.mxu0 0
        %1926 = vmatpush2.bf16.xpose.msra.mxu0 0
        %1927 = vmatprep.subr.bf16.mxu0 0
        %1928 = vmatpush2.bf16.xpose.msra.mxu0 0
        %1929 = vmatprep.mubr.bf16.mxu0 0
        %1930 = vmatmul.mubr.bf16.gmra.mxu0 %v1892
        %v1931 = vpop.f32.mrf.mxu0
        %v1932 = vadd.f32 0.0, %v1931
        %v1933 = vpop.f32.mrf.mxu0
        %v1934 = vpop.f32.mrf.mxu0
        %v1935 = vpop.f32.mrf.mxu0
        %1936 = vdwg.mxu0
        %v1937 = vmul.f32 %v1932, %v931
        %s1938 = scalar_lea.vmem [#allocation4], 56
        %v1939 = vld [vmem:[%s1938] sm:$0xff]
        %v1940 = vsel %vm935, %v1937, -inf
        %1941 = vmax.xlane.f32.xlu0 %v1940
        %v1942 = vpop.xlane.xlu0 %1941
        %v1943 = vmax.f32 %v1939, %v1942
        %v1944 = vsub.f32 %v1939, %v1943
        %v1945 = vmul.f32 %v1944, 1.442695
        %v1946 = vpow.pop %v1945
        %1948 = vset.pattern.permute.xlu0 0
        %1949 = vperm.xlu0 %1948, %v1943
        %v1950 = vpop.permute.xlu0 %1949
        %v1952 = vsub.f32 %v1937, %v1950
        %v1953 = vmul.f32 %v1952, 1.442695
        %v1954 = vpow.pop %v1953
        %s1955 = scalar_lea.vmem [#allocation5], 56
        %v1956 = vld [vmem:[%s1955] sm:$0xff]
        %v1957 = vmul.f32 %v1946, %v1956
        %v1958 = vsel %vm935, %v1954, 0.0
        %1959 = vadd.xlane.f32.xlu0 %v1958
        %v1960 = vpop.xlane.xlu0 %1959
        %v1961 = vadd.f32 %v1957, %v1960
        %1962 = vst.msk [vmem:[%s1955] sm:$0xff] %vm957, %v1961
        %v1963 = vld [vmem:[#allocation3] sm:$0xff]
        %1965 = vset.pattern.permute.xlu0 0
        %1966 = vperm.xlu0 %1965, %v1946
        %v1967 = vpop.permute.xlu0 %1966
        %v1969 = vmul.f32 %v1967, %v1963
        %v1970 = vpack.c.bf16 %v1954, %v1954
        %1971 = vrot.lane.b32.xlu0 %v878, 100
        %v1972 = vpop.permute.xlu0 %1971
        %v1974 = vsel %vm935, %v1970, 0
        %v1977 = vsel %vm970, %v1972, 0
        %1979 = vmatprep.subr.bf16.mxu0 0
        %1980 = vmatpush1.bf16.msra.mxu0 0
        %1981 = vmatprep.subr.bf16.mxu0 0
        %1982 = vmatpush1.bf16.msra.mxu0 0
        %1983 = vmatprep.subr.bf16.mxu0 0
        %1984 = vmatpush1.bf16.msra.mxu0 0
        %1985 = vmatprep.subr.bf16.mxu0 0
        %1986 = vmatpush1.bf16.msra.mxu0 0
        %1987 = vmatprep.subr.bf16.mxu0 0
        %1988 = vmatpush1.bf16.msra.mxu0 0
        %1989 = vmatprep.subr.bf16.mxu0 0
        %1990 = vmatpush1.bf16.msra.mxu0 0
        %1991 = vmatprep.subr.bf16.mxu0 0
        %1992 = vmatpush1.bf16.msra.mxu0 0
        %1993 = vmatprep.subr.bf16.mxu0 0
        %1994 = vmatpush1.bf16.msra.mxu0 %v1977
        %1995 = vmatprep.subr.bf16.mxu0 0
        %1996 = vmatpush2.bf16.msra.mxu0 0
        %1997 = vmatprep.subr.bf16.mxu0 0
        %1998 = vmatpush2.bf16.msra.mxu0 0
        %1999 = vmatprep.subr.bf16.mxu0 0
        %2000 = vmatpush2.bf16.msra.mxu0 0
        %2001 = vmatprep.subr.bf16.mxu0 0
        %2002 = vmatpush2.bf16.msra.mxu0 0
        %2003 = vmatprep.subr.bf16.mxu0 0
        %2004 = vmatpush2.bf16.msra.mxu0 0
        %2005 = vmatprep.subr.bf16.mxu0 0
        %2006 = vmatpush2.bf16.msra.mxu0 0
        %2007 = vmatprep.subr.bf16.mxu0 0
        %2008 = vmatpush2.bf16.msra.mxu0 0
        %2009 = vmatprep.subr.bf16.mxu0 0
        %2010 = vmatpush2.bf16.msra.mxu0 0
        %2011 = vmatprep.mubr.bf16.mxu0 0
        %2012 = vmatmul.mubr.bf16.gmra.mxu0 %v1974
        %v2013 = vpop.f32.mrf.mxu0
        %v2014 = vadd.f32 0.0, %v2013
        %v2015 = vpop.f32.mrf.mxu0
        %v2016 = vpop.f32.mrf.mxu0
        %v2017 = vpop.f32.mrf.mxu0
        %2018 = vdwg.mxu0
        %2020 = vrot.lane.b32.xlu0 %v2014, 28
        %v2021 = vpop.permute.xlu0 %2020
        %v2023 = vadd.f32 %v1969, %v2021
        %vm2024 = vcmask 261344
        %2025 = vst.msk [vmem:[#allocation3] sm:$0xff] %vm2024, %v2023
        %2026 = vst.msk [vmem:[%s1938] sm:$0xff] %vm957, %v1943
        %p2027 = scmp.eq.s32.totalorder %s38, 1
        // Predicated region
        $region85: #{tpu_custom_call.1} parent=55 // pred_check
          %p2028 = pneg %p2027
        $region86: #{tpu_custom_call.1} parent=55 // pred_check_branch
          %2030 = sbr.rel (%p2028) target = $region88
        $region87: #{tpu_custom_call.1} parent=55 // pred_region
          %v2031 = vld [vmem:[#allocation5] sm:$0xff]
          %v2032 = vrcp.pop %v2031
          %v2033 = vld [vmem:[#allocation3] sm:$0xff]
          %2035 = vset.pattern.permute.xlu0 0
          %2036 = vperm.xlu0 %2035, %v2032
          %v2037 = vpop.permute.xlu0 %2036
          %v2039 = vmul.f32 %v2033, %v2037
          %2040 = vst.msk [vmem:[#allocation3] sm:$0xff] %vm881, %v2039
          %v2041 = vld [vmem:[%s1090] sm:$0xff]
          %v2042 = vrcp.pop %v2041
          %v2043 = vld [vmem:[#allocation3] sm:$0xff]
          %2045 = vset.pattern.permute.xlu0 0
          %2046 = vperm.xlu0 %2045, %v2042
          %v2047 = vpop.permute.xlu0 %2046
          %v2049 = vmul.f32 %v2043, %v2047
          %2050 = vst.msk [vmem:[#allocation3] sm:$0xff] %vm1160, %v2049
          %v2051 = vld [vmem:[%s1235] sm:$0xff]
          %v2052 = vrcp.pop %v2051
          %v2053 = vld [vmem:[#allocation3] sm:$0xff]
          %2055 = vset.pattern.permute.xlu0 0
          %2056 = vperm.xlu0 %2055, %v2052
          %v2057 = vpop.permute.xlu0 %2056
          %v2059 = vmul.f32 %v2053, %v2057
          %2060 = vst.msk [vmem:[#allocation3] sm:$0xff] %vm1304, %v2059
          %v2061 = vld [vmem:[%s1379] sm:$0xff]
          %v2062 = vrcp.pop %v2061
          %v2063 = vld [vmem:[#allocation3] sm:$0xff]
          %2065 = vset.pattern.permute.xlu0 0
          %2066 = vperm.xlu0 %2065, %v2062
          %v2067 = vpop.permute.xlu0 %2066
          %v2069 = vmul.f32 %v2063, %v2067
          %2070 = vst.msk [vmem:[#allocation3] sm:$0xff] %vm1448, %v2069
          %v2071 = vld [vmem:[%s1523] sm:$0xff]
          %v2072 = vrcp.pop %v2071
          %v2073 = vld [vmem:[#allocation3] sm:$0xff]
          %2075 = vset.pattern.permute.xlu0 0
          %2076 = vperm.xlu0 %2075, %v2072
          %v2077 = vpop.permute.xlu0 %2076
          %v2079 = vmul.f32 %v2073, %v2077
          %2080 = vst.msk [vmem:[#allocation3] sm:$0xff] %vm1592, %v2079
          %v2081 = vld [vmem:[%s1667] sm:$0xff]
          %v2082 = vrcp.pop %v2081
          %v2083 = vld [vmem:[#allocation3] sm:$0xff]
          %2085 = vset.pattern.permute.xlu0 0
          %2086 = vperm.xlu0 %2085, %v2082
          %v2087 = vpop.permute.xlu0 %2086
          %v2089 = vmul.f32 %v2083, %v2087
          %2090 = vst.msk [vmem:[#allocation3] sm:$0xff] %vm1736, %v2089
          %v2091 = vld [vmem:[%s1811] sm:$0xff]
          %v2092 = vrcp.pop %v2091
          %v2093 = vld [vmem:[#allocation3] sm:$0xff]
          %2095 = vset.pattern.permute.xlu0 0
          %2096 = vperm.xlu0 %2095, %v2092
          %v2097 = vpop.permute.xlu0 %2096
          %v2099 = vmul.f32 %v2093, %v2097
          %2100 = vst.msk [vmem:[#allocation3] sm:$0xff] %vm1880, %v2099
          %v2101 = vld [vmem:[%s1955] sm:$0xff]
          %v2102 = vrcp.pop %v2101
          %v2103 = vld [vmem:[#allocation3] sm:$0xff]
          %2105 = vset.pattern.permute.xlu0 0
          %2106 = vperm.xlu0 %2105, %v2102
          %v2107 = vpop.permute.xlu0 %2106
          %v2109 = vmul.f32 %v2103, %v2107
          %2110 = vst.msk [vmem:[#allocation3] sm:$0xff] %vm2024, %v2109
          %v2111 = vld [vmem:[#allocation3] sm:$0xff]
          %v2112 = vpack.c.bf16 %v2111, %v2111
          %v2113 = vld [vmem:[#allocation15] sm:$0xf]
          %v2114 = vld [vmem:[#allocation15 + $0x4] sm:$0xf]
          %v2115 = vld [vmem:[#allocation15 + $0x8] sm:$0xf]
          %v2116 = vld [vmem:[#allocation15 + $0xc] sm:$0xf]
          %v2117 = vld [vmem:[#allocation15 + $0x10] sm:$0xf]
          %v2118 = vld [vmem:[#allocation15 + $0x14] sm:$0xf]
          %v2119 = vld [vmem:[#allocation15 + $0x18] sm:$0xf]
          %v2120 = vld [vmem:[#allocation15 + $0x1c] sm:$0xf]
          %v2121 = vld [vmem:[#allocation15 + $0x20] sm:$0xf]
          %v2122 = vld [vmem:[#allocation15 + $0x24] sm:$0xf]
          %v2123 = vld [vmem:[#allocation15 + $0x28] sm:$0xf]
          %v2124 = vld [vmem:[#allocation15 + $0x2c] sm:$0xf]
          %v2125 = vld [vmem:[#allocation15 + $0x30] sm:$0xf]
          %v2126 = vld [vmem:[#allocation15 + $0x34] sm:$0xf]
          %v2127 = vld [vmem:[#allocation15 + $0x38] sm:$0xf]
          %v2128 = vld [vmem:[#allocation15 + $0x3c] sm:$0xf]
          %v2129 = vld [vmem:[%s8] sm:$0x1]
          %v2131 = vlaneseq
          %v2132 = vshrl.u32 %v2131, 7
          %v2133 = vsub.s32 0, %v2132
          %v2134 = vrot.slane %v2129, %v2133
          %v2152 = vunpack.c.l.b16 %v2113
          %v2153 = vunpack.c.l.b16 %v2114
          %v2154 = vunpack.c.l.b16 %v2115
          %v2155 = vunpack.c.l.b16 %v2116
          %v2156 = vunpack.c.l.b16 %v2117
          %v2157 = vunpack.c.l.b16 %v2118
          %v2158 = vunpack.c.l.b16 %v2119
          %v2159 = vunpack.c.l.b16 %v2120
          %v2160 = vunpack.c.l.b16 %v2121
          %v2161 = vunpack.c.l.b16 %v2122
          %v2162 = vunpack.c.l.b16 %v2123
          %v2163 = vunpack.c.l.b16 %v2124
          %v2164 = vunpack.c.l.b16 %v2125
          %v2165 = vunpack.c.l.b16 %v2126
          %v2166 = vunpack.c.l.b16 %v2127
          %v2167 = vunpack.c.l.b16 %v2128
          %v2168 = vpack.c.b16 %v2153, %v2152
          %v2169 = vpack.c.b16 %v2155, %v2154
          %v2170 = vpack.c.b16 %v2157, %v2156
          %v2171 = vpack.c.b16 %v2159, %v2158
          %v2172 = vpack.c.b16 %v2161, %v2160
          %v2173 = vpack.c.b16 %v2163, %v2162
          %v2174 = vpack.c.b16 %v2165, %v2164
          %v2175 = vpack.c.b16 %v2167, %v2166
          %2184 = vmatprep.subr.bf16.mxu0 0
          %2185 = vmatpush1.bf16.msra.mxu0 %v2175
          %2186 = vmatprep.subr.bf16.mxu0 0
          %2187 = vmatpush1.bf16.msra.mxu0 %v2174
          %2188 = vmatprep.subr.bf16.mxu0 0
          %2189 = vmatpush1.bf16.msra.mxu0 %v2173
          %2190 = vmatprep.subr.bf16.mxu0 0
          %2191 = vmatpush1.bf16.msra.mxu0 %v2172
          %2192 = vmatprep.subr.bf16.mxu0 0
          %2193 = vmatpush1.bf16.msra.mxu0 %v2171
          %2194 = vmatprep.subr.bf16.mxu0 0
          %2195 = vmatpush1.bf16.msra.mxu0 %v2170
          %2196 = vmatprep.subr.bf16.mxu0 0
          %2197 = vmatpush1.bf16.msra.mxu0 %v2169
          %2198 = vmatprep.subr.bf16.mxu0 0
          %2199 = vmatpush1.bf16.msra.mxu0 %v2168
          %2200 = vmatprep.subr.bf16.mxu0 0
          %2201 = vmatpush2.bf16.msra.mxu0 0
          %2202 = vmatprep.subr.bf16.mxu0 0
          %2203 = vmatpush2.bf16.msra.mxu0 0
          %2204 = vmatprep.subr.bf16.mxu0 0
          %2205 = vmatpush2.bf16.msra.mxu0 0
          %2206 = vmatprep.subr.bf16.mxu0 0
          %2207 = vmatpush2.bf16.msra.mxu0 0
          %2208 = vmatprep.subr.bf16.mxu0 0
          %2209 = vmatpush2.bf16.msra.mxu0 0
          %2210 = vmatprep.subr.bf16.mxu0 0
          %2211 = vmatpush2.bf16.msra.mxu0 0
          %2212 = vmatprep.subr.bf16.mxu0 0
          %2213 = vmatpush2.bf16.msra.mxu0 0
          %2214 = vmatprep.subr.bf16.mxu0 0
          %2215 = vmatpush2.bf16.msra.mxu0 0
          %2216 = vmatprep.mubr.bf16.mxu0 0
          %2217 = vmatmul.mubr.bf16.gmra.mxu0 %v2112
          %v2218 = vpop.f32.mrf.mxu0
          %v2219 = vadd.f32 %v2134, %v2218
          %v2220 = vpop.f32.mrf.mxu0
          %v2221 = vpop.f32.mrf.mxu0
          %v2222 = vpop.f32.mrf.mxu0
          %2223 = vdwg.mxu0
          %2224 = vst [vmem:[%s517] sm:$0xff] %v2219
        $region88: #{tpu_custom_call.1} parent=55 // pred_fallthru
          _
        %s2225 = sand.u32 %s277, 1
        %s2226 = scalar_lea.sflag [#allocation8], %s2225
        %s2227 = sand.u32 %s277, 1
        %s2228 = smul.addr %s2227, 8
        %s2229 = scalar_lea.vmem [#allocation17], %s2228
        // Predicated region
        $region89: #{tpu_custom_call.1} parent=55 // pred_check
          %p2230 = pneg %p287
        $region90: #{tpu_custom_call.1} parent=55 // pred_check_branch
          %2232 = sbr.rel (%p2230) target = $region92
        $region91: #{tpu_custom_call.1} parent=55 // pred_region
          %s2234 = ssub.s32 128, 128
          %2235 = vsyncadd %s2226, %s2234
          %s2236 = smul.addr %s36, 2
          %s2237 = sadd.s32 %s37, %s2236
          %s2238 = smul.addr %s2237, 128
          %s2239 = scalar_lea.hbm %s9, %s2238
          %s2241 = sshll.u32 %s2229, 4
          %s2242 = int_to_ptr.vmem [resolvable:$true] %s2241
          %2244 = dma.vmem_to_hbm [thread:$0]  %s2242, 128, %s2239, %s2226
        $region92: #{tpu_custom_call.1} parent=55 // pred_fallthru
          _
      $region56: #{tpu_custom_call.1} parent=5 // pred_fallthru
        _
      %p2245 = scmp.le.s32.totalorder 2, %s26
      // Predicated region
      $region93: #{tpu_custom_call.1} parent=5 // pred_check
        %p2246 = pneg %p2245
      $region94: #{tpu_custom_call.1} parent=5 // pred_check_branch
        %2248 = sbr.rel (%p2246) target = $region96
      $region95: #{tpu_custom_call.1} parent=5 // pred_region
        %s2249 = ssub.s32 %s26, 2
        // Predicated region
        $region97: #{tpu_custom_call.1} parent=95 // pred_check
          %p2250 = pneg %p293
        $region98: #{tpu_custom_call.1} parent=95 // pred_check_branch
          %2252 = sbr.rel (%p2250) target = $region100
        $region99: #{tpu_custom_call.1} parent=95 // pred_region
          %s2253 = sand.u32 %s278, 1
          %s2254 = scalar_lea.sflag [#allocation8], %s2253
          %s2255 = sand.u32 %s278, 1
          %s2256 = smul.addr %s2255, 8
          %s2257 = scalar_lea.vmem [#allocation17], %s2256
          %2258 = dma.done %s2254, 128
        $region100: #{tpu_custom_call.1} parent=95 // pred_fallthru
          _
      $region96: #{tpu_custom_call.1} parent=5 // pred_fallthru
        _
    $region6: #{tpu_custom_call.1} parent=1 // loop_footer
      %s30 = sadd.s32 1, %s26
    $region7: #{tpu_custom_call.1} parent=1 // loop_footer_branch
      %25 = sbr.rel target = $region3
    $region8: #{tpu_custom_call.1} parent=1 // loop_exit
      _
    %2259 = vsyncpa [#allocation7], 1
    %s2260 = scalar_lea.sflag [#allocation7], 1
    %2261 = vsyncpa %s2260, 1
    %2262 = vsyncpa [#allocation10], 1
    %s2263 = scalar_lea.sflag [#allocation10], 1
    %2264 = vsyncpa %s2263, 1
    %2265 = vsyncpa [#allocation13], 1
    %2266 = vsyncpa [#allocation16], 1
    %2267 = vsyncpa [#allocation8], 1
    %s2268 = scalar_lea.sflag [#allocation8], 1
    %2269 = vsyncpa %s2268, 1

// kernel: tpu_custom_call.1
$region0: #{tpu_custom_call.1}
  #allocation0 [shape = 'u32[]', space=smem, size = 0x4, offset = 0x4, fixed_abs, tag = 'smem constant byte address 0x4 - core index']
  #allocation1 [shape = 'u32[144,128]{1,0:T(1,128)}', space=vmem, size = 0x12000, scoped, tag = 'internal scratch']
  #allocation2 [shape = 'bf16[8,128]{1,0:T(8,128)(2,1)}', space=vmem, size = 0x800, scoped, tag = 'scratch operand']
  #allocation3 [shape = 'f32[8,128]{1,0:T(8,128)}', space=vmem, size = 0x1000, scoped, tag = 'scratch operand']
  #allocation4 [shape = 'f32[8,8,1]{2,1,0:T(8,128)}', space=vmem, size = 0x8000, scoped, tag = 'scratch operand']
  #allocation5 [shape = 'f32[8,8,1]{2,1,0:T(8,128)}', space=vmem, size = 0x8000, scoped, tag = 'scratch operand']
  %s0 = inlined_call_operand.vmem [shape: f32[2,16,128], index: 0, kind: input, shape index: {}]
  %s1 = inlined_call_operand.hbm [shape: f32[2,16,128], index: 1, kind: input, shape index: {}]
  %s2 = inlined_call_operand.hbm [shape: f32[2,16,128], index: 2, kind: input, shape index: {}]
  %s3 = inlined_call_operand.vmem [shape: f32[2,16,1], index: 3, kind: input, shape index: {}]
  %s4 = inlined_call_operand.hbm [shape: bf16[128,128], index: 4, kind: input, shape index: {}]
  %s5 = inlined_call_operand.hbm [shape: bf16[128,128], index: 5, kind: input, shape index: {}]
  %s6 = inlined_call_operand.hbm [shape: bf16[128,128], index: 6, kind: input, shape index: {}]
  %s7 = inlined_call_operand.hbm [shape: bf16[128,128], index: 7, kind: input, shape index: {}]
  %s8 = inlined_call_operand.vmem [shape: f32[1,128], index: 8, kind: input, shape index: {}]
  %s9 = inlined_call_operand.hbm [shape: f32[2,16,128], index: 9, kind: output, shape index: {}]
  %s10 = sld [smem:[#allocation0]]
  $region101: #{tpu_custom_call.1} parent=0
    _
  %s12 = ssub.s32 1, %s10
  %s13 = scalar_select 0, %s12, %s10
  $region1: #{tpu_custom_call.1} parent=0
    #allocation6 [shape = 'u8[8192]{0}', space=vmem, size = 0x2000, scoped, tag = 'input window, operand 1']
    #allocation7 [shape = 's32[2]{0}', space=sflag, size = 0x8, scoped, tag = 'scoped memory for tpu_custom_call.1']
    #allocation8 [shape = 's32[2]{0}', space=sflag, size = 0x8, scoped, tag = 'scoped memory for tpu_custom_call.1']
    #allocation9 [shape = 'u8[8192]{0}', space=vmem, size = 0x2000, scoped, tag = 'input window, operand 2']
    #allocation10 [shape = 's32[2]{0}', space=sflag, size = 0x8, scoped, tag = 'scoped memory for tpu_custom_call.1']
    #allocation11 [shape = 'u8[32768]{0}', space=vmem, size = 0x8000, scoped, tag = 'input window, operand 4, single buffered']
    #allocation12 [shape = 'u8[32768]{0}', space=vmem, size = 0x8000, scoped, tag = 'input window, operand 5, single buffered']
    #allocation13 [shape = 's32[1]{0}', space=sflag, size = 0x4, scoped, tag = 'scoped memory for tpu_custom_call.1']
    #allocation14 [shape = 'u8[32768]{0}', space=vmem, size = 0x8000, scoped, tag = 'input window, operand 6, single buffered']
    #allocation15 [shape = 'u8[32768]{0}', space=vmem, size = 0x8000, scoped, tag = 'input window, operand 7, single buffered']
    #allocation16 [shape = 's32[1]{0}', space=sflag, size = 0x4, scoped, tag = 'scoped memory for tpu_custom_call.1']
    #allocation17 [shape = 'u8[8192]{0}', space=vmem, size = 0x2000, scoped, tag = 'output window, operand 0']
    %14 = vsyncpa [#allocation7], 0
    %s15 = scalar_lea.sflag [#allocation7], 1
    %16 = vsyncpa %s15, 0
    %17 = vsyncpa [#allocation10], 0
    %s18 = scalar_lea.sflag [#allocation10], 1
    %19 = vsyncpa %s18, 0
    %20 = vsyncpa [#allocation13], 0
    %21 = vsyncpa [#allocation16], 0
    %22 = vsyncpa [#allocation8], 0
    %s23 = scalar_lea.sflag [#allocation8], 1
    %24 = vsyncpa %s23, 0
    loop: start=0, step=1, limit=10
    $region2: #{tpu_custom_call.1} parent=1 // loop_pre_header
      _
    $region3: #{tpu_custom_call.1} parent=1 // loop_header
      %s26 = sphi 0, %s30
      %p27 = scmp.ge.s32.totalorder %s26, 10
      %s33 = sphi 0, %s52
      %s34 = sphi 0, %s48
      %s35 = sphi 0, %s44
      %s36 = sphi 0, %s33
      %s37 = sphi 0, %s34
      %s38 = sphi 0, %s35
      %s39 = sphi 0, %s36
      %s40 = sphi 0, %s37
      %s41 = sphi 0, %s38
      %s57 = sphi 0, %s59
      %s60 = sphi 0, %s57
      %s61 = sphi 0, %s60
      %s77 = sphi 0, %s61
      %s85 = sphi 0, %s87
      %s88 = sphi 0, %s85
      %s89 = sphi 0, %s88
      %s105 = sphi 0, %s89
      %s113 = sphi 0, %s115
      %s116 = sphi 0, %s113
      %s117 = sphi 0, %s116
      %s133 = sphi 0, %s117
      %s141 = sphi 0, %s143
      %s144 = sphi 0, %s141
      %s145 = sphi 0, %s144
      %s161 = sphi 0, %s145
      %s165 = sphi 0, %s165
      %s167 = sphi 0, %s165
      %s168 = sphi 0, %s167
      %s182 = sphi 0, %s168
      %s186 = sphi 0, %s186
      %s188 = sphi 0, %s186
      %s189 = sphi 0, %s188
      %s203 = sphi 0, %s189
      %s207 = sphi 0, %s207
      %s209 = sphi 0, %s207
      %s210 = sphi 0, %s209
      %s224 = sphi 0, %s210
      %s228 = sphi 0, %s228
      %s230 = sphi 0, %s228
      %s231 = sphi 0, %s230
      %s245 = sphi 0, %s231
      %s249 = sphi 0, %s249
      %s251 = sphi 0, %s249
      %s252 = sphi 0, %s251
      %s266 = sphi 0, %s252
      %s274 = sphi 0, %s276
      %s277 = sphi 0, %s274
      %s278 = sphi 0, %s277
      %s294 = sphi 0, %s278
    $region4: #{tpu_custom_call.1} parent=1 // loop_header_branch
      %29 = sbr.rel (%p27) target = $region8
    $region5: #{tpu_custom_call.1} parent=1 // loop_body
      %s31 = ssub.s32 %s26, 1
      %s32 = ssub.s32 %s26, 2
      %s42 = sadd.s32 1, %s35
      %p43 = scmp.ge.s32.totalorder %s42, 2
      %s44 = scalar_select %p43, 0, %s42
      %s45 = sadd.s32 1, %s34
      %s46 = scalar_select %p43, %s45, %s34
      %p47 = scmp.ge.s32.totalorder %s46, 2
      %s48 = scalar_select %p47, 0, %s46
      %s49 = sadd.s32 1, %s33
      %s50 = scalar_select %p47, %s49, %s33
      %p51 = scmp.ge.s32.totalorder %s50, 2
      %s52 = scalar_select %p51, 0, %s50
      %s53 = ssub.s32 %s33, %s52
      %s54 = ssub.s32 %s34, %s48
      %s55 = sor.u32 %s53, %s54
      %p56 = scmp.eq.s32.totalorder %s55, 0
      %s58 = sadd.s32 %s57, 1
      %s59 = scalar_select %p56, %s57, %s58
      %p62 = pneg %p56
      %p63 = scmp.eq.s32.totalorder %s26, 7
      %p64 = por %p62, %p63
      %p65 = scmp.ne.s32.totalorder %s57, %s60
      %p66 = scmp.eq.s32.totalorder %s26, 0
      %p67 = por %p65, %p66
      %p68 = scmp.ne.s32.totalorder %s57, %s60
      %p69 = scmp.eq.s32.totalorder %s31, 7
      %p70 = por %p68, %p69
      %p71 = scmp.ne.s32.totalorder %s60, %s61
      %p72 = scmp.eq.s32.totalorder %s31, 0
      %p73 = por %p71, %p72
      %p74 = scmp.ne.s32.totalorder %s60, %s61
      %p75 = scmp.eq.s32.totalorder %s32, 7
      %p76 = por %p74, %p75
      %p78 = scmp.ne.s32.totalorder %s61, %s77
      %p79 = scmp.eq.s32.totalorder %s32, 0
      %p80 = por %p78, %p79
      %s81 = ssub.s32 %s33, %s52
      %s82 = ssub.s32 %s35, %s44
      %s83 = sor.u32 %s81, %s82
      %p84 = scmp.eq.s32.totalorder %s83, 0
      %s86 = sadd.s32 %s85, 1
      %s87 = scalar_select %p84, %s85, %s86
      %p90 = pneg %p84
      %p91 = scmp.eq.s32.totalorder %s26, 7
      %p92 = por %p90, %p91
      %p93 = scmp.ne.s32.totalorder %s85, %s88
      %p94 = scmp.eq.s32.totalorder %s26, 0
      %p95 = por %p93, %p94
      %p96 = scmp.ne.s32.totalorder %s85, %s88
      %p97 = scmp.eq.s32.totalorder %s31, 7
      %p98 = por %p96, %p97
      %p99 = scmp.ne.s32.totalorder %s88, %s89
      %p100 = scmp.eq.s32.totalorder %s31, 0
      %p101 = por %p99, %p100
      %p102 = scmp.ne.s32.totalorder %s88, %s89
      %p103 = scmp.eq.s32.totalorder %s32, 7
      %p104 = por %p102, %p103
      %p106 = scmp.ne.s32.totalorder %s89, %s105
      %p107 = scmp.eq.s32.totalorder %s32, 0
      %p108 = por %p106, %p107
      %s109 = ssub.s32 %s33, %s52
      %s110 = ssub.s32 %s35, %s44
      %s111 = sor.u32 %s109, %s110
      %p112 = scmp.eq.s32.totalorder %s111, 0
      %s114 = sadd.s32 %s113, 1
      %s115 = scalar_select %p112, %s113, %s114
      %p118 = pneg %p112
      %p119 = scmp.eq.s32.totalorder %s26, 7
      %p120 = por %p118, %p119
      %p121 = scmp.ne.s32.totalorder %s113, %s116
      %p122 = scmp.eq.s32.totalorder %s26, 0
      %p123 = por %p121, %p122
      %p124 = scmp.ne.s32.totalorder %s113, %s116
      %p125 = scmp.eq.s32.totalorder %s31, 7
      %p126 = por %p124, %p125
      %p127 = scmp.ne.s32.totalorder %s116, %s117
      %p128 = scmp.eq.s32.totalorder %s31, 0
      %p129 = por %p127, %p128
      %p130 = scmp.ne.s32.totalorder %s116, %s117
      %p131 = scmp.eq.s32.totalorder %s32, 7
      %p132 = por %p130, %p131
      %p134 = scmp.ne.s32.totalorder %s117, %s133
      %p135 = scmp.eq.s32.totalorder %s32, 0
      %p136 = por %p134, %p135
      %s137 = ssub.s32 %s33, %s52
      %s138 = ssub.s32 %s34, %s48
      %s139 = sor.u32 %s137, %s138
      %p140 = scmp.eq.s32.totalorder %s139, 0
      %s142 = sadd.s32 %s141, 1
      %s143 = scalar_select %p140, %s141, %s142
      %p146 = pneg %p140
      %p147 = scmp.eq.s32.totalorder %s26, 7
      %p148 = por %p146, %p147
      %p149 = scmp.ne.s32.totalorder %s141, %s144
      %p150 = scmp.eq.s32.totalorder %s26, 0
      %p151 = por %p149, %p150
      %p152 = scmp.ne.s32.totalorder %s141, %s144
      %p153 = scmp.eq.s32.totalorder %s31, 7
      %p154 = por %p152, %p153
      %p155 = scmp.ne.s32.totalorder %s144, %s145
      %p156 = scmp.eq.s32.totalorder %s31, 0
      %p157 = por %p155, %p156
      %p158 = scmp.ne.s32.totalorder %s144, %s145
      %p159 = scmp.eq.s32.totalorder %s32, 7
      %p160 = por %p158, %p159
      %p162 = scmp.ne.s32.totalorder %s145, %s161
      %p163 = scmp.eq.s32.totalorder %s32, 0
      %p164 = por %p162, %p163
      %s166 = sadd.s32 %s165, 1
      %p169 = scmp.eq.s32.totalorder %s26, 7
      %p170 = scmp.ne.s32.totalorder %s165, %s167
      %p171 = scmp.eq.s32.totalorder %s26, 0
      %p172 = por %p170, %p171
      %p173 = scmp.ne.s32.totalorder %s165, %s167
      %p174 = scmp.eq.s32.totalorder %s31, 7
      %p175 = por %p173, %p174
      %p176 = scmp.ne.s32.totalorder %s167, %s168
      %p177 = scmp.eq.s32.totalorder %s31, 0
      %p178 = por %p176, %p177
      %p179 = scmp.ne.s32.totalorder %s167, %s168
      %p180 = scmp.eq.s32.totalorder %s32, 7
      %p181 = por %p179, %p180
      %p183 = scmp.ne.s32.totalorder %s168, %s182
      %p184 = scmp.eq.s32.totalorder %s32, 0
      %p185 = por %p183, %p184
      %s187 = sadd.s32 %s186, 1
      %p190 = scmp.eq.s32.totalorder %s26, 7
      %p191 = scmp.ne.s32.totalorder %s186, %s188
      %p192 = scmp.eq.s32.totalorder %s26, 0
      %p193 = por %p191, %p192
      %p194 = scmp.ne.s32.totalorder %s186, %s188
      %p195 = scmp.eq.s32.totalorder %s31, 7
      %p196 = por %p194, %p195
      %p197 = scmp.ne.s32.totalorder %s188, %s189
      %p198 = scmp.eq.s32.totalorder %s31, 0
      %p199 = por %p197, %p198
      %p200 = scmp.ne.s32.totalorder %s188, %s189
      %p201 = scmp.eq.s32.totalorder %s32, 7
      %p202 = por %p200, %p201
      %p204 = scmp.ne.s32.totalorder %s189, %s203
      %p205 = scmp.eq.s32.totalorder %s32, 0
      %p206 = por %p204, %p205
      %s208 = sadd.s32 %s207, 1
      %p211 = scmp.eq.s32.totalorder %s26, 7
      %p212 = scmp.ne.s32.totalorder %s207, %s209
      %p213 = scmp.eq.s32.totalorder %s26, 0
      %p214 = por %p212, %p213
      %p215 = scmp.ne.s32.totalorder %s207, %s209
      %p216 = scmp.eq.s32.totalorder %s31, 7
      %p217 = por %p215, %p216
      %p218 = scmp.ne.s32.totalorder %s209, %s210
      %p219 = scmp.eq.s32.totalorder %s31, 0
      %p220 = por %p218, %p219
      %p221 = scmp.ne.s32.totalorder %s209, %s210
      %p222 = scmp.eq.s32.totalorder %s32, 7
      %p223 = por %p221, %p222
      %p225 = scmp.ne.s32.totalorder %s210, %s224
      %p226 = scmp.eq.s32.totalorder %s32, 0
      %p227 = por %p225, %p226
      %s229 = sadd.s32 %s228, 1
      %p232 = scmp.eq.s32.totalorder %s26, 7
      %p233 = scmp.ne.s32.totalorder %s228, %s230
      %p234 = scmp.eq.s32.totalorder %s26, 0
      %p235 = por %p233, %p234
      %p236 = scmp.ne.s32.totalorder %s228, %s230
      %p237 = scmp.eq.s32.totalorder %s31, 7
      %p238 = por %p236, %p237
      %p239 = scmp.ne.s32.totalorder %s230, %s231
      %p240 = scmp.eq.s32.totalorder %s31, 0
      %p241 = por %p239, %p240
      %p242 = scmp.ne.s32.totalorder %s230, %s231
      %p243 = scmp.eq.s32.totalorder %s32, 7
      %p244 = por %p242, %p243
      %p246 = scmp.ne.s32.totalorder %s231, %s245
      %p247 = scmp.eq.s32.totalorder %s32, 0
      %p248 = por %p246, %p247
      %s250 = sadd.s32 %s249, 1
      %p253 = scmp.eq.s32.totalorder %s26, 7
      %p254 = scmp.ne.s32.totalorder %s249, %s251
      %p255 = scmp.eq.s32.totalorder %s26, 0
      %p256 = por %p254, %p255
      %p257 = scmp.ne.s32.totalorder %s249, %s251
      %p258 = scmp.eq.s32.totalorder %s31, 7
      %p259 = por %p257, %p258
      %p260 = scmp.ne.s32.totalorder %s251, %s252
      %p261 = scmp.eq.s32.totalorder %s31, 0
      %p262 = por %p260, %p261
      %p263 = scmp.ne.s32.totalorder %s251, %s252
      %p264 = scmp.eq.s32.totalorder %s32, 7
      %p265 = por %p263, %p264
      %p267 = scmp.ne.s32.totalorder %s252, %s266
      %p268 = scmp.eq.s32.totalorder %s32, 0
      %p269 = por %p267, %p268
      %s270 = ssub.s32 %s33, %s52
      %s271 = ssub.s32 %s34, %s48
      %s272 = sor.u32 %s270, %s271
      %p273 = scmp.eq.s32.totalorder %s272, 0
      %s275 = sadd.s32 %s274, 1
      %s276 = scalar_select %p273, %s274, %s275
      %p279 = pneg %p273
      %p280 = scmp.eq.s32.totalorder %s26, 7
      %p281 = por %p279, %p280
      %p282 = scmp.ne.s32.totalorder %s274, %s277
      %p283 = scmp.eq.s32.totalorder %s26, 0
      %p284 = por %p282, %p283
      %p285 = scmp.ne.s32.totalorder %s274, %s277
      %p286 = scmp.eq.s32.totalorder %s31, 7
      %p287 = por %p285, %p286
      %p288 = scmp.ne.s32.totalorder %s277, %s278
      %p289 = scmp.eq.s32.totalorder %s31, 0
      %p290 = por %p288, %p289
      %p291 = scmp.ne.s32.totalorder %s277, %s278
      %p292 = scmp.eq.s32.totalorder %s32, 7
      %p293 = por %p291, %p292
      %p295 = scmp.ne.s32.totalorder %s278, %s294
      %p296 = scmp.eq.s32.totalorder %s32, 0
      %p297 = por %p295, %p296
      %p298 = scmp.le.s32.totalorder 1, %s26
      %p299 = scmp.lt.s32.totalorder %s26, 9
      %p300 = pnand %p298, %p299
      %p301 = pneg %p300
      // Predicated region
      $region9: #{tpu_custom_call.1} parent=5 // pred_check
        _
      $region10: #{tpu_custom_call.1} parent=5 // pred_check_branch
        %303 = sbr.rel (%p300) target = $region12
      $region11: #{tpu_custom_call.1} parent=5 // pred_region
        %s304 = ssub.s32 %s26, 1
        // Predicated region
        $region13: #{tpu_custom_call.1} parent=11 // pred_check
          %p305 = pneg %p178
        $region14: #{tpu_custom_call.1} parent=11 // pred_check_branch
          %307 = sbr.rel (%p305) target = $region16
        $region15: #{tpu_custom_call.1} parent=11 // pred_region
          %s309 = ssub.s32 1024, 1024
          %310 = vsyncadd [#allocation10], %s309
          %s311 = sshll.u32 [#allocation11], 4
          %s312 = int_to_ptr.vmem [resolvable:$true] %s311
          %317 = dma.hbm_to_vmem [thread:$0]  %s4, 1024, %s312, [#allocation10], 64, 64, 4
        $region16: #{tpu_custom_call.1} parent=11 // pred_fallthru
          _
        // Predicated region
        $region17: #{tpu_custom_call.1} parent=11 // pred_check
          %p318 = pneg %p199
        $region18: #{tpu_custom_call.1} parent=11 // pred_check_branch
          %320 = sbr.rel (%p318) target = $region20
        $region19: #{tpu_custom_call.1} parent=11 // pred_region
          %s322 = ssub.s32 1024, 1024
          %323 = vsyncadd [#allocation13], %s322
          %s324 = sshll.u32 [#allocation12], 4
          %s325 = int_to_ptr.vmem [resolvable:$true] %s324
          %330 = dma.hbm_to_vmem [thread:$0]  %s5, 1024, %s325, [#allocation13], 64, 64, 4
        $region20: #{tpu_custom_call.1} parent=11 // pred_fallthru
          _
        // Predicated region
        $region21: #{tpu_custom_call.1} parent=11 // pred_check
          %p331 = pneg %p220
        $region22: #{tpu_custom_call.1} parent=11 // pred_check_branch
          %333 = sbr.rel (%p331) target = $region24
        $region23: #{tpu_custom_call.1} parent=11 // pred_region
          %s335 = ssub.s32 1024, 1024
          %336 = vsyncadd [#allocation13], %s335
          %s337 = sshll.u32 [#allocation14], 4
          %s338 = int_to_ptr.vmem [resolvable:$true] %s337
          %343 = dma.hbm_to_vmem [thread:$0]  %s6, 1024, %s338, [#allocation13], 64, 64, 4
        $region24: #{tpu_custom_call.1} parent=11 // pred_fallthru
          _
        // Predicated region
        $region25: #{tpu_custom_call.1} parent=11 // pred_check
          %p344 = pneg %p241
        $region26: #{tpu_custom_call.1} parent=11 // pred_check_branch
          %346 = sbr.rel (%p344) target = $region28
        $region27: #{tpu_custom_call.1} parent=11 // pred_region
          %s348 = ssub.s32 1024, 1024
          %349 = vsyncadd [#allocation16], %s348
          %s350 = sshll.u32 [#allocation15], 4
          %s351 = int_to_ptr.vmem [resolvable:$true] %s350
          %356 = dma.hbm_to_vmem [thread:$0]  %s7, 1024, %s351, [#allocation16], 64, 64, 4
        $region28: #{tpu_custom_call.1} parent=11 // pred_fallthru
          _
        // Predicated region
        $region29: #{tpu_custom_call.1} parent=11 // pred_check
          %p357 = pneg %p262
        $region30: #{tpu_custom_call.1} parent=11 // pred_check_branch
          %359 = sbr.rel (%p357) target = $region32
        $region31: #{tpu_custom_call.1} parent=11 // pred_region
          _
        $region32: #{tpu_custom_call.1} parent=11 // pred_fallthru
          _
      $region12: #{tpu_custom_call.1} parent=5 // pred_fallthru
        _
      %p360 = scmp.lt.s32.totalorder %s26, 8
      // Predicated region
      $region33: #{tpu_custom_call.1} parent=5 // pred_check
        %p361 = pneg %p360
      $region34: #{tpu_custom_call.1} parent=5 // pred_check_branch
        %363 = sbr.rel (%p361) target = $region36
      $region35: #{tpu_custom_call.1} parent=5 // pred_region
        // Predicated region
        $region37: #{tpu_custom_call.1} parent=35 // pred_check
          %p364 = pneg %p67
        $region38: #{tpu_custom_call.1} parent=35 // pred_check_branch
          %366 = sbr.rel (%p364) target = $region40
        $region39: #{tpu_custom_call.1} parent=35 // pred_region
          %p367 = scmp.lt.s32.totalorder %s33, 1
          %s368 = scalar_select %p367, %s33, 1
          %p369 = scmp.lt.s32.totalorder %s34, 1
          %s370 = scalar_select %p369, %s34, 1
          %s371 = smul.addr %s368, 2
          %s372 = sadd.s32 %s370, %s371
          %s373 = smul.addr %s372, 8
          %s374 = scalar_lea.vmem %s0, %s373
        $region40: #{tpu_custom_call.1} parent=35 // pred_fallthru
          _
        // Predicated region
        $region41: #{tpu_custom_call.1} parent=35 // pred_check
          %p375 = pneg %p95
        $region42: #{tpu_custom_call.1} parent=35 // pred_check_branch
          %377 = sbr.rel (%p375) target = $region44
        $region43: #{tpu_custom_call.1} parent=35 // pred_region
          %s378 = sand.u32 %s85, 1
          %s379 = scalar_lea.sflag [#allocation7], %s378
          %s380 = sand.u32 %s85, 1
          %s381 = smul.addr %s380, 8
          %s382 = scalar_lea.vmem [#allocation6], %s381
          %s384 = ssub.s32 128, 128
          %385 = vsyncadd %s379, %s384
          %s386 = smul.addr %s33, 2
          %s387 = sadd.s32 %s35, %s386
          %s388 = smul.addr %s387, 128
          %s389 = scalar_lea.hbm %s1, %s388
          %s391 = sshll.u32 %s382, 4
          %s392 = int_to_ptr.vmem [resolvable:$true] %s391
          %394 = dma.hbm_to_vmem [thread:$0]  %s389, 128, %s392, %s379
        $region44: #{tpu_custom_call.1} parent=35 // pred_fallthru
          _
        // Predicated region
        $region45: #{tpu_custom_call.1} parent=35 // pred_check
          %p395 = pneg %p123
        $region46: #{tpu_custom_call.1} parent=35 // pred_check_branch
          %397 = sbr.rel (%p395) target = $region48
        $region47: #{tpu_custom_call.1} parent=35 // pred_region
          %s398 = sand.u32 %s26, 1
          %s399 = scalar_lea.sflag [#allocation10], %s398
          %s400 = sand.u32 %s113, 1
          %s401 = smul.addr %s400, 8
          %s402 = scalar_lea.vmem [#allocation9], %s401
          %s404 = ssub.s32 128, 128
          %405 = vsyncadd %s399, %s404
          %s406 = smul.addr %s33, 2
          %s407 = sadd.s32 %s35, %s406
          %s408 = smul.addr %s407, 128
          %s409 = scalar_lea.hbm %s2, %s408
          %s411 = sshll.u32 %s402, 4
          %s412 = int_to_ptr.vmem [resolvable:$true] %s411
          %414 = dma.hbm_to_vmem [thread:$0]  %s409, 128, %s412, %s399
        $region48: #{tpu_custom_call.1} parent=35 // pred_fallthru
          _
        // Predicated region
        $region49: #{tpu_custom_call.1} parent=35 // pred_check
          %p415 = pneg %p151
        $region50: #{tpu_custom_call.1} parent=35 // pred_check_branch
          %417 = sbr.rel (%p415) target = $region52
        $region51: #{tpu_custom_call.1} parent=35 // pred_region
          %p418 = scmp.lt.s32.totalorder %s33, 1
          %s419 = scalar_select %p418, %s33, 1
          %p420 = scmp.lt.s32.totalorder %s34, 1
          %s421 = scalar_select %p420, %s34, 1
          %s422 = smul.addr %s419, 2
          %s423 = sadd.s32 %s421, %s422
          %s424 = smul.addr %s423, 8
          %s425 = scalar_lea.vmem %s3, %s424
        $region52: #{tpu_custom_call.1} parent=35 // pred_fallthru
          _
      $region36: #{tpu_custom_call.1} parent=5 // pred_fallthru
        _
      %p426 = scmp.le.s32.totalorder 1, %s26
      %p427 = scmp.lt.s32.totalorder %s26, 9
      %p428 = pnand %p426, %p427
      %p429 = pneg %p428
      // Predicated region
      $region53: #{tpu_custom_call.1} parent=5 // pred_check
        _
      $region54: #{tpu_custom_call.1} parent=5 // pred_check_branch
        %431 = sbr.rel (%p428) target = $region56
      $region55: #{tpu_custom_call.1} parent=5 // pred_region
        %s432 = ssub.s32 %s26, 1
        %s433 = sand.u32 %s88, 1
        %s434 = scalar_lea.sflag [#allocation7], %s433
        %s435 = sand.u32 %s88, 1
        %s436 = smul.addr %s435, 8
        %s437 = scalar_lea.vmem [#allocation6], %s436
        // Predicated region
        $region57: #{tpu_custom_call.1} parent=55 // pred_check
          %p438 = pneg %p101
        $region58: #{tpu_custom_call.1} parent=55 // pred_check_branch
          %440 = sbr.rel (%p438) target = $region60
        $region59: #{tpu_custom_call.1} parent=55 // pred_region
          %441 = dma.done %s434, 128
        $region60: #{tpu_custom_call.1} parent=55 // pred_fallthru
          _
        %s442 = sand.u32 %s31, 1
        %s443 = scalar_lea.sflag [#allocation10], %s442
        %s444 = sand.u32 %s116, 1
        %s445 = smul.addr %s444, 8
        %s446 = scalar_lea.vmem [#allocation9], %s445
        // Predicated region
        $region61: #{tpu_custom_call.1} parent=55 // pred_check
          %p447 = pneg %p129
        $region62: #{tpu_custom_call.1} parent=55 // pred_check_branch
          %449 = sbr.rel (%p447) target = $region64
        $region63: #{tpu_custom_call.1} parent=55 // pred_region
          %450 = dma.done %s443, 128
        $region64: #{tpu_custom_call.1} parent=55 // pred_fallthru
          _
        // Predicated region
        $region65: #{tpu_custom_call.1} parent=55 // pred_check
          %p451 = pneg %p178
        $region66: #{tpu_custom_call.1} parent=55 // pred_check_branch
          %453 = sbr.rel (%p451) target = $region68
        $region67: #{tpu_custom_call.1} parent=55 // pred_region
          %454 = dma.done [#allocation10], 1024
        $region68: #{tpu_custom_call.1} parent=55 // pred_fallthru
          _
        // Predicated region
        $region69: #{tpu_custom_call.1} parent=55 // pred_check
          %p455 = pneg %p199
        $region70: #{tpu_custom_call.1} parent=55 // pred_check_branch
          %457 = sbr.rel (%p455) target = $region72
        $region71: #{tpu_custom_call.1} parent=55 // pred_region
          %458 = dma.done [#allocation13], 1024
        $region72: #{tpu_custom_call.1} parent=55 // pred_fallthru
          _
        // Predicated region
        $region73: #{tpu_custom_call.1} parent=55 // pred_check
          %p459 = pneg %p220
        $region74: #{tpu_custom_call.1} parent=55 // pred_check_branch
          %461 = sbr.rel (%p459) target = $region76
        $region75: #{tpu_custom_call.1} parent=55 // pred_region
          %462 = dma.done [#allocation13], 1024
        $region76: #{tpu_custom_call.1} parent=55 // pred_fallthru
          _
        // Predicated region
        $region77: #{tpu_custom_call.1} parent=55 // pred_check
          %p463 = pneg %p241
        $region78: #{tpu_custom_call.1} parent=55 // pred_check_branch
          %465 = sbr.rel (%p463) target = $region80
        $region79: #{tpu_custom_call.1} parent=55 // pred_region
          %466 = dma.done [#allocation16], 1024
        $region80: #{tpu_custom_call.1} parent=55 // pred_fallthru
          _
        %p467 = scmp.lt.s32.totalorder %s36, 1
        %s468 = scalar_select %p467, %s36, 1
        %p469 = scmp.lt.s32.totalorder %s37, 1
        %s470 = scalar_select %p469, %s37, 1
        %s471 = smul.addr %s468, 2
        %s472 = sadd.s32 %s470, %s471
        %s473 = smul.addr %s472, 8
        %s474 = scalar_lea.vmem %s0, %s473
        %p475 = pneg %p73
        %p476 = pneg %p70
        %s477 = sand.u32 %s88, 1
        %s478 = scalar_lea.sflag [#allocation7], %s477
        %s479 = sand.u32 %s88, 1
        %s480 = smul.addr %s479, 8
        %s481 = scalar_lea.vmem [#allocation6], %s480
        %p482 = pneg %p101
        %p483 = pneg %p98
        %s484 = sand.u32 %s31, 1
        %s485 = scalar_lea.sflag [#allocation10], %s484
        %s486 = sand.u32 %s116, 1
        %s487 = smul.addr %s486, 8
        %s488 = scalar_lea.vmem [#allocation9], %s487
        %p489 = pneg %p129
        %p490 = pneg %p126
        %p491 = scmp.lt.s32.totalorder %s36, 1
        %s492 = scalar_select %p491, %s36, 1
        %p493 = scmp.lt.s32.totalorder %s37, 1
        %s494 = scalar_select %p493, %s37, 1
        %s495 = smul.addr %s492, 2
        %s496 = sadd.s32 %s494, %s495
        %s497 = smul.addr %s496, 8
        %s498 = scalar_lea.vmem %s3, %s497
        %p499 = pneg %p157
        %p500 = pneg %p154
        %p501 = pneg %p178
        %p502 = pneg %p175
        %p503 = pneg %p199
        %p504 = pneg %p196
        %p505 = pneg %p220
        %p506 = pneg %p217
        %p507 = pneg %p241
        %p508 = pneg %p238
        %p509 = pneg %p262
        %p510 = pneg %p259
        %p511 = pneg %p290
        %p512 = pneg %p287
        %s513 = sand.u32 %s277, 1
        %s514 = scalar_lea.sflag [#allocation8], %s513
        %s515 = sand.u32 %s277, 1
        %s516 = smul.addr %s515, 8
        %s517 = scalar_lea.vmem [#allocation17], %s516
        %p518 = scmp.lt.s32.totalorder %s36, 1
        %s519 = scalar_select %p518, %s36, 1
        %p520 = scmp.lt.s32.totalorder %s37, 1
        %s521 = scalar_select %p520, %s37, 1
        %s522 = smul.addr %s519, 2
        %s523 = sadd.s32 %s521, %s522
        %s524 = smul.addr %s523, 8
        %s525 = scalar_lea.vmem %s0, %s524
        %p526 = scmp.lt.s32.totalorder %s36, 1
        %s527 = scalar_select %p526, %s36, 1
        %p528 = scmp.lt.s32.totalorder %s37, 1
        %s529 = scalar_select %p528, %s37, 1
        %s530 = smul.addr %s527, 2
        %s531 = sadd.s32 %s529, %s530
        %s532 = smul.addr %s531, 8
        %s533 = scalar_lea.vmem %s3, %s532
        %p535 = scmp.eq.s32.totalorder %s38, 0
        // Predicated region
        $region81: #{tpu_custom_call.1} parent=55 // pred_check
          %p536 = pneg %p535
        $region82: #{tpu_custom_call.1} parent=55 // pred_check_branch
          %538 = sbr.rel (%p536) target = $region84
        $region83: #{tpu_custom_call.1} parent=55 // pred_region
          %v539 = vld [vmem:[%s525] sm:$0xff]
          %v540 = vpack.c.bf16 %v539, %v539
          %v541 = vld [vmem:[#allocation11] sm:$0xf]
          %v542 = vld [vmem:[#allocation11 + $0x4] sm:$0xf]
          %v543 = vld [vmem:[#allocation11 + $0x8] sm:$0xf]
          %v544 = vld [vmem:[#allocation11 + $0xc] sm:$0xf]
          %v545 = vld [vmem:[#allocation11 + $0x10] sm:$0xf]
          %v546 = vld [vmem:[#allocation11 + $0x14] sm:$0xf]
          %v547 = vld [vmem:[#allocation11 + $0x18] sm:$0xf]
          %v548 = vld [vmem:[#allocation11 + $0x1c] sm:$0xf]
          %v549 = vld [vmem:[#allocation11 + $0x20] sm:$0xf]
          %v550 = vld [vmem:[#allocation11 + $0x24] sm:$0xf]
          %v551 = vld [vmem:[#allocation11 + $0x28] sm:$0xf]
          %v552 = vld [vmem:[#allocation11 + $0x2c] sm:$0xf]
          %v553 = vld [vmem:[#allocation11 + $0x30] sm:$0xf]
          %v554 = vld [vmem:[#allocation11 + $0x34] sm:$0xf]
          %v555 = vld [vmem:[#allocation11 + $0x38] sm:$0xf]
          %v556 = vld [vmem:[#allocation11 + $0x3c] sm:$0xf]
          %v573 = vunpack.c.l.b16 %v541
          %v574 = vunpack.c.l.b16 %v542
          %v575 = vunpack.c.l.b16 %v543
          %v576 = vunpack.c.l.b16 %v544
          %v577 = vunpack.c.l.b16 %v545
          %v578 = vunpack.c.l.b16 %v546
          %v579 = vunpack.c.l.b16 %v547
          %v580 = vunpack.c.l.b16 %v548
          %v581 = vunpack.c.l.b16 %v549
          %v582 = vunpack.c.l.b16 %v550
          %v583 = vunpack.c.l.b16 %v551
          %v584 = vunpack.c.l.b16 %v552
          %v585 = vunpack.c.l.b16 %v553
          %v586 = vunpack.c.l.b16 %v554
          %v587 = vunpack.c.l.b16 %v555
          %v588 = vunpack.c.l.b16 %v556
          %v589 = vpack.c.b16 %v574, %v573
          %v590 = vpack.c.b16 %v576, %v575
          %v591 = vpack.c.b16 %v578, %v577
          %v592 = vpack.c.b16 %v580, %v579
          %v593 = vpack.c.b16 %v582, %v581
          %v594 = vpack.c.b16 %v584, %v583
          %v595 = vpack.c.b16 %v586, %v585
          %v596 = vpack.c.b16 %v588, %v587
          %605 = vmatprep.subr.bf16.mxu0 0
          %606 = vmatpush1.bf16.msra.mxu0 %v596
          %607 = vmatprep.subr.bf16.mxu0 0
          %608 = vmatpush1.bf16.msra.mxu0 %v595
          %609 = vmatprep.subr.bf16.mxu0 0
          %610 = vmatpush1.bf16.msra.mxu0 %v594
          %611 = vmatprep.subr.bf16.mxu0 0
          %612 = vmatpush1.bf16.msra.mxu0 %v593
          %613 = vmatprep.subr.bf16.mxu0 0
          %614 = vmatpush1.bf16.msra.mxu0 %v592
          %615 = vmatprep.subr.bf16.mxu0 0
          %616 = vmatpush1.bf16.msra.mxu0 %v591
          %617 = vmatprep.subr.bf16.mxu0 0
          %618 = vmatpush1.bf16.msra.mxu0 %v590
          %619 = vmatprep.subr.bf16.mxu0 0
          %620 = vmatpush1.bf16.msra.mxu0 %v589
          %621 = vmatprep.subr.bf16.mxu0 0
          %622 = vmatpush2.bf16.msra.mxu0 0
          %623 = vmatprep.subr.bf16.mxu0 0
          %624 = vmatpush2.bf16.msra.mxu0 0
          %625 = vmatprep.subr.bf16.mxu0 0
          %626 = vmatpush2.bf16.msra.mxu0 0
          %627 = vmatprep.subr.bf16.mxu0 0
          %628 = vmatpush2.bf16.msra.mxu0 0
          %629 = vmatprep.subr.bf16.mxu0 0
          %630 = vmatpush2.bf16.msra.mxu0 0
          %631 = vmatprep.subr.bf16.mxu0 0
          %632 = vmatpush2.bf16.msra.mxu0 0
          %633 = vmatprep.subr.bf16.mxu0 0
          %634 = vmatpush2.bf16.msra.mxu0 0
          %635 = vmatprep.subr.bf16.mxu0 0
          %636 = vmatpush2.bf16.msra.mxu0 0
          %637 = vmatprep.mubr.bf16.mxu0 0
          %638 = vmatmul.mubr.bf16.gmra.mxu0 %v540
          %v639 = vpop.f32.mrf.mxu0
          %v640 = vadd.f32 0.0, %v639
          %v641 = vpop.f32.mrf.mxu0
          %v642 = vpop.f32.mrf.mxu0
          %v643 = vpop.f32.mrf.mxu0
          %644 = vdwg.mxu0
          %v645 = vpack.c.bf16 %v640, %v640
          %646 = vst [vmem:[#allocation2] sm:$0xf] %v645
          %647 = vst [vmem:[#allocation3] sm:$0xff] 0.0
          %vm648 = vcmask 7168
          %649 = vst.msk [vmem:[#allocation4] sm:$0xff] %vm648, -inf
          %650 = vst.msk [vmem:[#allocation4 + $0x8] sm:$0xff] %vm648, -inf
          %651 = vst.msk [vmem:[#allocation4 + $0x10] sm:$0xff] %vm648, -inf
          %652 = vst.msk [vmem:[#allocation4 + $0x18] sm:$0xff] %vm648, -inf
          %653 = vst.msk [vmem:[#allocation4 + $0x20] sm:$0xff] %vm648, -inf
          %654 = vst.msk [vmem:[#allocation4 + $0x28] sm:$0xff] %vm648, -inf
          %655 = vst.msk [vmem:[#allocation4 + $0x30] sm:$0xff] %vm648, -inf
          %656 = vst.msk [vmem:[#allocation4 + $0x38] sm:$0xff] %vm648, -inf
          %657 = vst.msk [vmem:[#allocation5] sm:$0xff] %vm648, 0.0
          %658 = vst.msk [vmem:[#allocation5 + $0x8] sm:$0xff] %vm648, 0.0
          %659 = vst.msk [vmem:[#allocation5 + $0x10] sm:$0xff] %vm648, 0.0
          %660 = vst.msk [vmem:[#allocation5 + $0x18] sm:$0xff] %vm648, 0.0
          %661 = vst.msk [vmem:[#allocation5 + $0x20] sm:$0xff] %vm648, 0.0
          %662 = vst.msk [vmem:[#allocation5 + $0x28] sm:$0xff] %vm648, 0.0
          %663 = vst.msk [vmem:[#allocation5 + $0x30] sm:$0xff] %vm648, 0.0
          %664 = vst.msk [vmem:[#allocation5 + $0x38] sm:$0xff] %vm648, 0.0
        $region84: #{tpu_custom_call.1} parent=55 // pred_fallthru
          _
        %v665 = vld [vmem:[%s437] sm:$0xff]
        %v666 = vpack.c.bf16 %v665, %v665
        %v667 = vld [vmem:[%s446] sm:$0xff]
        %v668 = vpack.c.bf16 %v667, %v667
        %v669 = vld [vmem:[#allocation12] sm:$0xf]
        %v670 = vld [vmem:[#allocation12 + $0x4] sm:$0xf]
        %v671 = vld [vmem:[#allocation12 + $0x8] sm:$0xf]
        %v672 = vld [vmem:[#allocation12 + $0xc] sm:$0xf]
        %v673 = vld [vmem:[#allocation12 + $0x10] sm:$0xf]
        %v674 = vld [vmem:[#allocation12 + $0x14] sm:$0xf]
        %v675 = vld [vmem:[#allocation12 + $0x18] sm:$0xf]
        %v676 = vld [vmem:[#allocation12 + $0x1c] sm:$0xf]
        %v677 = vld [vmem:[#allocation12 + $0x20] sm:$0xf]
        %v678 = vld [vmem:[#allocation12 + $0x24] sm:$0xf]
        %v679 = vld [vmem:[#allocation12 + $0x28] sm:$0xf]
        %v680 = vld [vmem:[#allocation12 + $0x2c] sm:$0xf]
        %v681 = vld [vmem:[#allocation12 + $0x30] sm:$0xf]
        %v682 = vld [vmem:[#allocation12 + $0x34] sm:$0xf]
        %v683 = vld [vmem:[#allocation12 + $0x38] sm:$0xf]
        %v684 = vld [vmem:[#allocation12 + $0x3c] sm:$0xf]
        %v701 = vunpack.c.l.b16 %v669
        %v702 = vunpack.c.l.b16 %v670
        %v703 = vunpack.c.l.b16 %v671
        %v704 = vunpack.c.l.b16 %v672
        %v705 = vunpack.c.l.b16 %v673
        %v706 = vunpack.c.l.b16 %v674
        %v707 = vunpack.c.l.b16 %v675
        %v708 = vunpack.c.l.b16 %v676
        %v709 = vunpack.c.l.b16 %v677
        %v710 = vunpack.c.l.b16 %v678
        %v711 = vunpack.c.l.b16 %v679
        %v712 = vunpack.c.l.b16 %v680
        %v713 = vunpack.c.l.b16 %v681
        %v714 = vunpack.c.l.b16 %v682
        %v715 = vunpack.c.l.b16 %v683
        %v716 = vunpack.c.l.b16 %v684
        %v717 = vpack.c.b16 %v702, %v701
        %v718 = vpack.c.b16 %v704, %v703
        %v719 = vpack.c.b16 %v706, %v705
        %v720 = vpack.c.b16 %v708, %v707
        %v721 = vpack.c.b16 %v710, %v709
        %v722 = vpack.c.b16 %v712, %v711
        %v723 = vpack.c.b16 %v714, %v713
        %v724 = vpack.c.b16 %v716, %v715
        %733 = vmatprep.subr.bf16.mxu0 0
        %734 = vmatpush1.bf16.msra.mxu0 %v724
        %735 = vmatprep.subr.bf16.mxu0 0
        %736 = vmatpush1.bf16.msra.mxu0 %v723
        %737 = vmatprep.subr.bf16.mxu0 0
        %738 = vmatpush1.bf16.msra.mxu0 %v722
        %739 = vmatprep.subr.bf16.mxu0 0
        %740 = vmatpush1.bf16.msra.mxu0 %v721
        %741 = vmatprep.subr.bf16.mxu0 0
        %742 = vmatpush1.bf16.msra.mxu0 %v720
        %743 = vmatprep.subr.bf16.mxu0 0
        %744 = vmatpush1.bf16.msra.mxu0 %v719
        %745 = vmatprep.subr.bf16.mxu0 0
        %746 = vmatpush1.bf16.msra.mxu0 %v718
        %747 = vmatprep.subr.bf16.mxu0 0
        %748 = vmatpush1.bf16.msra.mxu0 %v717
        %749 = vmatprep.subr.bf16.mxu0 0
        %750 = vmatpush2.bf16.msra.mxu0 0
        %751 = vmatprep.subr.bf16.mxu0 0
        %752 = vmatpush2.bf16.msra.mxu0 0
        %753 = vmatprep.subr.bf16.mxu0 0
        %754 = vmatpush2.bf16.msra.mxu0 0
        %755 = vmatprep.subr.bf16.mxu0 0
        %756 = vmatpush2.bf16.msra.mxu0 0
        %757 = vmatprep.subr.bf16.mxu0 0
        %758 = vmatpush2.bf16.msra.mxu0 0
        %759 = vmatprep.subr.bf16.mxu0 0
        %760 = vmatpush2.bf16.msra.mxu0 0
        %761 = vmatprep.subr.bf16.mxu0 0
        %762 = vmatpush2.bf16.msra.mxu0 0
        %763 = vmatprep.subr.bf16.mxu0 0
        %764 = vmatpush2.bf16.msra.mxu0 0
        %765 = vmatprep.mubr.bf16.mxu0 0
        %766 = vmatmul.mubr.bf16.gmra.mxu0 %v666
        %v767 = vpop.f32.mrf.mxu0
        %v768 = vadd.f32 0.0, %v767
        %v769 = vpop.f32.mrf.mxu0
        %v770 = vpop.f32.mrf.mxu0
        %v771 = vpop.f32.mrf.mxu0
        %772 = vdwg.mxu0
        %v773 = vpack.c.bf16 %v768, %v768
        %v774 = vld [vmem:[#allocation14] sm:$0xf]
        %v775 = vld [vmem:[#allocation14 + $0x4] sm:$0xf]
        %v776 = vld [vmem:[#allocation14 + $0x8] sm:$0xf]
        %v777 = vld [vmem:[#allocation14 + $0xc] sm:$0xf]
        %v778 = vld [vmem:[#allocation14 + $0x10] sm:$0xf]
        %v779 = vld [vmem:[#allocation14 + $0x14] sm:$0xf]
        %v780 = vld [vmem:[#allocation14 + $0x18] sm:$0xf]
        %v781 = vld [vmem:[#allocation14 + $0x1c] sm:$0xf]
        %v782 = vld [vmem:[#allocation14 + $0x20] sm:$0xf]
        %v783 = vld [vmem:[#allocation14 + $0x24] sm:$0xf]
        %v784 = vld [vmem:[#allocation14 + $0x28] sm:$0xf]
        %v785 = vld [vmem:[#allocation14 + $0x2c] sm:$0xf]
        %v786 = vld [vmem:[#allocation14 + $0x30] sm:$0xf]
        %v787 = vld [vmem:[#allocation14 + $0x34] sm:$0xf]
        %v788 = vld [vmem:[#allocation14 + $0x38] sm:$0xf]
        %v789 = vld [vmem:[#allocation14 + $0x3c] sm:$0xf]
        %v806 = vunpack.c.l.b16 %v774
        %v807 = vunpack.c.l.b16 %v775
        %v808 = vunpack.c.l.b16 %v776
        %v809 = vunpack.c.l.b16 %v777
        %v810 = vunpack.c.l.b16 %v778
        %v811 = vunpack.c.l.b16 %v779
        %v812 = vunpack.c.l.b16 %v780
        %v813 = vunpack.c.l.b16 %v781
        %v814 = vunpack.c.l.b16 %v782
        %v815 = vunpack.c.l.b16 %v783
        %v816 = vunpack.c.l.b16 %v784
        %v817 = vunpack.c.l.b16 %v785
        %v818 = vunpack.c.l.b16 %v786
        %v819 = vunpack.c.l.b16 %v787
        %v820 = vunpack.c.l.b16 %v788
        %v821 = vunpack.c.l.b16 %v789
        %v822 = vpack.c.b16 %v807, %v806
        %v823 = vpack.c.b16 %v809, %v808
        %v824 = vpack.c.b16 %v811, %v810
        %v825 = vpack.c.b16 %v813, %v812
        %v826 = vpack.c.b16 %v815, %v814
        %v827 = vpack.c.b16 %v817, %v816
        %v828 = vpack.c.b16 %v819, %v818
        %v829 = vpack.c.b16 %v821, %v820
        %838 = vmatprep.subr.bf16.mxu0 0
        %839 = vmatpush1.bf16.msra.mxu0 %v829
        %840 = vmatprep.subr.bf16.mxu0 0
        %841 = vmatpush1.bf16.msra.mxu0 %v828
        %842 = vmatprep.subr.bf16.mxu0 0
        %843 = vmatpush1.bf16.msra.mxu0 %v827
        %844 = vmatprep.subr.bf16.mxu0 0
        %845 = vmatpush1.bf16.msra.mxu0 %v826
        %846 = vmatprep.subr.bf16.mxu0 0
        %847 = vmatpush1.bf16.msra.mxu0 %v825
        %848 = vmatprep.subr.bf16.mxu0 0
        %849 = vmatpush1.bf16.msra.mxu0 %v824
        %850 = vmatprep.subr.bf16.mxu0 0
        %851 = vmatpush1.bf16.msra.mxu0 %v823
        %852 = vmatprep.subr.bf16.mxu0 0
        %853 = vmatpush1.bf16.msra.mxu0 %v822
        %854 = vmatprep.subr.bf16.mxu0 0
        %855 = vmatpush2.bf16.msra.mxu0 0
        %856 = vmatprep.subr.bf16.mxu0 0
        %857 = vmatpush2.bf16.msra.mxu0 0
        %858 = vmatprep.subr.bf16.mxu0 0
        %859 = vmatpush2.bf16.msra.mxu0 0
        %860 = vmatprep.subr.bf16.mxu0 0
        %861 = vmatpush2.bf16.msra.mxu0 0
        %862 = vmatprep.subr.bf16.mxu0 0
        %863 = vmatpush2.bf16.msra.mxu0 0
        %864 = vmatprep.subr.bf16.mxu0 0
        %865 = vmatpush2.bf16.msra.mxu0 0
        %866 = vmatprep.subr.bf16.mxu0 0
        %867 = vmatpush2.bf16.msra.mxu0 0
        %868 = vmatprep.subr.bf16.mxu0 0
        %869 = vmatpush2.bf16.msra.mxu0 0
        %870 = vmatprep.mubr.bf16.mxu0 0
        %871 = vmatmul.mubr.bf16.gmra.mxu0 %v668
        %v872 = vpop.f32.mrf.mxu0
        %v873 = vadd.f32 0.0, %v872
        %v874 = vpop.f32.mrf.mxu0
        %v875 = vpop.f32.mrf.mxu0
        %v876 = vpop.f32.mrf.mxu0
        %877 = vdwg.mxu0
        %v878 = vpack.c.bf16 %v873, %v873
        %v879 = vld [vmem:[%s533] sm:$0xff]
        %v880 = vld [vmem:[#allocation2] sm:$0xf]
        %vm881 = vcmask 31744
        %v883 = vsel %vm881, %v880, 0
        %v886 = vsel %vm881, %v773, 0
        %888 = vmatprep.subr.bf16.mxu0 0
        %889 = vmatpush1.bf16.xpose.msra.mxu0 0
        %890 = vmatprep.subr.bf16.mxu0 0
        %891 = vmatpush1.bf16.xpose.msra.mxu0 0
        %892 = vmatprep.subr.bf16.mxu0 0
        %893 = vmatpush1.bf16.xpose.msra.mxu0 0
        %894 = vmatprep.subr.bf16.mxu0 0
        %895 = vmatpush1.bf16.xpose.msra.mxu0 0
        %896 = vmatprep.subr.bf16.mxu0 0
        %897 = vmatpush1.bf16.xpose.msra.mxu0 0
        %898 = vmatprep.subr.bf16.mxu0 0
        %899 = vmatpush1.bf16.xpose.msra.mxu0 0
        %900 = vmatprep.subr.bf16.mxu0 0
        %901 = vmatpush1.bf16.xpose.msra.mxu0 0
        %902 = vmatprep.subr.bf16.mxu0 0
        %903 = vmatpush1.bf16.xpose.msra.mxu0 %v886
        %904 = vmatprep.subr.bf16.mxu0 0
        %905 = vmatpush2.bf16.xpose.msra.mxu0 0
        %906 = vmatprep.subr.bf16.mxu0 0
        %907 = vmatpush2.bf16.xpose.msra.mxu0 0
        %908 = vmatprep.subr.bf16.mxu0 0
        %909 = vmatpush2.bf16.xpose.msra.mxu0 0
        %910 = vmatprep.subr.bf16.mxu0 0
        %911 = vmatpush2.bf16.xpose.msra.mxu0 0
        %912 = vmatprep.subr.bf16.mxu0 0
        %913 = vmatpush2.bf16.xpose.msra.mxu0 0
        %914 = vmatprep.subr.bf16.mxu0 0
        %915 = vmatpush2.bf16.xpose.msra.mxu0 0
        %916 = vmatprep.subr.bf16.mxu0 0
        %917 = vmatpush2.bf16.xpose.msra.mxu0 0
        %918 = vmatprep.subr.bf16.mxu0 0
        %919 = vmatpush2.bf16.xpose.msra.mxu0 0
        %920 = vmatprep.mubr.bf16.mxu0 0
        %921 = vmatmul.mubr.bf16.gmra.mxu0 %v883
        %v922 = vpop.f32.mrf.mxu0
        %v923 = vadd.f32 0.0, %v922
        %v924 = vpop.f32.mrf.mxu0
        %v925 = vpop.f32.mrf.mxu0
        %v926 = vpop.f32.mrf.mxu0
        %927 = vdwg.mxu0
        %929 = vset.pattern.permute.xlu0 0
        %930 = vperm.xlu0 %929, %v879
        %v931 = vpop.permute.xlu0 %930
        %v933 = vmul.f32 %v923, %v931
        %v934 = vld [vmem:[#allocation4] sm:$0xff]
        %vm935 = vcmask 64512
        %v936 = vsel %vm935, %v933, -inf
        %937 = vmax.xlane.f32.xlu0 %v936
        %v938 = vpop.xlane.xlu0 %937
        %v939 = vmax.f32 %v934, %v938
        %v940 = vsub.f32 %v934, %v939
        %v941 = vmul.f32 %v940, 1.442695
        %v942 = vpow.pop %v941
        %944 = vset.pattern.permute.xlu0 0
        %945 = vperm.xlu0 %944, %v939
        %v946 = vpop.permute.xlu0 %945
        %v948 = vsub.f32 %v933, %v946
        %v949 = vmul.f32 %v948, 1.442695
        %v950 = vpow.pop %v949
        %v951 = vld [vmem:[#allocation5] sm:$0xff]
        %v952 = vmul.f32 %v942, %v951
        %v953 = vsel %vm935, %v950, 0.0
        %954 = vadd.xlane.f32.xlu0 %v953
        %v955 = vpop.xlane.xlu0 %954
        %v956 = vadd.f32 %v952, %v955
        %vm957 = vcmask 7168
        %958 = vst.msk [vmem:[#allocation5] sm:$0xff] %vm957, %v956
        %v959 = vld [vmem:[#allocation3] sm:$0xff]
        %961 = vset.pattern.permute.xlu0 0
        %962 = vperm.xlu0 %961, %v942
        %v963 = vpop.permute.xlu0 %962
        %v965 = vmul.f32 %v963, %v959
        %v966 = vpack.c.bf16 %v950, %v950
        %v968 = vsel %vm935, %v966, 0
        %vm970 = vcmask 1043456
        %v972 = vsel %vm970, %v878, 0
        %974 = vmatprep.subr.bf16.mxu0 0
        %975 = vmatpush1.bf16.msra.mxu0 0
        %976 = vmatprep.subr.bf16.mxu0 0
        %977 = vmatpush1.bf16.msra.mxu0 0
        %978 = vmatprep.subr.bf16.mxu0 0
        %979 = vmatpush1.bf16.msra.mxu0 0
        %980 = vmatprep.subr.bf16.mxu0 0
        %981 = vmatpush1.bf16.msra.mxu0 0
        %982 = vmatprep.subr.bf16.mxu0 0
        %983 = vmatpush1.bf16.msra.mxu0 0
        %984 = vmatprep.subr.bf16.mxu0 0
        %985 = vmatpush1.bf16.msra.mxu0 0
        %986 = vmatprep.subr.bf16.mxu0 0
        %987 = vmatpush1.bf16.msra.mxu0 0
        %988 = vmatprep.subr.bf16.mxu0 0
        %989 = vmatpush1.bf16.msra.mxu0 %v972
        %990 = vmatprep.subr.bf16.mxu0 0
        %991 = vmatpush2.bf16.msra.mxu0 0
        %992 = vmatprep.subr.bf16.mxu0 0
        %993 = vmatpush2.bf16.msra.mxu0 0
        %994 = vmatprep.subr.bf16.mxu0 0
        %995 = vmatpush2.bf16.msra.mxu0 0
        %996 = vmatprep.subr.bf16.mxu0 0
        %997 = vmatpush2.bf16.msra.mxu0 0
        %998 = vmatprep.subr.bf16.mxu0 0
        %999 = vmatpush2.bf16.msra.mxu0 0
        %1000 = vmatprep.subr.bf16.mxu0 0
        %1001 = vmatpush2.bf16.msra.mxu0 0
        %1002 = vmatprep.subr.bf16.mxu0 0
        %1003 = vmatpush2.bf16.msra.mxu0 0
        %1004 = vmatprep.subr.bf16.mxu0 0
        %1005 = vmatpush2.bf16.msra.mxu0 0
        %1006 = vmatprep.mubr.bf16.mxu0 0
        %1007 = vmatmul.mubr.bf16.gmra.mxu0 %v968
        %v1008 = vpop.f32.mrf.mxu0
        %v1009 = vadd.f32 0.0, %v1008
        %v1010 = vpop.f32.mrf.mxu0
        %v1011 = vpop.f32.mrf.mxu0
        %v1012 = vpop.f32.mrf.mxu0
        %1013 = vdwg.mxu0
        %v1014 = vadd.f32 %v965, %v1009
        %1015 = vst.msk [vmem:[#allocation3] sm:$0xff] %vm881, %v1014
        %1016 = vst.msk [vmem:[#allocation4] sm:$0xff] %vm957, %v939
        %v1017 = vld [vmem:[#allocation2] sm:$0xf]
        %v1019 = vunpack.c.l.b16 %v1017
        %v1020 = vpack.c.b16 %v1019, %v1019
        %1021 = vrot.lane.b32.xlu0 %v1020, 124
        %v1022 = vpop.permute.xlu0 %1021
        %1024 = vrot.lane.b32.xlu0 %v773, 124
        %v1025 = vpop.permute.xlu0 %1024
        %v1027 = vsel %vm881, %v1022, 0
        %v1030 = vsel %vm881, %v1025, 0
        %1032 = vmatprep.subr.bf16.mxu0 0
        %1033 = vmatpush1.bf16.xpose.msra.mxu0 0
        %1034 = vmatprep.subr.bf16.mxu0 0
        %1035 = vmatpush1.bf16.xpose.msra.mxu0 0
        %1036 = vmatprep.subr.bf16.mxu0 0
        %1037 = vmatpush1.bf16.xpose.msra.mxu0 0
        %1038 = vmatprep.subr.bf16.mxu0 0
        %1039 = vmatpush1.bf16.xpose.msra.mxu0 0
        %1040 = vmatprep.subr.bf16.mxu0 0
        %1041 = vmatpush1.bf16.xpose.msra.mxu0 0
        %1042 = vmatprep.subr.bf16.mxu0 0
        %1043 = vmatpush1.bf16.xpose.msra.mxu0 0
        %1044 = vmatprep.subr.bf16.mxu0 0
        %1045 = vmatpush1.bf16.xpose.msra.mxu0 0
        %1046 = vmatprep.subr.bf16.mxu0 0
        %1047 = vmatpush1.bf16.xpose.msra.mxu0 %v1030
        %1048 = vmatprep.subr.bf16.mxu0 0
        %1049 = vmatpush2.bf16.xpose.msra.mxu0 0
        %1050 = vmatprep.subr.bf16.mxu0 0
        %1051 = vmatpush2.bf16.xpose.msra.mxu0 0
        %1052 = vmatprep.subr.bf16.mxu0 0
        %1053 = vmatpush2.bf16.xpose.msra.mxu0 0
        %1054 = vmatprep.subr.bf16.mxu0 0
        %1055 = vmatpush2.bf16.xpose.msra.mxu0 0
        %1056 = vmatprep.subr.bf16.mxu0 0
        %1057 = vmatpush2.bf16.xpose.msra.mxu0 0
        %1058 = vmatprep.subr.bf16.mxu0 0
        %1059 = vmatpush2.bf16.xpose.msra.mxu0 0
        %1060 = vmatprep.subr.bf16.mxu0 0
        %1061 = vmatpush2.bf16.xpose.msra.mxu0 0
        %1062 = vmatprep.subr.bf16.mxu0 0
        %1063 = vmatpush2.bf16.xpose.msra.mxu0 0
        %1064 = vmatprep.mubr.bf16.mxu0 0
        %1065 = vmatmul.mubr.bf16.gmra.mxu0 %v1027
        %v1066 = vpop.f32.mrf.mxu0
        %v1067 = vadd.f32 0.0, %v1066
        %v1068 = vpop.f32.mrf.mxu0
        %v1069 = vpop.f32.mrf.mxu0
        %v1070 = vpop.f32.mrf.mxu0
        %1071 = vdwg.mxu0
        %v1072 = vmul.f32 %v1067, %v931
        %s1073 = scalar_lea.vmem [#allocation4], 8
        %v1074 = vld [vmem:[%s1073] sm:$0xff]
        %v1075 = vsel %vm935, %v1072, -inf
        %1076 = vmax.xlane.f32.xlu0 %v1075
        %v1077 = vpop.xlane.xlu0 %1076
        %v1078 = vmax.f32 %v1074, %v1077
        %v1079 = vsub.f32 %v1074, %v1078
        %v1080 = vmul.f32 %v1079, 1.442695
        %v1081 = vpow.pop %v1080
        %1083 = vset.pattern.permute.xlu0 0
        %1084 = vperm.xlu0 %1083, %v1078
        %v1085 = vpop.permute.xlu0 %1084
        %v1087 = vsub.f32 %v1072, %v1085
        %v1088 = vmul.f32 %v1087, 1.442695
        %v1089 = vpow.pop %v1088
        %s1090 = scalar_lea.vmem [#allocation5], 8
        %v1091 = vld [vmem:[%s1090] sm:$0xff]
        %v1092 = vmul.f32 %v1081, %v1091
        %v1093 = vsel %vm935, %v1089, 0.0
        %1094 = vadd.xlane.f32.xlu0 %v1093
        %v1095 = vpop.xlane.xlu0 %1094
        %v1096 = vadd.f32 %v1092, %v1095
        %1097 = vst.msk [vmem:[%s1090] sm:$0xff] %vm957, %v1096
        %v1098 = vld [vmem:[#allocation3] sm:$0xff]
        %1100 = vset.pattern.permute.xlu0 0
        %1101 = vperm.xlu0 %1100, %v1081
        %v1102 = vpop.permute.xlu0 %1101
        %v1104 = vmul.f32 %v1102, %v1098
        %v1105 = vpack.c.bf16 %v1089, %v1089
        %1107 = vrot.lane.b32.xlu0 %v878, 124
        %v1108 = vpop.permute.xlu0 %1107
        %v1110 = vsel %vm935, %v1105, 0
        %v1113 = vsel %vm970, %v1108, 0
        %1115 = vmatprep.subr.bf16.mxu0 0
        %1116 = vmatpush1.bf16.msra.mxu0 0
        %1117 = vmatprep.subr.bf16.mxu0 0
        %1118 = vmatpush1.bf16.msra.mxu0 0
        %1119 = vmatprep.subr.bf16.mxu0 0
        %1120 = vmatpush1.bf16.msra.mxu0 0
        %1121 = vmatprep.subr.bf16.mxu0 0
        %1122 = vmatpush1.bf16.msra.mxu0 0
        %1123 = vmatprep.subr.bf16.mxu0 0
        %1124 = vmatpush1.bf16.msra.mxu0 0
        %1125 = vmatprep.subr.bf16.mxu0 0
        %1126 = vmatpush1.bf16.msra.mxu0 0
        %1127 = vmatprep.subr.bf16.mxu0 0
        %1128 = vmatpush1.bf16.msra.mxu0 0
        %1129 = vmatprep.subr.bf16.mxu0 0
        %1130 = vmatpush1.bf16.msra.mxu0 %v1113
        %1131 = vmatprep.subr.bf16.mxu0 0
        %1132 = vmatpush2.bf16.msra.mxu0 0
        %1133 = vmatprep.subr.bf16.mxu0 0
        %1134 = vmatpush2.bf16.msra.mxu0 0
        %1135 = vmatprep.subr.bf16.mxu0 0
        %1136 = vmatpush2.bf16.msra.mxu0 0
        %1137 = vmatprep.subr.bf16.mxu0 0
        %1138 = vmatpush2.bf16.msra.mxu0 0
        %1139 = vmatprep.subr.bf16.mxu0 0
        %1140 = vmatpush2.bf16.msra.mxu0 0
        %1141 = vmatprep.subr.bf16.mxu0 0
        %1142 = vmatpush2.bf16.msra.mxu0 0
        %1143 = vmatprep.subr.bf16.mxu0 0
        %1144 = vmatpush2.bf16.msra.mxu0 0
        %1145 = vmatprep.subr.bf16.mxu0 0
        %1146 = vmatpush2.bf16.msra.mxu0 0
        %1147 = vmatprep.mubr.bf16.mxu0 0
        %1148 = vmatmul.mubr.bf16.gmra.mxu0 %v1110
        %v1149 = vpop.f32.mrf.mxu0
        %v1150 = vadd.f32 0.0, %v1149
        %v1151 = vpop.f32.mrf.mxu0
        %v1152 = vpop.f32.mrf.mxu0
        %v1153 = vpop.f32.mrf.mxu0
        %1154 = vdwg.mxu0
        %1156 = vrot.lane.b32.xlu0 %v1150, 4
        %v1157 = vpop.permute.xlu0 %1156
        %v1159 = vadd.f32 %v1104, %v1157
        %vm1160 = vcmask 64544
        %1161 = vst.msk [vmem:[#allocation3] sm:$0xff] %vm1160, %v1159
        %1162 = vst.msk [vmem:[%s1073] sm:$0xff] %vm957, %v1078
        %v1163 = vld [vmem:[#allocation2] sm:$0xf]
        %v1165 = vunpack.c.l.b16 %v1163
        %v1166 = vpack.c.b16 %v1165, %v1165
        %1167 = vrot.lane.b32.xlu0 %v1166, 120
        %v1168 = vpop.permute.xlu0 %1167
        %1169 = vrot.lane.b32.xlu0 %v773, 120
        %v1170 = vpop.permute.xlu0 %1169
        %v1172 = vsel %vm881, %v1168, 0
        %v1175 = vsel %vm881, %v1170, 0
        %1177 = vmatprep.subr.bf16.mxu0 0
        %1178 = vmatpush1.bf16.xpose.msra.mxu0 0
        %1179 = vmatprep.subr.bf16.mxu0 0
        %1180 = vmatpush1.bf16.xpose.msra.mxu0 0
        %1181 = vmatprep.subr.bf16.mxu0 0
        %1182 = vmatpush1.bf16.xpose.msra.mxu0 0
        %1183 = vmatprep.subr.bf16.mxu0 0
        %1184 = vmatpush1.bf16.xpose.msra.mxu0 0
        %1185 = vmatprep.subr.bf16.mxu0 0
        %1186 = vmatpush1.bf16.xpose.msra.mxu0 0
        %1187 = vmatprep.subr.bf16.mxu0 0
        %1188 = vmatpush1.bf16.xpose.msra.mxu0 0
        %1189 = vmatprep.subr.bf16.mxu0 0
        %1190 = vmatpush1.bf16.xpose.msra.mxu0 0
        %1191 = vmatprep.subr.bf16.mxu0 0
        %1192 = vmatpush1.bf16.xpose.msra.mxu0 %v1175
        %1193 = vmatprep.subr.bf16.mxu0 0
        %1194 = vmatpush2.bf16.xpose.msra.mxu0 0
        %1195 = vmatprep.subr.bf16.mxu0 0
        %1196 = vmatpush2.bf16.xpose.msra.mxu0 0
        %1197 = vmatprep.subr.bf16.mxu0 0
        %1198 = vmatpush2.bf16.xpose.msra.mxu0 0
        %1199 = vmatprep.subr.bf16.mxu0 0
        %1200 = vmatpush2.bf16.xpose.msra.mxu0 0
        %1201 = vmatprep.subr.bf16.mxu0 0
        %1202 = vmatpush2.bf16.xpose.msra.mxu0 0
        %1203 = vmatprep.subr.bf16.mxu0 0
        %1204 = vmatpush2.bf16.xpose.msra.mxu0 0
        %1205 = vmatprep.subr.bf16.mxu0 0
        %1206 = vmatpush2.bf16.xpose.msra.mxu0 0
        %1207 = vmatprep.subr.bf16.mxu0 0
        %1208 = vmatpush2.bf16.xpose.msra.mxu0 0
        %1209 = vmatprep.mubr.bf16.mxu0 0
        %1210 = vmatmul.mubr.bf16.gmra.mxu0 %v1172
        %v1211 = vpop.f32.mrf.mxu0
        %v1212 = vadd.f32 0.0, %v1211
        %v1213 = vpop.f32.mrf.mxu0
        %v1214 = vpop.f32.mrf.mxu0
        %v1215 = vpop.f32.mrf.mxu0
        %1216 = vdwg.mxu0
        %v1217 = vmul.f32 %v1212, %v931
        %s1218 = scalar_lea.vmem [#allocation4], 16
        %v1219 = vld [vmem:[%s1218] sm:$0xff]
        %v1220 = vsel %vm935, %v1217, -inf
        %1221 = vmax.xlane.f32.xlu0 %v1220
        %v1222 = vpop.xlane.xlu0 %1221
        %v1223 = vmax.f32 %v1219, %v1222
        %v1224 = vsub.f32 %v1219, %v1223
        %v1225 = vmul.f32 %v1224, 1.442695
        %v1226 = vpow.pop %v1225
        %1228 = vset.pattern.permute.xlu0 0
        %1229 = vperm.xlu0 %1228, %v1223
        %v1230 = vpop.permute.xlu0 %1229
        %v1232 = vsub.f32 %v1217, %v1230
        %v1233 = vmul.f32 %v1232, 1.442695
        %v1234 = vpow.pop %v1233
        %s1235 = scalar_lea.vmem [#allocation5], 16
        %v1236 = vld [vmem:[%s1235] sm:$0xff]
        %v1237 = vmul.f32 %v1226, %v1236
        %v1238 = vsel %vm935, %v1234, 0.0
        %1239 = vadd.xlane.f32.xlu0 %v1238
        %v1240 = vpop.xlane.xlu0 %1239
        %v1241 = vadd.f32 %v1237, %v1240
        %1242 = vst.msk [vmem:[%s1235] sm:$0xff] %vm957, %v1241
        %v1243 = vld [vmem:[#allocation3] sm:$0xff]
        %1245 = vset.pattern.permute.xlu0 0
        %1246 = vperm.xlu0 %1245, %v1226
        %v1247 = vpop.permute.xlu0 %1246
        %v1249 = vmul.f32 %v1247, %v1243
        %v1250 = vpack.c.bf16 %v1234, %v1234
        %1251 = vrot.lane.b32.xlu0 %v878, 120
        %v1252 = vpop.permute.xlu0 %1251
        %v1254 = vsel %vm935, %v1250, 0
        %v1257 = vsel %vm970, %v1252, 0
        %1259 = vmatprep.subr.bf16.mxu0 0
        %1260 = vmatpush1.bf16.msra.mxu0 0
        %1261 = vmatprep.subr.bf16.mxu0 0
        %1262 = vmatpush1.bf16.msra.mxu0 0
        %1263 = vmatprep.subr.bf16.mxu0 0
        %1264 = vmatpush1.bf16.msra.mxu0 0
        %1265 = vmatprep.subr.bf16.mxu0 0
        %1266 = vmatpush1.bf16.msra.mxu0 0
        %1267 = vmatprep.subr.bf16.mxu0 0
        %1268 = vmatpush1.bf16.msra.mxu0 0
        %1269 = vmatprep.subr.bf16.mxu0 0
        %1270 = vmatpush1.bf16.msra.mxu0 0
        %1271 = vmatprep.subr.bf16.mxu0 0
        %1272 = vmatpush1.bf16.msra.mxu0 0
        %1273 = vmatprep.subr.bf16.mxu0 0
        %1274 = vmatpush1.bf16.msra.mxu0 %v1257
        %1275 = vmatprep.subr.bf16.mxu0 0
        %1276 = vmatpush2.bf16.msra.mxu0 0
        %1277 = vmatprep.subr.bf16.mxu0 0
        %1278 = vmatpush2.bf16.msra.mxu0 0
        %1279 = vmatprep.subr.bf16.mxu0 0
        %1280 = vmatpush2.bf16.msra.mxu0 0
        %1281 = vmatprep.subr.bf16.mxu0 0
        %1282 = vmatpush2.bf16.msra.mxu0 0
        %1283 = vmatprep.subr.bf16.mxu0 0
        %1284 = vmatpush2.bf16.msra.mxu0 0
        %1285 = vmatprep.subr.bf16.mxu0 0
        %1286 = vmatpush2.bf16.msra.mxu0 0
        %1287 = vmatprep.subr.bf16.mxu0 0
        %1288 = vmatpush2.bf16.msra.mxu0 0
        %1289 = vmatprep.subr.bf16.mxu0 0
        %1290 = vmatpush2.bf16.msra.mxu0 0
        %1291 = vmatprep.mubr.bf16.mxu0 0
        %1292 = vmatmul.mubr.bf16.gmra.mxu0 %v1254
        %v1293 = vpop.f32.mrf.mxu0
        %v1294 = vadd.f32 0.0, %v1293
        %v1295 = vpop.f32.mrf.mxu0
        %v1296 = vpop.f32.mrf.mxu0
        %v1297 = vpop.f32.mrf.mxu0
        %1298 = vdwg.mxu0
        %1300 = vrot.lane.b32.xlu0 %v1294, 8
        %v1301 = vpop.permute.xlu0 %1300
        %v1303 = vadd.f32 %v1249, %v1301
        %vm1304 = vcmask 97344
        %1305 = vst.msk [vmem:[#allocation3] sm:$0xff] %vm1304, %v1303
        %1306 = vst.msk [vmem:[%s1218] sm:$0xff] %vm957, %v1223
        %v1307 = vld [vmem:[#allocation2] sm:$0xf]
        %v1309 = vunpack.c.l.b16 %v1307
        %v1310 = vpack.c.b16 %v1309, %v1309
        %1311 = vrot.lane.b32.xlu0 %v1310, 116
        %v1312 = vpop.permute.xlu0 %1311
        %1313 = vrot.lane.b32.xlu0 %v773, 116
        %v1314 = vpop.permute.xlu0 %1313
        %v1316 = vsel %vm881, %v1312, 0
        %v1319 = vsel %vm881, %v1314, 0
        %1321 = vmatprep.subr.bf16.mxu0 0
        %1322 = vmatpush1.bf16.xpose.msra.mxu0 0
        %1323 = vmatprep.subr.bf16.mxu0 0
        %1324 = vmatpush1.bf16.xpose.msra.mxu0 0
        %1325 = vmatprep.subr.bf16.mxu0 0
        %1326 = vmatpush1.bf16.xpose.msra.mxu0 0
        %1327 = vmatprep.subr.bf16.mxu0 0
        %1328 = vmatpush1.bf16.xpose.msra.mxu0 0
        %1329 = vmatprep.subr.bf16.mxu0 0
        %1330 = vmatpush1.bf16.xpose.msra.mxu0 0
        %1331 = vmatprep.subr.bf16.mxu0 0
        %1332 = vmatpush1.bf16.xpose.msra.mxu0 0
        %1333 = vmatprep.subr.bf16.mxu0 0
        %1334 = vmatpush1.bf16.xpose.msra.mxu0 0
        %1335 = vmatprep.subr.bf16.mxu0 0
        %1336 = vmatpush1.bf16.xpose.msra.mxu0 %v1319
        %1337 = vmatprep.subr.bf16.mxu0 0
        %1338 = vmatpush2.bf16.xpose.msra.mxu0 0
        %1339 = vmatprep.subr.bf16.mxu0 0
        %1340 = vmatpush2.bf16.xpose.msra.mxu0 0
        %1341 = vmatprep.subr.bf16.mxu0 0
        %1342 = vmatpush2.bf16.xpose.msra.mxu0 0
        %1343 = vmatprep.subr.bf16.mxu0 0
        %1344 = vmatpush2.bf16.xpose.msra.mxu0 0
        %1345 = vmatprep.subr.bf16.mxu0 0
        %1346 = vmatpush2.bf16.xpose.msra.mxu0 0
        %1347 = vmatprep.subr.bf16.mxu0 0
        %1348 = vmatpush2.bf16.xpose.msra.mxu0 0
        %1349 = vmatprep.subr.bf16.mxu0 0
        %1350 = vmatpush2.bf16.xpose.msra.mxu0 0
        %1351 = vmatprep.subr.bf16.mxu0 0
        %1352 = vmatpush2.bf16.xpose.msra.mxu0 0
        %1353 = vmatprep.mubr.bf16.mxu0 0
        %1354 = vmatmul.mubr.bf16.gmra.mxu0 %v1316
        %v1355 = vpop.f32.mrf.mxu0
        %v1356 = vadd.f32 0.0, %v1355
        %v1357 = vpop.f32.mrf.mxu0
        %v1358 = vpop.f32.mrf.mxu0
        %v1359 = vpop.f32.mrf.mxu0
        %1360 = vdwg.mxu0
        %v1361 = vmul.f32 %v1356, %v931
        %s1362 = scalar_lea.vmem [#allocation4], 24
        %v1363 = vld [vmem:[%s1362] sm:$0xff]
        %v1364 = vsel %vm935, %v1361, -inf
        %1365 = vmax.xlane.f32.xlu0 %v1364
        %v1366 = vpop.xlane.xlu0 %1365
        %v1367 = vmax.f32 %v1363, %v1366
        %v1368 = vsub.f32 %v1363, %v1367
        %v1369 = vmul.f32 %v1368, 1.442695
        %v1370 = vpow.pop %v1369
        %1372 = vset.pattern.permute.xlu0 0
        %1373 = vperm.xlu0 %1372, %v1367
        %v1374 = vpop.permute.xlu0 %1373
        %v1376 = vsub.f32 %v1361, %v1374
        %v1377 = vmul.f32 %v1376, 1.442695
        %v1378 = vpow.pop %v1377
        %s1379 = scalar_lea.vmem [#allocation5], 24
        %v1380 = vld [vmem:[%s1379] sm:$0xff]
        %v1381 = vmul.f32 %v1370, %v1380
        %v1382 = vsel %vm935, %v1378, 0.0
        %1383 = vadd.xlane.f32.xlu0 %v1382
        %v1384 = vpop.xlane.xlu0 %1383
        %v1385 = vadd.f32 %v1381, %v1384
        %1386 = vst.msk [vmem:[%s1379] sm:$0xff] %vm957, %v1385
        %v1387 = vld [vmem:[#allocation3] sm:$0xff]
        %1389 = vset.pattern.permute.xlu0 0
        %1390 = vperm.xlu0 %1389, %v1370
        %v1391 = vpop.permute.xlu0 %1390
        %v1393 = vmul.f32 %v1391, %v1387
        %v1394 = vpack.c.bf16 %v1378, %v1378
        %1395 = vrot.lane.b32.xlu0 %v878, 116
        %v1396 = vpop.permute.xlu0 %1395
        %v1398 = vsel %vm935, %v1394, 0
        %v1401 = vsel %vm970, %v1396, 0
        %1403 = vmatprep.subr.bf16.mxu0 0
        %1404 = vmatpush1.bf16.msra.mxu0 0
        %1405 = vmatprep.subr.bf16.mxu0 0
        %1406 = vmatpush1.bf16.msra.mxu0 0
        %1407 = vmatprep.subr.bf16.mxu0 0
        %1408 = vmatpush1.bf16.msra.mxu0 0
        %1409 = vmatprep.subr.bf16.mxu0 0
        %1410 = vmatpush1.bf16.msra.mxu0 0
        %1411 = vmatprep.subr.bf16.mxu0 0
        %1412 = vmatpush1.bf16.msra.mxu0 0
        %1413 = vmatprep.subr.bf16.mxu0 0
        %1414 = vmatpush1.bf16.msra.mxu0 0
        %1415 = vmatprep.subr.bf16.mxu0 0
        %1416 = vmatpush1.bf16.msra.mxu0 0
        %1417 = vmatprep.subr.bf16.mxu0 0
        %1418 = vmatpush1.bf16.msra.mxu0 %v1401
        %1419 = vmatprep.subr.bf16.mxu0 0
        %1420 = vmatpush2.bf16.msra.mxu0 0
        %1421 = vmatprep.subr.bf16.mxu0 0
        %1422 = vmatpush2.bf16.msra.mxu0 0
        %1423 = vmatprep.subr.bf16.mxu0 0
        %1424 = vmatpush2.bf16.msra.mxu0 0
        %1425 = vmatprep.subr.bf16.mxu0 0
        %1426 = vmatpush2.bf16.msra.mxu0 0
        %1427 = vmatprep.subr.bf16.mxu0 0
        %1428 = vmatpush2.bf16.msra.mxu0 0
        %1429 = vmatprep.subr.bf16.mxu0 0
        %1430 = vmatpush2.bf16.msra.mxu0 0
        %1431 = vmatprep.subr.bf16.mxu0 0
        %1432 = vmatpush2.bf16.msra.mxu0 0
        %1433 = vmatprep.subr.bf16.mxu0 0
        %1434 = vmatpush2.bf16.msra.mxu0 0
        %1435 = vmatprep.mubr.bf16.mxu0 0
        %1436 = vmatmul.mubr.bf16.gmra.mxu0 %v1398
        %v1437 = vpop.f32.mrf.mxu0
        %v1438 = vadd.f32 0.0, %v1437
        %v1439 = vpop.f32.mrf.mxu0
        %v1440 = vpop.f32.mrf.mxu0
        %v1441 = vpop.f32.mrf.mxu0
        %1442 = vdwg.mxu0
        %1444 = vrot.lane.b32.xlu0 %v1438, 12
        %v1445 = vpop.permute.xlu0 %1444
        %v1447 = vadd.f32 %v1393, %v1445
        %vm1448 = vcmask 130144
        %1449 = vst.msk [vmem:[#allocation3] sm:$0xff] %vm1448, %v1447
        %1450 = vst.msk [vmem:[%s1362] sm:$0xff] %vm957, %v1367
        %v1451 = vld [vmem:[#allocation2] sm:$0xf]
        %v1453 = vunpack.c.l.b16 %v1451
        %v1454 = vpack.c.b16 %v1453, %v1453
        %1455 = vrot.lane.b32.xlu0 %v1454, 112
        %v1456 = vpop.permute.xlu0 %1455
        %1457 = vrot.lane.b32.xlu0 %v773, 112
        %v1458 = vpop.permute.xlu0 %1457
        %v1460 = vsel %vm881, %v1456, 0
        %v1463 = vsel %vm881, %v1458, 0
        %1465 = vmatprep.subr.bf16.mxu0 0
        %1466 = vmatpush1.bf16.xpose.msra.mxu0 0
        %1467 = vmatprep.subr.bf16.mxu0 0
        %1468 = vmatpush1.bf16.xpose.msra.mxu0 0
        %1469 = vmatprep.subr.bf16.mxu0 0
        %1470 = vmatpush1.bf16.xpose.msra.mxu0 0
        %1471 = vmatprep.subr.bf16.mxu0 0
        %1472 = vmatpush1.bf16.xpose.msra.mxu0 0
        %1473 = vmatprep.subr.bf16.mxu0 0
        %1474 = vmatpush1.bf16.xpose.msra.mxu0 0
        %1475 = vmatprep.subr.bf16.mxu0 0
        %1476 = vmatpush1.bf16.xpose.msra.mxu0 0
        %1477 = vmatprep.subr.bf16.mxu0 0
        %1478 = vmatpush1.bf16.xpose.msra.mxu0 0
        %1479 = vmatprep.subr.bf16.mxu0 0
        %1480 = vmatpush1.bf16.xpose.msra.mxu0 %v1463
        %1481 = vmatprep.subr.bf16.mxu0 0
        %1482 = vmatpush2.bf16.xpose.msra.mxu0 0
        %1483 = vmatprep.subr.bf16.mxu0 0
        %1484 = vmatpush2.bf16.xpose.msra.mxu0 0
        %1485 = vmatprep.subr.bf16.mxu0 0
        %1486 = vmatpush2.bf16.xpose.msra.mxu0 0
        %1487 = vmatprep.subr.bf16.mxu0 0
        %1488 = vmatpush2.bf16.xpose.msra.mxu0 0
        %1489 = vmatprep.subr.bf16.mxu0 0
        %1490 = vmatpush2.bf16.xpose.msra.mxu0 0
        %1491 = vmatprep.subr.bf16.mxu0 0
        %1492 = vmatpush2.bf16.xpose.msra.mxu0 0
        %1493 = vmatprep.subr.bf16.mxu0 0
        %1494 = vmatpush2.bf16.xpose.msra.mxu0 0
        %1495 = vmatprep.subr.bf16.mxu0 0
        %1496 = vmatpush2.bf16.xpose.msra.mxu0 0
        %1497 = vmatprep.mubr.bf16.mxu0 0
        %1498 = vmatmul.mubr.bf16.gmra.mxu0 %v1460
        %v1499 = vpop.f32.mrf.mxu0
        %v1500 = vadd.f32 0.0, %v1499
        %v1501 = vpop.f32.mrf.mxu0
        %v1502 = vpop.f32.mrf.mxu0
        %v1503 = vpop.f32.mrf.mxu0
        %1504 = vdwg.mxu0
        %v1505 = vmul.f32 %v1500, %v931
        %s1506 = scalar_lea.vmem [#allocation4], 32
        %v1507 = vld [vmem:[%s1506] sm:$0xff]
        %v1508 = vsel %vm935, %v1505, -inf
        %1509 = vmax.xlane.f32.xlu0 %v1508
        %v1510 = vpop.xlane.xlu0 %1509
        %v1511 = vmax.f32 %v1507, %v1510
        %v1512 = vsub.f32 %v1507, %v1511
        %v1513 = vmul.f32 %v1512, 1.442695
        %v1514 = vpow.pop %v1513
        %1516 = vset.pattern.permute.xlu0 0
        %1517 = vperm.xlu0 %1516, %v1511
        %v1518 = vpop.permute.xlu0 %1517
        %v1520 = vsub.f32 %v1505, %v1518
        %v1521 = vmul.f32 %v1520, 1.442695
        %v1522 = vpow.pop %v1521
        %s1523 = scalar_lea.vmem [#allocation5], 32
        %v1524 = vld [vmem:[%s1523] sm:$0xff]
        %v1525 = vmul.f32 %v1514, %v1524
        %v1526 = vsel %vm935, %v1522, 0.0
        %1527 = vadd.xlane.f32.xlu0 %v1526
        %v1528 = vpop.xlane.xlu0 %1527
        %v1529 = vadd.f32 %v1525, %v1528
        %1530 = vst.msk [vmem:[%s1523] sm:$0xff] %vm957, %v1529
        %v1531 = vld [vmem:[#allocation3] sm:$0xff]
        %1533 = vset.pattern.permute.xlu0 0
        %1534 = vperm.xlu0 %1533, %v1514
        %v1535 = vpop.permute.xlu0 %1534
        %v1537 = vmul.f32 %v1535, %v1531
        %v1538 = vpack.c.bf16 %v1522, %v1522
        %1539 = vrot.lane.b32.xlu0 %v878, 112
        %v1540 = vpop.permute.xlu0 %1539
        %v1542 = vsel %vm935, %v1538, 0
        %v1545 = vsel %vm970, %v1540, 0
        %1547 = vmatprep.subr.bf16.mxu0 0
        %1548 = vmatpush1.bf16.msra.mxu0 0
        %1549 = vmatprep.subr.bf16.mxu0 0
        %1550 = vmatpush1.bf16.msra.mxu0 0
        %1551 = vmatprep.subr.bf16.mxu0 0
        %1552 = vmatpush1.bf16.msra.mxu0 0
        %1553 = vmatprep.subr.bf16.mxu0 0
        %1554 = vmatpush1.bf16.msra.mxu0 0
        %1555 = vmatprep.subr.bf16.mxu0 0
        %1556 = vmatpush1.bf16.msra.mxu0 0
        %1557 = vmatprep.subr.bf16.mxu0 0
        %1558 = vmatpush1.bf16.msra.mxu0 0
        %1559 = vmatprep.subr.bf16.mxu0 0
        %1560 = vmatpush1.bf16.msra.mxu0 0
        %1561 = vmatprep.subr.bf16.mxu0 0
        %1562 = vmatpush1.bf16.msra.mxu0 %v1545
        %1563 = vmatprep.subr.bf16.mxu0 0
        %1564 = vmatpush2.bf16.msra.mxu0 0
        %1565 = vmatprep.subr.bf16.mxu0 0
        %1566 = vmatpush2.bf16.msra.mxu0 0
        %1567 = vmatprep.subr.bf16.mxu0 0
        %1568 = vmatpush2.bf16.msra.mxu0 0
        %1569 = vmatprep.subr.bf16.mxu0 0
        %1570 = vmatpush2.bf16.msra.mxu0 0
        %1571 = vmatprep.subr.bf16.mxu0 0
        %1572 = vmatpush2.bf16.msra.mxu0 0
        %1573 = vmatprep.subr.bf16.mxu0 0
        %1574 = vmatpush2.bf16.msra.mxu0 0
        %1575 = vmatprep.subr.bf16.mxu0 0
        %1576 = vmatpush2.bf16.msra.mxu0 0
        %1577 = vmatprep.subr.bf16.mxu0 0
        %1578 = vmatpush2.bf16.msra.mxu0 0
        %1579 = vmatprep.mubr.bf16.mxu0 0
        %1580 = vmatmul.mubr.bf16.gmra.mxu0 %v1542
        %v1581 = vpop.f32.mrf.mxu0
        %v1582 = vadd.f32 0.0, %v1581
        %v1583 = vpop.f32.mrf.mxu0
        %v1584 = vpop.f32.mrf.mxu0
        %v1585 = vpop.f32.mrf.mxu0
        %1586 = vdwg.mxu0
        %1588 = vrot.lane.b32.xlu0 %v1582, 16
        %v1589 = vpop.permute.xlu0 %1588
        %v1591 = vadd.f32 %v1537, %v1589
        %vm1592 = vcmask 162944
        %1593 = vst.msk [vmem:[#allocation3] sm:$0xff] %vm1592, %v1591
        %1594 = vst.msk [vmem:[%s1506] sm:$0xff] %vm957, %v1511
        %v1595 = vld [vmem:[#allocation2] sm:$0xf]
        %v1597 = vunpack.c.l.b16 %v1595
        %v1598 = vpack.c.b16 %v1597, %v1597
        %1599 = vrot.lane.b32.xlu0 %v1598, 108
        %v1600 = vpop.permute.xlu0 %1599
        %1601 = vrot.lane.b32.xlu0 %v773, 108
        %v1602 = vpop.permute.xlu0 %1601
        %v1604 = vsel %vm881, %v1600, 0
        %v1607 = vsel %vm881, %v1602, 0
        %1609 = vmatprep.subr.bf16.mxu0 0
        %1610 = vmatpush1.bf16.xpose.msra.mxu0 0
        %1611 = vmatprep.subr.bf16.mxu0 0
        %1612 = vmatpush1.bf16.xpose.msra.mxu0 0
        %1613 = vmatprep.subr.bf16.mxu0 0
        %1614 = vmatpush1.bf16.xpose.msra.mxu0 0
        %1615 = vmatprep.subr.bf16.mxu0 0
        %1616 = vmatpush1.bf16.xpose.msra.mxu0 0
        %1617 = vmatprep.subr.bf16.mxu0 0
        %1618 = vmatpush1.bf16.xpose.msra.mxu0 0
        %1619 = vmatprep.subr.bf16.mxu0 0
        %1620 = vmatpush1.bf16.xpose.msra.mxu0 0
        %1621 = vmatprep.subr.bf16.mxu0 0
        %1622 = vmatpush1.bf16.xpose.msra.mxu0 0
        %1623 = vmatprep.subr.bf16.mxu0 0
        %1624 = vmatpush1.bf16.xpose.msra.mxu0 %v1607
        %1625 = vmatprep.subr.bf16.mxu0 0
        %1626 = vmatpush2.bf16.xpose.msra.mxu0 0
        %1627 = vmatprep.subr.bf16.mxu0 0
        %1628 = vmatpush2.bf16.xpose.msra.mxu0 0
        %1629 = vmatprep.subr.bf16.mxu0 0
        %1630 = vmatpush2.bf16.xpose.msra.mxu0 0
        %1631 = vmatprep.subr.bf16.mxu0 0
        %1632 = vmatpush2.bf16.xpose.msra.mxu0 0
        %1633 = vmatprep.subr.bf16.mxu0 0
        %1634 = vmatpush2.bf16.xpose.msra.mxu0 0
        %1635 = vmatprep.subr.bf16.mxu0 0
        %1636 = vmatpush2.bf16.xpose.msra.mxu0 0
        %1637 = vmatprep.subr.bf16.mxu0 0
        %1638 = vmatpush2.bf16.xpose.msra.mxu0 0
        %1639 = vmatprep.subr.bf16.mxu0 0
        %1640 = vmatpush2.bf16.xpose.msra.mxu0 0
        %1641 = vmatprep.mubr.bf16.mxu0 0
        %1642 = vmatmul.mubr.bf16.gmra.mxu0 %v1604
        %v1643 = vpop.f32.mrf.mxu0
        %v1644 = vadd.f32 0.0, %v1643
        %v1645 = vpop.f32.mrf.mxu0
        %v1646 = vpop.f32.mrf.mxu0
        %v1647 = vpop.f32.mrf.mxu0
        %1648 = vdwg.mxu0
        %v1649 = vmul.f32 %v1644, %v931
        %s1650 = scalar_lea.vmem [#allocation4], 40
        %v1651 = vld [vmem:[%s1650] sm:$0xff]
        %v1652 = vsel %vm935, %v1649, -inf
        %1653 = vmax.xlane.f32.xlu0 %v1652
        %v1654 = vpop.xlane.xlu0 %1653
        %v1655 = vmax.f32 %v1651, %v1654
        %v1656 = vsub.f32 %v1651, %v1655
        %v1657 = vmul.f32 %v1656, 1.442695
        %v1658 = vpow.pop %v1657
        %1660 = vset.pattern.permute.xlu0 0
        %1661 = vperm.xlu0 %1660, %v1655
        %v1662 = vpop.permute.xlu0 %1661
        %v1664 = vsub.f32 %v1649, %v1662
        %v1665 = vmul.f32 %v1664, 1.442695
        %v1666 = vpow.pop %v1665
        %s1667 = scalar_lea.vmem [#allocation5], 40
        %v1668 = vld [vmem:[%s1667] sm:$0xff]
        %v1669 = vmul.f32 %v1658, %v1668
        %v1670 = vsel %vm935, %v1666, 0.0
        %1671 = vadd.xlane.f32.xlu0 %v1670
        %v1672 = vpop.xlane.xlu0 %1671
        %v1673 = vadd.f32 %v1669, %v1672
        %1674 = vst.msk [vmem:[%s1667] sm:$0xff] %vm957, %v1673
        %v1675 = vld [vmem:[#allocation3] sm:$0xff]
        %1677 = vset.pattern.permute.xlu0 0
        %1678 = vperm.xlu0 %1677, %v1658
        %v1679 = vpop.permute.xlu0 %1678
        %v1681 = vmul.f32 %v1679, %v1675
        %v1682 = vpack.c.bf16 %v1666, %v1666
        %1683 = vrot.lane.b32.xlu0 %v878, 108
        %v1684 = vpop.permute.xlu0 %1683
        %v1686 = vsel %vm935, %v1682, 0
        %v1689 = vsel %vm970, %v1684, 0
        %1691 = vmatprep.subr.bf16.mxu0 0
        %1692 = vmatpush1.bf16.msra.mxu0 0
        %1693 = vmatprep.subr.bf16.mxu0 0
        %1694 = vmatpush1.bf16.msra.mxu0 0
        %1695 = vmatprep.subr.bf16.mxu0 0
        %1696 = vmatpush1.bf16.msra.mxu0 0
        %1697 = vmatprep.subr.bf16.mxu0 0
        %1698 = vmatpush1.bf16.msra.mxu0 0
        %1699 = vmatprep.subr.bf16.mxu0 0
        %1700 = vmatpush1.bf16.msra.mxu0 0
        %1701 = vmatprep.subr.bf16.mxu0 0
        %1702 = vmatpush1.bf16.msra.mxu0 0
        %1703 = vmatprep.subr.bf16.mxu0 0
        %1704 = vmatpush1.bf16.msra.mxu0 0
        %1705 = vmatprep.subr.bf16.mxu0 0
        %1706 = vmatpush1.bf16.msra.mxu0 %v1689
        %1707 = vmatprep.subr.bf16.mxu0 0
        %1708 = vmatpush2.bf16.msra.mxu0 0
        %1709 = vmatprep.subr.bf16.mxu0 0
        %1710 = vmatpush2.bf16.msra.mxu0 0
        %1711 = vmatprep.subr.bf16.mxu0 0
        %1712 = vmatpush2.bf16.msra.mxu0 0
        %1713 = vmatprep.subr.bf16.mxu0 0
        %1714 = vmatpush2.bf16.msra.mxu0 0
        %1715 = vmatprep.subr.bf16.mxu0 0
        %1716 = vmatpush2.bf16.msra.mxu0 0
        %1717 = vmatprep.subr.bf16.mxu0 0
        %1718 = vmatpush2.bf16.msra.mxu0 0
        %1719 = vmatprep.subr.bf16.mxu0 0
        %1720 = vmatpush2.bf16.msra.mxu0 0
        %1721 = vmatprep.subr.bf16.mxu0 0
        %1722 = vmatpush2.bf16.msra.mxu0 0
        %1723 = vmatprep.mubr.bf16.mxu0 0
        %1724 = vmatmul.mubr.bf16.gmra.mxu0 %v1686
        %v1725 = vpop.f32.mrf.mxu0
        %v1726 = vadd.f32 0.0, %v1725
        %v1727 = vpop.f32.mrf.mxu0
        %v1728 = vpop.f32.mrf.mxu0
        %v1729 = vpop.f32.mrf.mxu0
        %1730 = vdwg.mxu0
        %1732 = vrot.lane.b32.xlu0 %v1726, 20
        %v1733 = vpop.permute.xlu0 %1732
        %v1735 = vadd.f32 %v1681, %v1733
        %vm1736 = vcmask 195744
        %1737 = vst.msk [vmem:[#allocation3] sm:$0xff] %vm1736, %v1735
        %1738 = vst.msk [vmem:[%s1650] sm:$0xff] %vm957, %v1655
        %v1739 = vld [vmem:[#allocation2] sm:$0xf]
        %v1741 = vunpack.c.l.b16 %v1739
        %v1742 = vpack.c.b16 %v1741, %v1741
        %1743 = vrot.lane.b32.xlu0 %v1742, 104
        %v1744 = vpop.permute.xlu0 %1743
        %1745 = vrot.lane.b32.xlu0 %v773, 104
        %v1746 = vpop.permute.xlu0 %1745
        %v1748 = vsel %vm881, %v1744, 0
        %v1751 = vsel %vm881, %v1746, 0
        %1753 = vmatprep.subr.bf16.mxu0 0
        %1754 = vmatpush1.bf16.xpose.msra.mxu0 0
        %1755 = vmatprep.subr.bf16.mxu0 0
        %1756 = vmatpush1.bf16.xpose.msra.mxu0 0
        %1757 = vmatprep.subr.bf16.mxu0 0
        %1758 = vmatpush1.bf16.xpose.msra.mxu0 0
        %1759 = vmatprep.subr.bf16.mxu0 0
        %1760 = vmatpush1.bf16.xpose.msra.mxu0 0
        %1761 = vmatprep.subr.bf16.mxu0 0
        %1762 = vmatpush1.bf16.xpose.msra.mxu0 0
        %1763 = vmatprep.subr.bf16.mxu0 0
        %1764 = vmatpush1.bf16.xpose.msra.mxu0 0
        %1765 = vmatprep.subr.bf16.mxu0 0
        %1766 = vmatpush1.bf16.xpose.msra.mxu0 0
        %1767 = vmatprep.subr.bf16.mxu0 0
        %1768 = vmatpush1.bf16.xpose.msra.mxu0 %v1751
        %1769 = vmatprep.subr.bf16.mxu0 0
        %1770 = vmatpush2.bf16.xpose.msra.mxu0 0
        %1771 = vmatprep.subr.bf16.mxu0 0
        %1772 = vmatpush2.bf16.xpose.msra.mxu0 0
        %1773 = vmatprep.subr.bf16.mxu0 0
        %1774 = vmatpush2.bf16.xpose.msra.mxu0 0
        %1775 = vmatprep.subr.bf16.mxu0 0
        %1776 = vmatpush2.bf16.xpose.msra.mxu0 0
        %1777 = vmatprep.subr.bf16.mxu0 0
        %1778 = vmatpush2.bf16.xpose.msra.mxu0 0
        %1779 = vmatprep.subr.bf16.mxu0 0
        %1780 = vmatpush2.bf16.xpose.msra.mxu0 0
        %1781 = vmatprep.subr.bf16.mxu0 0
        %1782 = vmatpush2.bf16.xpose.msra.mxu0 0
        %1783 = vmatprep.subr.bf16.mxu0 0
        %1784 = vmatpush2.bf16.xpose.msra.mxu0 0
        %1785 = vmatprep.mubr.bf16.mxu0 0
        %1786 = vmatmul.mubr.bf16.gmra.mxu0 %v1748
        %v1787 = vpop.f32.mrf.mxu0
        %v1788 = vadd.f32 0.0, %v1787
        %v1789 = vpop.f32.mrf.mxu0
        %v1790 = vpop.f32.mrf.mxu0
        %v1791 = vpop.f32.mrf.mxu0
        %1792 = vdwg.mxu0
        %v1793 = vmul.f32 %v1788, %v931
        %s1794 = scalar_lea.vmem [#allocation4], 48
        %v1795 = vld [vmem:[%s1794] sm:$0xff]
        %v1796 = vsel %vm935, %v1793, -inf
        %1797 = vmax.xlane.f32.xlu0 %v1796
        %v1798 = vpop.xlane.xlu0 %1797
        %v1799 = vmax.f32 %v1795, %v1798
        %v1800 = vsub.f32 %v1795, %v1799
        %v1801 = vmul.f32 %v1800, 1.442695
        %v1802 = vpow.pop %v1801
        %1804 = vset.pattern.permute.xlu0 0
        %1805 = vperm.xlu0 %1804, %v1799
        %v1806 = vpop.permute.xlu0 %1805
        %v1808 = vsub.f32 %v1793, %v1806
        %v1809 = vmul.f32 %v1808, 1.442695
        %v1810 = vpow.pop %v1809
        %s1811 = scalar_lea.vmem [#allocation5], 48
        %v1812 = vld [vmem:[%s1811] sm:$0xff]
        %v1813 = vmul.f32 %v1802, %v1812
        %v1814 = vsel %vm935, %v1810, 0.0
        %1815 = vadd.xlane.f32.xlu0 %v1814
        %v1816 = vpop.xlane.xlu0 %1815
        %v1817 = vadd.f32 %v1813, %v1816
        %1818 = vst.msk [vmem:[%s1811] sm:$0xff] %vm957, %v1817
        %v1819 = vld [vmem:[#allocation3] sm:$0xff]
        %1821 = vset.pattern.permute.xlu0 0
        %1822 = vperm.xlu0 %1821, %v1802
        %v1823 = vpop.permute.xlu0 %1822
        %v1825 = vmul.f32 %v1823, %v1819
        %v1826 = vpack.c.bf16 %v1810, %v1810
        %1827 = vrot.lane.b32.xlu0 %v878, 104
        %v1828 = vpop.permute.xlu0 %1827
        %v1830 = vsel %vm935, %v1826, 0
        %v1833 = vsel %vm970, %v1828, 0
        %1835 = vmatprep.subr.bf16.mxu0 0
        %1836 = vmatpush1.bf16.msra.mxu0 0
        %1837 = vmatprep.subr.bf16.mxu0 0
        %1838 = vmatpush1.bf16.msra.mxu0 0
        %1839 = vmatprep.subr.bf16.mxu0 0
        %1840 = vmatpush1.bf16.msra.mxu0 0
        %1841 = vmatprep.subr.bf16.mxu0 0
        %1842 = vmatpush1.bf16.msra.mxu0 0
        %1843 = vmatprep.subr.bf16.mxu0 0
        %1844 = vmatpush1.bf16.msra.mxu0 0
        %1845 = vmatprep.subr.bf16.mxu0 0
        %1846 = vmatpush1.bf16.msra.mxu0 0
        %1847 = vmatprep.subr.bf16.mxu0 0
        %1848 = vmatpush1.bf16.msra.mxu0 0
        %1849 = vmatprep.subr.bf16.mxu0 0
        %1850 = vmatpush1.bf16.msra.mxu0 %v1833
        %1851 = vmatprep.subr.bf16.mxu0 0
        %1852 = vmatpush2.bf16.msra.mxu0 0
        %1853 = vmatprep.subr.bf16.mxu0 0
        %1854 = vmatpush2.bf16.msra.mxu0 0
        %1855 = vmatprep.subr.bf16.mxu0 0
        %1856 = vmatpush2.bf16.msra.mxu0 0
        %1857 = vmatprep.subr.bf16.mxu0 0
        %1858 = vmatpush2.bf16.msra.mxu0 0
        %1859 = vmatprep.subr.bf16.mxu0 0
        %1860 = vmatpush2.bf16.msra.mxu0 0
        %1861 = vmatprep.subr.bf16.mxu0 0
        %1862 = vmatpush2.bf16.msra.mxu0 0
        %1863 = vmatprep.subr.bf16.mxu0 0
        %1864 = vmatpush2.bf16.msra.mxu0 0
        %1865 = vmatprep.subr.bf16.mxu0 0
        %1866 = vmatpush2.bf16.msra.mxu0 0
        %1867 = vmatprep.mubr.bf16.mxu0 0
        %1868 = vmatmul.mubr.bf16.gmra.mxu0 %v1830
        %v1869 = vpop.f32.mrf.mxu0
        %v1870 = vadd.f32 0.0, %v1869
        %v1871 = vpop.f32.mrf.mxu0
        %v1872 = vpop.f32.mrf.mxu0
        %v1873 = vpop.f32.mrf.mxu0
        %1874 = vdwg.mxu0
        %1876 = vrot.lane.b32.xlu0 %v1870, 24
        %v1877 = vpop.permute.xlu0 %1876
        %v1879 = vadd.f32 %v1825, %v1877
        %vm1880 = vcmask 228544
        %1881 = vst.msk [vmem:[#allocation3] sm:$0xff] %vm1880, %v1879
        %1882 = vst.msk [vmem:[%s1794] sm:$0xff] %vm957, %v1799
        %v1883 = vld [vmem:[#allocation2] sm:$0xf]
        %v1885 = vunpack.c.l.b16 %v1883
        %v1886 = vpack.c.b16 %v1885, %v1885
        %1887 = vrot.lane.b32.xlu0 %v1886, 100
        %v1888 = vpop.permute.xlu0 %1887
        %1889 = vrot.lane.b32.xlu0 %v773, 100
        %v1890 = vpop.permute.xlu0 %1889
        %v1892 = vsel %vm881, %v1888, 0
        %v1895 = vsel %vm881, %v1890, 0
        %1897 = vmatprep.subr.bf16.mxu0 0
        %1898 = vmatpush1.bf16.xpose.msra.mxu0 0
        %1899 = vmatprep.subr.bf16.mxu0 0
        %1900 = vmatpush1.bf16.xpose.msra.mxu0 0
        %1901 = vmatprep.subr.bf16.mxu0 0
        %1902 = vmatpush1.bf16.xpose.msra.mxu0 0
        %1903 = vmatprep.subr.bf16.mxu0 0
        %1904 = vmatpush1.bf16.xpose.msra.mxu0 0
        %1905 = vmatprep.subr.bf16.mxu0 0
        %1906 = vmatpush1.bf16.xpose.msra.mxu0 0
        %1907 = vmatprep.subr.bf16.mxu0 0
        %1908 = vmatpush1.bf16.xpose.msra.mxu0 0
        %1909 = vmatprep.subr.bf16.mxu0 0
        %1910 = vmatpush1.bf16.xpose.msra.mxu0 0
        %1911 = vmatprep.subr.bf16.mxu0 0
        %1912 = vmatpush1.bf16.xpose.msra.mxu0 %v1895
        %1913 = vmatprep.subr.bf16.mxu0 0
        %1914 = vmatpush2.bf16.xpose.msra.mxu0 0
        %1915 = vmatprep.subr.bf16.mxu0 0
        %1916 = vmatpush2.bf16.xpose.msra.mxu0 0
        %1917 = vmatprep.subr.bf16.mxu0 0
        %1918 = vmatpush2.bf16.xpose.msra.mxu0 0
        %1919 = vmatprep.subr.bf16.mxu0 0
        %1920 = vmatpush2.bf16.xpose.msra.mxu0 0
        %1921 = vmatprep.subr.bf16.mxu0 0
        %1922 = vmatpush2.bf16.xpose.msra.mxu0 0
        %1923 = vmatprep.subr.bf16.mxu0 0
        %1924 = vmatpush2.bf16.xpose.msra.mxu0 0
        %1925 = vmatprep.subr.bf16.mxu0 0
        %1926 = vmatpush2.bf16.xpose.msra.mxu0 0
        %1927 = vmatprep.subr.bf16.mxu0 0
        %1928 = vmatpush2.bf16.xpose.msra.mxu0 0
        %1929 = vmatprep.mubr.bf16.mxu0 0
        %1930 = vmatmul.mubr.bf16.gmra.mxu0 %v1892
        %v1931 = vpop.f32.mrf.mxu0
        %v1932 = vadd.f32 0.0, %v1931
        %v1933 = vpop.f32.mrf.mxu0
        %v1934 = vpop.f32.mrf.mxu0
        %v1935 = vpop.f32.mrf.mxu0
        %1936 = vdwg.mxu0
        %v1937 = vmul.f32 %v1932, %v931
        %s1938 = scalar_lea.vmem [#allocation4], 56
        %v1939 = vld [vmem:[%s1938] sm:$0xff]
        %v1940 = vsel %vm935, %v1937, -inf
        %1941 = vmax.xlane.f32.xlu0 %v1940
        %v1942 = vpop.xlane.xlu0 %1941
        %v1943 = vmax.f32 %v1939, %v1942
        %v1944 = vsub.f32 %v1939, %v1943
        %v1945 = vmul.f32 %v1944, 1.442695
        %v1946 = vpow.pop %v1945
        %1948 = vset.pattern.permute.xlu0 0
        %1949 = vperm.xlu0 %1948, %v1943
        %v1950 = vpop.permute.xlu0 %1949
        %v1952 = vsub.f32 %v1937, %v1950
        %v1953 = vmul.f32 %v1952, 1.442695
        %v1954 = vpow.pop %v1953
        %s1955 = scalar_lea.vmem [#allocation5], 56
        %v1956 = vld [vmem:[%s1955] sm:$0xff]
        %v1957 = vmul.f32 %v1946, %v1956
        %v1958 = vsel %vm935, %v1954, 0.0
        %1959 = vadd.xlane.f32.xlu0 %v1958
        %v1960 = vpop.xlane.xlu0 %1959
        %v1961 = vadd.f32 %v1957, %v1960
        %1962 = vst.msk [vmem:[%s1955] sm:$0xff] %vm957, %v1961
        %v1963 = vld [vmem:[#allocation3] sm:$0xff]
        %1965 = vset.pattern.permute.xlu0 0
        %1966 = vperm.xlu0 %1965, %v1946
        %v1967 = vpop.permute.xlu0 %1966
        %v1969 = vmul.f32 %v1967, %v1963
        %v1970 = vpack.c.bf16 %v1954, %v1954
        %1971 = vrot.lane.b32.xlu0 %v878, 100
        %v1972 = vpop.permute.xlu0 %1971
        %v1974 = vsel %vm935, %v1970, 0
        %v1977 = vsel %vm970, %v1972, 0
        %1979 = vmatprep.subr.bf16.mxu0 0
        %1980 = vmatpush1.bf16.msra.mxu0 0
        %1981 = vmatprep.subr.bf16.mxu0 0
        %1982 = vmatpush1.bf16.msra.mxu0 0
        %1983 = vmatprep.subr.bf16.mxu0 0
        %1984 = vmatpush1.bf16.msra.mxu0 0
        %1985 = vmatprep.subr.bf16.mxu0 0
        %1986 = vmatpush1.bf16.msra.mxu0 0
        %1987 = vmatprep.subr.bf16.mxu0 0
        %1988 = vmatpush1.bf16.msra.mxu0 0
        %1989 = vmatprep.subr.bf16.mxu0 0
        %1990 = vmatpush1.bf16.msra.mxu0 0
        %1991 = vmatprep.subr.bf16.mxu0 0
        %1992 = vmatpush1.bf16.msra.mxu0 0
        %1993 = vmatprep.subr.bf16.mxu0 0
        %1994 = vmatpush1.bf16.msra.mxu0 %v1977
        %1995 = vmatprep.subr.bf16.mxu0 0
        %1996 = vmatpush2.bf16.msra.mxu0 0
        %1997 = vmatprep.subr.bf16.mxu0 0
        %1998 = vmatpush2.bf16.msra.mxu0 0
        %1999 = vmatprep.subr.bf16.mxu0 0
        %2000 = vmatpush2.bf16.msra.mxu0 0
        %2001 = vmatprep.subr.bf16.mxu0 0
        %2002 = vmatpush2.bf16.msra.mxu0 0
        %2003 = vmatprep.subr.bf16.mxu0 0
        %2004 = vmatpush2.bf16.msra.mxu0 0
        %2005 = vmatprep.subr.bf16.mxu0 0
        %2006 = vmatpush2.bf16.msra.mxu0 0
        %2007 = vmatprep.subr.bf16.mxu0 0
        %2008 = vmatpush2.bf16.msra.mxu0 0
        %2009 = vmatprep.subr.bf16.mxu0 0
        %2010 = vmatpush2.bf16.msra.mxu0 0
        %2011 = vmatprep.mubr.bf16.mxu0 0
        %2012 = vmatmul.mubr.bf16.gmra.mxu0 %v1974
        %v2013 = vpop.f32.mrf.mxu0
        %v2014 = vadd.f32 0.0, %v2013
        %v2015 = vpop.f32.mrf.mxu0
        %v2016 = vpop.f32.mrf.mxu0
        %v2017 = vpop.f32.mrf.mxu0
        %2018 = vdwg.mxu0
        %2020 = vrot.lane.b32.xlu0 %v2014, 28
        %v2021 = vpop.permute.xlu0 %2020
        %v2023 = vadd.f32 %v1969, %v2021
        %vm2024 = vcmask 261344
        %2025 = vst.msk [vmem:[#allocation3] sm:$0xff] %vm2024, %v2023
        %2026 = vst.msk [vmem:[%s1938] sm:$0xff] %vm957, %v1943
        %p2027 = scmp.eq.s32.totalorder %s38, 1
        // Predicated region
        $region85: #{tpu_custom_call.1} parent=55 // pred_check
          %p2028 = pneg %p2027
        $region86: #{tpu_custom_call.1} parent=55 // pred_check_branch
          %2030 = sbr.rel (%p2028) target = $region88
        $region87: #{tpu_custom_call.1} parent=55 // pred_region
          %v2031 = vld [vmem:[#allocation5] sm:$0xff]
          %v2032 = vrcp.pop %v2031
          %v2033 = vld [vmem:[#allocation3] sm:$0xff]
          %2035 = vset.pattern.permute.xlu0 0
          %2036 = vperm.xlu0 %2035, %v2032
          %v2037 = vpop.permute.xlu0 %2036
          %v2039 = vmul.f32 %v2033, %v2037
          %2040 = vst.msk [vmem:[#allocation3] sm:$0xff] %vm881, %v2039
          %v2041 = vld [vmem:[%s1090] sm:$0xff]
          %v2042 = vrcp.pop %v2041
          %v2043 = vld [vmem:[#allocation3] sm:$0xff]
          %2045 = vset.pattern.permute.xlu0 0
          %2046 = vperm.xlu0 %2045, %v2042
          %v2047 = vpop.permute.xlu0 %2046
          %v2049 = vmul.f32 %v2043, %v2047
          %2050 = vst.msk [vmem:[#allocation3] sm:$0xff] %vm1160, %v2049
          %v2051 = vld [vmem:[%s1235] sm:$0xff]
          %v2052 = vrcp.pop %v2051
          %v2053 = vld [vmem:[#allocation3] sm:$0xff]
          %2055 = vset.pattern.permute.xlu0 0
          %2056 = vperm.xlu0 %2055, %v2052
          %v2057 = vpop.permute.xlu0 %2056
          %v2059 = vmul.f32 %v2053, %v2057
          %2060 = vst.msk [vmem:[#allocation3] sm:$0xff] %vm1304, %v2059
          %v2061 = vld [vmem:[%s1379] sm:$0xff]
          %v2062 = vrcp.pop %v2061
          %v2063 = vld [vmem:[#allocation3] sm:$0xff]
          %2065 = vset.pattern.permute.xlu0 0
          %2066 = vperm.xlu0 %2065, %v2062
          %v2067 = vpop.permute.xlu0 %2066
          %v2069 = vmul.f32 %v2063, %v2067
          %2070 = vst.msk [vmem:[#allocation3] sm:$0xff] %vm1448, %v2069
          %v2071 = vld [vmem:[%s1523] sm:$0xff]
          %v2072 = vrcp.pop %v2071
          %v2073 = vld [vmem:[#allocation3] sm:$0xff]
          %2075 = vset.pattern.permute.xlu0 0
          %2076 = vperm.xlu0 %2075, %v2072
          %v2077 = vpop.permute.xlu0 %2076
          %v2079 = vmul.f32 %v2073, %v2077
          %2080 = vst.msk [vmem:[#allocation3] sm:$0xff] %vm1592, %v2079
          %v2081 = vld [vmem:[%s1667] sm:$0xff]
          %v2082 = vrcp.pop %v2081
          %v2083 = vld [vmem:[#allocation3] sm:$0xff]
          %2085 = vset.pattern.permute.xlu0 0
          %2086 = vperm.xlu0 %2085, %v2082
          %v2087 = vpop.permute.xlu0 %2086
          %v2089 = vmul.f32 %v2083, %v2087
          %2090 = vst.msk [vmem:[#allocation3] sm:$0xff] %vm1736, %v2089
          %v2091 = vld [vmem:[%s1811] sm:$0xff]
          %v2092 = vrcp.pop %v2091
          %v2093 = vld [vmem:[#allocation3] sm:$0xff]
          %2095 = vset.pattern.permute.xlu0 0
          %2096 = vperm.xlu0 %2095, %v2092
          %v2097 = vpop.permute.xlu0 %2096
          %v2099 = vmul.f32 %v2093, %v2097
          %2100 = vst.msk [vmem:[#allocation3] sm:$0xff] %vm1880, %v2099
          %v2101 = vld [vmem:[%s1955] sm:$0xff]
          %v2102 = vrcp.pop %v2101
          %v2103 = vld [vmem:[#allocation3] sm:$0xff]
          %2105 = vset.pattern.permute.xlu0 0
          %2106 = vperm.xlu0 %2105, %v2102
          %v2107 = vpop.permute.xlu0 %2106
          %v2109 = vmul.f32 %v2103, %v2107
          %2110 = vst.msk [vmem:[#allocation3] sm:$0xff] %vm2024, %v2109
          %v2111 = vld [vmem:[#allocation3] sm:$0xff]
          %v2112 = vpack.c.bf16 %v2111, %v2111
          %v2113 = vld [vmem:[#allocation15] sm:$0xf]
          %v2114 = vld [vmem:[#allocation15 + $0x4] sm:$0xf]
          %v2115 = vld [vmem:[#allocation15 + $0x8] sm:$0xf]
          %v2116 = vld [vmem:[#allocation15 + $0xc] sm:$0xf]
          %v2117 = vld [vmem:[#allocation15 + $0x10] sm:$0xf]
          %v2118 = vld [vmem:[#allocation15 + $0x14] sm:$0xf]
          %v2119 = vld [vmem:[#allocation15 + $0x18] sm:$0xf]
          %v2120 = vld [vmem:[#allocation15 + $0x1c] sm:$0xf]
          %v2121 = vld [vmem:[#allocation15 + $0x20] sm:$0xf]
          %v2122 = vld [vmem:[#allocation15 + $0x24] sm:$0xf]
          %v2123 = vld [vmem:[#allocation15 + $0x28] sm:$0xf]
          %v2124 = vld [vmem:[#allocation15 + $0x2c] sm:$0xf]
          %v2125 = vld [vmem:[#allocation15 + $0x30] sm:$0xf]
          %v2126 = vld [vmem:[#allocation15 + $0x34] sm:$0xf]
          %v2127 = vld [vmem:[#allocation15 + $0x38] sm:$0xf]
          %v2128 = vld [vmem:[#allocation15 + $0x3c] sm:$0xf]
          %v2129 = vld [vmem:[%s8] sm:$0x1]
          %v2131 = vlaneseq
          %v2132 = vshrl.u32 %v2131, 7
          %v2133 = vsub.s32 0, %v2132
          %v2134 = vrot.slane %v2129, %v2133
          %v2152 = vunpack.c.l.b16 %v2113
          %v2153 = vunpack.c.l.b16 %v2114
          %v2154 = vunpack.c.l.b16 %v2115
          %v2155 = vunpack.c.l.b16 %v2116
          %v2156 = vunpack.c.l.b16 %v2117
          %v2157 = vunpack.c.l.b16 %v2118
          %v2158 = vunpack.c.l.b16 %v2119
          %v2159 = vunpack.c.l.b16 %v2120
          %v2160 = vunpack.c.l.b16 %v2121
          %v2161 = vunpack.c.l.b16 %v2122
          %v2162 = vunpack.c.l.b16 %v2123
          %v2163 = vunpack.c.l.b16 %v2124
          %v2164 = vunpack.c.l.b16 %v2125
          %v2165 = vunpack.c.l.b16 %v2126
          %v2166 = vunpack.c.l.b16 %v2127
          %v2167 = vunpack.c.l.b16 %v2128
          %v2168 = vpack.c.b16 %v2153, %v2152
          %v2169 = vpack.c.b16 %v2155, %v2154
          %v2170 = vpack.c.b16 %v2157, %v2156
          %v2171 = vpack.c.b16 %v2159, %v2158
          %v2172 = vpack.c.b16 %v2161, %v2160
          %v2173 = vpack.c.b16 %v2163, %v2162
          %v2174 = vpack.c.b16 %v2165, %v2164
          %v2175 = vpack.c.b16 %v2167, %v2166
          %2184 = vmatprep.subr.bf16.mxu0 0
          %2185 = vmatpush1.bf16.msra.mxu0 %v2175
          %2186 = vmatprep.subr.bf16.mxu0 0
          %2187 = vmatpush1.bf16.msra.mxu0 %v2174
          %2188 = vmatprep.subr.bf16.mxu0 0
          %2189 = vmatpush1.bf16.msra.mxu0 %v2173
          %2190 = vmatprep.subr.bf16.mxu0 0
          %2191 = vmatpush1.bf16.msra.mxu0 %v2172
          %2192 = vmatprep.subr.bf16.mxu0 0
          %2193 = vmatpush1.bf16.msra.mxu0 %v2171
          %2194 = vmatprep.subr.bf16.mxu0 0
          %2195 = vmatpush1.bf16.msra.mxu0 %v2170
          %2196 = vmatprep.subr.bf16.mxu0 0
          %2197 = vmatpush1.bf16.msra.mxu0 %v2169
          %2198 = vmatprep.subr.bf16.mxu0 0
          %2199 = vmatpush1.bf16.msra.mxu0 %v2168
          %2200 = vmatprep.subr.bf16.mxu0 0
          %2201 = vmatpush2.bf16.msra.mxu0 0
          %2202 = vmatprep.subr.bf16.mxu0 0
          %2203 = vmatpush2.bf16.msra.mxu0 0
          %2204 = vmatprep.subr.bf16.mxu0 0
          %2205 = vmatpush2.bf16.msra.mxu0 0
          %2206 = vmatprep.subr.bf16.mxu0 0
          %2207 = vmatpush2.bf16.msra.mxu0 0
          %2208 = vmatprep.subr.bf16.mxu0 0
          %2209 = vmatpush2.bf16.msra.mxu0 0
          %2210 = vmatprep.subr.bf16.mxu0 0
          %2211 = vmatpush2.bf16.msra.mxu0 0
          %2212 = vmatprep.subr.bf16.mxu0 0
          %2213 = vmatpush2.bf16.msra.mxu0 0
          %2214 = vmatprep.subr.bf16.mxu0 0
          %2215 = vmatpush2.bf16.msra.mxu0 0
          %2216 = vmatprep.mubr.bf16.mxu0 0
          %2217 = vmatmul.mubr.bf16.gmra.mxu0 %v2112
          %v2218 = vpop.f32.mrf.mxu0
          %v2219 = vadd.f32 %v2134, %v2218
          %v2220 = vpop.f32.mrf.mxu0
          %v2221 = vpop.f32.mrf.mxu0
          %v2222 = vpop.f32.mrf.mxu0
          %2223 = vdwg.mxu0
          %2224 = vst [vmem:[%s517] sm:$0xff] %v2219
        $region88: #{tpu_custom_call.1} parent=55 // pred_fallthru
          _
        %s2225 = sand.u32 %s277, 1
        %s2226 = scalar_lea.sflag [#allocation8], %s2225
        %s2227 = sand.u32 %s277, 1
        %s2228 = smul.addr %s2227, 8
        %s2229 = scalar_lea.vmem [#allocation17], %s2228
        // Predicated region
        $region89: #{tpu_custom_call.1} parent=55 // pred_check
          %p2230 = pneg %p287
        $region90: #{tpu_custom_call.1} parent=55 // pred_check_branch
          %2232 = sbr.rel (%p2230) target = $region92
        $region91: #{tpu_custom_call.1} parent=55 // pred_region
          %s2234 = ssub.s32 128, 128
          %2235 = vsyncadd %s2226, %s2234
          %s2236 = smul.addr %s36, 2
          %s2237 = sadd.s32 %s37, %s2236
          %s2238 = smul.addr %s2237, 128
          %s2239 = scalar_lea.hbm %s9, %s2238
          %s2241 = sshll.u32 %s2229, 4
          %s2242 = int_to_ptr.vmem [resolvable:$true] %s2241
          %2244 = dma.vmem_to_hbm [thread:$0]  %s2242, 128, %s2239, %s2226
        $region92: #{tpu_custom_call.1} parent=55 // pred_fallthru
          _
      $region56: #{tpu_custom_call.1} parent=5 // pred_fallthru
        _
      %p2245 = scmp.le.s32.totalorder 2, %s26
      // Predicated region
      $region93: #{tpu_custom_call.1} parent=5 // pred_check
        %p2246 = pneg %p2245
      $region94: #{tpu_custom_call.1} parent=5 // pred_check_branch
        %2248 = sbr.rel (%p2246) target = $region96
      $region95: #{tpu_custom_call.1} parent=5 // pred_region
        %s2249 = ssub.s32 %s26, 2
        // Predicated region
        $region97: #{tpu_custom_call.1} parent=95 // pred_check
          %p2250 = pneg %p293
        $region98: #{tpu_custom_call.1} parent=95 // pred_check_branch
          %2252 = sbr.rel (%p2250) target = $region100
        $region99: #{tpu_custom_call.1} parent=95 // pred_region
          %s2253 = sand.u32 %s278, 1
          %s2254 = scalar_lea.sflag [#allocation8], %s2253
          %s2255 = sand.u32 %s278, 1
          %s2256 = smul.addr %s2255, 8
          %s2257 = scalar_lea.vmem [#allocation17], %s2256
          %2258 = dma.done %s2254, 128
        $region100: #{tpu_custom_call.1} parent=95 // pred_fallthru
          _
      $region96: #{tpu_custom_call.1} parent=5 // pred_fallthru
        _
    $region6: #{tpu_custom_call.1} parent=1 // loop_footer
      %s30 = sadd.s32 1, %s26
    $region7: #{tpu_custom_call.1} parent=1 // loop_footer_branch
      %25 = sbr.rel target = $region3
    $region8: #{tpu_custom_call.1} parent=1 // loop_exit
      _
    %2259 = vsyncpa [#allocation7], 1
    %s2260 = scalar_lea.sflag [#allocation7], 1
    %2261 = vsyncpa %s2260, 1
    %2262 = vsyncpa [#allocation10], 1
    %s2263 = scalar_lea.sflag [#allocation10], 1
    %2264 = vsyncpa %s2263, 1
    %2265 = vsyncpa [#allocation13], 1
    %2266 = vsyncpa [#allocation16], 1
    %2267 = vsyncpa [#allocation8], 1
    %s2268 = scalar_lea.sflag [#allocation8], 1
    %2269 = vsyncpa %s2268, 1

</llo_original>
